<compile_context>
chip_gen: v7x
topology: tpu7x:2x2x1
jax: 0.10.0
libtpu: 0.0.40
codegen_flags: <defaults>
</compile_context>

<pallas_src>
import jax
import jax.numpy as jnp
from jax.experimental import pallas as pl
from jax.experimental.pallas import tpu as pltpu


_VMEM = pl.BlockSpec(memory_space=pltpu.MemorySpace.VMEM)
_BOARD = 8                    # 8x8 board
_PADDED = _BOARD + 2          # spatially zero-padded extent (10)
_PPOS = _PADDED * _PADDED     # 100 padded positions per sample
_MARGIN = 16                  # extra zero rows so every tap slice is in-bounds


# ----------------------------- Pallas kernels ------------------------------

def _trunk_kernel(x_ref, mask_ref, w1_ref, b1_ref, w2_ref, b2_ref,
                  w3_ref, b3_ref, wh1_ref, bh1_ref, pv_ref, buf2, buf3):
    """conv1 -> conv2 -> conv3 -> fused 1x1 policy/value conv, all in VMEM.

    Activations are flat channels-last buffers whose row r = n*100 + hp*10 + wp
    (padded board coords), so a 3x3 conv is 9 row-shifted matmuls against the
    per-tap (Cin, Cout) weight blocks.  Border rows are re-zeroed with `mask`
    after every layer so they act as the next layer's zero padding; outputs at
    border rows are garbage but discarded by the wrapper.
    """
    R = pv_ref.shape[0]        # N * 100
    M = _MARGIN

    def conv3x3_relu(src_ref, w_ref, b_ref, cin, cout):
        acc = jnp.zeros((R, cout), jnp.float32)
        for kh in range(3):
            for kw in range(3):
                shift = (kh - 1) * _PADDED + (kw - 1)
                patch = src_ref[M + shift:M + shift + R, :]           # (R, cin)
                tap = w_ref[(kh * 3 + kw) * cin:(kh * 3 + kw + 1) * cin, :]
                acc = acc + jnp.dot(patch, tap,
                                    preferred_element_type=jnp.float32)
        return jnp.maximum(acc + b_ref[...], 0.0)

    mask = mask_ref[...]                       # (R, 1): 1 on interior positions

    # conv1: 4 -> 32
    a1 = conv3x3_relu(x_ref, w1_ref, b1_ref, 4, 32)
    buf2[...] = jnp.zeros_like(buf2)
    buf2[M:M + R, :] = a1 * mask               # re-establish zero padding

    # conv2: 32 -> 64
    a2 = conv3x3_relu(buf2, w2_ref, b2_ref, 32, 64)
    buf3[...] = jnp.zeros_like(buf3)
    buf3[M:M + R, :] = a2 * mask

    # conv3: 64 -> 128
    a3 = conv3x3_relu(buf3, w3_ref, b3_ref, 64, 128)

    # fused 1x1 head conv: 128 -> 6 channels (policy 0..3, value 4..5), ReLU
    pv = jnp.dot(a3, wh1_ref[...], preferred_element_type=jnp.float32)
    pv_ref[...] = jnp.maximum(pv + bh1_ref[...], 0.0)


def _heads_kernel(h_ref, w_ref, b_ref, o_ref):
    """Fused p_fc2 + softmax(dim=0) and v_fc2 + tanh.

    Single lane-dense (N, 128) output slab: lanes 0..63 = policy softmax,
    lane 64 = value, lanes 65..127 = 0.
    """
    y = jnp.dot(h_ref[...], w_ref[...],
                preferred_element_type=jnp.float32) + b_ref[...]
    # softmax over the batch dimension, matching F.softmax(..., dim=0)
    m = jnp.max(y, axis=0, keepdims=True)
    e = jnp.exp(y - m)
    sm = e / jnp.sum(e, axis=0, keepdims=True)
    v = jnp.tanh(y)
    col = jax.lax.broadcasted_iota(jnp.int32, y.shape, 1)
    o_ref[...] = jnp.where(col < 64, sm, jnp.where(col == 64, v, 0.0))


# ----------------------------- parameters -----------------------------------

def init_params(key):
    """Deterministic, PyTorch-default-style uniform(-1/sqrt(fan_in), +) init."""
    ks = jax.random.split(key, 14)

    def u(k, shape, fan_in):
        bound = 1.0 / float(fan_in) ** 0.5
        return jax.random.uniform(k, shape, jnp.float32, -bound, bound)

    return {
        "conv1_w": u(ks[0], (32, 4, 3, 3), 4 * 9),
        "conv1_b": u(ks[1], (32,), 4 * 9),
        "conv2_w": u(ks[2], (64, 32, 3, 3), 32 * 9),
        "conv2_b": u(ks[3], (64,), 32 * 9),
        "conv3_w": u(ks[4], (128, 64, 3, 3), 64 * 9),
        "conv3_b": u(ks[5], (128,), 64 * 9),
        "pfc1_w": u(ks[6], (4, 128, 1, 1), 128),
        "pfc1_b": u(ks[7], (4,), 128),
        "pfc2_w": u(ks[8], (64, 4 * 8 * 8), 4 * 8 * 8),   # nn.Linear(256, 64)
        "pfc2_b": u(ks[9], (64,), 4 * 8 * 8),
        "vfc1_w": u(ks[10], (2, 128, 1, 1), 128),
        "vfc1_b": u(ks[11], (2,), 128),
        "vfc2_w": u(ks[12], (1, 2 * 8 * 8), 2 * 8 * 8),   # nn.Linear(128, 1)
        "vfc2_b": u(ks[13], (1,), 2 * 8 * 8),
    }


def pack_params(p):
    """One-time weight packing: conv weights as per-tap-stacked (9*Cin, Cout)
    matrices, the two 1x1 head convs fused into one (128, 6) matrix, and the
    two FC heads fused into one lane-dense (384, 128) matrix."""
    def conv_pack(w):                       # (Cout, Cin, 3, 3) -> (9*Cin, Cout)
        cout, cin = w.shape[0], w.shape[1]
        return jnp.transpose(w, (2, 3, 1, 0)).reshape(9 * cin, cout)

    wh2 = jnp.zeros((384, 128), jnp.float32)
    wh2 = wh2.at[0:256, 0:64].set(p["pfc2_w"].T)        # policy Linear
    wh2 = wh2.at[256:384, 64:65].set(p["vfc2_w"].T)     # value Linear
    bh2 = jnp.zeros((1, 128), jnp.float32)
    bh2 = bh2.at[0, 0:64].set(p["pfc2_b"])
    bh2 = bh2.at[0, 64].set(p["vfc2_b"][0])

    return {
        "w1": conv_pack(p["conv1_w"]), "b1": p["conv1_b"].reshape(1, -1),
        "w2": conv_pack(p["conv2_w"]), "b2": p["conv2_b"].reshape(1, -1),
        "w3": conv_pack(p["conv3_w"]), "b3": p["conv3_b"].reshape(1, -1),
        "wh1": jnp.concatenate([p["pfc1_w"].reshape(4, 128).T,
                                p["vfc1_w"].reshape(2, 128).T], axis=1),
        "bh1": jnp.concatenate([p["pfc1_b"], p["vfc1_b"]]).reshape(1, 6),
        "wh2": wh2, "bh2": bh2,
    }


# ----------------------------- forward pass ----------------------------------

def net_forward(packed, x):
    """x: (N, 4, 8, 8) float32 NCHW, like the PyTorch module."""
    N = x.shape[0]
    R = N * _PPOS

    # boundary-only layout work: NCHW -> flat padded channels-last buffer
    x_nhwc = jnp.transpose(x, (0, 2, 3, 1))
    xp = jnp.pad(x_nhwc, ((0, 0), (1, 1), (1, 1), (0, 0))).reshape(R, 4)
    xp = jnp.pad(xp, ((_MARGIN, _MARGIN), (0, 0)))

    # interior-position mask (a jit-time constant)
    pos = jnp.arange(R)
    hp = (pos % _PPOS) // _PADDED
    wp = pos % _PADDED
    interior = (hp >= 1) & (hp <= _BOARD) & (wp >= 1) & (wp <= _BOARD)
    mask = interior.astype(jnp.float32).reshape(R, 1)

    pv = pl.pallas_call(
        _trunk_kernel,
        out_shape=jax.ShapeDtypeStruct((R, 6), jnp.float32),
        in_specs=[_VMEM] * 10,
        out_specs=_VMEM,
        scratch_shapes=[pltpu.VMEM((R + 2 * _MARGIN, 32), jnp.float32),
                        pltpu.VMEM((R + 2 * _MARGIN, 64), jnp.float32)],
    )(xp, mask, packed["w1"], packed["b1"], packed["w2"], packed["b2"],
      packed["w3"], packed["b3"], packed["wh1"], packed["bh1"])

    # Tiny (N*8*8*6 floats) layout glue reproducing PyTorch's channel-major
    # .view(-1, C*8*8) flatten before the fused FC-head kernel.
    pv = pv.reshape(N, _PADDED, _PADDED, 6)[:, 1:-1, 1:-1, :]   # (N, 8, 8, 6)
    p_act = jnp.transpose(pv[..., :4], (0, 3, 1, 2)).reshape(N, 4 * 64)
    v_act = jnp.transpose(pv[..., 4:], (0, 3, 1, 2)).reshape(N, 2 * 64)
    h = jnp.concatenate([p_act, v_act], axis=1)                 # (N, 384)

    out = pl.pallas_call(
        _heads_kernel,
        out_shape=jax.ShapeDtypeStruct((N, 128), jnp.float32),
        in_specs=[_VMEM] * 3,
        out_specs=_VMEM,
    )(h, packed["wh2"], packed["bh2"])

    return out[:, :64], out[:, 64:65]


# ----------------------------- reference (for checking) ----------------------

def _reference_forward(params, x):
    """Pure-JAX/XLA reference with the original module's semantics."""
    def conv(x, w, b, pad):
        y = jax.lax.conv_general_dilated(
            x, w, window_strides=(1, 1), padding=[(pad, pad), (pad, pad)],
            dimension_numbers=("NCHW", "OIHW", "NCHW"))
        return jax.nn.relu(y + b.reshape(1, -1, 1, 1))

    n = x.shape[0]
    a1 = conv(x, params["conv1_w"], params["conv1_b"], 1)
    a2 = conv(a1, params["conv2_w"], params["conv2_b"], 1)
    a3 = conv(a2, params["conv3_w"], params["conv3_b"], 1)
    p1 = conv(a3, params["pfc1_w"], params["pfc1_b"], 0)
    p_out = jax.nn.softmax(p1.reshape(n, -1) @ params["pfc2_w"].T
                           + params["pfc2_b"], axis=0)
    v1 = conv(a3, params["vfc1_w"], params["vfc1_b"], 0)
    v_out = jnp.tanh(v1.reshape(n, -1) @ params["vfc2_w"].T + params["vfc2_b"])
    return p_out, v_out


if __name__ == "__main__":
    key = jax.random.PRNGKey(0)
    k_params, k_x = jax.random.split(key)
    params = init_params(k_params)
    packed = pack_params(params)            # one-time weight packing
    x = jax.random.normal(k_x, (2, 4, 8, 8), dtype=jnp.float32)

    p_out, v_out = jax.jit(net_forward)(packed, x)
    jax.block_until_ready((p_out, v_out))

    assert p_out.shape == (2, 64) and v_out.shape == (2, 1)
    assert bool(jnp.isfinite(p_out).all()) and bool(jnp.isfinite(v_out).all())
    # F.softmax(dim=0): every policy column sums to 1 over the batch
    assert bool(jnp.allclose(jnp.sum(p_out, axis=0), 1.0, atol=1e-4))

    # loose-tolerance structural check against the XLA reference
    p_ref, v_ref = _reference_forward(params, x)
    assert bool(jnp.allclose(p_out, p_ref, atol=3e-2, rtol=3e-2)), "policy mismatch"
    assert bool(jnp.allclose(v_out, v_ref, atol=3e-2, rtol=3e-2)), "value mismatch"

    print("KERNEL_OK")
</pallas_src>

<mosaic_0001>
module attributes {stable_mosaic.version = 11 : i64} {
  func.func @_trunk_kernel(%arg0: memref<232x4xf32, #tpu.memory_space<vmem>>, %arg1: memref<200x1xf32, #tpu.memory_space<vmem>>, %arg2: memref<36x32xf32, #tpu.memory_space<vmem>>, %arg3: memref<1x32xf32, #tpu.memory_space<vmem>>, %arg4: memref<288x64xf32, #tpu.memory_space<vmem>>, %arg5: memref<1x64xf32, #tpu.memory_space<vmem>>, %arg6: memref<576x128xf32, #tpu.memory_space<vmem>>, %arg7: memref<1x128xf32, #tpu.memory_space<vmem>>, %arg8: memref<128x6xf32, #tpu.memory_space<vmem>>, %arg9: memref<1x6xf32, #tpu.memory_space<vmem>>, %arg10: memref<200x6xf32, #tpu.memory_space<vmem>>, %arg11: memref<232x32xf32, #tpu.memory_space<vmem>>, %arg12: memref<232x64xf32, #tpu.memory_space<vmem>>) attributes {dimension_semantics = [], scalar_prefetch = 0 : i64, scratch_operands = 2 : i64, tpu.core_type = #tpu.core_type<tc>} {
    %c0 = arith.constant 0 : index
    %c0_0 = arith.constant 0 : index
    %0 = vector.load %arg1[%c0, %c0_0] : memref<200x1xf32, #tpu.memory_space<vmem>>, vector<200x1xf32>
    %cst = arith.constant 0.000000e+00 : f32
    %1 = vector.broadcast %cst : f32 to vector<200x32xf32>
    %c5 = arith.constant 5 : index
    %c0_1 = arith.constant 0 : index
    %2 = vector.load %arg0[%c5, %c0_1] : memref<232x4xf32, #tpu.memory_space<vmem>>, vector<200x4xf32>
    %c0_2 = arith.constant 0 : index
    %c0_3 = arith.constant 0 : index
    %3 = vector.load %arg2[%c0_2, %c0_3] : memref<36x32xf32, #tpu.memory_space<vmem>>, vector<4x32xf32>
    %cst_4 = arith.constant dense<0.000000e+00> : vector<200x32xf32>
    %4 = tpu.matmul %2, %3, %cst_4 {dimension_numbers = #tpu.dot_dimension_numbers<[1], [0], [0], [1], [0, 0, 1, 1], [], []>} : vector<200x4xf32>, vector<4x32xf32>, vector<200x32xf32> -> vector<200x32xf32>
    %5 = arith.addf %1, %4 : vector<200x32xf32>
    %c6 = arith.constant 6 : index
    %c0_5 = arith.constant 0 : index
    %6 = vector.load %arg0[%c6, %c0_5] : memref<232x4xf32, #tpu.memory_space<vmem>>, vector<200x4xf32>
    %c4 = arith.constant 4 : index
    %c0_6 = arith.constant 0 : index
    %7 = vector.load %arg2[%c4, %c0_6] : memref<36x32xf32, #tpu.memory_space<vmem>>, vector<4x32xf32>
    %cst_7 = arith.constant dense<0.000000e+00> : vector<200x32xf32>
    %8 = tpu.matmul %6, %7, %cst_7 {dimension_numbers = #tpu.dot_dimension_numbers<[1], [0], [0], [1], [0, 0, 1, 1], [], []>} : vector<200x4xf32>, vector<4x32xf32>, vector<200x32xf32> -> vector<200x32xf32>
    %9 = arith.addf %5, %8 : vector<200x32xf32>
    %c7 = arith.constant 7 : index
    %c0_8 = arith.constant 0 : index
    %10 = vector.load %arg0[%c7, %c0_8] : memref<232x4xf32, #tpu.memory_space<vmem>>, vector<200x4xf32>
    %c8 = arith.constant 8 : index
    %c0_9 = arith.constant 0 : index
    %11 = vector.load %arg2[%c8, %c0_9] : memref<36x32xf32, #tpu.memory_space<vmem>>, vector<4x32xf32>
    %cst_10 = arith.constant dense<0.000000e+00> : vector<200x32xf32>
    %12 = tpu.matmul %10, %11, %cst_10 {dimension_numbers = #tpu.dot_dimension_numbers<[1], [0], [0], [1], [0, 0, 1, 1], [], []>} : vector<200x4xf32>, vector<4x32xf32>, vector<200x32xf32> -> vector<200x32xf32>
    %13 = arith.addf %9, %12 : vector<200x32xf32>
    %c15 = arith.constant 15 : index
    %c0_11 = arith.constant 0 : index
    %14 = vector.load %arg0[%c15, %c0_11] : memref<232x4xf32, #tpu.memory_space<vmem>>, vector<200x4xf32>
    %c12 = arith.constant 12 : index
    %c0_12 = arith.constant 0 : index
    %15 = vector.load %arg2[%c12, %c0_12] : memref<36x32xf32, #tpu.memory_space<vmem>>, vector<4x32xf32>
    %cst_13 = arith.constant dense<0.000000e+00> : vector<200x32xf32>
    %16 = tpu.matmul %14, %15, %cst_13 {dimension_numbers = #tpu.dot_dimension_numbers<[1], [0], [0], [1], [0, 0, 1, 1], [], []>} : vector<200x4xf32>, vector<4x32xf32>, vector<200x32xf32> -> vector<200x32xf32>
    %17 = arith.addf %13, %16 : vector<200x32xf32>
    %c16 = arith.constant 16 : index
    %c0_14 = arith.constant 0 : index
    %18 = vector.load %arg0[%c16, %c0_14] : memref<232x4xf32, #tpu.memory_space<vmem>>, vector<200x4xf32>
    %c16_15 = arith.constant 16 : index
    %c0_16 = arith.constant 0 : index
    %19 = vector.load %arg2[%c16_15, %c0_16] : memref<36x32xf32, #tpu.memory_space<vmem>>, vector<4x32xf32>
    %cst_17 = arith.constant dense<0.000000e+00> : vector<200x32xf32>
    %20 = tpu.matmul %18, %19, %cst_17 {dimension_numbers = #tpu.dot_dimension_numbers<[1], [0], [0], [1], [0, 0, 1, 1], [], []>} : vector<200x4xf32>, vector<4x32xf32>, vector<200x32xf32> -> vector<200x32xf32>
    %21 = arith.addf %17, %20 : vector<200x32xf32>
    %c17 = arith.constant 17 : index
    %c0_18 = arith.constant 0 : index
    %22 = vector.load %arg0[%c17, %c0_18] : memref<232x4xf32, #tpu.memory_space<vmem>>, vector<200x4xf32>
    %c20 = arith.constant 20 : index
    %c0_19 = arith.constant 0 : index
    %23 = vector.load %arg2[%c20, %c0_19] : memref<36x32xf32, #tpu.memory_space<vmem>>, vector<4x32xf32>
    %cst_20 = arith.constant dense<0.000000e+00> : vector<200x32xf32>
    %24 = tpu.matmul %22, %23, %cst_20 {dimension_numbers = #tpu.dot_dimension_numbers<[1], [0], [0], [1], [0, 0, 1, 1], [], []>} : vector<200x4xf32>, vector<4x32xf32>, vector<200x32xf32> -> vector<200x32xf32>
    %25 = arith.addf %21, %24 : vector<200x32xf32>
    %c25 = arith.constant 25 : index
    %c0_21 = arith.constant 0 : index
    %26 = vector.load %arg0[%c25, %c0_21] : memref<232x4xf32, #tpu.memory_space<vmem>>, vector<200x4xf32>
    %c24 = arith.constant 24 : index
    %c0_22 = arith.constant 0 : index
    %27 = vector.load %arg2[%c24, %c0_22] : memref<36x32xf32, #tpu.memory_space<vmem>>, vector<4x32xf32>
    %cst_23 = arith.constant dense<0.000000e+00> : vector<200x32xf32>
    %28 = tpu.matmul %26, %27, %cst_23 {dimension_numbers = #tpu.dot_dimension_numbers<[1], [0], [0], [1], [0, 0, 1, 1], [], []>} : vector<200x4xf32>, vector<4x32xf32>, vector<200x32xf32> -> vector<200x32xf32>
    %29 = arith.addf %25, %28 : vector<200x32xf32>
    %c26 = arith.constant 26 : index
    %c0_24 = arith.constant 0 : index
    %30 = vector.load %arg0[%c26, %c0_24] : memref<232x4xf32, #tpu.memory_space<vmem>>, vector<200x4xf32>
    %c28 = arith.constant 28 : index
    %c0_25 = arith.constant 0 : index
    %31 = vector.load %arg2[%c28, %c0_25] : memref<36x32xf32, #tpu.memory_space<vmem>>, vector<4x32xf32>
    %cst_26 = arith.constant dense<0.000000e+00> : vector<200x32xf32>
    %32 = tpu.matmul %30, %31, %cst_26 {dimension_numbers = #tpu.dot_dimension_numbers<[1], [0], [0], [1], [0, 0, 1, 1], [], []>} : vector<200x4xf32>, vector<4x32xf32>, vector<200x32xf32> -> vector<200x32xf32>
    %33 = arith.addf %29, %32 : vector<200x32xf32>
    %c27 = arith.constant 27 : index
    %c0_27 = arith.constant 0 : index
    %34 = vector.load %arg0[%c27, %c0_27] : memref<232x4xf32, #tpu.memory_space<vmem>>, vector<200x4xf32>
    %c32 = arith.constant 32 : index
    %c0_28 = arith.constant 0 : index
    %35 = vector.load %arg2[%c32, %c0_28] : memref<36x32xf32, #tpu.memory_space<vmem>>, vector<4x32xf32>
    %cst_29 = arith.constant dense<0.000000e+00> : vector<200x32xf32>
    %36 = tpu.matmul %34, %35, %cst_29 {dimension_numbers = #tpu.dot_dimension_numbers<[1], [0], [0], [1], [0, 0, 1, 1], [], []>} : vector<200x4xf32>, vector<4x32xf32>, vector<200x32xf32> -> vector<200x32xf32>
    %37 = arith.addf %33, %36 : vector<200x32xf32>
    %c0_30 = arith.constant 0 : index
    %c0_31 = arith.constant 0 : index
    %38 = vector.load %arg3[%c0_30, %c0_31] : memref<1x32xf32, #tpu.memory_space<vmem>>, vector<1x32xf32>
    %39 = vector.broadcast %38 : vector<1x32xf32> to vector<200x32xf32>
    %40 = arith.addf %37, %39 : vector<200x32xf32>
    %cst_32 = arith.constant 0.000000e+00 : f32
    %41 = vector.broadcast %cst_32 : f32 to vector<200x32xf32>
    %42 = arith.maximumf %40, %41 : vector<200x32xf32>
    %cst_33 = arith.constant 0.000000e+00 : f32
    %43 = vector.broadcast %cst_33 : f32 to vector<232x32xf32>
    %c0_34 = arith.constant 0 : index
    %c0_35 = arith.constant 0 : index
    %44 = vector.load %arg11[%c0_34, %c0_35] : memref<232x32xf32, #tpu.memory_space<vmem>>, vector<232x32xf32>
    tpu.vector_store %arg11[%c0_34, %c0_35], %43 {strides = array<i32>} : memref<232x32xf32, #tpu.memory_space<vmem>>, vector<232x32xf32>,
    %45 = vector.broadcast %0 : vector<200x1xf32> to vector<200x32xf32>
    %46 = arith.mulf %42, %45 : vector<200x32xf32>
    %c16_36 = arith.constant 16 : index
    %c0_37 = arith.constant 0 : index
    %47 = vector.load %arg11[%c16_36, %c0_37] : memref<232x32xf32, #tpu.memory_space<vmem>>, vector<200x32xf32>
    tpu.vector_store %arg11[%c16_36, %c0_37], %46 {strides = array<i32>} : memref<232x32xf32, #tpu.memory_space<vmem>>, vector<200x32xf32>,
    %cst_38 = arith.constant 0.000000e+00 : f32
    %48 = vector.broadcast %cst_38 : f32 to vector<200x64xf32>
    %c5_39 = arith.constant 5 : index
    %c0_40 = arith.constant 0 : index
    %49 = vector.load %arg11[%c5_39, %c0_40] : memref<232x32xf32, #tpu.memory_space<vmem>>, vector<200x32xf32>
    %c0_41 = arith.constant 0 : index
    %c0_42 = arith.constant 0 : index
    %50 = vector.load %arg4[%c0_41, %c0_42] : memref<288x64xf32, #tpu.memory_space<vmem>>, vector<32x64xf32>
    %cst_43 = arith.constant dense<0.000000e+00> : vector<200x64xf32>
    %51 = tpu.matmul %49, %50, %cst_43 {dimension_numbers = #tpu.dot_dimension_numbers<[1], [0], [0], [1], [0, 0, 1, 1], [], []>} : vector<200x32xf32>, vector<32x64xf32>, vector<200x64xf32> -> vector<200x64xf32>
    %52 = arith.addf %48, %51 : vector<200x64xf32>
    %c6_44 = arith.constant 6 : index
    %c0_45 = arith.constant 0 : index
    %53 = vector.load %arg11[%c6_44, %c0_45] : memref<232x32xf32, #tpu.memory_space<vmem>>, vector<200x32xf32>
    %c32_46 = arith.constant 32 : index
    %c0_47 = arith.constant 0 : index
    %54 = vector.load %arg4[%c32_46, %c0_47] : memref<288x64xf32, #tpu.memory_space<vmem>>, vector<32x64xf32>
    %cst_48 = arith.constant dense<0.000000e+00> : vector<200x64xf32>
    %55 = tpu.matmul %53, %54, %cst_48 {dimension_numbers = #tpu.dot_dimension_numbers<[1], [0], [0], [1], [0, 0, 1, 1], [], []>} : vector<200x32xf32>, vector<32x64xf32>, vector<200x64xf32> -> vector<200x64xf32>
    %56 = arith.addf %52, %55 : vector<200x64xf32>
    %c7_49 = arith.constant 7 : index
    %c0_50 = arith.constant 0 : index
    %57 = vector.load %arg11[%c7_49, %c0_50] : memref<232x32xf32, #tpu.memory_space<vmem>>, vector<200x32xf32>
    %c64 = arith.constant 64 : index
    %c0_51 = arith.constant 0 : index
    %58 = vector.load %arg4[%c64, %c0_51] : memref<288x64xf32, #tpu.memory_space<vmem>>, vector<32x64xf32>
    %cst_52 = arith.constant dense<0.000000e+00> : vector<200x64xf32>
    %59 = tpu.matmul %57, %58, %cst_52 {dimension_numbers = #tpu.dot_dimension_numbers<[1], [0], [0], [1], [0, 0, 1, 1], [], []>} : vector<200x32xf32>, vector<32x64xf32>, vector<200x64xf32> -> vector<200x64xf32>
    %60 = arith.addf %56, %59 : vector<200x64xf32>
    %c15_53 = arith.constant 15 : index
    %c0_54 = arith.constant 0 : index
    %61 = vector.load %arg11[%c15_53, %c0_54] : memref<232x32xf32, #tpu.memory_space<vmem>>, vector<200x32xf32>
    %c96 = arith.constant 96 : index
    %c0_55 = arith.constant 0 : index
    %62 = vector.load %arg4[%c96, %c0_55] : memref<288x64xf32, #tpu.memory_space<vmem>>, vector<32x64xf32>
    %cst_56 = arith.constant dense<0.000000e+00> : vector<200x64xf32>
    %63 = tpu.matmul %61, %62, %cst_56 {dimension_numbers = #tpu.dot_dimension_numbers<[1], [0], [0], [1], [0, 0, 1, 1], [], []>} : vector<200x32xf32>, vector<32x64xf32>, vector<200x64xf32> -> vector<200x64xf32>
    %64 = arith.addf %60, %63 : vector<200x64xf32>
    %c16_57 = arith.constant 16 : index
    %c0_58 = arith.constant 0 : index
    %65 = vector.load %arg11[%c16_57, %c0_58] : memref<232x32xf32, #tpu.memory_space<vmem>>, vector<200x32xf32>
    %c128 = arith.constant 128 : index
    %c0_59 = arith.constant 0 : index
    %66 = vector.load %arg4[%c128, %c0_59] : memref<288x64xf32, #tpu.memory_space<vmem>>, vector<32x64xf32>
    %cst_60 = arith.constant dense<0.000000e+00> : vector<200x64xf32>
    %67 = tpu.matmul %65, %66, %cst_60 {dimension_numbers = #tpu.dot_dimension_numbers<[1], [0], [0], [1], [0, 0, 1, 1], [], []>} : vector<200x32xf32>, vector<32x64xf32>, vector<200x64xf32> -> vector<200x64xf32>
    %68 = arith.addf %64, %67 : vector<200x64xf32>
    %c17_61 = arith.constant 17 : index
    %c0_62 = arith.constant 0 : index
    %69 = vector.load %arg11[%c17_61, %c0_62] : memref<232x32xf32, #tpu.memory_space<vmem>>, vector<200x32xf32>
    %c160 = arith.constant 160 : index
    %c0_63 = arith.constant 0 : index
    %70 = vector.load %arg4[%c160, %c0_63] : memref<288x64xf32, #tpu.memory_space<vmem>>, vector<32x64xf32>
    %cst_64 = arith.constant dense<0.000000e+00> : vector<200x64xf32>
    %71 = tpu.matmul %69, %70, %cst_64 {dimension_numbers = #tpu.dot_dimension_numbers<[1], [0], [0], [1], [0, 0, 1, 1], [], []>} : vector<200x32xf32>, vector<32x64xf32>, vector<200x64xf32> -> vector<200x64xf32>
    %72 = arith.addf %68, %71 : vector<200x64xf32>
    %c25_65 = arith.constant 25 : index
    %c0_66 = arith.constant 0 : index
    %73 = vector.load %arg11[%c25_65, %c0_66] : memref<232x32xf32, #tpu.memory_space<vmem>>, vector<200x32xf32>
    %c192 = arith.constant 192 : index
    %c0_67 = arith.constant 0 : index
    %74 = vector.load %arg4[%c192, %c0_67] : memref<288x64xf32, #tpu.memory_space<vmem>>, vector<32x64xf32>
    %cst_68 = arith.constant dense<0.000000e+00> : vector<200x64xf32>
    %75 = tpu.matmul %73, %74, %cst_68 {dimension_numbers = #tpu.dot_dimension_numbers<[1], [0], [0], [1], [0, 0, 1, 1], [], []>} : vector<200x32xf32>, vector<32x64xf32>, vector<200x64xf32> -> vector<200x64xf32>
    %76 = arith.addf %72, %75 : vector<200x64xf32>
    %c26_69 = arith.constant 26 : index
    %c0_70 = arith.constant 0 : index
    %77 = vector.load %arg11[%c26_69, %c0_70] : memref<232x32xf32, #tpu.memory_space<vmem>>, vector<200x32xf32>
    %c224 = arith.constant 224 : index
    %c0_71 = arith.constant 0 : index
    %78 = vector.load %arg4[%c224, %c0_71] : memref<288x64xf32, #tpu.memory_space<vmem>>, vector<32x64xf32>
    %cst_72 = arith.constant dense<0.000000e+00> : vector<200x64xf32>
    %79 = tpu.matmul %77, %78, %cst_72 {dimension_numbers = #tpu.dot_dimension_numbers<[1], [0], [0], [1], [0, 0, 1, 1], [], []>} : vector<200x32xf32>, vector<32x64xf32>, vector<200x64xf32> -> vector<200x64xf32>
    %80 = arith.addf %76, %79 : vector<200x64xf32>
    %c27_73 = arith.constant 27 : index
    %c0_74 = arith.constant 0 : index
    %81 = vector.load %arg11[%c27_73, %c0_74] : memref<232x32xf32, #tpu.memory_space<vmem>>, vector<200x32xf32>
    %c256 = arith.constant 256 : index
    %c0_75 = arith.constant 0 : index
    %82 = vector.load %arg4[%c256, %c0_75] : memref<288x64xf32, #tpu.memory_space<vmem>>, vector<32x64xf32>
    %cst_76 = arith.constant dense<0.000000e+00> : vector<200x64xf32>
    %83 = tpu.matmul %81, %82, %cst_76 {dimension_numbers = #tpu.dot_dimension_numbers<[1], [0], [0], [1], [0, 0, 1, 1], [], []>} : vector<200x32xf32>, vector<32x64xf32>, vector<200x64xf32> -> vector<200x64xf32>
    %84 = arith.addf %80, %83 : vector<200x64xf32>
    %c0_77 = arith.constant 0 : index
    %c0_78 = arith.constant 0 : index
    %85 = vector.load %arg5[%c0_77, %c0_78] : memref<1x64xf32, #tpu.memory_space<vmem>>, vector<1x64xf32>
    %86 = vector.broadcast %85 : vector<1x64xf32> to vector<200x64xf32>
    %87 = arith.addf %84, %86 : vector<200x64xf32>
    %cst_79 = arith.constant 0.000000e+00 : f32
    %88 = vector.broadcast %cst_79 : f32 to vector<200x64xf32>
    %89 = arith.maximumf %87, %88 : vector<200x64xf32>
    %cst_80 = arith.constant 0.000000e+00 : f32
    %90 = vector.broadcast %cst_80 : f32 to vector<232x64xf32>
    %c0_81 = arith.constant 0 : index
    %c0_82 = arith.constant 0 : index
    %91 = vector.load %arg12[%c0_81, %c0_82] : memref<232x64xf32, #tpu.memory_space<vmem>>, vector<232x64xf32>
    tpu.vector_store %arg12[%c0_81, %c0_82], %90 {strides = array<i32>} : memref<232x64xf32, #tpu.memory_space<vmem>>, vector<232x64xf32>,
    %92 = vector.broadcast %0 : vector<200x1xf32> to vector<200x64xf32>
    %93 = arith.mulf %89, %92 : vector<200x64xf32>
    %c16_83 = arith.constant 16 : index
    %c0_84 = arith.constant 0 : index
    %94 = vector.load %arg12[%c16_83, %c0_84] : memref<232x64xf32, #tpu.memory_space<vmem>>, vector<200x64xf32>
    tpu.vector_store %arg12[%c16_83, %c0_84], %93 {strides = array<i32>} : memref<232x64xf32, #tpu.memory_space<vmem>>, vector<200x64xf32>,
    %cst_85 = arith.constant 0.000000e+00 : f32
    %95 = vector.broadcast %cst_85 : f32 to vector<200x128xf32>
    %c5_86 = arith.constant 5 : index
    %c0_87 = arith.constant 0 : index
    %96 = vector.load %arg12[%c5_86, %c0_87] : memref<232x64xf32, #tpu.memory_space<vmem>>, vector<200x64xf32>
    %c0_88 = arith.constant 0 : index
    %c0_89 = arith.constant 0 : index
    %97 = vector.load %arg6[%c0_88, %c0_89] : memref<576x128xf32, #tpu.memory_space<vmem>>, vector<64x128xf32>
    %cst_90 = arith.constant dense<0.000000e+00> : vector<200x128xf32>
    %98 = tpu.matmul %96, %97, %cst_90 {dimension_numbers = #tpu.dot_dimension_numbers<[1], [0], [0], [1], [0, 0, 1, 1], [], []>} : vector<200x64xf32>, vector<64x128xf32>, vector<200x128xf32> -> vector<200x128xf32>
    %99 = arith.addf %95, %98 : vector<200x128xf32>
    %c6_91 = arith.constant 6 : index
    %c0_92 = arith.constant 0 : index
    %100 = vector.load %arg12[%c6_91, %c0_92] : memref<232x64xf32, #tpu.memory_space<vmem>>, vector<200x64xf32>
    %c64_93 = arith.constant 64 : index
    %c0_94 = arith.constant 0 : index
    %101 = vector.load %arg6[%c64_93, %c0_94] : memref<576x128xf32, #tpu.memory_space<vmem>>, vector<64x128xf32>
    %cst_95 = arith.constant dense<0.000000e+00> : vector<200x128xf32>
    %102 = tpu.matmul %100, %101, %cst_95 {dimension_numbers = #tpu.dot_dimension_numbers<[1], [0], [0], [1], [0, 0, 1, 1], [], []>} : vector<200x64xf32>, vector<64x128xf32>, vector<200x128xf32> -> vector<200x128xf32>
    %103 = arith.addf %99, %102 : vector<200x128xf32>
    %c7_96 = arith.constant 7 : index
    %c0_97 = arith.constant 0 : index
    %104 = vector.load %arg12[%c7_96, %c0_97] : memref<232x64xf32, #tpu.memory_space<vmem>>, vector<200x64xf32>
    %c128_98 = arith.constant 128 : index
    %c0_99 = arith.constant 0 : index
    %105 = vector.load %arg6[%c128_98, %c0_99] : memref<576x128xf32, #tpu.memory_space<vmem>>, vector<64x128xf32>
    %cst_100 = arith.constant dense<0.000000e+00> : vector<200x128xf32>
    %106 = tpu.matmul %104, %105, %cst_100 {dimension_numbers = #tpu.dot_dimension_numbers<[1], [0], [0], [1], [0, 0, 1, 1], [], []>} : vector<200x64xf32>, vector<64x128xf32>, vector<200x128xf32> -> vector<200x128xf32>
    %107 = arith.addf %103, %106 : vector<200x128xf32>
    %c15_101 = arith.constant 15 : index
    %c0_102 = arith.constant 0 : index
    %108 = vector.load %arg12[%c15_101, %c0_102] : memref<232x64xf32, #tpu.memory_space<vmem>>, vector<200x64xf32>
    %c192_103 = arith.constant 192 : index
    %c0_104 = arith.constant 0 : index
    %109 = vector.load %arg6[%c192_103, %c0_104] : memref<576x128xf32, #tpu.memory_space<vmem>>, vector<64x128xf32>
    %cst_105 = arith.constant dense<0.000000e+00> : vector<200x128xf32>
    %110 = tpu.matmul %108, %109, %cst_105 {dimension_numbers = #tpu.dot_dimension_numbers<[1], [0], [0], [1], [0, 0, 1, 1], [], []>} : vector<200x64xf32>, vector<64x128xf32>, vector<200x128xf32> -> vector<200x128xf32>
    %111 = arith.addf %107, %110 : vector<200x128xf32>
    %c16_106 = arith.constant 16 : index
    %c0_107 = arith.constant 0 : index
    %112 = vector.load %arg12[%c16_106, %c0_107] : memref<232x64xf32, #tpu.memory_space<vmem>>, vector<200x64xf32>
    %c256_108 = arith.constant 256 : index
    %c0_109 = arith.constant 0 : index
    %113 = vector.load %arg6[%c256_108, %c0_109] : memref<576x128xf32, #tpu.memory_space<vmem>>, vector<64x128xf32>
    %cst_110 = arith.constant dense<0.000000e+00> : vector<200x128xf32>
    %114 = tpu.matmul %112, %113, %cst_110 {dimension_numbers = #tpu.dot_dimension_numbers<[1], [0], [0], [1], [0, 0, 1, 1], [], []>} : vector<200x64xf32>, vector<64x128xf32>, vector<200x128xf32> -> vector<200x128xf32>
    %115 = arith.addf %111, %114 : vector<200x128xf32>
    %c17_111 = arith.constant 17 : index
    %c0_112 = arith.constant 0 : index
    %116 = vector.load %arg12[%c17_111, %c0_112] : memref<232x64xf32, #tpu.memory_space<vmem>>, vector<200x64xf32>
    %c320 = arith.constant 320 : index
    %c0_113 = arith.constant 0 : index
    %117 = vector.load %arg6[%c320, %c0_113] : memref<576x128xf32, #tpu.memory_space<vmem>>, vector<64x128xf32>
    %cst_114 = arith.constant dense<0.000000e+00> : vector<200x128xf32>
    %118 = tpu.matmul %116, %117, %cst_114 {dimension_numbers = #tpu.dot_dimension_numbers<[1], [0], [0], [1], [0, 0, 1, 1], [], []>} : vector<200x64xf32>, vector<64x128xf32>, vector<200x128xf32> -> vector<200x128xf32>
    %119 = arith.addf %115, %118 : vector<200x128xf32>
    %c25_115 = arith.constant 25 : index
    %c0_116 = arith.constant 0 : index
    %120 = vector.load %arg12[%c25_115, %c0_116] : memref<232x64xf32, #tpu.memory_space<vmem>>, vector<200x64xf32>
    %c384 = arith.constant 384 : index
    %c0_117 = arith.constant 0 : index
    %121 = vector.load %arg6[%c384, %c0_117] : memref<576x128xf32, #tpu.memory_space<vmem>>, vector<64x128xf32>
    %cst_118 = arith.constant dense<0.000000e+00> : vector<200x128xf32>
    %122 = tpu.matmul %120, %121, %cst_118 {dimension_numbers = #tpu.dot_dimension_numbers<[1], [0], [0], [1], [0, 0, 1, 1], [], []>} : vector<200x64xf32>, vector<64x128xf32>, vector<200x128xf32> -> vector<200x128xf32>
    %123 = arith.addf %119, %122 : vector<200x128xf32>
    %c26_119 = arith.constant 26 : index
    %c0_120 = arith.constant 0 : index
    %124 = vector.load %arg12[%c26_119, %c0_120] : memref<232x64xf32, #tpu.memory_space<vmem>>, vector<200x64xf32>
    %c448 = arith.constant 448 : index
    %c0_121 = arith.constant 0 : index
    %125 = vector.load %arg6[%c448, %c0_121] : memref<576x128xf32, #tpu.memory_space<vmem>>, vector<64x128xf32>
    %cst_122 = arith.constant dense<0.000000e+00> : vector<200x128xf32>
    %126 = tpu.matmul %124, %125, %cst_122 {dimension_numbers = #tpu.dot_dimension_numbers<[1], [0], [0], [1], [0, 0, 1, 1], [], []>} : vector<200x64xf32>, vector<64x128xf32>, vector<200x128xf32> -> vector<200x128xf32>
    %127 = arith.addf %123, %126 : vector<200x128xf32>
    %c27_123 = arith.constant 27 : index
    %c0_124 = arith.constant 0 : index
    %128 = vector.load %arg12[%c27_123, %c0_124] : memref<232x64xf32, #tpu.memory_space<vmem>>, vector<200x64xf32>
    %c512 = arith.constant 512 : index
    %c0_125 = arith.constant 0 : index
    %129 = vector.load %arg6[%c512, %c0_125] : memref<576x128xf32, #tpu.memory_space<vmem>>, vector<64x128xf32>
    %cst_126 = arith.constant dense<0.000000e+00> : vector<200x128xf32>
    %130 = tpu.matmul %128, %129, %cst_126 {dimension_numbers = #tpu.dot_dimension_numbers<[1], [0], [0], [1], [0, 0, 1, 1], [], []>} : vector<200x64xf32>, vector<64x128xf32>, vector<200x128xf32> -> vector<200x128xf32>
    %131 = arith.addf %127, %130 : vector<200x128xf32>
    %c0_127 = arith.constant 0 : index
    %c0_128 = arith.constant 0 : index
    %132 = vector.load %arg7[%c0_127, %c0_128] : memref<1x128xf32, #tpu.memory_space<vmem>>, vector<1x128xf32>
    %133 = vector.broadcast %132 : vector<1x128xf32> to vector<200x128xf32>
    %134 = arith.addf %131, %133 : vector<200x128xf32>
    %cst_129 = arith.constant 0.000000e+00 : f32
    %135 = vector.broadcast %cst_129 : f32 to vector<200x128xf32>
    %136 = arith.maximumf %134, %135 : vector<200x128xf32>
    %c0_130 = arith.constant 0 : index
    %c0_131 = arith.constant 0 : index
    %137 = vector.load %arg8[%c0_130, %c0_131] : memref<128x6xf32, #tpu.memory_space<vmem>>, vector<128x6xf32>
    %cst_132 = arith.constant dense<0.000000e+00> : vector<200x6xf32>
    %138 = tpu.matmul %136, %137, %cst_132 {dimension_numbers = #tpu.dot_dimension_numbers<[1], [0], [0], [1], [0, 0, 1, 1], [], []>} : vector<200x128xf32>, vector<128x6xf32>, vector<200x6xf32> -> vector<200x6xf32>
    %c0_133 = arith.constant 0 : index
    %c0_134 = arith.constant 0 : index
    %139 = vector.load %arg9[%c0_133, %c0_134] : memref<1x6xf32, #tpu.memory_space<vmem>>, vector<1x6xf32>
    %140 = vector.broadcast %139 : vector<1x6xf32> to vector<200x6xf32>
    %141 = arith.addf %138, %140 : vector<200x6xf32>
    %cst_135 = arith.constant 0.000000e+00 : f32
    %142 = vector.broadcast %cst_135 : f32 to vector<200x6xf32>
    %143 = arith.maximumf %141, %142 : vector<200x6xf32>
    %c0_136 = arith.constant 0 : index
    %c0_137 = arith.constant 0 : index
    %144 = vector.load %arg10[%c0_136, %c0_137] : memref<200x6xf32, #tpu.memory_space<vmem>>, vector<200x6xf32>
    tpu.vector_store %arg10[%c0_136, %c0_137], %143 {strides = array<i32>} : memref<200x6xf32, #tpu.memory_space<vmem>>, vector<200x6xf32>,
    return
  }
}

module attributes {stable_mosaic.version = 11 : i64} {
  func.func @_heads_kernel(%arg0: memref<2x384xf32, #tpu.memory_space<vmem>>, %arg1: memref<384x128xf32, #tpu.memory_space<vmem>>, %arg2: memref<1x128xf32, #tpu.memory_space<vmem>>, %arg3: memref<2x128xf32, #tpu.memory_space<vmem>>) attributes {dimension_semantics = [], scalar_prefetch = 0 : i64, scratch_operands = 0 : i64, tpu.core_type = #tpu.core_type<tc>} {
    %c0 = arith.constant 0 : index
    %c0_0 = arith.constant 0 : index
    %0 = vector.load %arg0[%c0, %c0_0] : memref<2x384xf32, #tpu.memory_space<vmem>>, vector<2x384xf32>
    %c0_1 = arith.constant 0 : index
    %c0_2 = arith.constant 0 : index
    %1 = vector.load %arg1[%c0_1, %c0_2] : memref<384x128xf32, #tpu.memory_space<vmem>>, vector<384x128xf32>
    %cst = arith.constant dense<0.000000e+00> : vector<2x128xf32>
    %2 = tpu.matmul %0, %1, %cst {dimension_numbers = #tpu.dot_dimension_numbers<[1], [0], [0], [1], [0, 0, 1, 1], [], []>} : vector<2x384xf32>, vector<384x128xf32>, vector<2x128xf32> -> vector<2x128xf32>
    %c0_3 = arith.constant 0 : index
    %c0_4 = arith.constant 0 : index
    %3 = vector.load %arg2[%c0_3, %c0_4] : memref<1x128xf32, #tpu.memory_space<vmem>>, vector<1x128xf32>
    %4 = vector.broadcast %3 : vector<1x128xf32> to vector<2x128xf32>
    %5 = arith.addf %2, %4 : vector<2x128xf32>
    %cst_5 = arith.constant dense<0xFF800000> : vector<128xf32>
    %6 = vector.multi_reduction <maximumf>, %5, %cst_5 [0] : vector<2x128xf32> to vector<128xf32>
    %7 = vector.shape_cast %6 : vector<128xf32> to vector<1x128xf32>
    %8 = vector.broadcast %7 : vector<1x128xf32> to vector<2x128xf32>
    %9 = arith.subf %5, %8 : vector<2x128xf32>
    %10 = math.exp %9 : vector<2x128xf32>
    %cst_6 = arith.constant dense<0.000000e+00> : vector<128xf32>
    %11 = vector.multi_reduction <add>, %10, %cst_6 [0] : vector<2x128xf32> to vector<128xf32>
    %12 = vector.shape_cast %11 : vector<128xf32> to vector<1x128xf32>
    %13 = vector.broadcast %12 : vector<1x128xf32> to vector<2x128xf32>
    %14 = arith.divf %10, %13 : vector<2x128xf32>
    %15 = math.tanh %5 : vector<2x128xf32>
    %16 = tpu.iota {dimensions = array<i32: 1>} : vector<2x128xi32>
    %c64_i32 = arith.constant 64 : i32
    %17 = vector.broadcast %c64_i32 : i32 to vector<2x128xi32>
    %18 = arith.cmpi slt, %16, %17 : vector<2x128xi32>
    %c64_i32_7 = arith.constant 64 : i32
    %19 = vector.broadcast %c64_i32_7 : i32 to vector<2x128xi32>
    %20 = arith.cmpi eq, %16, %19 : vector<2x128xi32>
    %cst_8 = arith.constant 0.000000e+00 : f32
    %21 = vector.broadcast %cst_8 : f32 to vector<2x128xf32>
    %22 = arith.select %20, %15, %21 : vector<2x128xi1>, vector<2x128xf32>
    %23 = arith.select %18, %14, %22 : vector<2x128xi1>, vector<2x128xf32>
    %c0_9 = arith.constant 0 : index
    %c0_10 = arith.constant 0 : index
    %24 = vector.load %arg3[%c0_9, %c0_10] : memref<2x128xf32, #tpu.memory_space<vmem>>, vector<2x128xf32>
    tpu.vector_store %arg3[%c0_9, %c0_10], %23 {strides = array<i32>} : memref<2x128xf32, #tpu.memory_space<vmem>>, vector<2x128xf32>,
    return
  }
}

</mosaic_0001>

<llo_original>
// kernel: net_forward.3
$region0: #{net_forward.3}
  #allocation0 [shape = 'u32[]', space=smem, size = 0x4, offset = 0x4, fixed_abs, tag = 'smem constant byte address 0x4 - core index']
  #allocation1 [shape = 'u32[144,128]{1,0:T(1,128)}', space=vmem, size = 0x12000, scoped, tag = 'internal scratch']
  %s0 = inlined_call_operand.vmem [shape: f32[2,384], index: 0, kind: input, shape index: {}]
  %s1 = inlined_call_operand.vmem [shape: f32[384,128], index: 1, kind: input, shape index: {}]
  %s2 = inlined_call_operand.vmem [shape: f32[1,128], index: 2, kind: input, shape index: {}]
  %s3 = inlined_call_operand.vmem [shape: f32[2,128], index: 3, kind: output, shape index: {}]
  %s4 = sld [smem:[#allocation0]]
  $region22: #{net_forward.3} parent=0
    _
  %s6 = ssub.s32 1, %s4
  %s7 = scalar_select 0, %s6, %s4
  // Predicated region
  $region2: #{net_forward.3} parent=0 // pred_check
    _
  $region3: #{net_forward.3} parent=0 // pred_check_branch
    %9 = sbr.rel (0) target = $region5
  $region4: #{net_forward.3} parent=0 // pred_region
    _
  $region5: #{net_forward.3} parent=0 // pred_fallthru
    _
  // Predicated region
  $region6: #{net_forward.3} parent=0 // pred_check
    _
  $region7: #{net_forward.3} parent=0 // pred_check_branch
    %11 = sbr.rel (0) target = $region9
  $region8: #{net_forward.3} parent=0 // pred_region
    _
  $region9: #{net_forward.3} parent=0 // pred_fallthru
    _
  // Predicated region
  $region10: #{net_forward.3} parent=0 // pred_check
    _
  $region11: #{net_forward.3} parent=0 // pred_check_branch
    %13 = sbr.rel (0) target = $region13
  $region12: #{net_forward.3} parent=0 // pred_region
    _
  $region13: #{net_forward.3} parent=0 // pred_fallthru
    _
  %v14 = vld [vmem:[%s0] sm:$0x3f]
  %v15 = vld [vmem:[%s1] sm:$0xff]
  %v16 = vld [vmem:[%s1 + $0x8] sm:$0xff]
  %v17 = vld [vmem:[%s1 + $0x10] sm:$0xff]
  %v18 = vld [vmem:[%s1 + $0x18] sm:$0xff]
  %v19 = vld [vmem:[%s1 + $0x20] sm:$0xff]
  %v20 = vld [vmem:[%s1 + $0x28] sm:$0xff]
  %v21 = vld [vmem:[%s1 + $0x30] sm:$0xff]
  %v22 = vld [vmem:[%s1 + $0x38] sm:$0xff]
  %v23 = vld [vmem:[%s1 + $0x40] sm:$0xff]
  %v24 = vld [vmem:[%s1 + $0x48] sm:$0xff]
  %v25 = vld [vmem:[%s1 + $0x50] sm:$0xff]
  %v26 = vld [vmem:[%s1 + $0x58] sm:$0xff]
  %v27 = vld [vmem:[%s1 + $0x60] sm:$0xff]
  %v28 = vld [vmem:[%s1 + $0x68] sm:$0xff]
  %v29 = vld [vmem:[%s1 + $0x70] sm:$0xff]
  %v30 = vld [vmem:[%s1 + $0x78] sm:$0xff]
  %v31 = vld [vmem:[%s1 + $0x80] sm:$0xff]
  %v32 = vld [vmem:[%s1 + $0x88] sm:$0xff]
  %v33 = vld [vmem:[%s1 + $0x90] sm:$0xff]
  %v34 = vld [vmem:[%s1 + $0x98] sm:$0xff]
  %v35 = vld [vmem:[%s1 + $0xa0] sm:$0xff]
  %v36 = vld [vmem:[%s1 + $0xa8] sm:$0xff]
  %v37 = vld [vmem:[%s1 + $0xb0] sm:$0xff]
  %v38 = vld [vmem:[%s1 + $0xb8] sm:$0xff]
  %v39 = vld [vmem:[%s1 + $0xc0] sm:$0xff]
  %v40 = vld [vmem:[%s1 + $0xc8] sm:$0xff]
  %v41 = vld [vmem:[%s1 + $0xd0] sm:$0xff]
  %v42 = vld [vmem:[%s1 + $0xd8] sm:$0xff]
  %v43 = vld [vmem:[%s1 + $0xe0] sm:$0xff]
  %v44 = vld [vmem:[%s1 + $0xe8] sm:$0xff]
  %v45 = vld [vmem:[%s1 + $0xf0] sm:$0xff]
  %v46 = vld [vmem:[%s1 + $0xf8] sm:$0xff]
  %v47 = vld [vmem:[%s1 + $0x100] sm:$0xff]
  %v48 = vld [vmem:[%s1 + $0x108] sm:$0xff]
  %v49 = vld [vmem:[%s1 + $0x110] sm:$0xff]
  %v50 = vld [vmem:[%s1 + $0x118] sm:$0xff]
  %v51 = vld [vmem:[%s1 + $0x120] sm:$0xff]
  %v52 = vld [vmem:[%s1 + $0x128] sm:$0xff]
  %v53 = vld [vmem:[%s1 + $0x130] sm:$0xff]
  %v54 = vld [vmem:[%s1 + $0x138] sm:$0xff]
  %v55 = vld [vmem:[%s1 + $0x140] sm:$0xff]
  %v56 = vld [vmem:[%s1 + $0x148] sm:$0xff]
  %v57 = vld [vmem:[%s1 + $0x150] sm:$0xff]
  %v58 = vld [vmem:[%s1 + $0x158] sm:$0xff]
  %v59 = vld [vmem:[%s1 + $0x160] sm:$0xff]
  %v60 = vld [vmem:[%s1 + $0x168] sm:$0xff]
  %v61 = vld [vmem:[%s1 + $0x170] sm:$0xff]
  %v62 = vld [vmem:[%s1 + $0x178] sm:$0xff]
  %v63 = vld [vmem:[%s2] sm:$0x1]
  %v65 = vlaneseq
  %v66 = vshrl.u32 %v65, 7
  %v67 = vsub.s32 0, %v66
  %v68 = vrot.slane %v63, %v67
  %v71 = vcombine.high %v14, %v14
  %v73 = vunpack.c.l.s4 1983009808
  %v74 = vunpack.c.0.s8 %v73
  %v75 = vlaneseq
  %v76 = vshrl.u32 %v75, 7
  %v77 = vsub.s32 %v74, %v76
  %v78 = vrot.slane %v14, %v77
  %v80 = vunpack.c.l.s4 1983009808
  %v81 = vunpack.c.0.s8 %v80
  %v82 = vlaneseq
  %v83 = vshrl.u32 %v82, 7
  %v84 = vsub.s32 %v81, %v83
  %v85 = vrot.slane %v71, %v84
  %v86 = vcombine.high %v78, %v78
  %90 = vmatprep.subr.mxu0 0.0
  %91 = vmatpush1.msra.mxu0 %v15
  %92 = vmatprep.subr.mxu0 0.0
  %93 = vmatpush1.msra.mxu0 %v16
  %94 = vmatprep.subr.mxu0 0.0
  %95 = vmatpush1.msra.mxu0 %v17
  %96 = vmatprep.subr.mxu0 0.0
  %97 = vmatpush1.msra.mxu0 %v18
  %98 = vmatprep.subr.mxu0 0.0
  %99 = vmatpush1.msra.mxu0 %v19
  %100 = vmatprep.subr.mxu0 0.0
  %101 = vmatpush1.msra.mxu0 %v20
  %102 = vmatprep.subr.mxu0 0.0
  %103 = vmatpush1.msra.mxu0 %v21
  %104 = vmatprep.subr.mxu0 0.0
  %105 = vmatpush1.msra.mxu0 %v22
  %106 = vmatprep.subr.mxu0 0.0
  %107 = vmatpush1.msra.mxu0 %v23
  %108 = vmatprep.subr.mxu0 0.0
  %109 = vmatpush1.msra.mxu0 %v24
  %110 = vmatprep.subr.mxu0 0.0
  %111 = vmatpush1.msra.mxu0 %v25
  %112 = vmatprep.subr.mxu0 0.0
  %113 = vmatpush1.msra.mxu0 %v26
  %114 = vmatprep.subr.mxu0 0.0
  %115 = vmatpush1.msra.mxu0 %v27
  %116 = vmatprep.subr.mxu0 0.0
  %117 = vmatpush1.msra.mxu0 %v28
  %118 = vmatprep.subr.mxu0 0.0
  %119 = vmatpush1.msra.mxu0 %v29
  %120 = vmatprep.subr.mxu0 0.0
  %121 = vmatpush1.msra.mxu0 %v30
  %122 = vmatprep.subr.mxu0 0.0
  %123 = vmatpush1.msra.mxu0 %v31
  %124 = vmatprep.subr.mxu0 0.0
  %125 = vmatpush1.msra.mxu0 %v32
  %126 = vmatprep.subr.mxu0 0.0
  %127 = vmatpush1.msra.mxu0 %v33
  %128 = vmatprep.subr.mxu0 0.0
  %129 = vmatpush1.msra.mxu0 %v34
  %130 = vmatprep.subr.mxu0 0.0
  %131 = vmatpush1.msra.mxu0 %v35
  %132 = vmatprep.subr.mxu0 0.0
  %133 = vmatpush1.msra.mxu0 %v36
  %134 = vmatprep.subr.mxu0 0.0
  %135 = vmatpush1.msra.mxu0 %v37
  %136 = vmatprep.subr.mxu0 0.0
  %137 = vmatpush1.msra.mxu0 %v38
  %138 = vmatprep.subr.mxu0 0.0
  %139 = vmatpush1.msra.mxu0 %v39
  %140 = vmatprep.subr.mxu0 0.0
  %141 = vmatpush1.msra.mxu0 %v40
  %142 = vmatprep.subr.mxu0 0.0
  %143 = vmatpush1.msra.mxu0 %v41
  %144 = vmatprep.subr.mxu0 0.0
  %145 = vmatpush1.msra.mxu0 %v42
  %146 = vmatprep.subr.mxu0 0.0
  %147 = vmatpush1.msra.mxu0 %v43
  %148 = vmatprep.subr.mxu0 0.0
  %149 = vmatpush1.msra.mxu0 %v44
  %150 = vmatprep.subr.mxu0 0.0
  %151 = vmatpush1.msra.mxu0 %v45
  %152 = vmatprep.subr.mxu0 0.0
  %153 = vmatpush1.msra.mxu0 %v46
  %154 = vmatprep.mubr.f32.mxu0 %v86
  %155 = vmatmul.mubr.f32.gmra.mrb[0].mxu0 %v78
  %v156 = vpop.f32.mrb[0].mxu0
  %v157 = vadd.f32 %v68, %v156
  %v158 = vpop.f32.mrb[0].mxu0
  %159 = vdwg.mxu0
  %160 = vmatprep.subr.mxu0 0.0
  %161 = vmatpush1.msra.mxu0 %v47
  %162 = vmatprep.subr.mxu0 0.0
  %163 = vmatpush1.msra.mxu0 %v48
  %164 = vmatprep.subr.mxu0 0.0
  %165 = vmatpush1.msra.mxu0 %v49
  %166 = vmatprep.subr.mxu0 0.0
  %167 = vmatpush1.msra.mxu0 %v50
  %168 = vmatprep.subr.mxu0 0.0
  %169 = vmatpush1.msra.mxu0 %v51
  %170 = vmatprep.subr.mxu0 0.0
  %171 = vmatpush1.msra.mxu0 %v52
  %172 = vmatprep.subr.mxu0 0.0
  %173 = vmatpush1.msra.mxu0 %v53
  %174 = vmatprep.subr.mxu0 0.0
  %175 = vmatpush1.msra.mxu0 %v54
  %176 = vmatprep.subr.mxu0 0.0
  %177 = vmatpush1.msra.mxu0 %v55
  %178 = vmatprep.subr.mxu0 0.0
  %179 = vmatpush1.msra.mxu0 %v56
  %180 = vmatprep.subr.mxu0 0.0
  %181 = vmatpush1.msra.mxu0 %v57
  %182 = vmatprep.subr.mxu0 0.0
  %183 = vmatpush1.msra.mxu0 %v58
  %184 = vmatprep.subr.mxu0 0.0
  %185 = vmatpush1.msra.mxu0 %v59
  %186 = vmatprep.subr.mxu0 0.0
  %187 = vmatpush1.msra.mxu0 %v60
  %188 = vmatprep.subr.mxu0 0.0
  %189 = vmatpush1.msra.mxu0 %v61
  %190 = vmatprep.subr.mxu0 0.0
  %191 = vmatpush1.msra.mxu0 %v62
  %192 = vmatprep.subr.mxu0 0.0
  %193 = vmatpush1.msra.mxu0 0.0
  %194 = vmatprep.subr.mxu0 0.0
  %195 = vmatpush1.msra.mxu0 0.0
  %196 = vmatprep.subr.mxu0 0.0
  %197 = vmatpush1.msra.mxu0 0.0
  %198 = vmatprep.subr.mxu0 0.0
  %199 = vmatpush1.msra.mxu0 0.0
  %200 = vmatprep.subr.mxu0 0.0
  %201 = vmatpush1.msra.mxu0 0.0
  %202 = vmatprep.subr.mxu0 0.0
  %203 = vmatpush1.msra.mxu0 0.0
  %204 = vmatprep.subr.mxu0 0.0
  %205 = vmatpush1.msra.mxu0 0.0
  %206 = vmatprep.subr.mxu0 0.0
  %207 = vmatpush1.msra.mxu0 0.0
  %208 = vmatprep.subr.mxu0 0.0
  %209 = vmatpush1.msra.mxu0 0.0
  %210 = vmatprep.subr.mxu0 0.0
  %211 = vmatpush1.msra.mxu0 0.0
  %212 = vmatprep.subr.mxu0 0.0
  %213 = vmatpush1.msra.mxu0 0.0
  %214 = vmatprep.subr.mxu0 0.0
  %215 = vmatpush1.msra.mxu0 0.0
  %216 = vmatprep.subr.mxu0 0.0
  %217 = vmatpush1.msra.mxu0 0.0
  %218 = vmatprep.subr.mxu0 0.0
  %219 = vmatpush1.msra.mxu0 0.0
  %220 = vmatprep.subr.mxu0 0.0
  %221 = vmatpush1.msra.mxu0 0.0
  %222 = vmatprep.subr.mxu0 0.0
  %223 = vmatpush1.msra.mxu0 0.0
  %224 = vmatprep.mubr.f32.mxu0 0.0
  %225 = vmatmul.mubr.f32.gmra.mrb[0].mxu0 %v85
  %v226 = vpop.f32.mrb[0].mxu0
  %v227 = vadd.f32 %v157, %v226
  %v228 = vpop.f32.mrb[0].mxu0
  %229 = vdwg.mxu0
  %vm230 = vcmask 1041408
  %v231 = vsel %vm230, %v227, -inf
  %v232 = vrot.slane %v231, 4
  %v233 = vmax.f32 %v231, %v232
  %v234 = vrot.slane %v233, 2
  %v235 = vmax.f32 %v233, %v234
  %v236 = vrot.slane %v235, 1
  %v237 = vmax.f32 %v235, %v236
  %v238 = vsub.f32 %v227, %v237
  %v239 = vmul.f32 %v238, 1.442695
  %v240 = vpow.pop %v239
  %v241 = vsel %vm230, %v240, 0.0
  %v242 = vrot.slane %v241, 4
  %v243 = vadd.f32 %v241, %v242
  %v244 = vrot.slane %v243, 2
  %v245 = vadd.f32 %v243, %v244
  %v246 = vrot.slane %v245, 1
  %v247 = vadd.f32 %v245, %v246
  %v248 = vrcp.pop %v247
  %v249 = vmul.f32 %v240, %v248
  %v250 = vtanh.pop %v227
  %v251 = vlaneseq
  %v252 = vand.u32 %v251, 127
  %vm253 = vcmp.lt.s32.totalorder %v252, 64
  %vm254 = vcmp.eq.s32.totalorder %v252, 64
  %v255 = vsel %vm254, %v250, 0.0
  %v256 = vsel %vm253, %v249, %v255
  %257 = vst [vmem:[%s3] sm:$0x3] %v256
  // Predicated region
  $region14: #{net_forward.3} parent=0 // pred_check
    _
  $region15: #{net_forward.3} parent=0 // pred_check_branch
    %259 = sbr.rel (0) target = $region17
  $region16: #{net_forward.3} parent=0 // pred_region
    _
  $region17: #{net_forward.3} parent=0 // pred_fallthru
    _
  // Predicated region
  $region18: #{net_forward.3} parent=0 // pred_check
    _
  $region19: #{net_forward.3} parent=0 // pred_check_branch
    %261 = sbr.rel (0) target = $region21
  $region20: #{net_forward.3} parent=0 // pred_region
    _
  $region21: #{net_forward.3} parent=0 // pred_fallthru
    _

// kernel: net_forward.2
$region0: #{net_forward.2}
  #allocation0 [shape = 'u32[]', space=smem, size = 0x4, offset = 0x4, fixed_abs, tag = 'smem constant byte address 0x4 - core index']
  #allocation1 [shape = 'u32[144,128]{1,0:T(1,128)}', space=vmem, size = 0x12000, scoped, tag = 'internal scratch']
  #allocation2 [shape = 'f32[232,32]{1,0:T(8,128)}', space=vmem, size = 0x1d000, scoped, tag = 'scratch operand']
  #allocation3 [shape = 'f32[232,64]{1,0:T(8,128)}', space=vmem, size = 0x1d000, scoped, tag = 'scratch operand']
  %s0 = inlined_call_operand.vmem [shape: f32[232,4], index: 0, kind: input, shape index: {}]
  %s1 = inlined_call_operand.vmem [shape: f32[200,1], index: 1, kind: input, shape index: {}]
  %s2 = inlined_call_operand.vmem [shape: f32[36,32], index: 2, kind: input, shape index: {}]
  %s3 = inlined_call_operand.vmem [shape: f32[1,32], index: 3, kind: input, shape index: {}]
  %s4 = inlined_call_operand.vmem [shape: f32[288,64], index: 4, kind: input, shape index: {}]
  %s5 = inlined_call_operand.vmem [shape: f32[1,64], index: 5, kind: input, shape index: {}]
  %s6 = inlined_call_operand.vmem [shape: f32[576,128], index: 6, kind: input, shape index: {}]
  %s7 = inlined_call_operand.vmem [shape: f32[1,128], index: 7, kind: input, shape index: {}]
  %s8 = inlined_call_operand.vmem [shape: f32[128,6], index: 8, kind: input, shape index: {}]
  %s9 = inlined_call_operand.vmem [shape: f32[1,6], index: 9, kind: input, shape index: {}]
  %s10 = inlined_call_operand.vmem [shape: f32[200,6], index: 10, kind: output, shape index: {}]
  %s11 = sld [smem:[#allocation0]]
  $region50: #{net_forward.2} parent=0
    _
  %s13 = ssub.s32 1, %s11
  %s14 = scalar_select 0, %s13, %s11
  // Predicated region
  $region2: #{net_forward.2} parent=0 // pred_check
    _
  $region3: #{net_forward.2} parent=0 // pred_check_branch
    %16 = sbr.rel (0) target = $region5
  $region4: #{net_forward.2} parent=0 // pred_region
    _
  $region5: #{net_forward.2} parent=0 // pred_fallthru
    _
  // Predicated region
  $region6: #{net_forward.2} parent=0 // pred_check
    _
  $region7: #{net_forward.2} parent=0 // pred_check_branch
    %18 = sbr.rel (0) target = $region9
  $region8: #{net_forward.2} parent=0 // pred_region
    _
  $region9: #{net_forward.2} parent=0 // pred_fallthru
    _
  // Predicated region
  $region10: #{net_forward.2} parent=0 // pred_check
    _
  $region11: #{net_forward.2} parent=0 // pred_check_branch
    %20 = sbr.rel (0) target = $region13
  $region12: #{net_forward.2} parent=0 // pred_region
    _
  $region13: #{net_forward.2} parent=0 // pred_fallthru
    _
  // Predicated region
  $region14: #{net_forward.2} parent=0 // pred_check
    _
  $region15: #{net_forward.2} parent=0 // pred_check_branch
    %22 = sbr.rel (0) target = $region17
  $region16: #{net_forward.2} parent=0 // pred_region
    _
  $region17: #{net_forward.2} parent=0 // pred_fallthru
    _
  // Predicated region
  $region18: #{net_forward.2} parent=0 // pred_check
    _
  $region19: #{net_forward.2} parent=0 // pred_check_branch
    %24 = sbr.rel (0) target = $region21
  $region20: #{net_forward.2} parent=0 // pred_region
    _
  $region21: #{net_forward.2} parent=0 // pred_fallthru
    _
  // Predicated region
  $region22: #{net_forward.2} parent=0 // pred_check
    _
  $region23: #{net_forward.2} parent=0 // pred_check_branch
    %26 = sbr.rel (0) target = $region25
  $region24: #{net_forward.2} parent=0 // pred_region
    _
  $region25: #{net_forward.2} parent=0 // pred_fallthru
    _
  // Predicated region
  $region26: #{net_forward.2} parent=0 // pred_check
    _
  $region27: #{net_forward.2} parent=0 // pred_check_branch
    %28 = sbr.rel (0) target = $region29
  $region28: #{net_forward.2} parent=0 // pred_region
    _
  $region29: #{net_forward.2} parent=0 // pred_fallthru
    _
  // Predicated region
  $region30: #{net_forward.2} parent=0 // pred_check
    _
  $region31: #{net_forward.2} parent=0 // pred_check_branch
    %30 = sbr.rel (0) target = $region33
  $region32: #{net_forward.2} parent=0 // pred_region
    _
  $region33: #{net_forward.2} parent=0 // pred_fallthru
    _
  // Predicated region
  $region34: #{net_forward.2} parent=0 // pred_check
    _
  $region35: #{net_forward.2} parent=0 // pred_check_branch
    %32 = sbr.rel (0) target = $region37
  $region36: #{net_forward.2} parent=0 // pred_region
    _
  $region37: #{net_forward.2} parent=0 // pred_fallthru
    _
  // Predicated region
  $region38: #{net_forward.2} parent=0 // pred_check
    _
  $region39: #{net_forward.2} parent=0 // pred_check_branch
    %34 = sbr.rel (0) target = $region41
  $region40: #{net_forward.2} parent=0 // pred_region
    _
  $region41: #{net_forward.2} parent=0 // pred_fallthru
    _
  %v35 = vld [vmem:[%s1] sm:$0xff]
  %v36 = vld [vmem:[%s1 + $0x8] sm:$0xff]
  %v37 = vld [vmem:[%s1 + $0x10] sm:$0xff]
  %v38 = vld [vmem:[%s1 + $0x18] sm:$0xff]
  %v39 = vld [vmem:[%s1 + $0x20] sm:$0xff]
  %v40 = vld [vmem:[%s1 + $0x28] sm:$0xff]
  %v41 = vld [vmem:[%s1 + $0x30] sm:$0xff]
  %v42 = vld [vmem:[%s1 + $0x38] sm:$0xff]
  %v43 = vld [vmem:[%s1 + $0x40] sm:$0xff]
  %v44 = vld [vmem:[%s1 + $0x48] sm:$0xff]
  %v45 = vld [vmem:[%s1 + $0x50] sm:$0xff]
  %v46 = vld [vmem:[%s1 + $0x58] sm:$0xff]
  %v47 = vld [vmem:[%s1 + $0x60] sm:$0xff]
  %v48 = vld [vmem:[%s1 + $0x68] sm:$0xff]
  %v49 = vld [vmem:[%s1 + $0x70] sm:$0xff]
  %v50 = vld [vmem:[%s1 + $0x78] sm:$0xff]
  %v51 = vld [vmem:[%s1 + $0x80] sm:$0xff]
  %v52 = vld [vmem:[%s1 + $0x88] sm:$0xff]
  %v53 = vld [vmem:[%s1 + $0x90] sm:$0xff]
  %v54 = vld [vmem:[%s1 + $0x98] sm:$0xff]
  %v55 = vld [vmem:[%s1 + $0xa0] sm:$0xff]
  %v56 = vld [vmem:[%s1 + $0xa8] sm:$0xff]
  %v57 = vld [vmem:[%s1 + $0xb0] sm:$0xff]
  %v58 = vld [vmem:[%s1 + $0xb8] sm:$0xff]
  %v59 = vld [vmem:[%s1 + $0xc0] sm:$0xff]
  %v60 = vld [vmem:[%s0 + $0x5] sm:$0xff]
  %v61 = vld [vmem:[%s0 + $0xd] sm:$0xff]
  %v62 = vld [vmem:[%s0 + $0x15] sm:$0xff]
  %v63 = vld [vmem:[%s0 + $0x1d] sm:$0xff]
  %v64 = vld [vmem:[%s0 + $0x25] sm:$0xff]
  %v65 = vld [vmem:[%s0 + $0x2d] sm:$0xff]
  %v66 = vld [vmem:[%s0 + $0x35] sm:$0xff]
  %v67 = vld [vmem:[%s0 + $0x3d] sm:$0xff]
  %v68 = vld [vmem:[%s0 + $0x45] sm:$0xff]
  %v69 = vld [vmem:[%s0 + $0x4d] sm:$0xff]
  %v70 = vld [vmem:[%s0 + $0x55] sm:$0xff]
  %v71 = vld [vmem:[%s0 + $0x5d] sm:$0xff]
  %v72 = vld [vmem:[%s0 + $0x65] sm:$0xff]
  %v73 = vld [vmem:[%s0 + $0x6d] sm:$0xff]
  %v74 = vld [vmem:[%s0 + $0x75] sm:$0xff]
  %v75 = vld [vmem:[%s0 + $0x7d] sm:$0xff]
  %v76 = vld [vmem:[%s0 + $0x85] sm:$0xff]
  %v77 = vld [vmem:[%s0 + $0x8d] sm:$0xff]
  %v78 = vld [vmem:[%s0 + $0x95] sm:$0xff]
  %v79 = vld [vmem:[%s0 + $0x9d] sm:$0xff]
  %v80 = vld [vmem:[%s0 + $0xa5] sm:$0xff]
  %v81 = vld [vmem:[%s0 + $0xad] sm:$0xff]
  %v82 = vld [vmem:[%s0 + $0xb5] sm:$0xff]
  %v83 = vld [vmem:[%s0 + $0xbd] sm:$0xff]
  %v84 = vld [vmem:[%s0 + $0xc5] sm:$0xff]
  %v85 = vld [vmem:[%s2] sm:$0xf]
  %v86 = vld [vmem:[%s0 + $0x6] sm:$0xff]
  %v87 = vld [vmem:[%s0 + $0xe] sm:$0xff]
  %v88 = vld [vmem:[%s0 + $0x16] sm:$0xff]
  %v89 = vld [vmem:[%s0 + $0x1e] sm:$0xff]
  %v90 = vld [vmem:[%s0 + $0x26] sm:$0xff]
  %v91 = vld [vmem:[%s0 + $0x2e] sm:$0xff]
  %v92 = vld [vmem:[%s0 + $0x36] sm:$0xff]
  %v93 = vld [vmem:[%s0 + $0x3e] sm:$0xff]
  %v94 = vld [vmem:[%s0 + $0x46] sm:$0xff]
  %v95 = vld [vmem:[%s0 + $0x4e] sm:$0xff]
  %v96 = vld [vmem:[%s0 + $0x56] sm:$0xff]
  %v97 = vld [vmem:[%s0 + $0x5e] sm:$0xff]
  %v98 = vld [vmem:[%s0 + $0x66] sm:$0xff]
  %v99 = vld [vmem:[%s0 + $0x6e] sm:$0xff]
  %v100 = vld [vmem:[%s0 + $0x76] sm:$0xff]
  %v101 = vld [vmem:[%s0 + $0x7e] sm:$0xff]
  %v102 = vld [vmem:[%s0 + $0x86] sm:$0xff]
  %v103 = vld [vmem:[%s0 + $0x8e] sm:$0xff]
  %v104 = vld [vmem:[%s0 + $0x96] sm:$0xff]
  %v105 = vld [vmem:[%s0 + $0x9e] sm:$0xff]
  %v106 = vld [vmem:[%s0 + $0xa6] sm:$0xff]
  %v107 = vld [vmem:[%s0 + $0xae] sm:$0xff]
  %v108 = vld [vmem:[%s0 + $0xb6] sm:$0xff]
  %v109 = vld [vmem:[%s0 + $0xbe] sm:$0xff]
  %v110 = vld [vmem:[%s0 + $0xc6] sm:$0xff]
  %v111 = vld [vmem:[%s2 + $0x4] sm:$0xf]
  %vm112 = vcmask 31744
  %v114 = vsel %vm112, %v86, 0
  %v117 = vsel %vm112, %v87, 0
  %v120 = vsel %vm112, %v88, 0
  %v123 = vsel %vm112, %v89, 0
  %v126 = vsel %vm112, %v90, 0
  %v129 = vsel %vm112, %v91, 0
  %v132 = vsel %vm112, %v92, 0
  %v135 = vsel %vm112, %v93, 0
  %v138 = vsel %vm112, %v94, 0
  %v141 = vsel %vm112, %v95, 0
  %v144 = vsel %vm112, %v96, 0
  %v147 = vsel %vm112, %v97, 0
  %v150 = vsel %vm112, %v98, 0
  %v153 = vsel %vm112, %v99, 0
  %v156 = vsel %vm112, %v100, 0
  %v159 = vsel %vm112, %v101, 0
  %v162 = vsel %vm112, %v102, 0
  %v165 = vsel %vm112, %v103, 0
  %v168 = vsel %vm112, %v104, 0
  %v171 = vsel %vm112, %v105, 0
  %v174 = vsel %vm112, %v106, 0
  %v177 = vsel %vm112, %v107, 0
  %v180 = vsel %vm112, %v108, 0
  %v183 = vsel %vm112, %v109, 0
  %v186 = vsel %vm112, %v110, 0
  %vm188 = vcmask 1043456
  %v190 = vsel %vm188, %v111, 0
  %192 = vmatprep.subr.mxu0 0.0
  %193 = vmatpush1.msra.mxu0 %v190
  %194 = vmatprep.subr.mxu0 0.0
  %195 = vmatpush1.msra.mxu0 0.0
  %196 = vmatprep.subr.mxu0 0.0
  %197 = vmatpush1.msra.mxu0 0.0
  %198 = vmatprep.subr.mxu0 0.0
  %199 = vmatpush1.msra.mxu0 0.0
  %200 = vmatprep.subr.mxu0 0.0
  %201 = vmatpush1.msra.mxu0 0.0
  %202 = vmatprep.subr.mxu0 0.0
  %203 = vmatpush1.msra.mxu0 0.0
  %204 = vmatprep.subr.mxu0 0.0
  %205 = vmatpush1.msra.mxu0 0.0
  %206 = vmatprep.subr.mxu0 0.0
  %207 = vmatpush1.msra.mxu0 0.0
  %208 = vmatprep.subr.mxu0 0.0
  %209 = vmatpush1.msra.mxu0 0.0
  %210 = vmatprep.subr.mxu0 0.0
  %211 = vmatpush1.msra.mxu0 0.0
  %212 = vmatprep.subr.mxu0 0.0
  %213 = vmatpush1.msra.mxu0 0.0
  %214 = vmatprep.subr.mxu0 0.0
  %215 = vmatpush1.msra.mxu0 0.0
  %216 = vmatprep.subr.mxu0 0.0
  %217 = vmatpush1.msra.mxu0 0.0
  %218 = vmatprep.subr.mxu0 0.0
  %219 = vmatpush1.msra.mxu0 0.0
  %220 = vmatprep.subr.mxu0 0.0
  %221 = vmatpush1.msra.mxu0 0.0
  %222 = vmatprep.subr.mxu0 0.0
  %223 = vmatpush1.msra.mxu0 0.0
  %224 = vmatprep.subr.mxu0 0.0
  %225 = vmatpush1.msra.mxu0 0.0
  %226 = vmatprep.subr.mxu0 0.0
  %227 = vmatpush1.msra.mxu0 0.0
  %228 = vmatprep.subr.mxu0 0.0
  %229 = vmatpush1.msra.mxu0 0.0
  %230 = vmatprep.subr.mxu0 0.0
  %231 = vmatpush1.msra.mxu0 0.0
  %232 = vmatprep.subr.mxu0 0.0
  %233 = vmatpush1.msra.mxu0 0.0
  %234 = vmatprep.subr.mxu0 0.0
  %235 = vmatpush1.msra.mxu0 0.0
  %236 = vmatprep.subr.mxu0 0.0
  %237 = vmatpush1.msra.mxu0 0.0
  %238 = vmatprep.subr.mxu0 0.0
  %239 = vmatpush1.msra.mxu0 0.0
  %240 = vmatprep.subr.mxu0 0.0
  %241 = vmatpush1.msra.mxu0 0.0
  %242 = vmatprep.subr.mxu0 0.0
  %243 = vmatpush1.msra.mxu0 0.0
  %244 = vmatprep.subr.mxu0 0.0
  %245 = vmatpush1.msra.mxu0 0.0
  %246 = vmatprep.subr.mxu0 0.0
  %247 = vmatpush1.msra.mxu0 0.0
  %248 = vmatprep.subr.mxu0 0.0
  %249 = vmatpush1.msra.mxu0 0.0
  %250 = vmatprep.subr.mxu0 0.0
  %251 = vmatpush1.msra.mxu0 0.0
  %252 = vmatprep.subr.mxu0 0.0
  %253 = vmatpush1.msra.mxu0 0.0
  %254 = vmatprep.subr.mxu0 0.0
  %255 = vmatpush1.msra.mxu0 0.0
  %256 = vmatprep.mubr.f32.mxu0 0.0
  %257 = vmatmul.mubr.f32.gmra.mrb[0].mxu0 %v114
  %v258 = vpop.f32.mrb[0].mxu0
  %v259 = vadd.f32 0.0, %v258
  %v260 = vpop.f32.mrb[0].mxu0
  %261 = vmatprep.mubr.f32.mxu0 0.0
  %262 = vmatmul.mubr.f32.gmra.mrb[0].mxu0 %v117
  %v263 = vpop.f32.mrb[0].mxu0
  %v264 = vadd.f32 0.0, %v263
  %v265 = vpop.f32.mrb[0].mxu0
  %266 = vmatprep.mubr.f32.mxu0 0.0
  %267 = vmatmul.mubr.f32.gmra.mrb[0].mxu0 %v120
  %v268 = vpop.f32.mrb[0].mxu0
  %v269 = vadd.f32 0.0, %v268
  %v270 = vpop.f32.mrb[0].mxu0
  %271 = vmatprep.mubr.f32.mxu0 0.0
  %272 = vmatmul.mubr.f32.gmra.mrb[0].mxu0 %v123
  %v273 = vpop.f32.mrb[0].mxu0
  %v274 = vadd.f32 0.0, %v273
  %v275 = vpop.f32.mrb[0].mxu0
  %276 = vmatprep.mubr.f32.mxu0 0.0
  %277 = vmatmul.mubr.f32.gmra.mrb[0].mxu0 %v126
  %v278 = vpop.f32.mrb[0].mxu0
  %v279 = vadd.f32 0.0, %v278
  %v280 = vpop.f32.mrb[0].mxu0
  %281 = vmatprep.mubr.f32.mxu0 0.0
  %282 = vmatmul.mubr.f32.gmra.mrb[0].mxu0 %v129
  %v283 = vpop.f32.mrb[0].mxu0
  %v284 = vadd.f32 0.0, %v283
  %v285 = vpop.f32.mrb[0].mxu0
  %286 = vmatprep.mubr.f32.mxu0 0.0
  %287 = vmatmul.mubr.f32.gmra.mrb[0].mxu0 %v132
  %v288 = vpop.f32.mrb[0].mxu0
  %v289 = vadd.f32 0.0, %v288
  %v290 = vpop.f32.mrb[0].mxu0
  %291 = vmatprep.mubr.f32.mxu0 0.0
  %292 = vmatmul.mubr.f32.gmra.mrb[0].mxu0 %v135
  %v293 = vpop.f32.mrb[0].mxu0
  %v294 = vadd.f32 0.0, %v293
  %v295 = vpop.f32.mrb[0].mxu0
  %296 = vmatprep.mubr.f32.mxu0 0.0
  %297 = vmatmul.mubr.f32.gmra.mrb[0].mxu0 %v138
  %v298 = vpop.f32.mrb[0].mxu0
  %v299 = vadd.f32 0.0, %v298
  %v300 = vpop.f32.mrb[0].mxu0
  %301 = vmatprep.mubr.f32.mxu0 0.0
  %302 = vmatmul.mubr.f32.gmra.mrb[0].mxu0 %v141
  %v303 = vpop.f32.mrb[0].mxu0
  %v304 = vadd.f32 0.0, %v303
  %v305 = vpop.f32.mrb[0].mxu0
  %306 = vmatprep.mubr.f32.mxu0 0.0
  %307 = vmatmul.mubr.f32.gmra.mrb[0].mxu0 %v144
  %v308 = vpop.f32.mrb[0].mxu0
  %v309 = vadd.f32 0.0, %v308
  %v310 = vpop.f32.mrb[0].mxu0
  %311 = vmatprep.mubr.f32.mxu0 0.0
  %312 = vmatmul.mubr.f32.gmra.mrb[0].mxu0 %v147
  %v313 = vpop.f32.mrb[0].mxu0
  %v314 = vadd.f32 0.0, %v313
  %v315 = vpop.f32.mrb[0].mxu0
  %316 = vmatprep.mubr.f32.mxu0 0.0
  %317 = vmatmul.mubr.f32.gmra.mrb[0].mxu0 %v150
  %v318 = vpop.f32.mrb[0].mxu0
  %v319 = vadd.f32 0.0, %v318
  %v320 = vpop.f32.mrb[0].mxu0
  %321 = vmatprep.mubr.f32.mxu0 0.0
  %322 = vmatmul.mubr.f32.gmra.mrb[0].mxu0 %v153
  %v323 = vpop.f32.mrb[0].mxu0
  %v324 = vadd.f32 0.0, %v323
  %v325 = vpop.f32.mrb[0].mxu0
  %326 = vmatprep.mubr.f32.mxu0 0.0
  %327 = vmatmul.mubr.f32.gmra.mrb[0].mxu0 %v156
  %v328 = vpop.f32.mrb[0].mxu0
  %v329 = vadd.f32 0.0, %v328
  %v330 = vpop.f32.mrb[0].mxu0
  %331 = vmatprep.mubr.f32.mxu0 0.0
  %332 = vmatmul.mubr.f32.gmra.mrb[0].mxu0 %v159
  %v333 = vpop.f32.mrb[0].mxu0
  %v334 = vadd.f32 0.0, %v333
  %v335 = vpop.f32.mrb[0].mxu0
  %336 = vmatprep.mubr.f32.mxu0 0.0
  %337 = vmatmul.mubr.f32.gmra.mrb[0].mxu0 %v162
  %v338 = vpop.f32.mrb[0].mxu0
  %v339 = vadd.f32 0.0, %v338
  %v340 = vpop.f32.mrb[0].mxu0
  %341 = vmatprep.mubr.f32.mxu0 0.0
  %342 = vmatmul.mubr.f32.gmra.mrb[0].mxu0 %v165
  %v343 = vpop.f32.mrb[0].mxu0
  %v344 = vadd.f32 0.0, %v343
  %v345 = vpop.f32.mrb[0].mxu0
  %346 = vmatprep.mubr.f32.mxu0 0.0
  %347 = vmatmul.mubr.f32.gmra.mrb[0].mxu0 %v168
  %v348 = vpop.f32.mrb[0].mxu0
  %v349 = vadd.f32 0.0, %v348
  %v350 = vpop.f32.mrb[0].mxu0
  %351 = vmatprep.mubr.f32.mxu0 0.0
  %352 = vmatmul.mubr.f32.gmra.mrb[0].mxu0 %v171
  %v353 = vpop.f32.mrb[0].mxu0
  %v354 = vadd.f32 0.0, %v353
  %v355 = vpop.f32.mrb[0].mxu0
  %356 = vmatprep.mubr.f32.mxu0 0.0
  %357 = vmatmul.mubr.f32.gmra.mrb[0].mxu0 %v174
  %v358 = vpop.f32.mrb[0].mxu0
  %v359 = vadd.f32 0.0, %v358
  %v360 = vpop.f32.mrb[0].mxu0
  %361 = vmatprep.mubr.f32.mxu0 0.0
  %362 = vmatmul.mubr.f32.gmra.mrb[0].mxu0 %v177
  %v363 = vpop.f32.mrb[0].mxu0
  %v364 = vadd.f32 0.0, %v363
  %v365 = vpop.f32.mrb[0].mxu0
  %366 = vmatprep.mubr.f32.mxu0 0.0
  %367 = vmatmul.mubr.f32.gmra.mrb[0].mxu0 %v180
  %v368 = vpop.f32.mrb[0].mxu0
  %v369 = vadd.f32 0.0, %v368
  %v370 = vpop.f32.mrb[0].mxu0
  %371 = vmatprep.mubr.f32.mxu0 0.0
  %372 = vmatmul.mubr.f32.gmra.mrb[0].mxu0 %v183
  %v373 = vpop.f32.mrb[0].mxu0
  %v374 = vadd.f32 0.0, %v373
  %v375 = vpop.f32.mrb[0].mxu0
  %376 = vmatprep.mubr.f32.mxu0 0.0
  %377 = vmatmul.mubr.f32.gmra.mrb[0].mxu0 %v186
  %v378 = vpop.f32.mrb[0].mxu0
  %v379 = vadd.f32 0.0, %v378
  %v380 = vpop.f32.mrb[0].mxu0
  %381 = vdwg.mxu0
  %v383 = vsel %vm112, %v60, 0
  %v386 = vsel %vm112, %v61, 0
  %v389 = vsel %vm112, %v62, 0
  %v392 = vsel %vm112, %v63, 0
  %v395 = vsel %vm112, %v64, 0
  %v398 = vsel %vm112, %v65, 0
  %v401 = vsel %vm112, %v66, 0
  %v404 = vsel %vm112, %v67, 0
  %v407 = vsel %vm112, %v68, 0
  %v410 = vsel %vm112, %v69, 0
  %v413 = vsel %vm112, %v70, 0
  %v416 = vsel %vm112, %v71, 0
  %v419 = vsel %vm112, %v72, 0
  %v422 = vsel %vm112, %v73, 0
  %v425 = vsel %vm112, %v74, 0
  %v428 = vsel %vm112, %v75, 0
  %v431 = vsel %vm112, %v76, 0
  %v434 = vsel %vm112, %v77, 0
  %v437 = vsel %vm112, %v78, 0
  %v440 = vsel %vm112, %v79, 0
  %v443 = vsel %vm112, %v80, 0
  %v446 = vsel %vm112, %v81, 0
  %v449 = vsel %vm112, %v82, 0
  %v452 = vsel %vm112, %v83, 0
  %v455 = vsel %vm112, %v84, 0
  %v458 = vsel %vm188, %v85, 0
  %460 = vmatprep.subr.mxu0 0.0
  %461 = vmatpush1.msra.mxu0 %v458
  %462 = vmatprep.subr.mxu0 0.0
  %463 = vmatpush1.msra.mxu0 0.0
  %464 = vmatprep.subr.mxu0 0.0
  %465 = vmatpush1.msra.mxu0 0.0
  %466 = vmatprep.subr.mxu0 0.0
  %467 = vmatpush1.msra.mxu0 0.0
  %468 = vmatprep.subr.mxu0 0.0
  %469 = vmatpush1.msra.mxu0 0.0
  %470 = vmatprep.subr.mxu0 0.0
  %471 = vmatpush1.msra.mxu0 0.0
  %472 = vmatprep.subr.mxu0 0.0
  %473 = vmatpush1.msra.mxu0 0.0
  %474 = vmatprep.subr.mxu0 0.0
  %475 = vmatpush1.msra.mxu0 0.0
  %476 = vmatprep.subr.mxu0 0.0
  %477 = vmatpush1.msra.mxu0 0.0
  %478 = vmatprep.subr.mxu0 0.0
  %479 = vmatpush1.msra.mxu0 0.0
  %480 = vmatprep.subr.mxu0 0.0
  %481 = vmatpush1.msra.mxu0 0.0
  %482 = vmatprep.subr.mxu0 0.0
  %483 = vmatpush1.msra.mxu0 0.0
  %484 = vmatprep.subr.mxu0 0.0
  %485 = vmatpush1.msra.mxu0 0.0
  %486 = vmatprep.subr.mxu0 0.0
  %487 = vmatpush1.msra.mxu0 0.0
  %488 = vmatprep.subr.mxu0 0.0
  %489 = vmatpush1.msra.mxu0 0.0
  %490 = vmatprep.subr.mxu0 0.0
  %491 = vmatpush1.msra.mxu0 0.0
  %492 = vmatprep.subr.mxu0 0.0
  %493 = vmatpush1.msra.mxu0 0.0
  %494 = vmatprep.subr.mxu0 0.0
  %495 = vmatpush1.msra.mxu0 0.0
  %496 = vmatprep.subr.mxu0 0.0
  %497 = vmatpush1.msra.mxu0 0.0
  %498 = vmatprep.subr.mxu0 0.0
  %499 = vmatpush1.msra.mxu0 0.0
  %500 = vmatprep.subr.mxu0 0.0
  %501 = vmatpush1.msra.mxu0 0.0
  %502 = vmatprep.subr.mxu0 0.0
  %503 = vmatpush1.msra.mxu0 0.0
  %504 = vmatprep.subr.mxu0 0.0
  %505 = vmatpush1.msra.mxu0 0.0
  %506 = vmatprep.subr.mxu0 0.0
  %507 = vmatpush1.msra.mxu0 0.0
  %508 = vmatprep.subr.mxu0 0.0
  %509 = vmatpush1.msra.mxu0 0.0
  %510 = vmatprep.subr.mxu0 0.0
  %511 = vmatpush1.msra.mxu0 0.0
  %512 = vmatprep.subr.mxu0 0.0
  %513 = vmatpush1.msra.mxu0 0.0
  %514 = vmatprep.subr.mxu0 0.0
  %515 = vmatpush1.msra.mxu0 0.0
  %516 = vmatprep.subr.mxu0 0.0
  %517 = vmatpush1.msra.mxu0 0.0
  %518 = vmatprep.subr.mxu0 0.0
  %519 = vmatpush1.msra.mxu0 0.0
  %520 = vmatprep.subr.mxu0 0.0
  %521 = vmatpush1.msra.mxu0 0.0
  %522 = vmatprep.subr.mxu0 0.0
  %523 = vmatpush1.msra.mxu0 0.0
  %524 = vmatprep.mubr.f32.mxu0 0.0
  %525 = vmatmul.mubr.f32.gmra.mrb[0].mxu0 %v383
  %v526 = vpop.f32.mrb[0].mxu0
  %v527 = vadd.f32 %v259, %v526
  %v528 = vpop.f32.mrb[0].mxu0
  %529 = vmatprep.mubr.f32.mxu0 0.0
  %530 = vmatmul.mubr.f32.gmra.mrb[0].mxu0 %v386
  %v531 = vpop.f32.mrb[0].mxu0
  %v532 = vadd.f32 %v264, %v531
  %v533 = vpop.f32.mrb[0].mxu0
  %534 = vmatprep.mubr.f32.mxu0 0.0
  %535 = vmatmul.mubr.f32.gmra.mrb[0].mxu0 %v389
  %v536 = vpop.f32.mrb[0].mxu0
  %v537 = vadd.f32 %v269, %v536
  %v538 = vpop.f32.mrb[0].mxu0
  %539 = vmatprep.mubr.f32.mxu0 0.0
  %540 = vmatmul.mubr.f32.gmra.mrb[0].mxu0 %v392
  %v541 = vpop.f32.mrb[0].mxu0
  %v542 = vadd.f32 %v274, %v541
  %v543 = vpop.f32.mrb[0].mxu0
  %544 = vmatprep.mubr.f32.mxu0 0.0
  %545 = vmatmul.mubr.f32.gmra.mrb[0].mxu0 %v395
  %v546 = vpop.f32.mrb[0].mxu0
  %v547 = vadd.f32 %v279, %v546
  %v548 = vpop.f32.mrb[0].mxu0
  %549 = vmatprep.mubr.f32.mxu0 0.0
  %550 = vmatmul.mubr.f32.gmra.mrb[0].mxu0 %v398
  %v551 = vpop.f32.mrb[0].mxu0
  %v552 = vadd.f32 %v284, %v551
  %v553 = vpop.f32.mrb[0].mxu0
  %554 = vmatprep.mubr.f32.mxu0 0.0
  %555 = vmatmul.mubr.f32.gmra.mrb[0].mxu0 %v401
  %v556 = vpop.f32.mrb[0].mxu0
  %v557 = vadd.f32 %v289, %v556
  %v558 = vpop.f32.mrb[0].mxu0
  %559 = vmatprep.mubr.f32.mxu0 0.0
  %560 = vmatmul.mubr.f32.gmra.mrb[0].mxu0 %v404
  %v561 = vpop.f32.mrb[0].mxu0
  %v562 = vadd.f32 %v294, %v561
  %v563 = vpop.f32.mrb[0].mxu0
  %564 = vmatprep.mubr.f32.mxu0 0.0
  %565 = vmatmul.mubr.f32.gmra.mrb[0].mxu0 %v407
  %v566 = vpop.f32.mrb[0].mxu0
  %v567 = vadd.f32 %v299, %v566
  %v568 = vpop.f32.mrb[0].mxu0
  %569 = vmatprep.mubr.f32.mxu0 0.0
  %570 = vmatmul.mubr.f32.gmra.mrb[0].mxu0 %v410
  %v571 = vpop.f32.mrb[0].mxu0
  %v572 = vadd.f32 %v304, %v571
  %v573 = vpop.f32.mrb[0].mxu0
  %574 = vmatprep.mubr.f32.mxu0 0.0
  %575 = vmatmul.mubr.f32.gmra.mrb[0].mxu0 %v413
  %v576 = vpop.f32.mrb[0].mxu0
  %v577 = vadd.f32 %v309, %v576
  %v578 = vpop.f32.mrb[0].mxu0
  %579 = vmatprep.mubr.f32.mxu0 0.0
  %580 = vmatmul.mubr.f32.gmra.mrb[0].mxu0 %v416
  %v581 = vpop.f32.mrb[0].mxu0
  %v582 = vadd.f32 %v314, %v581
  %v583 = vpop.f32.mrb[0].mxu0
  %584 = vmatprep.mubr.f32.mxu0 0.0
  %585 = vmatmul.mubr.f32.gmra.mrb[0].mxu0 %v419
  %v586 = vpop.f32.mrb[0].mxu0
  %v587 = vadd.f32 %v319, %v586
  %v588 = vpop.f32.mrb[0].mxu0
  %589 = vmatprep.mubr.f32.mxu0 0.0
  %590 = vmatmul.mubr.f32.gmra.mrb[0].mxu0 %v422
  %v591 = vpop.f32.mrb[0].mxu0
  %v592 = vadd.f32 %v324, %v591
  %v593 = vpop.f32.mrb[0].mxu0
  %594 = vmatprep.mubr.f32.mxu0 0.0
  %595 = vmatmul.mubr.f32.gmra.mrb[0].mxu0 %v425
  %v596 = vpop.f32.mrb[0].mxu0
  %v597 = vadd.f32 %v329, %v596
  %v598 = vpop.f32.mrb[0].mxu0
  %599 = vmatprep.mubr.f32.mxu0 0.0
  %600 = vmatmul.mubr.f32.gmra.mrb[0].mxu0 %v428
  %v601 = vpop.f32.mrb[0].mxu0
  %v602 = vadd.f32 %v334, %v601
  %v603 = vpop.f32.mrb[0].mxu0
  %604 = vmatprep.mubr.f32.mxu0 0.0
  %605 = vmatmul.mubr.f32.gmra.mrb[0].mxu0 %v431
  %v606 = vpop.f32.mrb[0].mxu0
  %v607 = vadd.f32 %v339, %v606
  %v608 = vpop.f32.mrb[0].mxu0
  %609 = vmatprep.mubr.f32.mxu0 0.0
  %610 = vmatmul.mubr.f32.gmra.mrb[0].mxu0 %v434
  %v611 = vpop.f32.mrb[0].mxu0
  %v612 = vadd.f32 %v344, %v611
  %v613 = vpop.f32.mrb[0].mxu0
  %614 = vmatprep.mubr.f32.mxu0 0.0
  %615 = vmatmul.mubr.f32.gmra.mrb[0].mxu0 %v437
  %v616 = vpop.f32.mrb[0].mxu0
  %v617 = vadd.f32 %v349, %v616
  %v618 = vpop.f32.mrb[0].mxu0
  %619 = vmatprep.mubr.f32.mxu0 0.0
  %620 = vmatmul.mubr.f32.gmra.mrb[0].mxu0 %v440
  %v621 = vpop.f32.mrb[0].mxu0
  %v622 = vadd.f32 %v354, %v621
  %v623 = vpop.f32.mrb[0].mxu0
  %624 = vmatprep.mubr.f32.mxu0 0.0
  %625 = vmatmul.mubr.f32.gmra.mrb[0].mxu0 %v443
  %v626 = vpop.f32.mrb[0].mxu0
  %v627 = vadd.f32 %v359, %v626
  %v628 = vpop.f32.mrb[0].mxu0
  %629 = vmatprep.mubr.f32.mxu0 0.0
  %630 = vmatmul.mubr.f32.gmra.mrb[0].mxu0 %v446
  %v631 = vpop.f32.mrb[0].mxu0
  %v632 = vadd.f32 %v364, %v631
  %v633 = vpop.f32.mrb[0].mxu0
  %634 = vmatprep.mubr.f32.mxu0 0.0
  %635 = vmatmul.mubr.f32.gmra.mrb[0].mxu0 %v449
  %v636 = vpop.f32.mrb[0].mxu0
  %v637 = vadd.f32 %v369, %v636
  %v638 = vpop.f32.mrb[0].mxu0
  %639 = vmatprep.mubr.f32.mxu0 0.0
  %640 = vmatmul.mubr.f32.gmra.mrb[0].mxu0 %v452
  %v641 = vpop.f32.mrb[0].mxu0
  %v642 = vadd.f32 %v374, %v641
  %v643 = vpop.f32.mrb[0].mxu0
  %644 = vmatprep.mubr.f32.mxu0 0.0
  %645 = vmatmul.mubr.f32.gmra.mrb[0].mxu0 %v455
  %v646 = vpop.f32.mrb[0].mxu0
  %v647 = vadd.f32 %v379, %v646
  %v648 = vpop.f32.mrb[0].mxu0
  %649 = vdwg.mxu0
  %v650 = vld [vmem:[%s0 + $0x7] sm:$0xff]
  %v651 = vld [vmem:[%s0 + $0xf] sm:$0xff]
  %v652 = vld [vmem:[%s0 + $0x17] sm:$0xff]
  %v653 = vld [vmem:[%s0 + $0x1f] sm:$0xff]
  %v654 = vld [vmem:[%s0 + $0x27] sm:$0xff]
  %v655 = vld [vmem:[%s0 + $0x2f] sm:$0xff]
  %v656 = vld [vmem:[%s0 + $0x37] sm:$0xff]
  %v657 = vld [vmem:[%s0 + $0x3f] sm:$0xff]
  %v658 = vld [vmem:[%s0 + $0x47] sm:$0xff]
  %v659 = vld [vmem:[%s0 + $0x4f] sm:$0xff]
  %v660 = vld [vmem:[%s0 + $0x57] sm:$0xff]
  %v661 = vld [vmem:[%s0 + $0x5f] sm:$0xff]
  %v662 = vld [vmem:[%s0 + $0x67] sm:$0xff]
  %v663 = vld [vmem:[%s0 + $0x6f] sm:$0xff]
  %v664 = vld [vmem:[%s0 + $0x77] sm:$0xff]
  %v665 = vld [vmem:[%s0 + $0x7f] sm:$0xff]
  %v666 = vld [vmem:[%s0 + $0x87] sm:$0xff]
  %v667 = vld [vmem:[%s0 + $0x8f] sm:$0xff]
  %v668 = vld [vmem:[%s0 + $0x97] sm:$0xff]
  %v669 = vld [vmem:[%s0 + $0x9f] sm:$0xff]
  %v670 = vld [vmem:[%s0 + $0xa7] sm:$0xff]
  %v671 = vld [vmem:[%s0 + $0xaf] sm:$0xff]
  %v672 = vld [vmem:[%s0 + $0xb7] sm:$0xff]
  %v673 = vld [vmem:[%s0 + $0xbf] sm:$0xff]
  %v674 = vld [vmem:[%s0 + $0xc7] sm:$0xff]
  %v675 = vld [vmem:[%s2 + $0x8] sm:$0xf]
  %v677 = vsel %vm112, %v650, 0
  %v680 = vsel %vm112, %v651, 0
  %v683 = vsel %vm112, %v652, 0
  %v686 = vsel %vm112, %v653, 0
  %v689 = vsel %vm112, %v654, 0
  %v692 = vsel %vm112, %v655, 0
  %v695 = vsel %vm112, %v656, 0
  %v698 = vsel %vm112, %v657, 0
  %v701 = vsel %vm112, %v658, 0
  %v704 = vsel %vm112, %v659, 0
  %v707 = vsel %vm112, %v660, 0
  %v710 = vsel %vm112, %v661, 0
  %v713 = vsel %vm112, %v662, 0
  %v716 = vsel %vm112, %v663, 0
  %v719 = vsel %vm112, %v664, 0
  %v722 = vsel %vm112, %v665, 0
  %v725 = vsel %vm112, %v666, 0
  %v728 = vsel %vm112, %v667, 0
  %v731 = vsel %vm112, %v668, 0
  %v734 = vsel %vm112, %v669, 0
  %v737 = vsel %vm112, %v670, 0
  %v740 = vsel %vm112, %v671, 0
  %v743 = vsel %vm112, %v672, 0
  %v746 = vsel %vm112, %v673, 0
  %v749 = vsel %vm112, %v674, 0
  %v752 = vsel %vm188, %v675, 0
  %754 = vmatprep.subr.mxu0 0.0
  %755 = vmatpush1.msra.mxu0 %v752
  %756 = vmatprep.subr.mxu0 0.0
  %757 = vmatpush1.msra.mxu0 0.0
  %758 = vmatprep.subr.mxu0 0.0
  %759 = vmatpush1.msra.mxu0 0.0
  %760 = vmatprep.subr.mxu0 0.0
  %761 = vmatpush1.msra.mxu0 0.0
  %762 = vmatprep.subr.mxu0 0.0
  %763 = vmatpush1.msra.mxu0 0.0
  %764 = vmatprep.subr.mxu0 0.0
  %765 = vmatpush1.msra.mxu0 0.0
  %766 = vmatprep.subr.mxu0 0.0
  %767 = vmatpush1.msra.mxu0 0.0
  %768 = vmatprep.subr.mxu0 0.0
  %769 = vmatpush1.msra.mxu0 0.0
  %770 = vmatprep.subr.mxu0 0.0
  %771 = vmatpush1.msra.mxu0 0.0
  %772 = vmatprep.subr.mxu0 0.0
  %773 = vmatpush1.msra.mxu0 0.0
  %774 = vmatprep.subr.mxu0 0.0
  %775 = vmatpush1.msra.mxu0 0.0
  %776 = vmatprep.subr.mxu0 0.0
  %777 = vmatpush1.msra.mxu0 0.0
  %778 = vmatprep.subr.mxu0 0.0
  %779 = vmatpush1.msra.mxu0 0.0
  %780 = vmatprep.subr.mxu0 0.0
  %781 = vmatpush1.msra.mxu0 0.0
  %782 = vmatprep.subr.mxu0 0.0
  %783 = vmatpush1.msra.mxu0 0.0
  %784 = vmatprep.subr.mxu0 0.0
  %785 = vmatpush1.msra.mxu0 0.0
  %786 = vmatprep.subr.mxu0 0.0
  %787 = vmatpush1.msra.mxu0 0.0
  %788 = vmatprep.subr.mxu0 0.0
  %789 = vmatpush1.msra.mxu0 0.0
  %790 = vmatprep.subr.mxu0 0.0
  %791 = vmatpush1.msra.mxu0 0.0
  %792 = vmatprep.subr.mxu0 0.0
  %793 = vmatpush1.msra.mxu0 0.0
  %794 = vmatprep.subr.mxu0 0.0
  %795 = vmatpush1.msra.mxu0 0.0
  %796 = vmatprep.subr.mxu0 0.0
  %797 = vmatpush1.msra.mxu0 0.0
  %798 = vmatprep.subr.mxu0 0.0
  %799 = vmatpush1.msra.mxu0 0.0
  %800 = vmatprep.subr.mxu0 0.0
  %801 = vmatpush1.msra.mxu0 0.0
  %802 = vmatprep.subr.mxu0 0.0
  %803 = vmatpush1.msra.mxu0 0.0
  %804 = vmatprep.subr.mxu0 0.0
  %805 = vmatpush1.msra.mxu0 0.0
  %806 = vmatprep.subr.mxu0 0.0
  %807 = vmatpush1.msra.mxu0 0.0
  %808 = vmatprep.subr.mxu0 0.0
  %809 = vmatpush1.msra.mxu0 0.0
  %810 = vmatprep.subr.mxu0 0.0
  %811 = vmatpush1.msra.mxu0 0.0
  %812 = vmatprep.subr.mxu0 0.0
  %813 = vmatpush1.msra.mxu0 0.0
  %814 = vmatprep.subr.mxu0 0.0
  %815 = vmatpush1.msra.mxu0 0.0
  %816 = vmatprep.subr.mxu0 0.0
  %817 = vmatpush1.msra.mxu0 0.0
  %818 = vmatprep.mubr.f32.mxu0 0.0
  %819 = vmatmul.mubr.f32.gmra.mrb[0].mxu0 %v677
  %v820 = vpop.f32.mrb[0].mxu0
  %v821 = vadd.f32 0.0, %v820
  %v822 = vpop.f32.mrb[0].mxu0
  %823 = vmatprep.mubr.f32.mxu0 0.0
  %824 = vmatmul.mubr.f32.gmra.mrb[0].mxu0 %v680
  %v825 = vpop.f32.mrb[0].mxu0
  %v826 = vadd.f32 0.0, %v825
  %v827 = vpop.f32.mrb[0].mxu0
  %828 = vmatprep.mubr.f32.mxu0 0.0
  %829 = vmatmul.mubr.f32.gmra.mrb[0].mxu0 %v683
  %v830 = vpop.f32.mrb[0].mxu0
  %v831 = vadd.f32 0.0, %v830
  %v832 = vpop.f32.mrb[0].mxu0
  %833 = vmatprep.mubr.f32.mxu0 0.0
  %834 = vmatmul.mubr.f32.gmra.mrb[0].mxu0 %v686
  %v835 = vpop.f32.mrb[0].mxu0
  %v836 = vadd.f32 0.0, %v835
  %v837 = vpop.f32.mrb[0].mxu0
  %838 = vmatprep.mubr.f32.mxu0 0.0
  %839 = vmatmul.mubr.f32.gmra.mrb[0].mxu0 %v689
  %v840 = vpop.f32.mrb[0].mxu0
  %v841 = vadd.f32 0.0, %v840
  %v842 = vpop.f32.mrb[0].mxu0
  %843 = vmatprep.mubr.f32.mxu0 0.0
  %844 = vmatmul.mubr.f32.gmra.mrb[0].mxu0 %v692
  %v845 = vpop.f32.mrb[0].mxu0
  %v846 = vadd.f32 0.0, %v845
  %v847 = vpop.f32.mrb[0].mxu0
  %848 = vmatprep.mubr.f32.mxu0 0.0
  %849 = vmatmul.mubr.f32.gmra.mrb[0].mxu0 %v695
  %v850 = vpop.f32.mrb[0].mxu0
  %v851 = vadd.f32 0.0, %v850
  %v852 = vpop.f32.mrb[0].mxu0
  %853 = vmatprep.mubr.f32.mxu0 0.0
  %854 = vmatmul.mubr.f32.gmra.mrb[0].mxu0 %v698
  %v855 = vpop.f32.mrb[0].mxu0
  %v856 = vadd.f32 0.0, %v855
  %v857 = vpop.f32.mrb[0].mxu0
  %858 = vmatprep.mubr.f32.mxu0 0.0
  %859 = vmatmul.mubr.f32.gmra.mrb[0].mxu0 %v701
  %v860 = vpop.f32.mrb[0].mxu0
  %v861 = vadd.f32 0.0, %v860
  %v862 = vpop.f32.mrb[0].mxu0
  %863 = vmatprep.mubr.f32.mxu0 0.0
  %864 = vmatmul.mubr.f32.gmra.mrb[0].mxu0 %v704
  %v865 = vpop.f32.mrb[0].mxu0
  %v866 = vadd.f32 0.0, %v865
  %v867 = vpop.f32.mrb[0].mxu0
  %868 = vmatprep.mubr.f32.mxu0 0.0
  %869 = vmatmul.mubr.f32.gmra.mrb[0].mxu0 %v707
  %v870 = vpop.f32.mrb[0].mxu0
  %v871 = vadd.f32 0.0, %v870
  %v872 = vpop.f32.mrb[0].mxu0
  %873 = vmatprep.mubr.f32.mxu0 0.0
  %874 = vmatmul.mubr.f32.gmra.mrb[0].mxu0 %v710
  %v875 = vpop.f32.mrb[0].mxu0
  %v876 = vadd.f32 0.0, %v875
  %v877 = vpop.f32.mrb[0].mxu0
  %878 = vmatprep.mubr.f32.mxu0 0.0
  %879 = vmatmul.mubr.f32.gmra.mrb[0].mxu0 %v713
  %v880 = vpop.f32.mrb[0].mxu0
  %v881 = vadd.f32 0.0, %v880
  %v882 = vpop.f32.mrb[0].mxu0
  %883 = vmatprep.mubr.f32.mxu0 0.0
  %884 = vmatmul.mubr.f32.gmra.mrb[0].mxu0 %v716
  %v885 = vpop.f32.mrb[0].mxu0
  %v886 = vadd.f32 0.0, %v885
  %v887 = vpop.f32.mrb[0].mxu0
  %888 = vmatprep.mubr.f32.mxu0 0.0
  %889 = vmatmul.mubr.f32.gmra.mrb[0].mxu0 %v719
  %v890 = vpop.f32.mrb[0].mxu0
  %v891 = vadd.f32 0.0, %v890
  %v892 = vpop.f32.mrb[0].mxu0
  %893 = vmatprep.mubr.f32.mxu0 0.0
  %894 = vmatmul.mubr.f32.gmra.mrb[0].mxu0 %v722
  %v895 = vpop.f32.mrb[0].mxu0
  %v896 = vadd.f32 0.0, %v895
  %v897 = vpop.f32.mrb[0].mxu0
  %898 = vmatprep.mubr.f32.mxu0 0.0
  %899 = vmatmul.mubr.f32.gmra.mrb[0].mxu0 %v725
  %v900 = vpop.f32.mrb[0].mxu0
  %v901 = vadd.f32 0.0, %v900
  %v902 = vpop.f32.mrb[0].mxu0
  %903 = vmatprep.mubr.f32.mxu0 0.0
  %904 = vmatmul.mubr.f32.gmra.mrb[0].mxu0 %v728
  %v905 = vpop.f32.mrb[0].mxu0
  %v906 = vadd.f32 0.0, %v905
  %v907 = vpop.f32.mrb[0].mxu0
  %908 = vmatprep.mubr.f32.mxu0 0.0
  %909 = vmatmul.mubr.f32.gmra.mrb[0].mxu0 %v731
  %v910 = vpop.f32.mrb[0].mxu0
  %v911 = vadd.f32 0.0, %v910
  %v912 = vpop.f32.mrb[0].mxu0
  %913 = vmatprep.mubr.f32.mxu0 0.0
  %914 = vmatmul.mubr.f32.gmra.mrb[0].mxu0 %v734
  %v915 = vpop.f32.mrb[0].mxu0
  %v916 = vadd.f32 0.0, %v915
  %v917 = vpop.f32.mrb[0].mxu0
  %918 = vmatprep.mubr.f32.mxu0 0.0
  %919 = vmatmul.mubr.f32.gmra.mrb[0].mxu0 %v737
  %v920 = vpop.f32.mrb[0].mxu0
  %v921 = vadd.f32 0.0, %v920
  %v922 = vpop.f32.mrb[0].mxu0
  %923 = vmatprep.mubr.f32.mxu0 0.0
  %924 = vmatmul.mubr.f32.gmra.mrb[0].mxu0 %v740
  %v925 = vpop.f32.mrb[0].mxu0
  %v926 = vadd.f32 0.0, %v925
  %v927 = vpop.f32.mrb[0].mxu0
  %928 = vmatprep.mubr.f32.mxu0 0.0
  %929 = vmatmul.mubr.f32.gmra.mrb[0].mxu0 %v743
  %v930 = vpop.f32.mrb[0].mxu0
  %v931 = vadd.f32 0.0, %v930
  %v932 = vpop.f32.mrb[0].mxu0
  %933 = vmatprep.mubr.f32.mxu0 0.0
  %934 = vmatmul.mubr.f32.gmra.mrb[0].mxu0 %v746
  %v935 = vpop.f32.mrb[0].mxu0
  %v936 = vadd.f32 0.0, %v935
  %v937 = vpop.f32.mrb[0].mxu0
  %938 = vmatprep.mubr.f32.mxu0 0.0
  %939 = vmatmul.mubr.f32.gmra.mrb[0].mxu0 %v749
  %v940 = vpop.f32.mrb[0].mxu0
  %v941 = vadd.f32 0.0, %v940
  %v942 = vpop.f32.mrb[0].mxu0
  %943 = vdwg.mxu0
  %v944 = vadd.f32 %v527, %v821
  %v945 = vadd.f32 %v532, %v826
  %v946 = vadd.f32 %v537, %v831
  %v947 = vadd.f32 %v542, %v836
  %v948 = vadd.f32 %v547, %v841
  %v949 = vadd.f32 %v552, %v846
  %v950 = vadd.f32 %v557, %v851
  %v951 = vadd.f32 %v562, %v856
  %v952 = vadd.f32 %v567, %v861
  %v953 = vadd.f32 %v572, %v866
  %v954 = vadd.f32 %v577, %v871
  %v955 = vadd.f32 %v582, %v876
  %v956 = vadd.f32 %v587, %v881
  %v957 = vadd.f32 %v592, %v886
  %v958 = vadd.f32 %v597, %v891
  %v959 = vadd.f32 %v602, %v896
  %v960 = vadd.f32 %v607, %v901
  %v961 = vadd.f32 %v612, %v906
  %v962 = vadd.f32 %v617, %v911
  %v963 = vadd.f32 %v622, %v916
  %v964 = vadd.f32 %v627, %v921
  %v965 = vadd.f32 %v632, %v926
  %v966 = vadd.f32 %v637, %v931
  %v967 = vadd.f32 %v642, %v936
  %v968 = vadd.f32 %v647, %v941
  %v969 = vld [vmem:[%s0 + $0xf] sm:$0xff]
  %v970 = vld [vmem:[%s0 + $0x17] sm:$0xff]
  %v971 = vld [vmem:[%s0 + $0x1f] sm:$0xff]
  %v972 = vld [vmem:[%s0 + $0x27] sm:$0xff]
  %v973 = vld [vmem:[%s0 + $0x2f] sm:$0xff]
  %v974 = vld [vmem:[%s0 + $0x37] sm:$0xff]
  %v975 = vld [vmem:[%s0 + $0x3f] sm:$0xff]
  %v976 = vld [vmem:[%s0 + $0x47] sm:$0xff]
  %v977 = vld [vmem:[%s0 + $0x4f] sm:$0xff]
  %v978 = vld [vmem:[%s0 + $0x57] sm:$0xff]
  %v979 = vld [vmem:[%s0 + $0x5f] sm:$0xff]
  %v980 = vld [vmem:[%s0 + $0x67] sm:$0xff]
  %v981 = vld [vmem:[%s0 + $0x6f] sm:$0xff]
  %v982 = vld [vmem:[%s0 + $0x77] sm:$0xff]
  %v983 = vld [vmem:[%s0 + $0x7f] sm:$0xff]
  %v984 = vld [vmem:[%s0 + $0x87] sm:$0xff]
  %v985 = vld [vmem:[%s0 + $0x8f] sm:$0xff]
  %v986 = vld [vmem:[%s0 + $0x97] sm:$0xff]
  %v987 = vld [vmem:[%s0 + $0x9f] sm:$0xff]
  %v988 = vld [vmem:[%s0 + $0xa7] sm:$0xff]
  %v989 = vld [vmem:[%s0 + $0xaf] sm:$0xff]
  %v990 = vld [vmem:[%s0 + $0xb7] sm:$0xff]
  %v991 = vld [vmem:[%s0 + $0xbf] sm:$0xff]
  %v992 = vld [vmem:[%s0 + $0xc7] sm:$0xff]
  %v993 = vld [vmem:[%s0 + $0xcf] sm:$0xff]
  %v994 = vld [vmem:[%s2 + $0xc] sm:$0xf]
  %v996 = vsel %vm112, %v969, 0
  %v999 = vsel %vm112, %v970, 0
  %v1002 = vsel %vm112, %v971, 0
  %v1005 = vsel %vm112, %v972, 0
  %v1008 = vsel %vm112, %v973, 0
  %v1011 = vsel %vm112, %v974, 0
  %v1014 = vsel %vm112, %v975, 0
  %v1017 = vsel %vm112, %v976, 0
  %v1020 = vsel %vm112, %v977, 0
  %v1023 = vsel %vm112, %v978, 0
  %v1026 = vsel %vm112, %v979, 0
  %v1029 = vsel %vm112, %v980, 0
  %v1032 = vsel %vm112, %v981, 0
  %v1035 = vsel %vm112, %v982, 0
  %v1038 = vsel %vm112, %v983, 0
  %v1041 = vsel %vm112, %v984, 0
  %v1044 = vsel %vm112, %v985, 0
  %v1047 = vsel %vm112, %v986, 0
  %v1050 = vsel %vm112, %v987, 0
  %v1053 = vsel %vm112, %v988, 0
  %v1056 = vsel %vm112, %v989, 0
  %v1059 = vsel %vm112, %v990, 0
  %v1062 = vsel %vm112, %v991, 0
  %v1065 = vsel %vm112, %v992, 0
  %v1068 = vsel %vm112, %v993, 0
  %v1071 = vsel %vm188, %v994, 0
  %1073 = vmatprep.subr.mxu0 0.0
  %1074 = vmatpush1.msra.mxu0 %v1071
  %1075 = vmatprep.subr.mxu0 0.0
  %1076 = vmatpush1.msra.mxu0 0.0
  %1077 = vmatprep.subr.mxu0 0.0
  %1078 = vmatpush1.msra.mxu0 0.0
  %1079 = vmatprep.subr.mxu0 0.0
  %1080 = vmatpush1.msra.mxu0 0.0
  %1081 = vmatprep.subr.mxu0 0.0
  %1082 = vmatpush1.msra.mxu0 0.0
  %1083 = vmatprep.subr.mxu0 0.0
  %1084 = vmatpush1.msra.mxu0 0.0
  %1085 = vmatprep.subr.mxu0 0.0
  %1086 = vmatpush1.msra.mxu0 0.0
  %1087 = vmatprep.subr.mxu0 0.0
  %1088 = vmatpush1.msra.mxu0 0.0
  %1089 = vmatprep.subr.mxu0 0.0
  %1090 = vmatpush1.msra.mxu0 0.0
  %1091 = vmatprep.subr.mxu0 0.0
  %1092 = vmatpush1.msra.mxu0 0.0
  %1093 = vmatprep.subr.mxu0 0.0
  %1094 = vmatpush1.msra.mxu0 0.0
  %1095 = vmatprep.subr.mxu0 0.0
  %1096 = vmatpush1.msra.mxu0 0.0
  %1097 = vmatprep.subr.mxu0 0.0
  %1098 = vmatpush1.msra.mxu0 0.0
  %1099 = vmatprep.subr.mxu0 0.0
  %1100 = vmatpush1.msra.mxu0 0.0
  %1101 = vmatprep.subr.mxu0 0.0
  %1102 = vmatpush1.msra.mxu0 0.0
  %1103 = vmatprep.subr.mxu0 0.0
  %1104 = vmatpush1.msra.mxu0 0.0
  %1105 = vmatprep.subr.mxu0 0.0
  %1106 = vmatpush1.msra.mxu0 0.0
  %1107 = vmatprep.subr.mxu0 0.0
  %1108 = vmatpush1.msra.mxu0 0.0
  %1109 = vmatprep.subr.mxu0 0.0
  %1110 = vmatpush1.msra.mxu0 0.0
  %1111 = vmatprep.subr.mxu0 0.0
  %1112 = vmatpush1.msra.mxu0 0.0
  %1113 = vmatprep.subr.mxu0 0.0
  %1114 = vmatpush1.msra.mxu0 0.0
  %1115 = vmatprep.subr.mxu0 0.0
  %1116 = vmatpush1.msra.mxu0 0.0
  %1117 = vmatprep.subr.mxu0 0.0
  %1118 = vmatpush1.msra.mxu0 0.0
  %1119 = vmatprep.subr.mxu0 0.0
  %1120 = vmatpush1.msra.mxu0 0.0
  %1121 = vmatprep.subr.mxu0 0.0
  %1122 = vmatpush1.msra.mxu0 0.0
  %1123 = vmatprep.subr.mxu0 0.0
  %1124 = vmatpush1.msra.mxu0 0.0
  %1125 = vmatprep.subr.mxu0 0.0
  %1126 = vmatpush1.msra.mxu0 0.0
  %1127 = vmatprep.subr.mxu0 0.0
  %1128 = vmatpush1.msra.mxu0 0.0
  %1129 = vmatprep.subr.mxu0 0.0
  %1130 = vmatpush1.msra.mxu0 0.0
  %1131 = vmatprep.subr.mxu0 0.0
  %1132 = vmatpush1.msra.mxu0 0.0
  %1133 = vmatprep.subr.mxu0 0.0
  %1134 = vmatpush1.msra.mxu0 0.0
  %1135 = vmatprep.subr.mxu0 0.0
  %1136 = vmatpush1.msra.mxu0 0.0
  %1137 = vmatprep.mubr.f32.mxu0 0.0
  %1138 = vmatmul.mubr.f32.gmra.mrb[0].mxu0 %v996
  %v1139 = vpop.f32.mrb[0].mxu0
  %v1140 = vadd.f32 0.0, %v1139
  %v1141 = vpop.f32.mrb[0].mxu0
  %1142 = vmatprep.mubr.f32.mxu0 0.0
  %1143 = vmatmul.mubr.f32.gmra.mrb[0].mxu0 %v999
  %v1144 = vpop.f32.mrb[0].mxu0
  %v1145 = vadd.f32 0.0, %v1144
  %v1146 = vpop.f32.mrb[0].mxu0
  %1147 = vmatprep.mubr.f32.mxu0 0.0
  %1148 = vmatmul.mubr.f32.gmra.mrb[0].mxu0 %v1002
  %v1149 = vpop.f32.mrb[0].mxu0
  %v1150 = vadd.f32 0.0, %v1149
  %v1151 = vpop.f32.mrb[0].mxu0
  %1152 = vmatprep.mubr.f32.mxu0 0.0
  %1153 = vmatmul.mubr.f32.gmra.mrb[0].mxu0 %v1005
  %v1154 = vpop.f32.mrb[0].mxu0
  %v1155 = vadd.f32 0.0, %v1154
  %v1156 = vpop.f32.mrb[0].mxu0
  %1157 = vmatprep.mubr.f32.mxu0 0.0
  %1158 = vmatmul.mubr.f32.gmra.mrb[0].mxu0 %v1008
  %v1159 = vpop.f32.mrb[0].mxu0
  %v1160 = vadd.f32 0.0, %v1159
  %v1161 = vpop.f32.mrb[0].mxu0
  %1162 = vmatprep.mubr.f32.mxu0 0.0
  %1163 = vmatmul.mubr.f32.gmra.mrb[0].mxu0 %v1011
  %v1164 = vpop.f32.mrb[0].mxu0
  %v1165 = vadd.f32 0.0, %v1164
  %v1166 = vpop.f32.mrb[0].mxu0
  %1167 = vmatprep.mubr.f32.mxu0 0.0
  %1168 = vmatmul.mubr.f32.gmra.mrb[0].mxu0 %v1014
  %v1169 = vpop.f32.mrb[0].mxu0
  %v1170 = vadd.f32 0.0, %v1169
  %v1171 = vpop.f32.mrb[0].mxu0
  %1172 = vmatprep.mubr.f32.mxu0 0.0
  %1173 = vmatmul.mubr.f32.gmra.mrb[0].mxu0 %v1017
  %v1174 = vpop.f32.mrb[0].mxu0
  %v1175 = vadd.f32 0.0, %v1174
  %v1176 = vpop.f32.mrb[0].mxu0
  %1177 = vmatprep.mubr.f32.mxu0 0.0
  %1178 = vmatmul.mubr.f32.gmra.mrb[0].mxu0 %v1020
  %v1179 = vpop.f32.mrb[0].mxu0
  %v1180 = vadd.f32 0.0, %v1179
  %v1181 = vpop.f32.mrb[0].mxu0
  %1182 = vmatprep.mubr.f32.mxu0 0.0
  %1183 = vmatmul.mubr.f32.gmra.mrb[0].mxu0 %v1023
  %v1184 = vpop.f32.mrb[0].mxu0
  %v1185 = vadd.f32 0.0, %v1184
  %v1186 = vpop.f32.mrb[0].mxu0
  %1187 = vmatprep.mubr.f32.mxu0 0.0
  %1188 = vmatmul.mubr.f32.gmra.mrb[0].mxu0 %v1026
  %v1189 = vpop.f32.mrb[0].mxu0
  %v1190 = vadd.f32 0.0, %v1189
  %v1191 = vpop.f32.mrb[0].mxu0
  %1192 = vmatprep.mubr.f32.mxu0 0.0
  %1193 = vmatmul.mubr.f32.gmra.mrb[0].mxu0 %v1029
  %v1194 = vpop.f32.mrb[0].mxu0
  %v1195 = vadd.f32 0.0, %v1194
  %v1196 = vpop.f32.mrb[0].mxu0
  %1197 = vmatprep.mubr.f32.mxu0 0.0
  %1198 = vmatmul.mubr.f32.gmra.mrb[0].mxu0 %v1032
  %v1199 = vpop.f32.mrb[0].mxu0
  %v1200 = vadd.f32 0.0, %v1199
  %v1201 = vpop.f32.mrb[0].mxu0
  %1202 = vmatprep.mubr.f32.mxu0 0.0
  %1203 = vmatmul.mubr.f32.gmra.mrb[0].mxu0 %v1035
  %v1204 = vpop.f32.mrb[0].mxu0
  %v1205 = vadd.f32 0.0, %v1204
  %v1206 = vpop.f32.mrb[0].mxu0
  %1207 = vmatprep.mubr.f32.mxu0 0.0
  %1208 = vmatmul.mubr.f32.gmra.mrb[0].mxu0 %v1038
  %v1209 = vpop.f32.mrb[0].mxu0
  %v1210 = vadd.f32 0.0, %v1209
  %v1211 = vpop.f32.mrb[0].mxu0
  %1212 = vmatprep.mubr.f32.mxu0 0.0
  %1213 = vmatmul.mubr.f32.gmra.mrb[0].mxu0 %v1041
  %v1214 = vpop.f32.mrb[0].mxu0
  %v1215 = vadd.f32 0.0, %v1214
  %v1216 = vpop.f32.mrb[0].mxu0
  %1217 = vmatprep.mubr.f32.mxu0 0.0
  %1218 = vmatmul.mubr.f32.gmra.mrb[0].mxu0 %v1044
  %v1219 = vpop.f32.mrb[0].mxu0
  %v1220 = vadd.f32 0.0, %v1219
  %v1221 = vpop.f32.mrb[0].mxu0
  %1222 = vmatprep.mubr.f32.mxu0 0.0
  %1223 = vmatmul.mubr.f32.gmra.mrb[0].mxu0 %v1047
  %v1224 = vpop.f32.mrb[0].mxu0
  %v1225 = vadd.f32 0.0, %v1224
  %v1226 = vpop.f32.mrb[0].mxu0
  %1227 = vmatprep.mubr.f32.mxu0 0.0
  %1228 = vmatmul.mubr.f32.gmra.mrb[0].mxu0 %v1050
  %v1229 = vpop.f32.mrb[0].mxu0
  %v1230 = vadd.f32 0.0, %v1229
  %v1231 = vpop.f32.mrb[0].mxu0
  %1232 = vmatprep.mubr.f32.mxu0 0.0
  %1233 = vmatmul.mubr.f32.gmra.mrb[0].mxu0 %v1053
  %v1234 = vpop.f32.mrb[0].mxu0
  %v1235 = vadd.f32 0.0, %v1234
  %v1236 = vpop.f32.mrb[0].mxu0
  %1237 = vmatprep.mubr.f32.mxu0 0.0
  %1238 = vmatmul.mubr.f32.gmra.mrb[0].mxu0 %v1056
  %v1239 = vpop.f32.mrb[0].mxu0
  %v1240 = vadd.f32 0.0, %v1239
  %v1241 = vpop.f32.mrb[0].mxu0
  %1242 = vmatprep.mubr.f32.mxu0 0.0
  %1243 = vmatmul.mubr.f32.gmra.mrb[0].mxu0 %v1059
  %v1244 = vpop.f32.mrb[0].mxu0
  %v1245 = vadd.f32 0.0, %v1244
  %v1246 = vpop.f32.mrb[0].mxu0
  %1247 = vmatprep.mubr.f32.mxu0 0.0
  %1248 = vmatmul.mubr.f32.gmra.mrb[0].mxu0 %v1062
  %v1249 = vpop.f32.mrb[0].mxu0
  %v1250 = vadd.f32 0.0, %v1249
  %v1251 = vpop.f32.mrb[0].mxu0
  %1252 = vmatprep.mubr.f32.mxu0 0.0
  %1253 = vmatmul.mubr.f32.gmra.mrb[0].mxu0 %v1065
  %v1254 = vpop.f32.mrb[0].mxu0
  %v1255 = vadd.f32 0.0, %v1254
  %v1256 = vpop.f32.mrb[0].mxu0
  %1257 = vmatprep.mubr.f32.mxu0 0.0
  %1258 = vmatmul.mubr.f32.gmra.mrb[0].mxu0 %v1068
  %v1259 = vpop.f32.mrb[0].mxu0
  %v1260 = vadd.f32 0.0, %v1259
  %v1261 = vpop.f32.mrb[0].mxu0
  %1262 = vdwg.mxu0
  %v1263 = vadd.f32 %v944, %v1140
  %v1264 = vadd.f32 %v945, %v1145
  %v1265 = vadd.f32 %v946, %v1150
  %v1266 = vadd.f32 %v947, %v1155
  %v1267 = vadd.f32 %v948, %v1160
  %v1268 = vadd.f32 %v949, %v1165
  %v1269 = vadd.f32 %v950, %v1170
  %v1270 = vadd.f32 %v951, %v1175
  %v1271 = vadd.f32 %v952, %v1180
  %v1272 = vadd.f32 %v953, %v1185
  %v1273 = vadd.f32 %v954, %v1190
  %v1274 = vadd.f32 %v955, %v1195
  %v1275 = vadd.f32 %v956, %v1200
  %v1276 = vadd.f32 %v957, %v1205
  %v1277 = vadd.f32 %v958, %v1210
  %v1278 = vadd.f32 %v959, %v1215
  %v1279 = vadd.f32 %v960, %v1220
  %v1280 = vadd.f32 %v961, %v1225
  %v1281 = vadd.f32 %v962, %v1230
  %v1282 = vadd.f32 %v963, %v1235
  %v1283 = vadd.f32 %v964, %v1240
  %v1284 = vadd.f32 %v965, %v1245
  %v1285 = vadd.f32 %v966, %v1250
  %v1286 = vadd.f32 %v967, %v1255
  %v1287 = vadd.f32 %v968, %v1260
  %v1288 = vld [vmem:[%s0 + $0x10] sm:$0xff]
  %v1289 = vld [vmem:[%s0 + $0x18] sm:$0xff]
  %v1290 = vld [vmem:[%s0 + $0x20] sm:$0xff]
  %v1291 = vld [vmem:[%s0 + $0x28] sm:$0xff]
  %v1292 = vld [vmem:[%s0 + $0x30] sm:$0xff]
  %v1293 = vld [vmem:[%s0 + $0x38] sm:$0xff]
  %v1294 = vld [vmem:[%s0 + $0x40] sm:$0xff]
  %v1295 = vld [vmem:[%s0 + $0x48] sm:$0xff]
  %v1296 = vld [vmem:[%s0 + $0x50] sm:$0xff]
  %v1297 = vld [vmem:[%s0 + $0x58] sm:$0xff]
  %v1298 = vld [vmem:[%s0 + $0x60] sm:$0xff]
  %v1299 = vld [vmem:[%s0 + $0x68] sm:$0xff]
  %v1300 = vld [vmem:[%s0 + $0x70] sm:$0xff]
  %v1301 = vld [vmem:[%s0 + $0x78] sm:$0xff]
  %v1302 = vld [vmem:[%s0 + $0x80] sm:$0xff]
  %v1303 = vld [vmem:[%s0 + $0x88] sm:$0xff]
  %v1304 = vld [vmem:[%s0 + $0x90] sm:$0xff]
  %v1305 = vld [vmem:[%s0 + $0x98] sm:$0xff]
  %v1306 = vld [vmem:[%s0 + $0xa0] sm:$0xff]
  %v1307 = vld [vmem:[%s0 + $0xa8] sm:$0xff]
  %v1308 = vld [vmem:[%s0 + $0xb0] sm:$0xff]
  %v1309 = vld [vmem:[%s0 + $0xb8] sm:$0xff]
  %v1310 = vld [vmem:[%s0 + $0xc0] sm:$0xff]
  %v1311 = vld [vmem:[%s0 + $0xc8] sm:$0xff]
  %v1312 = vld [vmem:[%s0 + $0xd0] sm:$0xff]
  %v1313 = vld [vmem:[%s2 + $0x10] sm:$0xf]
  %v1315 = vsel %vm112, %v1288, 0
  %v1318 = vsel %vm112, %v1289, 0
  %v1321 = vsel %vm112, %v1290, 0
  %v1324 = vsel %vm112, %v1291, 0
  %v1327 = vsel %vm112, %v1292, 0
  %v1330 = vsel %vm112, %v1293, 0
  %v1333 = vsel %vm112, %v1294, 0
  %v1336 = vsel %vm112, %v1295, 0
  %v1339 = vsel %vm112, %v1296, 0
  %v1342 = vsel %vm112, %v1297, 0
  %v1345 = vsel %vm112, %v1298, 0
  %v1348 = vsel %vm112, %v1299, 0
  %v1351 = vsel %vm112, %v1300, 0
  %v1354 = vsel %vm112, %v1301, 0
  %v1357 = vsel %vm112, %v1302, 0
  %v1360 = vsel %vm112, %v1303, 0
  %v1363 = vsel %vm112, %v1304, 0
  %v1366 = vsel %vm112, %v1305, 0
  %v1369 = vsel %vm112, %v1306, 0
  %v1372 = vsel %vm112, %v1307, 0
  %v1375 = vsel %vm112, %v1308, 0
  %v1378 = vsel %vm112, %v1309, 0
  %v1381 = vsel %vm112, %v1310, 0
  %v1384 = vsel %vm112, %v1311, 0
  %v1387 = vsel %vm112, %v1312, 0
  %v1390 = vsel %vm188, %v1313, 0
  %1392 = vmatprep.subr.mxu0 0.0
  %1393 = vmatpush1.msra.mxu0 %v1390
  %1394 = vmatprep.subr.mxu0 0.0
  %1395 = vmatpush1.msra.mxu0 0.0
  %1396 = vmatprep.subr.mxu0 0.0
  %1397 = vmatpush1.msra.mxu0 0.0
  %1398 = vmatprep.subr.mxu0 0.0
  %1399 = vmatpush1.msra.mxu0 0.0
  %1400 = vmatprep.subr.mxu0 0.0
  %1401 = vmatpush1.msra.mxu0 0.0
  %1402 = vmatprep.subr.mxu0 0.0
  %1403 = vmatpush1.msra.mxu0 0.0
  %1404 = vmatprep.subr.mxu0 0.0
  %1405 = vmatpush1.msra.mxu0 0.0
  %1406 = vmatprep.subr.mxu0 0.0
  %1407 = vmatpush1.msra.mxu0 0.0
  %1408 = vmatprep.subr.mxu0 0.0
  %1409 = vmatpush1.msra.mxu0 0.0
  %1410 = vmatprep.subr.mxu0 0.0
  %1411 = vmatpush1.msra.mxu0 0.0
  %1412 = vmatprep.subr.mxu0 0.0
  %1413 = vmatpush1.msra.mxu0 0.0
  %1414 = vmatprep.subr.mxu0 0.0
  %1415 = vmatpush1.msra.mxu0 0.0
  %1416 = vmatprep.subr.mxu0 0.0
  %1417 = vmatpush1.msra.mxu0 0.0
  %1418 = vmatprep.subr.mxu0 0.0
  %1419 = vmatpush1.msra.mxu0 0.0
  %1420 = vmatprep.subr.mxu0 0.0
  %1421 = vmatpush1.msra.mxu0 0.0
  %1422 = vmatprep.subr.mxu0 0.0
  %1423 = vmatpush1.msra.mxu0 0.0
  %1424 = vmatprep.subr.mxu0 0.0
  %1425 = vmatpush1.msra.mxu0 0.0
  %1426 = vmatprep.subr.mxu0 0.0
  %1427 = vmatpush1.msra.mxu0 0.0
  %1428 = vmatprep.subr.mxu0 0.0
  %1429 = vmatpush1.msra.mxu0 0.0
  %1430 = vmatprep.subr.mxu0 0.0
  %1431 = vmatpush1.msra.mxu0 0.0
  %1432 = vmatprep.subr.mxu0 0.0
  %1433 = vmatpush1.msra.mxu0 0.0
  %1434 = vmatprep.subr.mxu0 0.0
  %1435 = vmatpush1.msra.mxu0 0.0
  %1436 = vmatprep.subr.mxu0 0.0
  %1437 = vmatpush1.msra.mxu0 0.0
  %1438 = vmatprep.subr.mxu0 0.0
  %1439 = vmatpush1.msra.mxu0 0.0
  %1440 = vmatprep.subr.mxu0 0.0
  %1441 = vmatpush1.msra.mxu0 0.0
  %1442 = vmatprep.subr.mxu0 0.0
  %1443 = vmatpush1.msra.mxu0 0.0
  %1444 = vmatprep.subr.mxu0 0.0
  %1445 = vmatpush1.msra.mxu0 0.0
  %1446 = vmatprep.subr.mxu0 0.0
  %1447 = vmatpush1.msra.mxu0 0.0
  %1448 = vmatprep.subr.mxu0 0.0
  %1449 = vmatpush1.msra.mxu0 0.0
  %1450 = vmatprep.subr.mxu0 0.0
  %1451 = vmatpush1.msra.mxu0 0.0
  %1452 = vmatprep.subr.mxu0 0.0
  %1453 = vmatpush1.msra.mxu0 0.0
  %1454 = vmatprep.subr.mxu0 0.0
  %1455 = vmatpush1.msra.mxu0 0.0
  %1456 = vmatprep.mubr.f32.mxu0 0.0
  %1457 = vmatmul.mubr.f32.gmra.mrb[0].mxu0 %v1315
  %v1458 = vpop.f32.mrb[0].mxu0
  %v1459 = vadd.f32 0.0, %v1458
  %v1460 = vpop.f32.mrb[0].mxu0
  %1461 = vmatprep.mubr.f32.mxu0 0.0
  %1462 = vmatmul.mubr.f32.gmra.mrb[0].mxu0 %v1318
  %v1463 = vpop.f32.mrb[0].mxu0
  %v1464 = vadd.f32 0.0, %v1463
  %v1465 = vpop.f32.mrb[0].mxu0
  %1466 = vmatprep.mubr.f32.mxu0 0.0
  %1467 = vmatmul.mubr.f32.gmra.mrb[0].mxu0 %v1321
  %v1468 = vpop.f32.mrb[0].mxu0
  %v1469 = vadd.f32 0.0, %v1468
  %v1470 = vpop.f32.mrb[0].mxu0
  %1471 = vmatprep.mubr.f32.mxu0 0.0
  %1472 = vmatmul.mubr.f32.gmra.mrb[0].mxu0 %v1324
  %v1473 = vpop.f32.mrb[0].mxu0
  %v1474 = vadd.f32 0.0, %v1473
  %v1475 = vpop.f32.mrb[0].mxu0
  %1476 = vmatprep.mubr.f32.mxu0 0.0
  %1477 = vmatmul.mubr.f32.gmra.mrb[0].mxu0 %v1327
  %v1478 = vpop.f32.mrb[0].mxu0
  %v1479 = vadd.f32 0.0, %v1478
  %v1480 = vpop.f32.mrb[0].mxu0
  %1481 = vmatprep.mubr.f32.mxu0 0.0
  %1482 = vmatmul.mubr.f32.gmra.mrb[0].mxu0 %v1330
  %v1483 = vpop.f32.mrb[0].mxu0
  %v1484 = vadd.f32 0.0, %v1483
  %v1485 = vpop.f32.mrb[0].mxu0
  %1486 = vmatprep.mubr.f32.mxu0 0.0
  %1487 = vmatmul.mubr.f32.gmra.mrb[0].mxu0 %v1333
  %v1488 = vpop.f32.mrb[0].mxu0
  %v1489 = vadd.f32 0.0, %v1488
  %v1490 = vpop.f32.mrb[0].mxu0
  %1491 = vmatprep.mubr.f32.mxu0 0.0
  %1492 = vmatmul.mubr.f32.gmra.mrb[0].mxu0 %v1336
  %v1493 = vpop.f32.mrb[0].mxu0
  %v1494 = vadd.f32 0.0, %v1493
  %v1495 = vpop.f32.mrb[0].mxu0
  %1496 = vmatprep.mubr.f32.mxu0 0.0
  %1497 = vmatmul.mubr.f32.gmra.mrb[0].mxu0 %v1339
  %v1498 = vpop.f32.mrb[0].mxu0
  %v1499 = vadd.f32 0.0, %v1498
  %v1500 = vpop.f32.mrb[0].mxu0
  %1501 = vmatprep.mubr.f32.mxu0 0.0
  %1502 = vmatmul.mubr.f32.gmra.mrb[0].mxu0 %v1342
  %v1503 = vpop.f32.mrb[0].mxu0
  %v1504 = vadd.f32 0.0, %v1503
  %v1505 = vpop.f32.mrb[0].mxu0
  %1506 = vmatprep.mubr.f32.mxu0 0.0
  %1507 = vmatmul.mubr.f32.gmra.mrb[0].mxu0 %v1345
  %v1508 = vpop.f32.mrb[0].mxu0
  %v1509 = vadd.f32 0.0, %v1508
  %v1510 = vpop.f32.mrb[0].mxu0
  %1511 = vmatprep.mubr.f32.mxu0 0.0
  %1512 = vmatmul.mubr.f32.gmra.mrb[0].mxu0 %v1348
  %v1513 = vpop.f32.mrb[0].mxu0
  %v1514 = vadd.f32 0.0, %v1513
  %v1515 = vpop.f32.mrb[0].mxu0
  %1516 = vmatprep.mubr.f32.mxu0 0.0
  %1517 = vmatmul.mubr.f32.gmra.mrb[0].mxu0 %v1351
  %v1518 = vpop.f32.mrb[0].mxu0
  %v1519 = vadd.f32 0.0, %v1518
  %v1520 = vpop.f32.mrb[0].mxu0
  %1521 = vmatprep.mubr.f32.mxu0 0.0
  %1522 = vmatmul.mubr.f32.gmra.mrb[0].mxu0 %v1354
  %v1523 = vpop.f32.mrb[0].mxu0
  %v1524 = vadd.f32 0.0, %v1523
  %v1525 = vpop.f32.mrb[0].mxu0
  %1526 = vmatprep.mubr.f32.mxu0 0.0
  %1527 = vmatmul.mubr.f32.gmra.mrb[0].mxu0 %v1357
  %v1528 = vpop.f32.mrb[0].mxu0
  %v1529 = vadd.f32 0.0, %v1528
  %v1530 = vpop.f32.mrb[0].mxu0
  %1531 = vmatprep.mubr.f32.mxu0 0.0
  %1532 = vmatmul.mubr.f32.gmra.mrb[0].mxu0 %v1360
  %v1533 = vpop.f32.mrb[0].mxu0
  %v1534 = vadd.f32 0.0, %v1533
  %v1535 = vpop.f32.mrb[0].mxu0
  %1536 = vmatprep.mubr.f32.mxu0 0.0
  %1537 = vmatmul.mubr.f32.gmra.mrb[0].mxu0 %v1363
  %v1538 = vpop.f32.mrb[0].mxu0
  %v1539 = vadd.f32 0.0, %v1538
  %v1540 = vpop.f32.mrb[0].mxu0
  %1541 = vmatprep.mubr.f32.mxu0 0.0
  %1542 = vmatmul.mubr.f32.gmra.mrb[0].mxu0 %v1366
  %v1543 = vpop.f32.mrb[0].mxu0
  %v1544 = vadd.f32 0.0, %v1543
  %v1545 = vpop.f32.mrb[0].mxu0
  %1546 = vmatprep.mubr.f32.mxu0 0.0
  %1547 = vmatmul.mubr.f32.gmra.mrb[0].mxu0 %v1369
  %v1548 = vpop.f32.mrb[0].mxu0
  %v1549 = vadd.f32 0.0, %v1548
  %v1550 = vpop.f32.mrb[0].mxu0
  %1551 = vmatprep.mubr.f32.mxu0 0.0
  %1552 = vmatmul.mubr.f32.gmra.mrb[0].mxu0 %v1372
  %v1553 = vpop.f32.mrb[0].mxu0
  %v1554 = vadd.f32 0.0, %v1553
  %v1555 = vpop.f32.mrb[0].mxu0
  %1556 = vmatprep.mubr.f32.mxu0 0.0
  %1557 = vmatmul.mubr.f32.gmra.mrb[0].mxu0 %v1375
  %v1558 = vpop.f32.mrb[0].mxu0
  %v1559 = vadd.f32 0.0, %v1558
  %v1560 = vpop.f32.mrb[0].mxu0
  %1561 = vmatprep.mubr.f32.mxu0 0.0
  %1562 = vmatmul.mubr.f32.gmra.mrb[0].mxu0 %v1378
  %v1563 = vpop.f32.mrb[0].mxu0
  %v1564 = vadd.f32 0.0, %v1563
  %v1565 = vpop.f32.mrb[0].mxu0
  %1566 = vmatprep.mubr.f32.mxu0 0.0
  %1567 = vmatmul.mubr.f32.gmra.mrb[0].mxu0 %v1381
  %v1568 = vpop.f32.mrb[0].mxu0
  %v1569 = vadd.f32 0.0, %v1568
  %v1570 = vpop.f32.mrb[0].mxu0
  %1571 = vmatprep.mubr.f32.mxu0 0.0
  %1572 = vmatmul.mubr.f32.gmra.mrb[0].mxu0 %v1384
  %v1573 = vpop.f32.mrb[0].mxu0
  %v1574 = vadd.f32 0.0, %v1573
  %v1575 = vpop.f32.mrb[0].mxu0
  %1576 = vmatprep.mubr.f32.mxu0 0.0
  %1577 = vmatmul.mubr.f32.gmra.mrb[0].mxu0 %v1387
  %v1578 = vpop.f32.mrb[0].mxu0
  %v1579 = vadd.f32 0.0, %v1578
  %v1580 = vpop.f32.mrb[0].mxu0
  %1581 = vdwg.mxu0
  %v1582 = vadd.f32 %v1263, %v1459
  %v1583 = vadd.f32 %v1264, %v1464
  %v1584 = vadd.f32 %v1265, %v1469
  %v1585 = vadd.f32 %v1266, %v1474
  %v1586 = vadd.f32 %v1267, %v1479
  %v1587 = vadd.f32 %v1268, %v1484
  %v1588 = vadd.f32 %v1269, %v1489
  %v1589 = vadd.f32 %v1270, %v1494
  %v1590 = vadd.f32 %v1271, %v1499
  %v1591 = vadd.f32 %v1272, %v1504
  %v1592 = vadd.f32 %v1273, %v1509
  %v1593 = vadd.f32 %v1274, %v1514
  %v1594 = vadd.f32 %v1275, %v1519
  %v1595 = vadd.f32 %v1276, %v1524
  %v1596 = vadd.f32 %v1277, %v1529
  %v1597 = vadd.f32 %v1278, %v1534
  %v1598 = vadd.f32 %v1279, %v1539
  %v1599 = vadd.f32 %v1280, %v1544
  %v1600 = vadd.f32 %v1281, %v1549
  %v1601 = vadd.f32 %v1282, %v1554
  %v1602 = vadd.f32 %v1283, %v1559
  %v1603 = vadd.f32 %v1284, %v1564
  %v1604 = vadd.f32 %v1285, %v1569
  %v1605 = vadd.f32 %v1286, %v1574
  %v1606 = vadd.f32 %v1287, %v1579
  %v1607 = vld [vmem:[%s0 + $0x11] sm:$0xff]
  %v1608 = vld [vmem:[%s0 + $0x19] sm:$0xff]
  %v1609 = vld [vmem:[%s0 + $0x21] sm:$0xff]
  %v1610 = vld [vmem:[%s0 + $0x29] sm:$0xff]
  %v1611 = vld [vmem:[%s0 + $0x31] sm:$0xff]
  %v1612 = vld [vmem:[%s0 + $0x39] sm:$0xff]
  %v1613 = vld [vmem:[%s0 + $0x41] sm:$0xff]
  %v1614 = vld [vmem:[%s0 + $0x49] sm:$0xff]
  %v1615 = vld [vmem:[%s0 + $0x51] sm:$0xff]
  %v1616 = vld [vmem:[%s0 + $0x59] sm:$0xff]
  %v1617 = vld [vmem:[%s0 + $0x61] sm:$0xff]
  %v1618 = vld [vmem:[%s0 + $0x69] sm:$0xff]
  %v1619 = vld [vmem:[%s0 + $0x71] sm:$0xff]
  %v1620 = vld [vmem:[%s0 + $0x79] sm:$0xff]
  %v1621 = vld [vmem:[%s0 + $0x81] sm:$0xff]
  %v1622 = vld [vmem:[%s0 + $0x89] sm:$0xff]
  %v1623 = vld [vmem:[%s0 + $0x91] sm:$0xff]
  %v1624 = vld [vmem:[%s0 + $0x99] sm:$0xff]
  %v1625 = vld [vmem:[%s0 + $0xa1] sm:$0xff]
  %v1626 = vld [vmem:[%s0 + $0xa9] sm:$0xff]
  %v1627 = vld [vmem:[%s0 + $0xb1] sm:$0xff]
  %v1628 = vld [vmem:[%s0 + $0xb9] sm:$0xff]
  %v1629 = vld [vmem:[%s0 + $0xc1] sm:$0xff]
  %v1630 = vld [vmem:[%s0 + $0xc9] sm:$0xff]
  %v1631 = vld [vmem:[%s0 + $0xd1] sm:$0xff]
  %v1632 = vld [vmem:[%s2 + $0x14] sm:$0xf]
  %v1634 = vsel %vm112, %v1607, 0
  %v1637 = vsel %vm112, %v1608, 0
  %v1640 = vsel %vm112, %v1609, 0
  %v1643 = vsel %vm112, %v1610, 0
  %v1646 = vsel %vm112, %v1611, 0
  %v1649 = vsel %vm112, %v1612, 0
  %v1652 = vsel %vm112, %v1613, 0
  %v1655 = vsel %vm112, %v1614, 0
  %v1658 = vsel %vm112, %v1615, 0
  %v1661 = vsel %vm112, %v1616, 0
  %v1664 = vsel %vm112, %v1617, 0
  %v1667 = vsel %vm112, %v1618, 0
  %v1670 = vsel %vm112, %v1619, 0
  %v1673 = vsel %vm112, %v1620, 0
  %v1676 = vsel %vm112, %v1621, 0
  %v1679 = vsel %vm112, %v1622, 0
  %v1682 = vsel %vm112, %v1623, 0
  %v1685 = vsel %vm112, %v1624, 0
  %v1688 = vsel %vm112, %v1625, 0
  %v1691 = vsel %vm112, %v1626, 0
  %v1694 = vsel %vm112, %v1627, 0
  %v1697 = vsel %vm112, %v1628, 0
  %v1700 = vsel %vm112, %v1629, 0
  %v1703 = vsel %vm112, %v1630, 0
  %v1706 = vsel %vm112, %v1631, 0
  %v1709 = vsel %vm188, %v1632, 0
  %1711 = vmatprep.subr.mxu0 0.0
  %1712 = vmatpush1.msra.mxu0 %v1709
  %1713 = vmatprep.subr.mxu0 0.0
  %1714 = vmatpush1.msra.mxu0 0.0
  %1715 = vmatprep.subr.mxu0 0.0
  %1716 = vmatpush1.msra.mxu0 0.0
  %1717 = vmatprep.subr.mxu0 0.0
  %1718 = vmatpush1.msra.mxu0 0.0
  %1719 = vmatprep.subr.mxu0 0.0
  %1720 = vmatpush1.msra.mxu0 0.0
  %1721 = vmatprep.subr.mxu0 0.0
  %1722 = vmatpush1.msra.mxu0 0.0
  %1723 = vmatprep.subr.mxu0 0.0
  %1724 = vmatpush1.msra.mxu0 0.0
  %1725 = vmatprep.subr.mxu0 0.0
  %1726 = vmatpush1.msra.mxu0 0.0
  %1727 = vmatprep.subr.mxu0 0.0
  %1728 = vmatpush1.msra.mxu0 0.0
  %1729 = vmatprep.subr.mxu0 0.0
  %1730 = vmatpush1.msra.mxu0 0.0
  %1731 = vmatprep.subr.mxu0 0.0
  %1732 = vmatpush1.msra.mxu0 0.0
  %1733 = vmatprep.subr.mxu0 0.0
  %1734 = vmatpush1.msra.mxu0 0.0
  %1735 = vmatprep.subr.mxu0 0.0
  %1736 = vmatpush1.msra.mxu0 0.0
  %1737 = vmatprep.subr.mxu0 0.0
  %1738 = vmatpush1.msra.mxu0 0.0
  %1739 = vmatprep.subr.mxu0 0.0
  %1740 = vmatpush1.msra.mxu0 0.0
  %1741 = vmatprep.subr.mxu0 0.0
  %1742 = vmatpush1.msra.mxu0 0.0
  %1743 = vmatprep.subr.mxu0 0.0
  %1744 = vmatpush1.msra.mxu0 0.0
  %1745 = vmatprep.subr.mxu0 0.0
  %1746 = vmatpush1.msra.mxu0 0.0
  %1747 = vmatprep.subr.mxu0 0.0
  %1748 = vmatpush1.msra.mxu0 0.0
  %1749 = vmatprep.subr.mxu0 0.0
  %1750 = vmatpush1.msra.mxu0 0.0
  %1751 = vmatprep.subr.mxu0 0.0
  %1752 = vmatpush1.msra.mxu0 0.0
  %1753 = vmatprep.subr.mxu0 0.0
  %1754 = vmatpush1.msra.mxu0 0.0
  %1755 = vmatprep.subr.mxu0 0.0
  %1756 = vmatpush1.msra.mxu0 0.0
  %1757 = vmatprep.subr.mxu0 0.0
  %1758 = vmatpush1.msra.mxu0 0.0
  %1759 = vmatprep.subr.mxu0 0.0
  %1760 = vmatpush1.msra.mxu0 0.0
  %1761 = vmatprep.subr.mxu0 0.0
  %1762 = vmatpush1.msra.mxu0 0.0
  %1763 = vmatprep.subr.mxu0 0.0
  %1764 = vmatpush1.msra.mxu0 0.0
  %1765 = vmatprep.subr.mxu0 0.0
  %1766 = vmatpush1.msra.mxu0 0.0
  %1767 = vmatprep.subr.mxu0 0.0
  %1768 = vmatpush1.msra.mxu0 0.0
  %1769 = vmatprep.subr.mxu0 0.0
  %1770 = vmatpush1.msra.mxu0 0.0
  %1771 = vmatprep.subr.mxu0 0.0
  %1772 = vmatpush1.msra.mxu0 0.0
  %1773 = vmatprep.subr.mxu0 0.0
  %1774 = vmatpush1.msra.mxu0 0.0
  %1775 = vmatprep.mubr.f32.mxu0 0.0
  %1776 = vmatmul.mubr.f32.gmra.mrb[0].mxu0 %v1634
  %v1777 = vpop.f32.mrb[0].mxu0
  %v1778 = vadd.f32 0.0, %v1777
  %v1779 = vpop.f32.mrb[0].mxu0
  %1780 = vmatprep.mubr.f32.mxu0 0.0
  %1781 = vmatmul.mubr.f32.gmra.mrb[0].mxu0 %v1637
  %v1782 = vpop.f32.mrb[0].mxu0
  %v1783 = vadd.f32 0.0, %v1782
  %v1784 = vpop.f32.mrb[0].mxu0
  %1785 = vmatprep.mubr.f32.mxu0 0.0
  %1786 = vmatmul.mubr.f32.gmra.mrb[0].mxu0 %v1640
  %v1787 = vpop.f32.mrb[0].mxu0
  %v1788 = vadd.f32 0.0, %v1787
  %v1789 = vpop.f32.mrb[0].mxu0
  %1790 = vmatprep.mubr.f32.mxu0 0.0
  %1791 = vmatmul.mubr.f32.gmra.mrb[0].mxu0 %v1643
  %v1792 = vpop.f32.mrb[0].mxu0
  %v1793 = vadd.f32 0.0, %v1792
  %v1794 = vpop.f32.mrb[0].mxu0
  %1795 = vmatprep.mubr.f32.mxu0 0.0
  %1796 = vmatmul.mubr.f32.gmra.mrb[0].mxu0 %v1646
  %v1797 = vpop.f32.mrb[0].mxu0
  %v1798 = vadd.f32 0.0, %v1797
  %v1799 = vpop.f32.mrb[0].mxu0
  %1800 = vmatprep.mubr.f32.mxu0 0.0
  %1801 = vmatmul.mubr.f32.gmra.mrb[0].mxu0 %v1649
  %v1802 = vpop.f32.mrb[0].mxu0
  %v1803 = vadd.f32 0.0, %v1802
  %v1804 = vpop.f32.mrb[0].mxu0
  %1805 = vmatprep.mubr.f32.mxu0 0.0
  %1806 = vmatmul.mubr.f32.gmra.mrb[0].mxu0 %v1652
  %v1807 = vpop.f32.mrb[0].mxu0
  %v1808 = vadd.f32 0.0, %v1807
  %v1809 = vpop.f32.mrb[0].mxu0
  %1810 = vmatprep.mubr.f32.mxu0 0.0
  %1811 = vmatmul.mubr.f32.gmra.mrb[0].mxu0 %v1655
  %v1812 = vpop.f32.mrb[0].mxu0
  %v1813 = vadd.f32 0.0, %v1812
  %v1814 = vpop.f32.mrb[0].mxu0
  %1815 = vmatprep.mubr.f32.mxu0 0.0
  %1816 = vmatmul.mubr.f32.gmra.mrb[0].mxu0 %v1658
  %v1817 = vpop.f32.mrb[0].mxu0
  %v1818 = vadd.f32 0.0, %v1817
  %v1819 = vpop.f32.mrb[0].mxu0
  %1820 = vmatprep.mubr.f32.mxu0 0.0
  %1821 = vmatmul.mubr.f32.gmra.mrb[0].mxu0 %v1661
  %v1822 = vpop.f32.mrb[0].mxu0
  %v1823 = vadd.f32 0.0, %v1822
  %v1824 = vpop.f32.mrb[0].mxu0
  %1825 = vmatprep.mubr.f32.mxu0 0.0
  %1826 = vmatmul.mubr.f32.gmra.mrb[0].mxu0 %v1664
  %v1827 = vpop.f32.mrb[0].mxu0
  %v1828 = vadd.f32 0.0, %v1827
  %v1829 = vpop.f32.mrb[0].mxu0
  %1830 = vmatprep.mubr.f32.mxu0 0.0
  %1831 = vmatmul.mubr.f32.gmra.mrb[0].mxu0 %v1667
  %v1832 = vpop.f32.mrb[0].mxu0
  %v1833 = vadd.f32 0.0, %v1832
  %v1834 = vpop.f32.mrb[0].mxu0
  %1835 = vmatprep.mubr.f32.mxu0 0.0
  %1836 = vmatmul.mubr.f32.gmra.mrb[0].mxu0 %v1670
  %v1837 = vpop.f32.mrb[0].mxu0
  %v1838 = vadd.f32 0.0, %v1837
  %v1839 = vpop.f32.mrb[0].mxu0
  %1840 = vmatprep.mubr.f32.mxu0 0.0
  %1841 = vmatmul.mubr.f32.gmra.mrb[0].mxu0 %v1673
  %v1842 = vpop.f32.mrb[0].mxu0
  %v1843 = vadd.f32 0.0, %v1842
  %v1844 = vpop.f32.mrb[0].mxu0
  %1845 = vmatprep.mubr.f32.mxu0 0.0
  %1846 = vmatmul.mubr.f32.gmra.mrb[0].mxu0 %v1676
  %v1847 = vpop.f32.mrb[0].mxu0
  %v1848 = vadd.f32 0.0, %v1847
  %v1849 = vpop.f32.mrb[0].mxu0
  %1850 = vmatprep.mubr.f32.mxu0 0.0
  %1851 = vmatmul.mubr.f32.gmra.mrb[0].mxu0 %v1679
  %v1852 = vpop.f32.mrb[0].mxu0
  %v1853 = vadd.f32 0.0, %v1852
  %v1854 = vpop.f32.mrb[0].mxu0
  %1855 = vmatprep.mubr.f32.mxu0 0.0
  %1856 = vmatmul.mubr.f32.gmra.mrb[0].mxu0 %v1682
  %v1857 = vpop.f32.mrb[0].mxu0
  %v1858 = vadd.f32 0.0, %v1857
  %v1859 = vpop.f32.mrb[0].mxu0
  %1860 = vmatprep.mubr.f32.mxu0 0.0
  %1861 = vmatmul.mubr.f32.gmra.mrb[0].mxu0 %v1685
  %v1862 = vpop.f32.mrb[0].mxu0
  %v1863 = vadd.f32 0.0, %v1862
  %v1864 = vpop.f32.mrb[0].mxu0
  %1865 = vmatprep.mubr.f32.mxu0 0.0
  %1866 = vmatmul.mubr.f32.gmra.mrb[0].mxu0 %v1688
  %v1867 = vpop.f32.mrb[0].mxu0
  %v1868 = vadd.f32 0.0, %v1867
  %v1869 = vpop.f32.mrb[0].mxu0
  %1870 = vmatprep.mubr.f32.mxu0 0.0
  %1871 = vmatmul.mubr.f32.gmra.mrb[0].mxu0 %v1691
  %v1872 = vpop.f32.mrb[0].mxu0
  %v1873 = vadd.f32 0.0, %v1872
  %v1874 = vpop.f32.mrb[0].mxu0
  %1875 = vmatprep.mubr.f32.mxu0 0.0
  %1876 = vmatmul.mubr.f32.gmra.mrb[0].mxu0 %v1694
  %v1877 = vpop.f32.mrb[0].mxu0
  %v1878 = vadd.f32 0.0, %v1877
  %v1879 = vpop.f32.mrb[0].mxu0
  %1880 = vmatprep.mubr.f32.mxu0 0.0
  %1881 = vmatmul.mubr.f32.gmra.mrb[0].mxu0 %v1697
  %v1882 = vpop.f32.mrb[0].mxu0
  %v1883 = vadd.f32 0.0, %v1882
  %v1884 = vpop.f32.mrb[0].mxu0
  %1885 = vmatprep.mubr.f32.mxu0 0.0
  %1886 = vmatmul.mubr.f32.gmra.mrb[0].mxu0 %v1700
  %v1887 = vpop.f32.mrb[0].mxu0
  %v1888 = vadd.f32 0.0, %v1887
  %v1889 = vpop.f32.mrb[0].mxu0
  %1890 = vmatprep.mubr.f32.mxu0 0.0
  %1891 = vmatmul.mubr.f32.gmra.mrb[0].mxu0 %v1703
  %v1892 = vpop.f32.mrb[0].mxu0
  %v1893 = vadd.f32 0.0, %v1892
  %v1894 = vpop.f32.mrb[0].mxu0
  %1895 = vmatprep.mubr.f32.mxu0 0.0
  %1896 = vmatmul.mubr.f32.gmra.mrb[0].mxu0 %v1706
  %v1897 = vpop.f32.mrb[0].mxu0
  %v1898 = vadd.f32 0.0, %v1897
  %v1899 = vpop.f32.mrb[0].mxu0
  %1900 = vdwg.mxu0
  %v1901 = vadd.f32 %v1582, %v1778
  %v1902 = vadd.f32 %v1583, %v1783
  %v1903 = vadd.f32 %v1584, %v1788
  %v1904 = vadd.f32 %v1585, %v1793
  %v1905 = vadd.f32 %v1586, %v1798
  %v1906 = vadd.f32 %v1587, %v1803
  %v1907 = vadd.f32 %v1588, %v1808
  %v1908 = vadd.f32 %v1589, %v1813
  %v1909 = vadd.f32 %v1590, %v1818
  %v1910 = vadd.f32 %v1591, %v1823
  %v1911 = vadd.f32 %v1592, %v1828
  %v1912 = vadd.f32 %v1593, %v1833
  %v1913 = vadd.f32 %v1594, %v1838
  %v1914 = vadd.f32 %v1595, %v1843
  %v1915 = vadd.f32 %v1596, %v1848
  %v1916 = vadd.f32 %v1597, %v1853
  %v1917 = vadd.f32 %v1598, %v1858
  %v1918 = vadd.f32 %v1599, %v1863
  %v1919 = vadd.f32 %v1600, %v1868
  %v1920 = vadd.f32 %v1601, %v1873
  %v1921 = vadd.f32 %v1602, %v1878
  %v1922 = vadd.f32 %v1603, %v1883
  %v1923 = vadd.f32 %v1604, %v1888
  %v1924 = vadd.f32 %v1605, %v1893
  %v1925 = vadd.f32 %v1606, %v1898
  %v1926 = vld [vmem:[%s0 + $0x19] sm:$0xff]
  %v1927 = vld [vmem:[%s0 + $0x21] sm:$0xff]
  %v1928 = vld [vmem:[%s0 + $0x29] sm:$0xff]
  %v1929 = vld [vmem:[%s0 + $0x31] sm:$0xff]
  %v1930 = vld [vmem:[%s0 + $0x39] sm:$0xff]
  %v1931 = vld [vmem:[%s0 + $0x41] sm:$0xff]
  %v1932 = vld [vmem:[%s0 + $0x49] sm:$0xff]
  %v1933 = vld [vmem:[%s0 + $0x51] sm:$0xff]
  %v1934 = vld [vmem:[%s0 + $0x59] sm:$0xff]
  %v1935 = vld [vmem:[%s0 + $0x61] sm:$0xff]
  %v1936 = vld [vmem:[%s0 + $0x69] sm:$0xff]
  %v1937 = vld [vmem:[%s0 + $0x71] sm:$0xff]
  %v1938 = vld [vmem:[%s0 + $0x79] sm:$0xff]
  %v1939 = vld [vmem:[%s0 + $0x81] sm:$0xff]
  %v1940 = vld [vmem:[%s0 + $0x89] sm:$0xff]
  %v1941 = vld [vmem:[%s0 + $0x91] sm:$0xff]
  %v1942 = vld [vmem:[%s0 + $0x99] sm:$0xff]
  %v1943 = vld [vmem:[%s0 + $0xa1] sm:$0xff]
  %v1944 = vld [vmem:[%s0 + $0xa9] sm:$0xff]
  %v1945 = vld [vmem:[%s0 + $0xb1] sm:$0xff]
  %v1946 = vld [vmem:[%s0 + $0xb9] sm:$0xff]
  %v1947 = vld [vmem:[%s0 + $0xc1] sm:$0xff]
  %v1948 = vld [vmem:[%s0 + $0xc9] sm:$0xff]
  %v1949 = vld [vmem:[%s0 + $0xd1] sm:$0xff]
  %v1950 = vld [vmem:[%s0 + $0xd9] sm:$0xff]
  %v1951 = vld [vmem:[%s2 + $0x18] sm:$0xf]
  %v1953 = vsel %vm112, %v1926, 0
  %v1956 = vsel %vm112, %v1927, 0
  %v1959 = vsel %vm112, %v1928, 0
  %v1962 = vsel %vm112, %v1929, 0
  %v1965 = vsel %vm112, %v1930, 0
  %v1968 = vsel %vm112, %v1931, 0
  %v1971 = vsel %vm112, %v1932, 0
  %v1974 = vsel %vm112, %v1933, 0
  %v1977 = vsel %vm112, %v1934, 0
  %v1980 = vsel %vm112, %v1935, 0
  %v1983 = vsel %vm112, %v1936, 0
  %v1986 = vsel %vm112, %v1937, 0
  %v1989 = vsel %vm112, %v1938, 0
  %v1992 = vsel %vm112, %v1939, 0
  %v1995 = vsel %vm112, %v1940, 0
  %v1998 = vsel %vm112, %v1941, 0
  %v2001 = vsel %vm112, %v1942, 0
  %v2004 = vsel %vm112, %v1943, 0
  %v2007 = vsel %vm112, %v1944, 0
  %v2010 = vsel %vm112, %v1945, 0
  %v2013 = vsel %vm112, %v1946, 0
  %v2016 = vsel %vm112, %v1947, 0
  %v2019 = vsel %vm112, %v1948, 0
  %v2022 = vsel %vm112, %v1949, 0
  %v2025 = vsel %vm112, %v1950, 0
  %v2028 = vsel %vm188, %v1951, 0
  %2030 = vmatprep.subr.mxu0 0.0
  %2031 = vmatpush1.msra.mxu0 %v2028
  %2032 = vmatprep.subr.mxu0 0.0
  %2033 = vmatpush1.msra.mxu0 0.0
  %2034 = vmatprep.subr.mxu0 0.0
  %2035 = vmatpush1.msra.mxu0 0.0
  %2036 = vmatprep.subr.mxu0 0.0
  %2037 = vmatpush1.msra.mxu0 0.0
  %2038 = vmatprep.subr.mxu0 0.0
  %2039 = vmatpush1.msra.mxu0 0.0
  %2040 = vmatprep.subr.mxu0 0.0
  %2041 = vmatpush1.msra.mxu0 0.0
  %2042 = vmatprep.subr.mxu0 0.0
  %2043 = vmatpush1.msra.mxu0 0.0
  %2044 = vmatprep.subr.mxu0 0.0
  %2045 = vmatpush1.msra.mxu0 0.0
  %2046 = vmatprep.subr.mxu0 0.0
  %2047 = vmatpush1.msra.mxu0 0.0
  %2048 = vmatprep.subr.mxu0 0.0
  %2049 = vmatpush1.msra.mxu0 0.0
  %2050 = vmatprep.subr.mxu0 0.0
  %2051 = vmatpush1.msra.mxu0 0.0
  %2052 = vmatprep.subr.mxu0 0.0
  %2053 = vmatpush1.msra.mxu0 0.0
  %2054 = vmatprep.subr.mxu0 0.0
  %2055 = vmatpush1.msra.mxu0 0.0
  %2056 = vmatprep.subr.mxu0 0.0
  %2057 = vmatpush1.msra.mxu0 0.0
  %2058 = vmatprep.subr.mxu0 0.0
  %2059 = vmatpush1.msra.mxu0 0.0
  %2060 = vmatprep.subr.mxu0 0.0
  %2061 = vmatpush1.msra.mxu0 0.0
  %2062 = vmatprep.subr.mxu0 0.0
  %2063 = vmatpush1.msra.mxu0 0.0
  %2064 = vmatprep.subr.mxu0 0.0
  %2065 = vmatpush1.msra.mxu0 0.0
  %2066 = vmatprep.subr.mxu0 0.0
  %2067 = vmatpush1.msra.mxu0 0.0
  %2068 = vmatprep.subr.mxu0 0.0
  %2069 = vmatpush1.msra.mxu0 0.0
  %2070 = vmatprep.subr.mxu0 0.0
  %2071 = vmatpush1.msra.mxu0 0.0
  %2072 = vmatprep.subr.mxu0 0.0
  %2073 = vmatpush1.msra.mxu0 0.0
  %2074 = vmatprep.subr.mxu0 0.0
  %2075 = vmatpush1.msra.mxu0 0.0
  %2076 = vmatprep.subr.mxu0 0.0
  %2077 = vmatpush1.msra.mxu0 0.0
  %2078 = vmatprep.subr.mxu0 0.0
  %2079 = vmatpush1.msra.mxu0 0.0
  %2080 = vmatprep.subr.mxu0 0.0
  %2081 = vmatpush1.msra.mxu0 0.0
  %2082 = vmatprep.subr.mxu0 0.0
  %2083 = vmatpush1.msra.mxu0 0.0
  %2084 = vmatprep.subr.mxu0 0.0
  %2085 = vmatpush1.msra.mxu0 0.0
  %2086 = vmatprep.subr.mxu0 0.0
  %2087 = vmatpush1.msra.mxu0 0.0
  %2088 = vmatprep.subr.mxu0 0.0
  %2089 = vmatpush1.msra.mxu0 0.0
  %2090 = vmatprep.subr.mxu0 0.0
  %2091 = vmatpush1.msra.mxu0 0.0
  %2092 = vmatprep.subr.mxu0 0.0
  %2093 = vmatpush1.msra.mxu0 0.0
  %2094 = vmatprep.mubr.f32.mxu0 0.0
  %2095 = vmatmul.mubr.f32.gmra.mrb[0].mxu0 %v1953
  %v2096 = vpop.f32.mrb[0].mxu0
  %v2097 = vadd.f32 0.0, %v2096
  %v2098 = vpop.f32.mrb[0].mxu0
  %2099 = vmatprep.mubr.f32.mxu0 0.0
  %2100 = vmatmul.mubr.f32.gmra.mrb[0].mxu0 %v1956
  %v2101 = vpop.f32.mrb[0].mxu0
  %v2102 = vadd.f32 0.0, %v2101
  %v2103 = vpop.f32.mrb[0].mxu0
  %2104 = vmatprep.mubr.f32.mxu0 0.0
  %2105 = vmatmul.mubr.f32.gmra.mrb[0].mxu0 %v1959
  %v2106 = vpop.f32.mrb[0].mxu0
  %v2107 = vadd.f32 0.0, %v2106
  %v2108 = vpop.f32.mrb[0].mxu0
  %2109 = vmatprep.mubr.f32.mxu0 0.0
  %2110 = vmatmul.mubr.f32.gmra.mrb[0].mxu0 %v1962
  %v2111 = vpop.f32.mrb[0].mxu0
  %v2112 = vadd.f32 0.0, %v2111
  %v2113 = vpop.f32.mrb[0].mxu0
  %2114 = vmatprep.mubr.f32.mxu0 0.0
  %2115 = vmatmul.mubr.f32.gmra.mrb[0].mxu0 %v1965
  %v2116 = vpop.f32.mrb[0].mxu0
  %v2117 = vadd.f32 0.0, %v2116
  %v2118 = vpop.f32.mrb[0].mxu0
  %2119 = vmatprep.mubr.f32.mxu0 0.0
  %2120 = vmatmul.mubr.f32.gmra.mrb[0].mxu0 %v1968
  %v2121 = vpop.f32.mrb[0].mxu0
  %v2122 = vadd.f32 0.0, %v2121
  %v2123 = vpop.f32.mrb[0].mxu0
  %2124 = vmatprep.mubr.f32.mxu0 0.0
  %2125 = vmatmul.mubr.f32.gmra.mrb[0].mxu0 %v1971
  %v2126 = vpop.f32.mrb[0].mxu0
  %v2127 = vadd.f32 0.0, %v2126
  %v2128 = vpop.f32.mrb[0].mxu0
  %2129 = vmatprep.mubr.f32.mxu0 0.0
  %2130 = vmatmul.mubr.f32.gmra.mrb[0].mxu0 %v1974
  %v2131 = vpop.f32.mrb[0].mxu0
  %v2132 = vadd.f32 0.0, %v2131
  %v2133 = vpop.f32.mrb[0].mxu0
  %2134 = vmatprep.mubr.f32.mxu0 0.0
  %2135 = vmatmul.mubr.f32.gmra.mrb[0].mxu0 %v1977
  %v2136 = vpop.f32.mrb[0].mxu0
  %v2137 = vadd.f32 0.0, %v2136
  %v2138 = vpop.f32.mrb[0].mxu0
  %2139 = vmatprep.mubr.f32.mxu0 0.0
  %2140 = vmatmul.mubr.f32.gmra.mrb[0].mxu0 %v1980
  %v2141 = vpop.f32.mrb[0].mxu0
  %v2142 = vadd.f32 0.0, %v2141
  %v2143 = vpop.f32.mrb[0].mxu0
  %2144 = vmatprep.mubr.f32.mxu0 0.0
  %2145 = vmatmul.mubr.f32.gmra.mrb[0].mxu0 %v1983
  %v2146 = vpop.f32.mrb[0].mxu0
  %v2147 = vadd.f32 0.0, %v2146
  %v2148 = vpop.f32.mrb[0].mxu0
  %2149 = vmatprep.mubr.f32.mxu0 0.0
  %2150 = vmatmul.mubr.f32.gmra.mrb[0].mxu0 %v1986
  %v2151 = vpop.f32.mrb[0].mxu0
  %v2152 = vadd.f32 0.0, %v2151
  %v2153 = vpop.f32.mrb[0].mxu0
  %2154 = vmatprep.mubr.f32.mxu0 0.0
  %2155 = vmatmul.mubr.f32.gmra.mrb[0].mxu0 %v1989
  %v2156 = vpop.f32.mrb[0].mxu0
  %v2157 = vadd.f32 0.0, %v2156
  %v2158 = vpop.f32.mrb[0].mxu0
  %2159 = vmatprep.mubr.f32.mxu0 0.0
  %2160 = vmatmul.mubr.f32.gmra.mrb[0].mxu0 %v1992
  %v2161 = vpop.f32.mrb[0].mxu0
  %v2162 = vadd.f32 0.0, %v2161
  %v2163 = vpop.f32.mrb[0].mxu0
  %2164 = vmatprep.mubr.f32.mxu0 0.0
  %2165 = vmatmul.mubr.f32.gmra.mrb[0].mxu0 %v1995
  %v2166 = vpop.f32.mrb[0].mxu0
  %v2167 = vadd.f32 0.0, %v2166
  %v2168 = vpop.f32.mrb[0].mxu0
  %2169 = vmatprep.mubr.f32.mxu0 0.0
  %2170 = vmatmul.mubr.f32.gmra.mrb[0].mxu0 %v1998
  %v2171 = vpop.f32.mrb[0].mxu0
  %v2172 = vadd.f32 0.0, %v2171
  %v2173 = vpop.f32.mrb[0].mxu0
  %2174 = vmatprep.mubr.f32.mxu0 0.0
  %2175 = vmatmul.mubr.f32.gmra.mrb[0].mxu0 %v2001
  %v2176 = vpop.f32.mrb[0].mxu0
  %v2177 = vadd.f32 0.0, %v2176
  %v2178 = vpop.f32.mrb[0].mxu0
  %2179 = vmatprep.mubr.f32.mxu0 0.0
  %2180 = vmatmul.mubr.f32.gmra.mrb[0].mxu0 %v2004
  %v2181 = vpop.f32.mrb[0].mxu0
  %v2182 = vadd.f32 0.0, %v2181
  %v2183 = vpop.f32.mrb[0].mxu0
  %2184 = vmatprep.mubr.f32.mxu0 0.0
  %2185 = vmatmul.mubr.f32.gmra.mrb[0].mxu0 %v2007
  %v2186 = vpop.f32.mrb[0].mxu0
  %v2187 = vadd.f32 0.0, %v2186
  %v2188 = vpop.f32.mrb[0].mxu0
  %2189 = vmatprep.mubr.f32.mxu0 0.0
  %2190 = vmatmul.mubr.f32.gmra.mrb[0].mxu0 %v2010
  %v2191 = vpop.f32.mrb[0].mxu0
  %v2192 = vadd.f32 0.0, %v2191
  %v2193 = vpop.f32.mrb[0].mxu0
  %2194 = vmatprep.mubr.f32.mxu0 0.0
  %2195 = vmatmul.mubr.f32.gmra.mrb[0].mxu0 %v2013
  %v2196 = vpop.f32.mrb[0].mxu0
  %v2197 = vadd.f32 0.0, %v2196
  %v2198 = vpop.f32.mrb[0].mxu0
  %2199 = vmatprep.mubr.f32.mxu0 0.0
  %2200 = vmatmul.mubr.f32.gmra.mrb[0].mxu0 %v2016
  %v2201 = vpop.f32.mrb[0].mxu0
  %v2202 = vadd.f32 0.0, %v2201
  %v2203 = vpop.f32.mrb[0].mxu0
  %2204 = vmatprep.mubr.f32.mxu0 0.0
  %2205 = vmatmul.mubr.f32.gmra.mrb[0].mxu0 %v2019
  %v2206 = vpop.f32.mrb[0].mxu0
  %v2207 = vadd.f32 0.0, %v2206
  %v2208 = vpop.f32.mrb[0].mxu0
  %2209 = vmatprep.mubr.f32.mxu0 0.0
  %2210 = vmatmul.mubr.f32.gmra.mrb[0].mxu0 %v2022
  %v2211 = vpop.f32.mrb[0].mxu0
  %v2212 = vadd.f32 0.0, %v2211
  %v2213 = vpop.f32.mrb[0].mxu0
  %2214 = vmatprep.mubr.f32.mxu0 0.0
  %2215 = vmatmul.mubr.f32.gmra.mrb[0].mxu0 %v2025
  %v2216 = vpop.f32.mrb[0].mxu0
  %v2217 = vadd.f32 0.0, %v2216
  %v2218 = vpop.f32.mrb[0].mxu0
  %2219 = vdwg.mxu0
  %v2220 = vadd.f32 %v1901, %v2097
  %v2221 = vadd.f32 %v1902, %v2102
  %v2222 = vadd.f32 %v1903, %v2107
  %v2223 = vadd.f32 %v1904, %v2112
  %v2224 = vadd.f32 %v1905, %v2117
  %v2225 = vadd.f32 %v1906, %v2122
  %v2226 = vadd.f32 %v1907, %v2127
  %v2227 = vadd.f32 %v1908, %v2132
  %v2228 = vadd.f32 %v1909, %v2137
  %v2229 = vadd.f32 %v1910, %v2142
  %v2230 = vadd.f32 %v1911, %v2147
  %v2231 = vadd.f32 %v1912, %v2152
  %v2232 = vadd.f32 %v1913, %v2157
  %v2233 = vadd.f32 %v1914, %v2162
  %v2234 = vadd.f32 %v1915, %v2167
  %v2235 = vadd.f32 %v1916, %v2172
  %v2236 = vadd.f32 %v1917, %v2177
  %v2237 = vadd.f32 %v1918, %v2182
  %v2238 = vadd.f32 %v1919, %v2187
  %v2239 = vadd.f32 %v1920, %v2192
  %v2240 = vadd.f32 %v1921, %v2197
  %v2241 = vadd.f32 %v1922, %v2202
  %v2242 = vadd.f32 %v1923, %v2207
  %v2243 = vadd.f32 %v1924, %v2212
  %v2244 = vadd.f32 %v1925, %v2217
  %v2245 = vld [vmem:[%s0 + $0x1a] sm:$0xff]
  %v2246 = vld [vmem:[%s0 + $0x22] sm:$0xff]
  %v2247 = vld [vmem:[%s0 + $0x2a] sm:$0xff]
  %v2248 = vld [vmem:[%s0 + $0x32] sm:$0xff]
  %v2249 = vld [vmem:[%s0 + $0x3a] sm:$0xff]
  %v2250 = vld [vmem:[%s0 + $0x42] sm:$0xff]
  %v2251 = vld [vmem:[%s0 + $0x4a] sm:$0xff]
  %v2252 = vld [vmem:[%s0 + $0x52] sm:$0xff]
  %v2253 = vld [vmem:[%s0 + $0x5a] sm:$0xff]
  %v2254 = vld [vmem:[%s0 + $0x62] sm:$0xff]
  %v2255 = vld [vmem:[%s0 + $0x6a] sm:$0xff]
  %v2256 = vld [vmem:[%s0 + $0x72] sm:$0xff]
  %v2257 = vld [vmem:[%s0 + $0x7a] sm:$0xff]
  %v2258 = vld [vmem:[%s0 + $0x82] sm:$0xff]
  %v2259 = vld [vmem:[%s0 + $0x8a] sm:$0xff]
  %v2260 = vld [vmem:[%s0 + $0x92] sm:$0xff]
  %v2261 = vld [vmem:[%s0 + $0x9a] sm:$0xff]
  %v2262 = vld [vmem:[%s0 + $0xa2] sm:$0xff]
  %v2263 = vld [vmem:[%s0 + $0xaa] sm:$0xff]
  %v2264 = vld [vmem:[%s0 + $0xb2] sm:$0xff]
  %v2265 = vld [vmem:[%s0 + $0xba] sm:$0xff]
  %v2266 = vld [vmem:[%s0 + $0xc2] sm:$0xff]
  %v2267 = vld [vmem:[%s0 + $0xca] sm:$0xff]
  %v2268 = vld [vmem:[%s0 + $0xd2] sm:$0xff]
  %v2269 = vld [vmem:[%s0 + $0xda] sm:$0xff]
  %v2270 = vld [vmem:[%s2 + $0x1c] sm:$0xf]
  %v2272 = vsel %vm112, %v2245, 0
  %v2275 = vsel %vm112, %v2246, 0
  %v2278 = vsel %vm112, %v2247, 0
  %v2281 = vsel %vm112, %v2248, 0
  %v2284 = vsel %vm112, %v2249, 0
  %v2287 = vsel %vm112, %v2250, 0
  %v2290 = vsel %vm112, %v2251, 0
  %v2293 = vsel %vm112, %v2252, 0
  %v2296 = vsel %vm112, %v2253, 0
  %v2299 = vsel %vm112, %v2254, 0
  %v2302 = vsel %vm112, %v2255, 0
  %v2305 = vsel %vm112, %v2256, 0
  %v2308 = vsel %vm112, %v2257, 0
  %v2311 = vsel %vm112, %v2258, 0
  %v2314 = vsel %vm112, %v2259, 0
  %v2317 = vsel %vm112, %v2260, 0
  %v2320 = vsel %vm112, %v2261, 0
  %v2323 = vsel %vm112, %v2262, 0
  %v2326 = vsel %vm112, %v2263, 0
  %v2329 = vsel %vm112, %v2264, 0
  %v2332 = vsel %vm112, %v2265, 0
  %v2335 = vsel %vm112, %v2266, 0
  %v2338 = vsel %vm112, %v2267, 0
  %v2341 = vsel %vm112, %v2268, 0
  %v2344 = vsel %vm112, %v2269, 0
  %v2347 = vsel %vm188, %v2270, 0
  %2349 = vmatprep.subr.mxu0 0.0
  %2350 = vmatpush1.msra.mxu0 %v2347
  %2351 = vmatprep.subr.mxu0 0.0
  %2352 = vmatpush1.msra.mxu0 0.0
  %2353 = vmatprep.subr.mxu0 0.0
  %2354 = vmatpush1.msra.mxu0 0.0
  %2355 = vmatprep.subr.mxu0 0.0
  %2356 = vmatpush1.msra.mxu0 0.0
  %2357 = vmatprep.subr.mxu0 0.0
  %2358 = vmatpush1.msra.mxu0 0.0
  %2359 = vmatprep.subr.mxu0 0.0
  %2360 = vmatpush1.msra.mxu0 0.0
  %2361 = vmatprep.subr.mxu0 0.0
  %2362 = vmatpush1.msra.mxu0 0.0
  %2363 = vmatprep.subr.mxu0 0.0
  %2364 = vmatpush1.msra.mxu0 0.0
  %2365 = vmatprep.subr.mxu0 0.0
  %2366 = vmatpush1.msra.mxu0 0.0
  %2367 = vmatprep.subr.mxu0 0.0
  %2368 = vmatpush1.msra.mxu0 0.0
  %2369 = vmatprep.subr.mxu0 0.0
  %2370 = vmatpush1.msra.mxu0 0.0
  %2371 = vmatprep.subr.mxu0 0.0
  %2372 = vmatpush1.msra.mxu0 0.0
  %2373 = vmatprep.subr.mxu0 0.0
  %2374 = vmatpush1.msra.mxu0 0.0
  %2375 = vmatprep.subr.mxu0 0.0
  %2376 = vmatpush1.msra.mxu0 0.0
  %2377 = vmatprep.subr.mxu0 0.0
  %2378 = vmatpush1.msra.mxu0 0.0
  %2379 = vmatprep.subr.mxu0 0.0
  %2380 = vmatpush1.msra.mxu0 0.0
  %2381 = vmatprep.subr.mxu0 0.0
  %2382 = vmatpush1.msra.mxu0 0.0
  %2383 = vmatprep.subr.mxu0 0.0
  %2384 = vmatpush1.msra.mxu0 0.0
  %2385 = vmatprep.subr.mxu0 0.0
  %2386 = vmatpush1.msra.mxu0 0.0
  %2387 = vmatprep.subr.mxu0 0.0
  %2388 = vmatpush1.msra.mxu0 0.0
  %2389 = vmatprep.subr.mxu0 0.0
  %2390 = vmatpush1.msra.mxu0 0.0
  %2391 = vmatprep.subr.mxu0 0.0
  %2392 = vmatpush1.msra.mxu0 0.0
  %2393 = vmatprep.subr.mxu0 0.0
  %2394 = vmatpush1.msra.mxu0 0.0
  %2395 = vmatprep.subr.mxu0 0.0
  %2396 = vmatpush1.msra.mxu0 0.0
  %2397 = vmatprep.subr.mxu0 0.0
  %2398 = vmatpush1.msra.mxu0 0.0
  %2399 = vmatprep.subr.mxu0 0.0
  %2400 = vmatpush1.msra.mxu0 0.0
  %2401 = vmatprep.subr.mxu0 0.0
  %2402 = vmatpush1.msra.mxu0 0.0
  %2403 = vmatprep.subr.mxu0 0.0
  %2404 = vmatpush1.msra.mxu0 0.0
  %2405 = vmatprep.subr.mxu0 0.0
  %2406 = vmatpush1.msra.mxu0 0.0
  %2407 = vmatprep.subr.mxu0 0.0
  %2408 = vmatpush1.msra.mxu0 0.0
  %2409 = vmatprep.subr.mxu0 0.0
  %2410 = vmatpush1.msra.mxu0 0.0
  %2411 = vmatprep.subr.mxu0 0.0
  %2412 = vmatpush1.msra.mxu0 0.0
  %2413 = vmatprep.mubr.f32.mxu0 0.0
  %2414 = vmatmul.mubr.f32.gmra.mrb[0].mxu0 %v2272
  %v2415 = vpop.f32.mrb[0].mxu0
  %v2416 = vadd.f32 0.0, %v2415
  %v2417 = vpop.f32.mrb[0].mxu0
  %2418 = vmatprep.mubr.f32.mxu0 0.0
  %2419 = vmatmul.mubr.f32.gmra.mrb[0].mxu0 %v2275
  %v2420 = vpop.f32.mrb[0].mxu0
  %v2421 = vadd.f32 0.0, %v2420
  %v2422 = vpop.f32.mrb[0].mxu0
  %2423 = vmatprep.mubr.f32.mxu0 0.0
  %2424 = vmatmul.mubr.f32.gmra.mrb[0].mxu0 %v2278
  %v2425 = vpop.f32.mrb[0].mxu0
  %v2426 = vadd.f32 0.0, %v2425
  %v2427 = vpop.f32.mrb[0].mxu0
  %2428 = vmatprep.mubr.f32.mxu0 0.0
  %2429 = vmatmul.mubr.f32.gmra.mrb[0].mxu0 %v2281
  %v2430 = vpop.f32.mrb[0].mxu0
  %v2431 = vadd.f32 0.0, %v2430
  %v2432 = vpop.f32.mrb[0].mxu0
  %2433 = vmatprep.mubr.f32.mxu0 0.0
  %2434 = vmatmul.mubr.f32.gmra.mrb[0].mxu0 %v2284
  %v2435 = vpop.f32.mrb[0].mxu0
  %v2436 = vadd.f32 0.0, %v2435
  %v2437 = vpop.f32.mrb[0].mxu0
  %2438 = vmatprep.mubr.f32.mxu0 0.0
  %2439 = vmatmul.mubr.f32.gmra.mrb[0].mxu0 %v2287
  %v2440 = vpop.f32.mrb[0].mxu0
  %v2441 = vadd.f32 0.0, %v2440
  %v2442 = vpop.f32.mrb[0].mxu0
  %2443 = vmatprep.mubr.f32.mxu0 0.0
  %2444 = vmatmul.mubr.f32.gmra.mrb[0].mxu0 %v2290
  %v2445 = vpop.f32.mrb[0].mxu0
  %v2446 = vadd.f32 0.0, %v2445
  %v2447 = vpop.f32.mrb[0].mxu0
  %2448 = vmatprep.mubr.f32.mxu0 0.0
  %2449 = vmatmul.mubr.f32.gmra.mrb[0].mxu0 %v2293
  %v2450 = vpop.f32.mrb[0].mxu0
  %v2451 = vadd.f32 0.0, %v2450
  %v2452 = vpop.f32.mrb[0].mxu0
  %2453 = vmatprep.mubr.f32.mxu0 0.0
  %2454 = vmatmul.mubr.f32.gmra.mrb[0].mxu0 %v2296
  %v2455 = vpop.f32.mrb[0].mxu0
  %v2456 = vadd.f32 0.0, %v2455
  %v2457 = vpop.f32.mrb[0].mxu0
  %2458 = vmatprep.mubr.f32.mxu0 0.0
  %2459 = vmatmul.mubr.f32.gmra.mrb[0].mxu0 %v2299
  %v2460 = vpop.f32.mrb[0].mxu0
  %v2461 = vadd.f32 0.0, %v2460
  %v2462 = vpop.f32.mrb[0].mxu0
  %2463 = vmatprep.mubr.f32.mxu0 0.0
  %2464 = vmatmul.mubr.f32.gmra.mrb[0].mxu0 %v2302
  %v2465 = vpop.f32.mrb[0].mxu0
  %v2466 = vadd.f32 0.0, %v2465
  %v2467 = vpop.f32.mrb[0].mxu0
  %2468 = vmatprep.mubr.f32.mxu0 0.0
  %2469 = vmatmul.mubr.f32.gmra.mrb[0].mxu0 %v2305
  %v2470 = vpop.f32.mrb[0].mxu0
  %v2471 = vadd.f32 0.0, %v2470
  %v2472 = vpop.f32.mrb[0].mxu0
  %2473 = vmatprep.mubr.f32.mxu0 0.0
  %2474 = vmatmul.mubr.f32.gmra.mrb[0].mxu0 %v2308
  %v2475 = vpop.f32.mrb[0].mxu0
  %v2476 = vadd.f32 0.0, %v2475
  %v2477 = vpop.f32.mrb[0].mxu0
  %2478 = vmatprep.mubr.f32.mxu0 0.0
  %2479 = vmatmul.mubr.f32.gmra.mrb[0].mxu0 %v2311
  %v2480 = vpop.f32.mrb[0].mxu0
  %v2481 = vadd.f32 0.0, %v2480
  %v2482 = vpop.f32.mrb[0].mxu0
  %2483 = vmatprep.mubr.f32.mxu0 0.0
  %2484 = vmatmul.mubr.f32.gmra.mrb[0].mxu0 %v2314
  %v2485 = vpop.f32.mrb[0].mxu0
  %v2486 = vadd.f32 0.0, %v2485
  %v2487 = vpop.f32.mrb[0].mxu0
  %2488 = vmatprep.mubr.f32.mxu0 0.0
  %2489 = vmatmul.mubr.f32.gmra.mrb[0].mxu0 %v2317
  %v2490 = vpop.f32.mrb[0].mxu0
  %v2491 = vadd.f32 0.0, %v2490
  %v2492 = vpop.f32.mrb[0].mxu0
  %2493 = vmatprep.mubr.f32.mxu0 0.0
  %2494 = vmatmul.mubr.f32.gmra.mrb[0].mxu0 %v2320
  %v2495 = vpop.f32.mrb[0].mxu0
  %v2496 = vadd.f32 0.0, %v2495
  %v2497 = vpop.f32.mrb[0].mxu0
  %2498 = vmatprep.mubr.f32.mxu0 0.0
  %2499 = vmatmul.mubr.f32.gmra.mrb[0].mxu0 %v2323
  %v2500 = vpop.f32.mrb[0].mxu0
  %v2501 = vadd.f32 0.0, %v2500
  %v2502 = vpop.f32.mrb[0].mxu0
  %2503 = vmatprep.mubr.f32.mxu0 0.0
  %2504 = vmatmul.mubr.f32.gmra.mrb[0].mxu0 %v2326
  %v2505 = vpop.f32.mrb[0].mxu0
  %v2506 = vadd.f32 0.0, %v2505
  %v2507 = vpop.f32.mrb[0].mxu0
  %2508 = vmatprep.mubr.f32.mxu0 0.0
  %2509 = vmatmul.mubr.f32.gmra.mrb[0].mxu0 %v2329
  %v2510 = vpop.f32.mrb[0].mxu0
  %v2511 = vadd.f32 0.0, %v2510
  %v2512 = vpop.f32.mrb[0].mxu0
  %2513 = vmatprep.mubr.f32.mxu0 0.0
  %2514 = vmatmul.mubr.f32.gmra.mrb[0].mxu0 %v2332
  %v2515 = vpop.f32.mrb[0].mxu0
  %v2516 = vadd.f32 0.0, %v2515
  %v2517 = vpop.f32.mrb[0].mxu0
  %2518 = vmatprep.mubr.f32.mxu0 0.0
  %2519 = vmatmul.mubr.f32.gmra.mrb[0].mxu0 %v2335
  %v2520 = vpop.f32.mrb[0].mxu0
  %v2521 = vadd.f32 0.0, %v2520
  %v2522 = vpop.f32.mrb[0].mxu0
  %2523 = vmatprep.mubr.f32.mxu0 0.0
  %2524 = vmatmul.mubr.f32.gmra.mrb[0].mxu0 %v2338
  %v2525 = vpop.f32.mrb[0].mxu0
  %v2526 = vadd.f32 0.0, %v2525
  %v2527 = vpop.f32.mrb[0].mxu0
  %2528 = vmatprep.mubr.f32.mxu0 0.0
  %2529 = vmatmul.mubr.f32.gmra.mrb[0].mxu0 %v2341
  %v2530 = vpop.f32.mrb[0].mxu0
  %v2531 = vadd.f32 0.0, %v2530
  %v2532 = vpop.f32.mrb[0].mxu0
  %2533 = vmatprep.mubr.f32.mxu0 0.0
  %2534 = vmatmul.mubr.f32.gmra.mrb[0].mxu0 %v2344
  %v2535 = vpop.f32.mrb[0].mxu0
  %v2536 = vadd.f32 0.0, %v2535
  %v2537 = vpop.f32.mrb[0].mxu0
  %2538 = vdwg.mxu0
  %v2539 = vadd.f32 %v2220, %v2416
  %v2540 = vadd.f32 %v2221, %v2421
  %v2541 = vadd.f32 %v2222, %v2426
  %v2542 = vadd.f32 %v2223, %v2431
  %v2543 = vadd.f32 %v2224, %v2436
  %v2544 = vadd.f32 %v2225, %v2441
  %v2545 = vadd.f32 %v2226, %v2446
  %v2546 = vadd.f32 %v2227, %v2451
  %v2547 = vadd.f32 %v2228, %v2456
  %v2548 = vadd.f32 %v2229, %v2461
  %v2549 = vadd.f32 %v2230, %v2466
  %v2550 = vadd.f32 %v2231, %v2471
  %v2551 = vadd.f32 %v2232, %v2476
  %v2552 = vadd.f32 %v2233, %v2481
  %v2553 = vadd.f32 %v2234, %v2486
  %v2554 = vadd.f32 %v2235, %v2491
  %v2555 = vadd.f32 %v2236, %v2496
  %v2556 = vadd.f32 %v2237, %v2501
  %v2557 = vadd.f32 %v2238, %v2506
  %v2558 = vadd.f32 %v2239, %v2511
  %v2559 = vadd.f32 %v2240, %v2516
  %v2560 = vadd.f32 %v2241, %v2521
  %v2561 = vadd.f32 %v2242, %v2526
  %v2562 = vadd.f32 %v2243, %v2531
  %v2563 = vadd.f32 %v2244, %v2536
  %v2564 = vld [vmem:[%s0 + $0x1b] sm:$0xff]
  %v2565 = vld [vmem:[%s0 + $0x23] sm:$0xff]
  %v2566 = vld [vmem:[%s0 + $0x2b] sm:$0xff]
  %v2567 = vld [vmem:[%s0 + $0x33] sm:$0xff]
  %v2568 = vld [vmem:[%s0 + $0x3b] sm:$0xff]
  %v2569 = vld [vmem:[%s0 + $0x43] sm:$0xff]
  %v2570 = vld [vmem:[%s0 + $0x4b] sm:$0xff]
  %v2571 = vld [vmem:[%s0 + $0x53] sm:$0xff]
  %v2572 = vld [vmem:[%s0 + $0x5b] sm:$0xff]
  %v2573 = vld [vmem:[%s0 + $0x63] sm:$0xff]
  %v2574 = vld [vmem:[%s0 + $0x6b] sm:$0xff]
  %v2575 = vld [vmem:[%s0 + $0x73] sm:$0xff]
  %v2576 = vld [vmem:[%s0 + $0x7b] sm:$0xff]
  %v2577 = vld [vmem:[%s0 + $0x83] sm:$0xff]
  %v2578 = vld [vmem:[%s0 + $0x8b] sm:$0xff]
  %v2579 = vld [vmem:[%s0 + $0x93] sm:$0xff]
  %v2580 = vld [vmem:[%s0 + $0x9b] sm:$0xff]
  %v2581 = vld [vmem:[%s0 + $0xa3] sm:$0xff]
  %v2582 = vld [vmem:[%s0 + $0xab] sm:$0xff]
  %v2583 = vld [vmem:[%s0 + $0xb3] sm:$0xff]
  %v2584 = vld [vmem:[%s0 + $0xbb] sm:$0xff]
  %v2585 = vld [vmem:[%s0 + $0xc3] sm:$0xff]
  %v2586 = vld [vmem:[%s0 + $0xcb] sm:$0xff]
  %v2587 = vld [vmem:[%s0 + $0xd3] sm:$0xff]
  %v2588 = vld [vmem:[%s0 + $0xdb] sm:$0xff]
  %v2589 = vld [vmem:[%s2 + $0x20] sm:$0xf]
  %v2591 = vsel %vm112, %v2564, 0
  %v2594 = vsel %vm112, %v2565, 0
  %v2597 = vsel %vm112, %v2566, 0
  %v2600 = vsel %vm112, %v2567, 0
  %v2603 = vsel %vm112, %v2568, 0
  %v2606 = vsel %vm112, %v2569, 0
  %v2609 = vsel %vm112, %v2570, 0
  %v2612 = vsel %vm112, %v2571, 0
  %v2615 = vsel %vm112, %v2572, 0
  %v2618 = vsel %vm112, %v2573, 0
  %v2621 = vsel %vm112, %v2574, 0
  %v2624 = vsel %vm112, %v2575, 0
  %v2627 = vsel %vm112, %v2576, 0
  %v2630 = vsel %vm112, %v2577, 0
  %v2633 = vsel %vm112, %v2578, 0
  %v2636 = vsel %vm112, %v2579, 0
  %v2639 = vsel %vm112, %v2580, 0
  %v2642 = vsel %vm112, %v2581, 0
  %v2645 = vsel %vm112, %v2582, 0
  %v2648 = vsel %vm112, %v2583, 0
  %v2651 = vsel %vm112, %v2584, 0
  %v2654 = vsel %vm112, %v2585, 0
  %v2657 = vsel %vm112, %v2586, 0
  %v2660 = vsel %vm112, %v2587, 0
  %v2663 = vsel %vm112, %v2588, 0
  %v2666 = vsel %vm188, %v2589, 0
  %2668 = vmatprep.subr.mxu0 0.0
  %2669 = vmatpush1.msra.mxu0 %v2666
  %2670 = vmatprep.subr.mxu0 0.0
  %2671 = vmatpush1.msra.mxu0 0.0
  %2672 = vmatprep.subr.mxu0 0.0
  %2673 = vmatpush1.msra.mxu0 0.0
  %2674 = vmatprep.subr.mxu0 0.0
  %2675 = vmatpush1.msra.mxu0 0.0
  %2676 = vmatprep.subr.mxu0 0.0
  %2677 = vmatpush1.msra.mxu0 0.0
  %2678 = vmatprep.subr.mxu0 0.0
  %2679 = vmatpush1.msra.mxu0 0.0
  %2680 = vmatprep.subr.mxu0 0.0
  %2681 = vmatpush1.msra.mxu0 0.0
  %2682 = vmatprep.subr.mxu0 0.0
  %2683 = vmatpush1.msra.mxu0 0.0
  %2684 = vmatprep.subr.mxu0 0.0
  %2685 = vmatpush1.msra.mxu0 0.0
  %2686 = vmatprep.subr.mxu0 0.0
  %2687 = vmatpush1.msra.mxu0 0.0
  %2688 = vmatprep.subr.mxu0 0.0
  %2689 = vmatpush1.msra.mxu0 0.0
  %2690 = vmatprep.subr.mxu0 0.0
  %2691 = vmatpush1.msra.mxu0 0.0
  %2692 = vmatprep.subr.mxu0 0.0
  %2693 = vmatpush1.msra.mxu0 0.0
  %2694 = vmatprep.subr.mxu0 0.0
  %2695 = vmatpush1.msra.mxu0 0.0
  %2696 = vmatprep.subr.mxu0 0.0
  %2697 = vmatpush1.msra.mxu0 0.0
  %2698 = vmatprep.subr.mxu0 0.0
  %2699 = vmatpush1.msra.mxu0 0.0
  %2700 = vmatprep.subr.mxu0 0.0
  %2701 = vmatpush1.msra.mxu0 0.0
  %2702 = vmatprep.subr.mxu0 0.0
  %2703 = vmatpush1.msra.mxu0 0.0
  %2704 = vmatprep.subr.mxu0 0.0
  %2705 = vmatpush1.msra.mxu0 0.0
  %2706 = vmatprep.subr.mxu0 0.0
  %2707 = vmatpush1.msra.mxu0 0.0
  %2708 = vmatprep.subr.mxu0 0.0
  %2709 = vmatpush1.msra.mxu0 0.0
  %2710 = vmatprep.subr.mxu0 0.0
  %2711 = vmatpush1.msra.mxu0 0.0
  %2712 = vmatprep.subr.mxu0 0.0
  %2713 = vmatpush1.msra.mxu0 0.0
  %2714 = vmatprep.subr.mxu0 0.0
  %2715 = vmatpush1.msra.mxu0 0.0
  %2716 = vmatprep.subr.mxu0 0.0
  %2717 = vmatpush1.msra.mxu0 0.0
  %2718 = vmatprep.subr.mxu0 0.0
  %2719 = vmatpush1.msra.mxu0 0.0
  %2720 = vmatprep.subr.mxu0 0.0
  %2721 = vmatpush1.msra.mxu0 0.0
  %2722 = vmatprep.subr.mxu0 0.0
  %2723 = vmatpush1.msra.mxu0 0.0
  %2724 = vmatprep.subr.mxu0 0.0
  %2725 = vmatpush1.msra.mxu0 0.0
  %2726 = vmatprep.subr.mxu0 0.0
  %2727 = vmatpush1.msra.mxu0 0.0
  %2728 = vmatprep.subr.mxu0 0.0
  %2729 = vmatpush1.msra.mxu0 0.0
  %2730 = vmatprep.subr.mxu0 0.0
  %2731 = vmatpush1.msra.mxu0 0.0
  %2732 = vmatprep.mubr.f32.mxu0 0.0
  %2733 = vmatmul.mubr.f32.gmra.mrb[0].mxu0 %v2591
  %v2734 = vpop.f32.mrb[0].mxu0
  %v2735 = vadd.f32 0.0, %v2734
  %v2736 = vpop.f32.mrb[0].mxu0
  %2737 = vmatprep.mubr.f32.mxu0 0.0
  %2738 = vmatmul.mubr.f32.gmra.mrb[0].mxu0 %v2594
  %v2739 = vpop.f32.mrb[0].mxu0
  %v2740 = vadd.f32 0.0, %v2739
  %v2741 = vpop.f32.mrb[0].mxu0
  %2742 = vmatprep.mubr.f32.mxu0 0.0
  %2743 = vmatmul.mubr.f32.gmra.mrb[0].mxu0 %v2597
  %v2744 = vpop.f32.mrb[0].mxu0
  %v2745 = vadd.f32 0.0, %v2744
  %v2746 = vpop.f32.mrb[0].mxu0
  %2747 = vmatprep.mubr.f32.mxu0 0.0
  %2748 = vmatmul.mubr.f32.gmra.mrb[0].mxu0 %v2600
  %v2749 = vpop.f32.mrb[0].mxu0
  %v2750 = vadd.f32 0.0, %v2749
  %v2751 = vpop.f32.mrb[0].mxu0
  %2752 = vmatprep.mubr.f32.mxu0 0.0
  %2753 = vmatmul.mubr.f32.gmra.mrb[0].mxu0 %v2603
  %v2754 = vpop.f32.mrb[0].mxu0
  %v2755 = vadd.f32 0.0, %v2754
  %v2756 = vpop.f32.mrb[0].mxu0
  %2757 = vmatprep.mubr.f32.mxu0 0.0
  %2758 = vmatmul.mubr.f32.gmra.mrb[0].mxu0 %v2606
  %v2759 = vpop.f32.mrb[0].mxu0
  %v2760 = vadd.f32 0.0, %v2759
  %v2761 = vpop.f32.mrb[0].mxu0
  %2762 = vmatprep.mubr.f32.mxu0 0.0
  %2763 = vmatmul.mubr.f32.gmra.mrb[0].mxu0 %v2609
  %v2764 = vpop.f32.mrb[0].mxu0
  %v2765 = vadd.f32 0.0, %v2764
  %v2766 = vpop.f32.mrb[0].mxu0
  %2767 = vmatprep.mubr.f32.mxu0 0.0
  %2768 = vmatmul.mubr.f32.gmra.mrb[0].mxu0 %v2612
  %v2769 = vpop.f32.mrb[0].mxu0
  %v2770 = vadd.f32 0.0, %v2769
  %v2771 = vpop.f32.mrb[0].mxu0
  %2772 = vmatprep.mubr.f32.mxu0 0.0
  %2773 = vmatmul.mubr.f32.gmra.mrb[0].mxu0 %v2615
  %v2774 = vpop.f32.mrb[0].mxu0
  %v2775 = vadd.f32 0.0, %v2774
  %v2776 = vpop.f32.mrb[0].mxu0
  %2777 = vmatprep.mubr.f32.mxu0 0.0
  %2778 = vmatmul.mubr.f32.gmra.mrb[0].mxu0 %v2618
  %v2779 = vpop.f32.mrb[0].mxu0
  %v2780 = vadd.f32 0.0, %v2779
  %v2781 = vpop.f32.mrb[0].mxu0
  %2782 = vmatprep.mubr.f32.mxu0 0.0
  %2783 = vmatmul.mubr.f32.gmra.mrb[0].mxu0 %v2621
  %v2784 = vpop.f32.mrb[0].mxu0
  %v2785 = vadd.f32 0.0, %v2784
  %v2786 = vpop.f32.mrb[0].mxu0
  %2787 = vmatprep.mubr.f32.mxu0 0.0
  %2788 = vmatmul.mubr.f32.gmra.mrb[0].mxu0 %v2624
  %v2789 = vpop.f32.mrb[0].mxu0
  %v2790 = vadd.f32 0.0, %v2789
  %v2791 = vpop.f32.mrb[0].mxu0
  %2792 = vmatprep.mubr.f32.mxu0 0.0
  %2793 = vmatmul.mubr.f32.gmra.mrb[0].mxu0 %v2627
  %v2794 = vpop.f32.mrb[0].mxu0
  %v2795 = vadd.f32 0.0, %v2794
  %v2796 = vpop.f32.mrb[0].mxu0
  %2797 = vmatprep.mubr.f32.mxu0 0.0
  %2798 = vmatmul.mubr.f32.gmra.mrb[0].mxu0 %v2630
  %v2799 = vpop.f32.mrb[0].mxu0
  %v2800 = vadd.f32 0.0, %v2799
  %v2801 = vpop.f32.mrb[0].mxu0
  %2802 = vmatprep.mubr.f32.mxu0 0.0
  %2803 = vmatmul.mubr.f32.gmra.mrb[0].mxu0 %v2633
  %v2804 = vpop.f32.mrb[0].mxu0
  %v2805 = vadd.f32 0.0, %v2804
  %v2806 = vpop.f32.mrb[0].mxu0
  %2807 = vmatprep.mubr.f32.mxu0 0.0
  %2808 = vmatmul.mubr.f32.gmra.mrb[0].mxu0 %v2636
  %v2809 = vpop.f32.mrb[0].mxu0
  %v2810 = vadd.f32 0.0, %v2809
  %v2811 = vpop.f32.mrb[0].mxu0
  %2812 = vmatprep.mubr.f32.mxu0 0.0
  %2813 = vmatmul.mubr.f32.gmra.mrb[0].mxu0 %v2639
  %v2814 = vpop.f32.mrb[0].mxu0
  %v2815 = vadd.f32 0.0, %v2814
  %v2816 = vpop.f32.mrb[0].mxu0
  %2817 = vmatprep.mubr.f32.mxu0 0.0
  %2818 = vmatmul.mubr.f32.gmra.mrb[0].mxu0 %v2642
  %v2819 = vpop.f32.mrb[0].mxu0
  %v2820 = vadd.f32 0.0, %v2819
  %v2821 = vpop.f32.mrb[0].mxu0
  %2822 = vmatprep.mubr.f32.mxu0 0.0
  %2823 = vmatmul.mubr.f32.gmra.mrb[0].mxu0 %v2645
  %v2824 = vpop.f32.mrb[0].mxu0
  %v2825 = vadd.f32 0.0, %v2824
  %v2826 = vpop.f32.mrb[0].mxu0
  %2827 = vmatprep.mubr.f32.mxu0 0.0
  %2828 = vmatmul.mubr.f32.gmra.mrb[0].mxu0 %v2648
  %v2829 = vpop.f32.mrb[0].mxu0
  %v2830 = vadd.f32 0.0, %v2829
  %v2831 = vpop.f32.mrb[0].mxu0
  %2832 = vmatprep.mubr.f32.mxu0 0.0
  %2833 = vmatmul.mubr.f32.gmra.mrb[0].mxu0 %v2651
  %v2834 = vpop.f32.mrb[0].mxu0
  %v2835 = vadd.f32 0.0, %v2834
  %v2836 = vpop.f32.mrb[0].mxu0
  %2837 = vmatprep.mubr.f32.mxu0 0.0
  %2838 = vmatmul.mubr.f32.gmra.mrb[0].mxu0 %v2654
  %v2839 = vpop.f32.mrb[0].mxu0
  %v2840 = vadd.f32 0.0, %v2839
  %v2841 = vpop.f32.mrb[0].mxu0
  %2842 = vmatprep.mubr.f32.mxu0 0.0
  %2843 = vmatmul.mubr.f32.gmra.mrb[0].mxu0 %v2657
  %v2844 = vpop.f32.mrb[0].mxu0
  %v2845 = vadd.f32 0.0, %v2844
  %v2846 = vpop.f32.mrb[0].mxu0
  %2847 = vmatprep.mubr.f32.mxu0 0.0
  %2848 = vmatmul.mubr.f32.gmra.mrb[0].mxu0 %v2660
  %v2849 = vpop.f32.mrb[0].mxu0
  %v2850 = vadd.f32 0.0, %v2849
  %v2851 = vpop.f32.mrb[0].mxu0
  %2852 = vmatprep.mubr.f32.mxu0 0.0
  %2853 = vmatmul.mubr.f32.gmra.mrb[0].mxu0 %v2663
  %v2854 = vpop.f32.mrb[0].mxu0
  %v2855 = vadd.f32 0.0, %v2854
  %v2856 = vpop.f32.mrb[0].mxu0
  %2857 = vdwg.mxu0
  %v2858 = vadd.f32 %v2539, %v2735
  %v2859 = vadd.f32 %v2540, %v2740
  %v2860 = vadd.f32 %v2541, %v2745
  %v2861 = vadd.f32 %v2542, %v2750
  %v2862 = vadd.f32 %v2543, %v2755
  %v2863 = vadd.f32 %v2544, %v2760
  %v2864 = vadd.f32 %v2545, %v2765
  %v2865 = vadd.f32 %v2546, %v2770
  %v2866 = vadd.f32 %v2547, %v2775
  %v2867 = vadd.f32 %v2548, %v2780
  %v2868 = vadd.f32 %v2549, %v2785
  %v2869 = vadd.f32 %v2550, %v2790
  %v2870 = vadd.f32 %v2551, %v2795
  %v2871 = vadd.f32 %v2552, %v2800
  %v2872 = vadd.f32 %v2553, %v2805
  %v2873 = vadd.f32 %v2554, %v2810
  %v2874 = vadd.f32 %v2555, %v2815
  %v2875 = vadd.f32 %v2556, %v2820
  %v2876 = vadd.f32 %v2557, %v2825
  %v2877 = vadd.f32 %v2558, %v2830
  %v2878 = vadd.f32 %v2559, %v2835
  %v2879 = vadd.f32 %v2560, %v2840
  %v2880 = vadd.f32 %v2561, %v2845
  %v2881 = vadd.f32 %v2562, %v2850
  %v2882 = vadd.f32 %v2563, %v2855
  %v2883 = vld [vmem:[%s3] sm:$0x1]
  %v2885 = vlaneseq
  %v2886 = vshrl.u32 %v2885, 7
  %v2887 = vsub.s32 0, %v2886
  %v2888 = vrot.slane %v2883, %v2887
  %v2890 = vadd.f32 %v2858, %v2888
  %v2891 = vadd.f32 %v2859, %v2888
  %v2892 = vadd.f32 %v2860, %v2888
  %v2893 = vadd.f32 %v2861, %v2888
  %v2894 = vadd.f32 %v2862, %v2888
  %v2895 = vadd.f32 %v2863, %v2888
  %v2896 = vadd.f32 %v2864, %v2888
  %v2897 = vadd.f32 %v2865, %v2888
  %v2898 = vadd.f32 %v2866, %v2888
  %v2899 = vadd.f32 %v2867, %v2888
  %v2900 = vadd.f32 %v2868, %v2888
  %v2901 = vadd.f32 %v2869, %v2888
  %v2902 = vadd.f32 %v2870, %v2888
  %v2903 = vadd.f32 %v2871, %v2888
  %v2904 = vadd.f32 %v2872, %v2888
  %v2905 = vadd.f32 %v2873, %v2888
  %v2906 = vadd.f32 %v2874, %v2888
  %v2907 = vadd.f32 %v2875, %v2888
  %v2908 = vadd.f32 %v2876, %v2888
  %v2909 = vadd.f32 %v2877, %v2888
  %v2910 = vadd.f32 %v2878, %v2888
  %v2911 = vadd.f32 %v2879, %v2888
  %v2912 = vadd.f32 %v2880, %v2888
  %v2913 = vadd.f32 %v2881, %v2888
  %v2914 = vadd.f32 %v2882, %v2888
  %v2915 = vmax.f32 %v2890, 0.0
  %v2916 = vmax.f32 %v2891, 0.0
  %v2917 = vmax.f32 %v2892, 0.0
  %v2918 = vmax.f32 %v2893, 0.0
  %v2919 = vmax.f32 %v2894, 0.0
  %v2920 = vmax.f32 %v2895, 0.0
  %v2921 = vmax.f32 %v2896, 0.0
  %v2922 = vmax.f32 %v2897, 0.0
  %v2923 = vmax.f32 %v2898, 0.0
  %v2924 = vmax.f32 %v2899, 0.0
  %v2925 = vmax.f32 %v2900, 0.0
  %v2926 = vmax.f32 %v2901, 0.0
  %v2927 = vmax.f32 %v2902, 0.0
  %v2928 = vmax.f32 %v2903, 0.0
  %v2929 = vmax.f32 %v2904, 0.0
  %v2930 = vmax.f32 %v2905, 0.0
  %v2931 = vmax.f32 %v2906, 0.0
  %v2932 = vmax.f32 %v2907, 0.0
  %v2933 = vmax.f32 %v2908, 0.0
  %v2934 = vmax.f32 %v2909, 0.0
  %v2935 = vmax.f32 %v2910, 0.0
  %v2936 = vmax.f32 %v2911, 0.0
  %v2937 = vmax.f32 %v2912, 0.0
  %v2938 = vmax.f32 %v2913, 0.0
  %v2939 = vmax.f32 %v2914, 0.0
  %vm2940 = vcmask 261120
  %2941 = vst.msk [vmem:[#allocation2] sm:$0xff] %vm2940, 0.0
  %2942 = vst.msk [vmem:[#allocation2 + $0x8] sm:$0xff] %vm2940, 0.0
  %2943 = vst.msk [vmem:[#allocation2 + $0x10] sm:$0xff] %vm2940, 0.0
  %2944 = vst.msk [vmem:[#allocation2 + $0x18] sm:$0xff] %vm2940, 0.0
  %2945 = vst.msk [vmem:[#allocation2 + $0x20] sm:$0xff] %vm2940, 0.0
  %2946 = vst.msk [vmem:[#allocation2 + $0x28] sm:$0xff] %vm2940, 0.0
  %2947 = vst.msk [vmem:[#allocation2 + $0x30] sm:$0xff] %vm2940, 0.0
  %2948 = vst.msk [vmem:[#allocation2 + $0x38] sm:$0xff] %vm2940, 0.0
  %2949 = vst.msk [vmem:[#allocation2 + $0x40] sm:$0xff] %vm2940, 0.0
  %2950 = vst.msk [vmem:[#allocation2 + $0x48] sm:$0xff] %vm2940, 0.0
  %2951 = vst.msk [vmem:[#allocation2 + $0x50] sm:$0xff] %vm2940, 0.0
  %2952 = vst.msk [vmem:[#allocation2 + $0x58] sm:$0xff] %vm2940, 0.0
  %2953 = vst.msk [vmem:[#allocation2 + $0x60] sm:$0xff] %vm2940, 0.0
  %2954 = vst.msk [vmem:[#allocation2 + $0x68] sm:$0xff] %vm2940, 0.0
  %2955 = vst.msk [vmem:[#allocation2 + $0x70] sm:$0xff] %vm2940, 0.0
  %2956 = vst.msk [vmem:[#allocation2 + $0x78] sm:$0xff] %vm2940, 0.0
  %2957 = vst.msk [vmem:[#allocation2 + $0x80] sm:$0xff] %vm2940, 0.0
  %2958 = vst.msk [vmem:[#allocation2 + $0x88] sm:$0xff] %vm2940, 0.0
  %2959 = vst.msk [vmem:[#allocation2 + $0x90] sm:$0xff] %vm2940, 0.0
  %2960 = vst.msk [vmem:[#allocation2 + $0x98] sm:$0xff] %vm2940, 0.0
  %2961 = vst.msk [vmem:[#allocation2 + $0xa0] sm:$0xff] %vm2940, 0.0
  %2962 = vst.msk [vmem:[#allocation2 + $0xa8] sm:$0xff] %vm2940, 0.0
  %2963 = vst.msk [vmem:[#allocation2 + $0xb0] sm:$0xff] %vm2940, 0.0
  %2964 = vst.msk [vmem:[#allocation2 + $0xb8] sm:$0xff] %vm2940, 0.0
  %2965 = vst.msk [vmem:[#allocation2 + $0xc0] sm:$0xff] %vm2940, 0.0
  %2966 = vst.msk [vmem:[#allocation2 + $0xc8] sm:$0xff] %vm2940, 0.0
  %2967 = vst.msk [vmem:[#allocation2 + $0xd0] sm:$0xff] %vm2940, 0.0
  %2968 = vst.msk [vmem:[#allocation2 + $0xd8] sm:$0xff] %vm2940, 0.0
  %2969 = vst.msk [vmem:[#allocation2 + $0xe0] sm:$0xff] %vm2940, 0.0
  %2971 = vset.pattern.permute.xlu0 0
  %2972 = vperm.xlu0 %2971, %v35
  %v2973 = vpop.permute.xlu0 %2972
  %2976 = vset.pattern.permute.xlu0 0
  %2977 = vperm.xlu0 %2976, %v36
  %v2978 = vpop.permute.xlu0 %2977
  %2981 = vset.pattern.permute.xlu0 0
  %2982 = vperm.xlu0 %2981, %v37
  %v2983 = vpop.permute.xlu0 %2982
  %2986 = vset.pattern.permute.xlu0 0
  %2987 = vperm.xlu0 %2986, %v38
  %v2988 = vpop.permute.xlu0 %2987
  %2991 = vset.pattern.permute.xlu0 0
  %2992 = vperm.xlu0 %2991, %v39
  %v2993 = vpop.permute.xlu0 %2992
  %2996 = vset.pattern.permute.xlu0 0
  %2997 = vperm.xlu0 %2996, %v40
  %v2998 = vpop.permute.xlu0 %2997
  %3001 = vset.pattern.permute.xlu0 0
  %3002 = vperm.xlu0 %3001, %v41
  %v3003 = vpop.permute.xlu0 %3002
  %3006 = vset.pattern.permute.xlu0 0
  %3007 = vperm.xlu0 %3006, %v42
  %v3008 = vpop.permute.xlu0 %3007
  %3011 = vset.pattern.permute.xlu0 0
  %3012 = vperm.xlu0 %3011, %v43
  %v3013 = vpop.permute.xlu0 %3012
  %3016 = vset.pattern.permute.xlu0 0
  %3017 = vperm.xlu0 %3016, %v44
  %v3018 = vpop.permute.xlu0 %3017
  %3021 = vset.pattern.permute.xlu0 0
  %3022 = vperm.xlu0 %3021, %v45
  %v3023 = vpop.permute.xlu0 %3022
  %3026 = vset.pattern.permute.xlu0 0
  %3027 = vperm.xlu0 %3026, %v46
  %v3028 = vpop.permute.xlu0 %3027
  %3031 = vset.pattern.permute.xlu0 0
  %3032 = vperm.xlu0 %3031, %v47
  %v3033 = vpop.permute.xlu0 %3032
  %3036 = vset.pattern.permute.xlu0 0
  %3037 = vperm.xlu0 %3036, %v48
  %v3038 = vpop.permute.xlu0 %3037
  %3041 = vset.pattern.permute.xlu0 0
  %3042 = vperm.xlu0 %3041, %v49
  %v3043 = vpop.permute.xlu0 %3042
  %3046 = vset.pattern.permute.xlu0 0
  %3047 = vperm.xlu0 %3046, %v50
  %v3048 = vpop.permute.xlu0 %3047
  %3051 = vset.pattern.permute.xlu0 0
  %3052 = vperm.xlu0 %3051, %v51
  %v3053 = vpop.permute.xlu0 %3052
  %3056 = vset.pattern.permute.xlu0 0
  %3057 = vperm.xlu0 %3056, %v52
  %v3058 = vpop.permute.xlu0 %3057
  %3061 = vset.pattern.permute.xlu0 0
  %3062 = vperm.xlu0 %3061, %v53
  %v3063 = vpop.permute.xlu0 %3062
  %3066 = vset.pattern.permute.xlu0 0
  %3067 = vperm.xlu0 %3066, %v54
  %v3068 = vpop.permute.xlu0 %3067
  %3071 = vset.pattern.permute.xlu0 0
  %3072 = vperm.xlu0 %3071, %v55
  %v3073 = vpop.permute.xlu0 %3072
  %3076 = vset.pattern.permute.xlu0 0
  %3077 = vperm.xlu0 %3076, %v56
  %v3078 = vpop.permute.xlu0 %3077
  %3081 = vset.pattern.permute.xlu0 0
  %3082 = vperm.xlu0 %3081, %v57
  %v3083 = vpop.permute.xlu0 %3082
  %3086 = vset.pattern.permute.xlu0 0
  %3087 = vperm.xlu0 %3086, %v58
  %v3088 = vpop.permute.xlu0 %3087
  %3091 = vset.pattern.permute.xlu0 0
  %3092 = vperm.xlu0 %3091, %v59
  %v3093 = vpop.permute.xlu0 %3092
  %v3095 = vmul.f32 %v2915, %v2973
  %v3096 = vmul.f32 %v2916, %v2978
  %v3097 = vmul.f32 %v2917, %v2983
  %v3098 = vmul.f32 %v2918, %v2988
  %v3099 = vmul.f32 %v2919, %v2993
  %v3100 = vmul.f32 %v2920, %v2998
  %v3101 = vmul.f32 %v2921, %v3003
  %v3102 = vmul.f32 %v2922, %v3008
  %v3103 = vmul.f32 %v2923, %v3013
  %v3104 = vmul.f32 %v2924, %v3018
  %v3105 = vmul.f32 %v2925, %v3023
  %v3106 = vmul.f32 %v2926, %v3028
  %v3107 = vmul.f32 %v2927, %v3033
  %v3108 = vmul.f32 %v2928, %v3038
  %v3109 = vmul.f32 %v2929, %v3043
  %v3110 = vmul.f32 %v2930, %v3048
  %v3111 = vmul.f32 %v2931, %v3053
  %v3112 = vmul.f32 %v2932, %v3058
  %v3113 = vmul.f32 %v2933, %v3063
  %v3114 = vmul.f32 %v2934, %v3068
  %v3115 = vmul.f32 %v2935, %v3073
  %v3116 = vmul.f32 %v2936, %v3078
  %v3117 = vmul.f32 %v2937, %v3083
  %v3118 = vmul.f32 %v2938, %v3088
  %v3119 = vmul.f32 %v2939, %v3093
  %3120 = vst.msk [vmem:[#allocation2 + $0x10] sm:$0xff] %vm2940, %v3095
  %3121 = vst.msk [vmem:[#allocation2 + $0x18] sm:$0xff] %vm2940, %v3096
  %3122 = vst.msk [vmem:[#allocation2 + $0x20] sm:$0xff] %vm2940, %v3097
  %3123 = vst.msk [vmem:[#allocation2 + $0x28] sm:$0xff] %vm2940, %v3098
  %3124 = vst.msk [vmem:[#allocation2 + $0x30] sm:$0xff] %vm2940, %v3099
  %3125 = vst.msk [vmem:[#allocation2 + $0x38] sm:$0xff] %vm2940, %v3100
  %3126 = vst.msk [vmem:[#allocation2 + $0x40] sm:$0xff] %vm2940, %v3101
  %3127 = vst.msk [vmem:[#allocation2 + $0x48] sm:$0xff] %vm2940, %v3102
  %3128 = vst.msk [vmem:[#allocation2 + $0x50] sm:$0xff] %vm2940, %v3103
  %3129 = vst.msk [vmem:[#allocation2 + $0x58] sm:$0xff] %vm2940, %v3104
  %3130 = vst.msk [vmem:[#allocation2 + $0x60] sm:$0xff] %vm2940, %v3105
  %3131 = vst.msk [vmem:[#allocation2 + $0x68] sm:$0xff] %vm2940, %v3106
  %3132 = vst.msk [vmem:[#allocation2 + $0x70] sm:$0xff] %vm2940, %v3107
  %3133 = vst.msk [vmem:[#allocation2 + $0x78] sm:$0xff] %vm2940, %v3108
  %3134 = vst.msk [vmem:[#allocation2 + $0x80] sm:$0xff] %vm2940, %v3109
  %3135 = vst.msk [vmem:[#allocation2 + $0x88] sm:$0xff] %vm2940, %v3110
  %3136 = vst.msk [vmem:[#allocation2 + $0x90] sm:$0xff] %vm2940, %v3111
  %3137 = vst.msk [vmem:[#allocation2 + $0x98] sm:$0xff] %vm2940, %v3112
  %3138 = vst.msk [vmem:[#allocation2 + $0xa0] sm:$0xff] %vm2940, %v3113
  %3139 = vst.msk [vmem:[#allocation2 + $0xa8] sm:$0xff] %vm2940, %v3114
  %3140 = vst.msk [vmem:[#allocation2 + $0xb0] sm:$0xff] %vm2940, %v3115
  %3141 = vst.msk [vmem:[#allocation2 + $0xb8] sm:$0xff] %vm2940, %v3116
  %3142 = vst.msk [vmem:[#allocation2 + $0xc0] sm:$0xff] %vm2940, %v3117
  %3143 = vst.msk [vmem:[#allocation2 + $0xc8] sm:$0xff] %vm2940, %v3118
  %3144 = vst.msk [vmem:[#allocation2 + $0xd0] sm:$0xff] %vm2940, %v3119
  %v3145 = vld [vmem:[#allocation2 + $0x5] sm:$0xff]
  %v3146 = vld [vmem:[#allocation2 + $0xd] sm:$0xff]
  %v3147 = vld [vmem:[#allocation2 + $0x15] sm:$0xff]
  %v3148 = vld [vmem:[#allocation2 + $0x1d] sm:$0xff]
  %v3149 = vld [vmem:[#allocation2 + $0x25] sm:$0xff]
  %v3150 = vld [vmem:[#allocation2 + $0x2d] sm:$0xff]
  %v3151 = vld [vmem:[#allocation2 + $0x35] sm:$0xff]
  %v3152 = vld [vmem:[#allocation2 + $0x3d] sm:$0xff]
  %v3153 = vld [vmem:[#allocation2 + $0x45] sm:$0xff]
  %v3154 = vld [vmem:[#allocation2 + $0x4d] sm:$0xff]
  %v3155 = vld [vmem:[#allocation2 + $0x55] sm:$0xff]
  %v3156 = vld [vmem:[#allocation2 + $0x5d] sm:$0xff]
  %v3157 = vld [vmem:[#allocation2 + $0x65] sm:$0xff]
  %v3158 = vld [vmem:[#allocation2 + $0x6d] sm:$0xff]
  %v3159 = vld [vmem:[#allocation2 + $0x75] sm:$0xff]
  %v3160 = vld [vmem:[#allocation2 + $0x7d] sm:$0xff]
  %v3161 = vld [vmem:[#allocation2 + $0x85] sm:$0xff]
  %v3162 = vld [vmem:[#allocation2 + $0x8d] sm:$0xff]
  %v3163 = vld [vmem:[#allocation2 + $0x95] sm:$0xff]
  %v3164 = vld [vmem:[#allocation2 + $0x9d] sm:$0xff]
  %v3165 = vld [vmem:[#allocation2 + $0xa5] sm:$0xff]
  %v3166 = vld [vmem:[#allocation2 + $0xad] sm:$0xff]
  %v3167 = vld [vmem:[#allocation2 + $0xb5] sm:$0xff]
  %v3168 = vld [vmem:[#allocation2 + $0xbd] sm:$0xff]
  %v3169 = vld [vmem:[#allocation2 + $0xc5] sm:$0xff]
  %v3170 = vld [vmem:[%s4] sm:$0xff]
  %v3171 = vld [vmem:[%s4 + $0x8] sm:$0xff]
  %v3172 = vld [vmem:[%s4 + $0x10] sm:$0xff]
  %v3173 = vld [vmem:[%s4 + $0x18] sm:$0xff]
  %v3174 = vld [vmem:[#allocation2 + $0x6] sm:$0xff]
  %v3175 = vld [vmem:[#allocation2 + $0xe] sm:$0xff]
  %v3176 = vld [vmem:[#allocation2 + $0x16] sm:$0xff]
  %v3177 = vld [vmem:[#allocation2 + $0x1e] sm:$0xff]
  %v3178 = vld [vmem:[#allocation2 + $0x26] sm:$0xff]
  %v3179 = vld [vmem:[#allocation2 + $0x2e] sm:$0xff]
  %v3180 = vld [vmem:[#allocation2 + $0x36] sm:$0xff]
  %v3181 = vld [vmem:[#allocation2 + $0x3e] sm:$0xff]
  %v3182 = vld [vmem:[#allocation2 + $0x46] sm:$0xff]
  %v3183 = vld [vmem:[#allocation2 + $0x4e] sm:$0xff]
  %v3184 = vld [vmem:[#allocation2 + $0x56] sm:$0xff]
  %v3185 = vld [vmem:[#allocation2 + $0x5e] sm:$0xff]
  %v3186 = vld [vmem:[#allocation2 + $0x66] sm:$0xff]
  %v3187 = vld [vmem:[#allocation2 + $0x6e] sm:$0xff]
  %v3188 = vld [vmem:[#allocation2 + $0x76] sm:$0xff]
  %v3189 = vld [vmem:[#allocation2 + $0x7e] sm:$0xff]
  %v3190 = vld [vmem:[#allocation2 + $0x86] sm:$0xff]
  %v3191 = vld [vmem:[#allocation2 + $0x8e] sm:$0xff]
  %v3192 = vld [vmem:[#allocation2 + $0x96] sm:$0xff]
  %v3193 = vld [vmem:[#allocation2 + $0x9e] sm:$0xff]
  %v3194 = vld [vmem:[#allocation2 + $0xa6] sm:$0xff]
  %v3195 = vld [vmem:[#allocation2 + $0xae] sm:$0xff]
  %v3196 = vld [vmem:[#allocation2 + $0xb6] sm:$0xff]
  %v3197 = vld [vmem:[#allocation2 + $0xbe] sm:$0xff]
  %v3198 = vld [vmem:[#allocation2 + $0xc6] sm:$0xff]
  %v3199 = vld [vmem:[%s4 + $0x20] sm:$0xff]
  %v3200 = vld [vmem:[%s4 + $0x28] sm:$0xff]
  %v3201 = vld [vmem:[%s4 + $0x30] sm:$0xff]
  %v3202 = vld [vmem:[%s4 + $0x38] sm:$0xff]
  %v3204 = vsel %vm2940, %v3174, 0
  %v3207 = vsel %vm2940, %v3175, 0
  %v3210 = vsel %vm2940, %v3176, 0
  %v3213 = vsel %vm2940, %v3177, 0
  %v3216 = vsel %vm2940, %v3178, 0
  %v3219 = vsel %vm2940, %v3179, 0
  %v3222 = vsel %vm2940, %v3180, 0
  %v3225 = vsel %vm2940, %v3181, 0
  %v3228 = vsel %vm2940, %v3182, 0
  %v3231 = vsel %vm2940, %v3183, 0
  %v3234 = vsel %vm2940, %v3184, 0
  %v3237 = vsel %vm2940, %v3185, 0
  %v3240 = vsel %vm2940, %v3186, 0
  %v3243 = vsel %vm2940, %v3187, 0
  %v3246 = vsel %vm2940, %v3188, 0
  %v3249 = vsel %vm2940, %v3189, 0
  %v3252 = vsel %vm2940, %v3190, 0
  %v3255 = vsel %vm2940, %v3191, 0
  %v3258 = vsel %vm2940, %v3192, 0
  %v3261 = vsel %vm2940, %v3193, 0
  %v3264 = vsel %vm2940, %v3194, 0
  %v3267 = vsel %vm2940, %v3195, 0
  %v3270 = vsel %vm2940, %v3196, 0
  %v3273 = vsel %vm2940, %v3197, 0
  %v3276 = vsel %vm2940, %v3198, 0
  %3278 = vmatprep.subr.mxu0 0.0
  %3279 = vmatpush1.msra.mxu0 %v3199
  %3280 = vmatprep.subr.mxu0 0.0
  %3281 = vmatpush1.msra.mxu0 %v3200
  %3282 = vmatprep.subr.mxu0 0.0
  %3283 = vmatpush1.msra.mxu0 %v3201
  %3284 = vmatprep.subr.mxu0 0.0
  %3285 = vmatpush1.msra.mxu0 %v3202
  %3286 = vmatprep.subr.mxu0 0.0
  %3287 = vmatpush1.msra.mxu0 0.0
  %3288 = vmatprep.subr.mxu0 0.0
  %3289 = vmatpush1.msra.mxu0 0.0
  %3290 = vmatprep.subr.mxu0 0.0
  %3291 = vmatpush1.msra.mxu0 0.0
  %3292 = vmatprep.subr.mxu0 0.0
  %3293 = vmatpush1.msra.mxu0 0.0
  %3294 = vmatprep.subr.mxu0 0.0
  %3295 = vmatpush1.msra.mxu0 0.0
  %3296 = vmatprep.subr.mxu0 0.0
  %3297 = vmatpush1.msra.mxu0 0.0
  %3298 = vmatprep.subr.mxu0 0.0
  %3299 = vmatpush1.msra.mxu0 0.0
  %3300 = vmatprep.subr.mxu0 0.0
  %3301 = vmatpush1.msra.mxu0 0.0
  %3302 = vmatprep.subr.mxu0 0.0
  %3303 = vmatpush1.msra.mxu0 0.0
  %3304 = vmatprep.subr.mxu0 0.0
  %3305 = vmatpush1.msra.mxu0 0.0
  %3306 = vmatprep.subr.mxu0 0.0
  %3307 = vmatpush1.msra.mxu0 0.0
  %3308 = vmatprep.subr.mxu0 0.0
  %3309 = vmatpush1.msra.mxu0 0.0
  %3310 = vmatprep.subr.mxu0 0.0
  %3311 = vmatpush1.msra.mxu0 0.0
  %3312 = vmatprep.subr.mxu0 0.0
  %3313 = vmatpush1.msra.mxu0 0.0
  %3314 = vmatprep.subr.mxu0 0.0
  %3315 = vmatpush1.msra.mxu0 0.0
  %3316 = vmatprep.subr.mxu0 0.0
  %3317 = vmatpush1.msra.mxu0 0.0
  %3318 = vmatprep.subr.mxu0 0.0
  %3319 = vmatpush1.msra.mxu0 0.0
  %3320 = vmatprep.subr.mxu0 0.0
  %3321 = vmatpush1.msra.mxu0 0.0
  %3322 = vmatprep.subr.mxu0 0.0
  %3323 = vmatpush1.msra.mxu0 0.0
  %3324 = vmatprep.subr.mxu0 0.0
  %3325 = vmatpush1.msra.mxu0 0.0
  %3326 = vmatprep.subr.mxu0 0.0
  %3327 = vmatpush1.msra.mxu0 0.0
  %3328 = vmatprep.subr.mxu0 0.0
  %3329 = vmatpush1.msra.mxu0 0.0
  %3330 = vmatprep.subr.mxu0 0.0
  %3331 = vmatpush1.msra.mxu0 0.0
  %3332 = vmatprep.subr.mxu0 0.0
  %3333 = vmatpush1.msra.mxu0 0.0
  %3334 = vmatprep.subr.mxu0 0.0
  %3335 = vmatpush1.msra.mxu0 0.0
  %3336 = vmatprep.subr.mxu0 0.0
  %3337 = vmatpush1.msra.mxu0 0.0
  %3338 = vmatprep.subr.mxu0 0.0
  %3339 = vmatpush1.msra.mxu0 0.0
  %3340 = vmatprep.subr.mxu0 0.0
  %3341 = vmatpush1.msra.mxu0 0.0
  %3342 = vmatprep.mubr.f32.mxu0 0.0
  %3343 = vmatmul.mubr.f32.gmra.mrb[0].mxu0 %v3204
  %v3344 = vpop.f32.mrb[0].mxu0
  %v3345 = vadd.f32 0.0, %v3344
  %v3346 = vpop.f32.mrb[0].mxu0
  %3347 = vmatprep.mubr.f32.mxu0 0.0
  %3348 = vmatmul.mubr.f32.gmra.mrb[0].mxu0 %v3207
  %v3349 = vpop.f32.mrb[0].mxu0
  %v3350 = vadd.f32 0.0, %v3349
  %v3351 = vpop.f32.mrb[0].mxu0
  %3352 = vmatprep.mubr.f32.mxu0 0.0
  %3353 = vmatmul.mubr.f32.gmra.mrb[0].mxu0 %v3210
  %v3354 = vpop.f32.mrb[0].mxu0
  %v3355 = vadd.f32 0.0, %v3354
  %v3356 = vpop.f32.mrb[0].mxu0
  %3357 = vmatprep.mubr.f32.mxu0 0.0
  %3358 = vmatmul.mubr.f32.gmra.mrb[0].mxu0 %v3213
  %v3359 = vpop.f32.mrb[0].mxu0
  %v3360 = vadd.f32 0.0, %v3359
  %v3361 = vpop.f32.mrb[0].mxu0
  %3362 = vmatprep.mubr.f32.mxu0 0.0
  %3363 = vmatmul.mubr.f32.gmra.mrb[0].mxu0 %v3216
  %v3364 = vpop.f32.mrb[0].mxu0
  %v3365 = vadd.f32 0.0, %v3364
  %v3366 = vpop.f32.mrb[0].mxu0
  %3367 = vmatprep.mubr.f32.mxu0 0.0
  %3368 = vmatmul.mubr.f32.gmra.mrb[0].mxu0 %v3219
  %v3369 = vpop.f32.mrb[0].mxu0
  %v3370 = vadd.f32 0.0, %v3369
  %v3371 = vpop.f32.mrb[0].mxu0
  %3372 = vmatprep.mubr.f32.mxu0 0.0
  %3373 = vmatmul.mubr.f32.gmra.mrb[0].mxu0 %v3222
  %v3374 = vpop.f32.mrb[0].mxu0
  %v3375 = vadd.f32 0.0, %v3374
  %v3376 = vpop.f32.mrb[0].mxu0
  %3377 = vmatprep.mubr.f32.mxu0 0.0
  %3378 = vmatmul.mubr.f32.gmra.mrb[0].mxu0 %v3225
  %v3379 = vpop.f32.mrb[0].mxu0
  %v3380 = vadd.f32 0.0, %v3379
  %v3381 = vpop.f32.mrb[0].mxu0
  %3382 = vmatprep.mubr.f32.mxu0 0.0
  %3383 = vmatmul.mubr.f32.gmra.mrb[0].mxu0 %v3228
  %v3384 = vpop.f32.mrb[0].mxu0
  %v3385 = vadd.f32 0.0, %v3384
  %v3386 = vpop.f32.mrb[0].mxu0
  %3387 = vmatprep.mubr.f32.mxu0 0.0
  %3388 = vmatmul.mubr.f32.gmra.mrb[0].mxu0 %v3231
  %v3389 = vpop.f32.mrb[0].mxu0
  %v3390 = vadd.f32 0.0, %v3389
  %v3391 = vpop.f32.mrb[0].mxu0
  %3392 = vmatprep.mubr.f32.mxu0 0.0
  %3393 = vmatmul.mubr.f32.gmra.mrb[0].mxu0 %v3234
  %v3394 = vpop.f32.mrb[0].mxu0
  %v3395 = vadd.f32 0.0, %v3394
  %v3396 = vpop.f32.mrb[0].mxu0
  %3397 = vmatprep.mubr.f32.mxu0 0.0
  %3398 = vmatmul.mubr.f32.gmra.mrb[0].mxu0 %v3237
  %v3399 = vpop.f32.mrb[0].mxu0
  %v3400 = vadd.f32 0.0, %v3399
  %v3401 = vpop.f32.mrb[0].mxu0
  %3402 = vmatprep.mubr.f32.mxu0 0.0
  %3403 = vmatmul.mubr.f32.gmra.mrb[0].mxu0 %v3240
  %v3404 = vpop.f32.mrb[0].mxu0
  %v3405 = vadd.f32 0.0, %v3404
  %v3406 = vpop.f32.mrb[0].mxu0
  %3407 = vmatprep.mubr.f32.mxu0 0.0
  %3408 = vmatmul.mubr.f32.gmra.mrb[0].mxu0 %v3243
  %v3409 = vpop.f32.mrb[0].mxu0
  %v3410 = vadd.f32 0.0, %v3409
  %v3411 = vpop.f32.mrb[0].mxu0
  %3412 = vmatprep.mubr.f32.mxu0 0.0
  %3413 = vmatmul.mubr.f32.gmra.mrb[0].mxu0 %v3246
  %v3414 = vpop.f32.mrb[0].mxu0
  %v3415 = vadd.f32 0.0, %v3414
  %v3416 = vpop.f32.mrb[0].mxu0
  %3417 = vmatprep.mubr.f32.mxu0 0.0
  %3418 = vmatmul.mubr.f32.gmra.mrb[0].mxu0 %v3249
  %v3419 = vpop.f32.mrb[0].mxu0
  %v3420 = vadd.f32 0.0, %v3419
  %v3421 = vpop.f32.mrb[0].mxu0
  %3422 = vmatprep.mubr.f32.mxu0 0.0
  %3423 = vmatmul.mubr.f32.gmra.mrb[0].mxu0 %v3252
  %v3424 = vpop.f32.mrb[0].mxu0
  %v3425 = vadd.f32 0.0, %v3424
  %v3426 = vpop.f32.mrb[0].mxu0
  %3427 = vmatprep.mubr.f32.mxu0 0.0
  %3428 = vmatmul.mubr.f32.gmra.mrb[0].mxu0 %v3255
  %v3429 = vpop.f32.mrb[0].mxu0
  %v3430 = vadd.f32 0.0, %v3429
  %v3431 = vpop.f32.mrb[0].mxu0
  %3432 = vmatprep.mubr.f32.mxu0 0.0
  %3433 = vmatmul.mubr.f32.gmra.mrb[0].mxu0 %v3258
  %v3434 = vpop.f32.mrb[0].mxu0
  %v3435 = vadd.f32 0.0, %v3434
  %v3436 = vpop.f32.mrb[0].mxu0
  %3437 = vmatprep.mubr.f32.mxu0 0.0
  %3438 = vmatmul.mubr.f32.gmra.mrb[0].mxu0 %v3261
  %v3439 = vpop.f32.mrb[0].mxu0
  %v3440 = vadd.f32 0.0, %v3439
  %v3441 = vpop.f32.mrb[0].mxu0
  %3442 = vmatprep.mubr.f32.mxu0 0.0
  %3443 = vmatmul.mubr.f32.gmra.mrb[0].mxu0 %v3264
  %v3444 = vpop.f32.mrb[0].mxu0
  %v3445 = vadd.f32 0.0, %v3444
  %v3446 = vpop.f32.mrb[0].mxu0
  %3447 = vmatprep.mubr.f32.mxu0 0.0
  %3448 = vmatmul.mubr.f32.gmra.mrb[0].mxu0 %v3267
  %v3449 = vpop.f32.mrb[0].mxu0
  %v3450 = vadd.f32 0.0, %v3449
  %v3451 = vpop.f32.mrb[0].mxu0
  %3452 = vmatprep.mubr.f32.mxu0 0.0
  %3453 = vmatmul.mubr.f32.gmra.mrb[0].mxu0 %v3270
  %v3454 = vpop.f32.mrb[0].mxu0
  %v3455 = vadd.f32 0.0, %v3454
  %v3456 = vpop.f32.mrb[0].mxu0
  %3457 = vmatprep.mubr.f32.mxu0 0.0
  %3458 = vmatmul.mubr.f32.gmra.mrb[0].mxu0 %v3273
  %v3459 = vpop.f32.mrb[0].mxu0
  %v3460 = vadd.f32 0.0, %v3459
  %v3461 = vpop.f32.mrb[0].mxu0
  %3462 = vmatprep.mubr.f32.mxu0 0.0
  %3463 = vmatmul.mubr.f32.gmra.mrb[0].mxu0 %v3276
  %v3464 = vpop.f32.mrb[0].mxu0
  %v3465 = vadd.f32 0.0, %v3464
  %v3466 = vpop.f32.mrb[0].mxu0
  %3467 = vdwg.mxu0
  %v3469 = vsel %vm2940, %v3145, 0
  %v3472 = vsel %vm2940, %v3146, 0
  %v3475 = vsel %vm2940, %v3147, 0
  %v3478 = vsel %vm2940, %v3148, 0
  %v3481 = vsel %vm2940, %v3149, 0
  %v3484 = vsel %vm2940, %v3150, 0
  %v3487 = vsel %vm2940, %v3151, 0
  %v3490 = vsel %vm2940, %v3152, 0
  %v3493 = vsel %vm2940, %v3153, 0
  %v3496 = vsel %vm2940, %v3154, 0
  %v3499 = vsel %vm2940, %v3155, 0
  %v3502 = vsel %vm2940, %v3156, 0
  %v3505 = vsel %vm2940, %v3157, 0
  %v3508 = vsel %vm2940, %v3158, 0
  %v3511 = vsel %vm2940, %v3159, 0
  %v3514 = vsel %vm2940, %v3160, 0
  %v3517 = vsel %vm2940, %v3161, 0
  %v3520 = vsel %vm2940, %v3162, 0
  %v3523 = vsel %vm2940, %v3163, 0
  %v3526 = vsel %vm2940, %v3164, 0
  %v3529 = vsel %vm2940, %v3165, 0
  %v3532 = vsel %vm2940, %v3166, 0
  %v3535 = vsel %vm2940, %v3167, 0
  %v3538 = vsel %vm2940, %v3168, 0
  %v3541 = vsel %vm2940, %v3169, 0
  %3543 = vmatprep.subr.mxu0 0.0
  %3544 = vmatpush1.msra.mxu0 %v3170
  %3545 = vmatprep.subr.mxu0 0.0
  %3546 = vmatpush1.msra.mxu0 %v3171
  %3547 = vmatprep.subr.mxu0 0.0
  %3548 = vmatpush1.msra.mxu0 %v3172
  %3549 = vmatprep.subr.mxu0 0.0
  %3550 = vmatpush1.msra.mxu0 %v3173
  %3551 = vmatprep.subr.mxu0 0.0
  %3552 = vmatpush1.msra.mxu0 0.0
  %3553 = vmatprep.subr.mxu0 0.0
  %3554 = vmatpush1.msra.mxu0 0.0
  %3555 = vmatprep.subr.mxu0 0.0
  %3556 = vmatpush1.msra.mxu0 0.0
  %3557 = vmatprep.subr.mxu0 0.0
  %3558 = vmatpush1.msra.mxu0 0.0
  %3559 = vmatprep.subr.mxu0 0.0
  %3560 = vmatpush1.msra.mxu0 0.0
  %3561 = vmatprep.subr.mxu0 0.0
  %3562 = vmatpush1.msra.mxu0 0.0
  %3563 = vmatprep.subr.mxu0 0.0
  %3564 = vmatpush1.msra.mxu0 0.0
  %3565 = vmatprep.subr.mxu0 0.0
  %3566 = vmatpush1.msra.mxu0 0.0
  %3567 = vmatprep.subr.mxu0 0.0
  %3568 = vmatpush1.msra.mxu0 0.0
  %3569 = vmatprep.subr.mxu0 0.0
  %3570 = vmatpush1.msra.mxu0 0.0
  %3571 = vmatprep.subr.mxu0 0.0
  %3572 = vmatpush1.msra.mxu0 0.0
  %3573 = vmatprep.subr.mxu0 0.0
  %3574 = vmatpush1.msra.mxu0 0.0
  %3575 = vmatprep.subr.mxu0 0.0
  %3576 = vmatpush1.msra.mxu0 0.0
  %3577 = vmatprep.subr.mxu0 0.0
  %3578 = vmatpush1.msra.mxu0 0.0
  %3579 = vmatprep.subr.mxu0 0.0
  %3580 = vmatpush1.msra.mxu0 0.0
  %3581 = vmatprep.subr.mxu0 0.0
  %3582 = vmatpush1.msra.mxu0 0.0
  %3583 = vmatprep.subr.mxu0 0.0
  %3584 = vmatpush1.msra.mxu0 0.0
  %3585 = vmatprep.subr.mxu0 0.0
  %3586 = vmatpush1.msra.mxu0 0.0
  %3587 = vmatprep.subr.mxu0 0.0
  %3588 = vmatpush1.msra.mxu0 0.0
  %3589 = vmatprep.subr.mxu0 0.0
  %3590 = vmatpush1.msra.mxu0 0.0
  %3591 = vmatprep.subr.mxu0 0.0
  %3592 = vmatpush1.msra.mxu0 0.0
  %3593 = vmatprep.subr.mxu0 0.0
  %3594 = vmatpush1.msra.mxu0 0.0
  %3595 = vmatprep.subr.mxu0 0.0
  %3596 = vmatpush1.msra.mxu0 0.0
  %3597 = vmatprep.subr.mxu0 0.0
  %3598 = vmatpush1.msra.mxu0 0.0
  %3599 = vmatprep.subr.mxu0 0.0
  %3600 = vmatpush1.msra.mxu0 0.0
  %3601 = vmatprep.subr.mxu0 0.0
  %3602 = vmatpush1.msra.mxu0 0.0
  %3603 = vmatprep.subr.mxu0 0.0
  %3604 = vmatpush1.msra.mxu0 0.0
  %3605 = vmatprep.subr.mxu0 0.0
  %3606 = vmatpush1.msra.mxu0 0.0
  %3607 = vmatprep.mubr.f32.mxu0 0.0
  %3608 = vmatmul.mubr.f32.gmra.mrb[0].mxu0 %v3469
  %v3609 = vpop.f32.mrb[0].mxu0
  %v3610 = vadd.f32 %v3345, %v3609
  %v3611 = vpop.f32.mrb[0].mxu0
  %3612 = vmatprep.mubr.f32.mxu0 0.0
  %3613 = vmatmul.mubr.f32.gmra.mrb[0].mxu0 %v3472
  %v3614 = vpop.f32.mrb[0].mxu0
  %v3615 = vadd.f32 %v3350, %v3614
  %v3616 = vpop.f32.mrb[0].mxu0
  %3617 = vmatprep.mubr.f32.mxu0 0.0
  %3618 = vmatmul.mubr.f32.gmra.mrb[0].mxu0 %v3475
  %v3619 = vpop.f32.mrb[0].mxu0
  %v3620 = vadd.f32 %v3355, %v3619
  %v3621 = vpop.f32.mrb[0].mxu0
  %3622 = vmatprep.mubr.f32.mxu0 0.0
  %3623 = vmatmul.mubr.f32.gmra.mrb[0].mxu0 %v3478
  %v3624 = vpop.f32.mrb[0].mxu0
  %v3625 = vadd.f32 %v3360, %v3624
  %v3626 = vpop.f32.mrb[0].mxu0
  %3627 = vmatprep.mubr.f32.mxu0 0.0
  %3628 = vmatmul.mubr.f32.gmra.mrb[0].mxu0 %v3481
  %v3629 = vpop.f32.mrb[0].mxu0
  %v3630 = vadd.f32 %v3365, %v3629
  %v3631 = vpop.f32.mrb[0].mxu0
  %3632 = vmatprep.mubr.f32.mxu0 0.0
  %3633 = vmatmul.mubr.f32.gmra.mrb[0].mxu0 %v3484
  %v3634 = vpop.f32.mrb[0].mxu0
  %v3635 = vadd.f32 %v3370, %v3634
  %v3636 = vpop.f32.mrb[0].mxu0
  %3637 = vmatprep.mubr.f32.mxu0 0.0
  %3638 = vmatmul.mubr.f32.gmra.mrb[0].mxu0 %v3487
  %v3639 = vpop.f32.mrb[0].mxu0
  %v3640 = vadd.f32 %v3375, %v3639
  %v3641 = vpop.f32.mrb[0].mxu0
  %3642 = vmatprep.mubr.f32.mxu0 0.0
  %3643 = vmatmul.mubr.f32.gmra.mrb[0].mxu0 %v3490
  %v3644 = vpop.f32.mrb[0].mxu0
  %v3645 = vadd.f32 %v3380, %v3644
  %v3646 = vpop.f32.mrb[0].mxu0
  %3647 = vmatprep.mubr.f32.mxu0 0.0
  %3648 = vmatmul.mubr.f32.gmra.mrb[0].mxu0 %v3493
  %v3649 = vpop.f32.mrb[0].mxu0
  %v3650 = vadd.f32 %v3385, %v3649
  %v3651 = vpop.f32.mrb[0].mxu0
  %3652 = vmatprep.mubr.f32.mxu0 0.0
  %3653 = vmatmul.mubr.f32.gmra.mrb[0].mxu0 %v3496
  %v3654 = vpop.f32.mrb[0].mxu0
  %v3655 = vadd.f32 %v3390, %v3654
  %v3656 = vpop.f32.mrb[0].mxu0
  %3657 = vmatprep.mubr.f32.mxu0 0.0
  %3658 = vmatmul.mubr.f32.gmra.mrb[0].mxu0 %v3499
  %v3659 = vpop.f32.mrb[0].mxu0
  %v3660 = vadd.f32 %v3395, %v3659
  %v3661 = vpop.f32.mrb[0].mxu0
  %3662 = vmatprep.mubr.f32.mxu0 0.0
  %3663 = vmatmul.mubr.f32.gmra.mrb[0].mxu0 %v3502
  %v3664 = vpop.f32.mrb[0].mxu0
  %v3665 = vadd.f32 %v3400, %v3664
  %v3666 = vpop.f32.mrb[0].mxu0
  %3667 = vmatprep.mubr.f32.mxu0 0.0
  %3668 = vmatmul.mubr.f32.gmra.mrb[0].mxu0 %v3505
  %v3669 = vpop.f32.mrb[0].mxu0
  %v3670 = vadd.f32 %v3405, %v3669
  %v3671 = vpop.f32.mrb[0].mxu0
  %3672 = vmatprep.mubr.f32.mxu0 0.0
  %3673 = vmatmul.mubr.f32.gmra.mrb[0].mxu0 %v3508
  %v3674 = vpop.f32.mrb[0].mxu0
  %v3675 = vadd.f32 %v3410, %v3674
  %v3676 = vpop.f32.mrb[0].mxu0
  %3677 = vmatprep.mubr.f32.mxu0 0.0
  %3678 = vmatmul.mubr.f32.gmra.mrb[0].mxu0 %v3511
  %v3679 = vpop.f32.mrb[0].mxu0
  %v3680 = vadd.f32 %v3415, %v3679
  %v3681 = vpop.f32.mrb[0].mxu0
  %3682 = vmatprep.mubr.f32.mxu0 0.0
  %3683 = vmatmul.mubr.f32.gmra.mrb[0].mxu0 %v3514
  %v3684 = vpop.f32.mrb[0].mxu0
  %v3685 = vadd.f32 %v3420, %v3684
  %v3686 = vpop.f32.mrb[0].mxu0
  %3687 = vmatprep.mubr.f32.mxu0 0.0
  %3688 = vmatmul.mubr.f32.gmra.mrb[0].mxu0 %v3517
  %v3689 = vpop.f32.mrb[0].mxu0
  %v3690 = vadd.f32 %v3425, %v3689
  %v3691 = vpop.f32.mrb[0].mxu0
  %3692 = vmatprep.mubr.f32.mxu0 0.0
  %3693 = vmatmul.mubr.f32.gmra.mrb[0].mxu0 %v3520
  %v3694 = vpop.f32.mrb[0].mxu0
  %v3695 = vadd.f32 %v3430, %v3694
  %v3696 = vpop.f32.mrb[0].mxu0
  %3697 = vmatprep.mubr.f32.mxu0 0.0
  %3698 = vmatmul.mubr.f32.gmra.mrb[0].mxu0 %v3523
  %v3699 = vpop.f32.mrb[0].mxu0
  %v3700 = vadd.f32 %v3435, %v3699
  %v3701 = vpop.f32.mrb[0].mxu0
  %3702 = vmatprep.mubr.f32.mxu0 0.0
  %3703 = vmatmul.mubr.f32.gmra.mrb[0].mxu0 %v3526
  %v3704 = vpop.f32.mrb[0].mxu0
  %v3705 = vadd.f32 %v3440, %v3704
  %v3706 = vpop.f32.mrb[0].mxu0
  %3707 = vmatprep.mubr.f32.mxu0 0.0
  %3708 = vmatmul.mubr.f32.gmra.mrb[0].mxu0 %v3529
  %v3709 = vpop.f32.mrb[0].mxu0
  %v3710 = vadd.f32 %v3445, %v3709
  %v3711 = vpop.f32.mrb[0].mxu0
  %3712 = vmatprep.mubr.f32.mxu0 0.0
  %3713 = vmatmul.mubr.f32.gmra.mrb[0].mxu0 %v3532
  %v3714 = vpop.f32.mrb[0].mxu0
  %v3715 = vadd.f32 %v3450, %v3714
  %v3716 = vpop.f32.mrb[0].mxu0
  %3717 = vmatprep.mubr.f32.mxu0 0.0
  %3718 = vmatmul.mubr.f32.gmra.mrb[0].mxu0 %v3535
  %v3719 = vpop.f32.mrb[0].mxu0
  %v3720 = vadd.f32 %v3455, %v3719
  %v3721 = vpop.f32.mrb[0].mxu0
  %3722 = vmatprep.mubr.f32.mxu0 0.0
  %3723 = vmatmul.mubr.f32.gmra.mrb[0].mxu0 %v3538
  %v3724 = vpop.f32.mrb[0].mxu0
  %v3725 = vadd.f32 %v3460, %v3724
  %v3726 = vpop.f32.mrb[0].mxu0
  %3727 = vmatprep.mubr.f32.mxu0 0.0
  %3728 = vmatmul.mubr.f32.gmra.mrb[0].mxu0 %v3541
  %v3729 = vpop.f32.mrb[0].mxu0
  %v3730 = vadd.f32 %v3465, %v3729
  %v3731 = vpop.f32.mrb[0].mxu0
  %3732 = vdwg.mxu0
  %v3733 = vld [vmem:[#allocation2 + $0x7] sm:$0xff]
  %v3734 = vld [vmem:[#allocation2 + $0xf] sm:$0xff]
  %v3735 = vld [vmem:[#allocation2 + $0x17] sm:$0xff]
  %v3736 = vld [vmem:[#allocation2 + $0x1f] sm:$0xff]
  %v3737 = vld [vmem:[#allocation2 + $0x27] sm:$0xff]
  %v3738 = vld [vmem:[#allocation2 + $0x2f] sm:$0xff]
  %v3739 = vld [vmem:[#allocation2 + $0x37] sm:$0xff]
  %v3740 = vld [vmem:[#allocation2 + $0x3f] sm:$0xff]
  %v3741 = vld [vmem:[#allocation2 + $0x47] sm:$0xff]
  %v3742 = vld [vmem:[#allocation2 + $0x4f] sm:$0xff]
  %v3743 = vld [vmem:[#allocation2 + $0x57] sm:$0xff]
  %v3744 = vld [vmem:[#allocation2 + $0x5f] sm:$0xff]
  %v3745 = vld [vmem:[#allocation2 + $0x67] sm:$0xff]
  %v3746 = vld [vmem:[#allocation2 + $0x6f] sm:$0xff]
  %v3747 = vld [vmem:[#allocation2 + $0x77] sm:$0xff]
  %v3748 = vld [vmem:[#allocation2 + $0x7f] sm:$0xff]
  %v3749 = vld [vmem:[#allocation2 + $0x87] sm:$0xff]
  %v3750 = vld [vmem:[#allocation2 + $0x8f] sm:$0xff]
  %v3751 = vld [vmem:[#allocation2 + $0x97] sm:$0xff]
  %v3752 = vld [vmem:[#allocation2 + $0x9f] sm:$0xff]
  %v3753 = vld [vmem:[#allocation2 + $0xa7] sm:$0xff]
  %v3754 = vld [vmem:[#allocation2 + $0xaf] sm:$0xff]
  %v3755 = vld [vmem:[#allocation2 + $0xb7] sm:$0xff]
  %v3756 = vld [vmem:[#allocation2 + $0xbf] sm:$0xff]
  %v3757 = vld [vmem:[#allocation2 + $0xc7] sm:$0xff]
  %v3758 = vld [vmem:[%s4 + $0x40] sm:$0xff]
  %v3759 = vld [vmem:[%s4 + $0x48] sm:$0xff]
  %v3760 = vld [vmem:[%s4 + $0x50] sm:$0xff]
  %v3761 = vld [vmem:[%s4 + $0x58] sm:$0xff]
  %v3763 = vsel %vm2940, %v3733, 0
  %v3766 = vsel %vm2940, %v3734, 0
  %v3769 = vsel %vm2940, %v3735, 0
  %v3772 = vsel %vm2940, %v3736, 0
  %v3775 = vsel %vm2940, %v3737, 0
  %v3778 = vsel %vm2940, %v3738, 0
  %v3781 = vsel %vm2940, %v3739, 0
  %v3784 = vsel %vm2940, %v3740, 0
  %v3787 = vsel %vm2940, %v3741, 0
  %v3790 = vsel %vm2940, %v3742, 0
  %v3793 = vsel %vm2940, %v3743, 0
  %v3796 = vsel %vm2940, %v3744, 0
  %v3799 = vsel %vm2940, %v3745, 0
  %v3802 = vsel %vm2940, %v3746, 0
  %v3805 = vsel %vm2940, %v3747, 0
  %v3808 = vsel %vm2940, %v3748, 0
  %v3811 = vsel %vm2940, %v3749, 0
  %v3814 = vsel %vm2940, %v3750, 0
  %v3817 = vsel %vm2940, %v3751, 0
  %v3820 = vsel %vm2940, %v3752, 0
  %v3823 = vsel %vm2940, %v3753, 0
  %v3826 = vsel %vm2940, %v3754, 0
  %v3829 = vsel %vm2940, %v3755, 0
  %v3832 = vsel %vm2940, %v3756, 0
  %v3835 = vsel %vm2940, %v3757, 0
  %3837 = vmatprep.subr.mxu0 0.0
  %3838 = vmatpush1.msra.mxu0 %v3758
  %3839 = vmatprep.subr.mxu0 0.0
  %3840 = vmatpush1.msra.mxu0 %v3759
  %3841 = vmatprep.subr.mxu0 0.0
  %3842 = vmatpush1.msra.mxu0 %v3760
  %3843 = vmatprep.subr.mxu0 0.0
  %3844 = vmatpush1.msra.mxu0 %v3761
  %3845 = vmatprep.subr.mxu0 0.0
  %3846 = vmatpush1.msra.mxu0 0.0
  %3847 = vmatprep.subr.mxu0 0.0
  %3848 = vmatpush1.msra.mxu0 0.0
  %3849 = vmatprep.subr.mxu0 0.0
  %3850 = vmatpush1.msra.mxu0 0.0
  %3851 = vmatprep.subr.mxu0 0.0
  %3852 = vmatpush1.msra.mxu0 0.0
  %3853 = vmatprep.subr.mxu0 0.0
  %3854 = vmatpush1.msra.mxu0 0.0
  %3855 = vmatprep.subr.mxu0 0.0
  %3856 = vmatpush1.msra.mxu0 0.0
  %3857 = vmatprep.subr.mxu0 0.0
  %3858 = vmatpush1.msra.mxu0 0.0
  %3859 = vmatprep.subr.mxu0 0.0
  %3860 = vmatpush1.msra.mxu0 0.0
  %3861 = vmatprep.subr.mxu0 0.0
  %3862 = vmatpush1.msra.mxu0 0.0
  %3863 = vmatprep.subr.mxu0 0.0
  %3864 = vmatpush1.msra.mxu0 0.0
  %3865 = vmatprep.subr.mxu0 0.0
  %3866 = vmatpush1.msra.mxu0 0.0
  %3867 = vmatprep.subr.mxu0 0.0
  %3868 = vmatpush1.msra.mxu0 0.0
  %3869 = vmatprep.subr.mxu0 0.0
  %3870 = vmatpush1.msra.mxu0 0.0
  %3871 = vmatprep.subr.mxu0 0.0
  %3872 = vmatpush1.msra.mxu0 0.0
  %3873 = vmatprep.subr.mxu0 0.0
  %3874 = vmatpush1.msra.mxu0 0.0
  %3875 = vmatprep.subr.mxu0 0.0
  %3876 = vmatpush1.msra.mxu0 0.0
  %3877 = vmatprep.subr.mxu0 0.0
  %3878 = vmatpush1.msra.mxu0 0.0
  %3879 = vmatprep.subr.mxu0 0.0
  %3880 = vmatpush1.msra.mxu0 0.0
  %3881 = vmatprep.subr.mxu0 0.0
  %3882 = vmatpush1.msra.mxu0 0.0
  %3883 = vmatprep.subr.mxu0 0.0
  %3884 = vmatpush1.msra.mxu0 0.0
  %3885 = vmatprep.subr.mxu0 0.0
  %3886 = vmatpush1.msra.mxu0 0.0
  %3887 = vmatprep.subr.mxu0 0.0
  %3888 = vmatpush1.msra.mxu0 0.0
  %3889 = vmatprep.subr.mxu0 0.0
  %3890 = vmatpush1.msra.mxu0 0.0
  %3891 = vmatprep.subr.mxu0 0.0
  %3892 = vmatpush1.msra.mxu0 0.0
  %3893 = vmatprep.subr.mxu0 0.0
  %3894 = vmatpush1.msra.mxu0 0.0
  %3895 = vmatprep.subr.mxu0 0.0
  %3896 = vmatpush1.msra.mxu0 0.0
  %3897 = vmatprep.subr.mxu0 0.0
  %3898 = vmatpush1.msra.mxu0 0.0
  %3899 = vmatprep.subr.mxu0 0.0
  %3900 = vmatpush1.msra.mxu0 0.0
  %3901 = vmatprep.mubr.f32.mxu0 0.0
  %3902 = vmatmul.mubr.f32.gmra.mrb[0].mxu0 %v3763
  %v3903 = vpop.f32.mrb[0].mxu0
  %v3904 = vadd.f32 0.0, %v3903
  %v3905 = vpop.f32.mrb[0].mxu0
  %3906 = vmatprep.mubr.f32.mxu0 0.0
  %3907 = vmatmul.mubr.f32.gmra.mrb[0].mxu0 %v3766
  %v3908 = vpop.f32.mrb[0].mxu0
  %v3909 = vadd.f32 0.0, %v3908
  %v3910 = vpop.f32.mrb[0].mxu0
  %3911 = vmatprep.mubr.f32.mxu0 0.0
  %3912 = vmatmul.mubr.f32.gmra.mrb[0].mxu0 %v3769
  %v3913 = vpop.f32.mrb[0].mxu0
  %v3914 = vadd.f32 0.0, %v3913
  %v3915 = vpop.f32.mrb[0].mxu0
  %3916 = vmatprep.mubr.f32.mxu0 0.0
  %3917 = vmatmul.mubr.f32.gmra.mrb[0].mxu0 %v3772
  %v3918 = vpop.f32.mrb[0].mxu0
  %v3919 = vadd.f32 0.0, %v3918
  %v3920 = vpop.f32.mrb[0].mxu0
  %3921 = vmatprep.mubr.f32.mxu0 0.0
  %3922 = vmatmul.mubr.f32.gmra.mrb[0].mxu0 %v3775
  %v3923 = vpop.f32.mrb[0].mxu0
  %v3924 = vadd.f32 0.0, %v3923
  %v3925 = vpop.f32.mrb[0].mxu0
  %3926 = vmatprep.mubr.f32.mxu0 0.0
  %3927 = vmatmul.mubr.f32.gmra.mrb[0].mxu0 %v3778
  %v3928 = vpop.f32.mrb[0].mxu0
  %v3929 = vadd.f32 0.0, %v3928
  %v3930 = vpop.f32.mrb[0].mxu0
  %3931 = vmatprep.mubr.f32.mxu0 0.0
  %3932 = vmatmul.mubr.f32.gmra.mrb[0].mxu0 %v3781
  %v3933 = vpop.f32.mrb[0].mxu0
  %v3934 = vadd.f32 0.0, %v3933
  %v3935 = vpop.f32.mrb[0].mxu0
  %3936 = vmatprep.mubr.f32.mxu0 0.0
  %3937 = vmatmul.mubr.f32.gmra.mrb[0].mxu0 %v3784
  %v3938 = vpop.f32.mrb[0].mxu0
  %v3939 = vadd.f32 0.0, %v3938
  %v3940 = vpop.f32.mrb[0].mxu0
  %3941 = vmatprep.mubr.f32.mxu0 0.0
  %3942 = vmatmul.mubr.f32.gmra.mrb[0].mxu0 %v3787
  %v3943 = vpop.f32.mrb[0].mxu0
  %v3944 = vadd.f32 0.0, %v3943
  %v3945 = vpop.f32.mrb[0].mxu0
  %3946 = vmatprep.mubr.f32.mxu0 0.0
  %3947 = vmatmul.mubr.f32.gmra.mrb[0].mxu0 %v3790
  %v3948 = vpop.f32.mrb[0].mxu0
  %v3949 = vadd.f32 0.0, %v3948
  %v3950 = vpop.f32.mrb[0].mxu0
  %3951 = vmatprep.mubr.f32.mxu0 0.0
  %3952 = vmatmul.mubr.f32.gmra.mrb[0].mxu0 %v3793
  %v3953 = vpop.f32.mrb[0].mxu0
  %v3954 = vadd.f32 0.0, %v3953
  %v3955 = vpop.f32.mrb[0].mxu0
  %3956 = vmatprep.mubr.f32.mxu0 0.0
  %3957 = vmatmul.mubr.f32.gmra.mrb[0].mxu0 %v3796
  %v3958 = vpop.f32.mrb[0].mxu0
  %v3959 = vadd.f32 0.0, %v3958
  %v3960 = vpop.f32.mrb[0].mxu0
  %3961 = vmatprep.mubr.f32.mxu0 0.0
  %3962 = vmatmul.mubr.f32.gmra.mrb[0].mxu0 %v3799
  %v3963 = vpop.f32.mrb[0].mxu0
  %v3964 = vadd.f32 0.0, %v3963
  %v3965 = vpop.f32.mrb[0].mxu0
  %3966 = vmatprep.mubr.f32.mxu0 0.0
  %3967 = vmatmul.mubr.f32.gmra.mrb[0].mxu0 %v3802
  %v3968 = vpop.f32.mrb[0].mxu0
  %v3969 = vadd.f32 0.0, %v3968
  %v3970 = vpop.f32.mrb[0].mxu0
  %3971 = vmatprep.mubr.f32.mxu0 0.0
  %3972 = vmatmul.mubr.f32.gmra.mrb[0].mxu0 %v3805
  %v3973 = vpop.f32.mrb[0].mxu0
  %v3974 = vadd.f32 0.0, %v3973
  %v3975 = vpop.f32.mrb[0].mxu0
  %3976 = vmatprep.mubr.f32.mxu0 0.0
  %3977 = vmatmul.mubr.f32.gmra.mrb[0].mxu0 %v3808
  %v3978 = vpop.f32.mrb[0].mxu0
  %v3979 = vadd.f32 0.0, %v3978
  %v3980 = vpop.f32.mrb[0].mxu0
  %3981 = vmatprep.mubr.f32.mxu0 0.0
  %3982 = vmatmul.mubr.f32.gmra.mrb[0].mxu0 %v3811
  %v3983 = vpop.f32.mrb[0].mxu0
  %v3984 = vadd.f32 0.0, %v3983
  %v3985 = vpop.f32.mrb[0].mxu0
  %3986 = vmatprep.mubr.f32.mxu0 0.0
  %3987 = vmatmul.mubr.f32.gmra.mrb[0].mxu0 %v3814
  %v3988 = vpop.f32.mrb[0].mxu0
  %v3989 = vadd.f32 0.0, %v3988
  %v3990 = vpop.f32.mrb[0].mxu0
  %3991 = vmatprep.mubr.f32.mxu0 0.0
  %3992 = vmatmul.mubr.f32.gmra.mrb[0].mxu0 %v3817
  %v3993 = vpop.f32.mrb[0].mxu0
  %v3994 = vadd.f32 0.0, %v3993
  %v3995 = vpop.f32.mrb[0].mxu0
  %3996 = vmatprep.mubr.f32.mxu0 0.0
  %3997 = vmatmul.mubr.f32.gmra.mrb[0].mxu0 %v3820
  %v3998 = vpop.f32.mrb[0].mxu0
  %v3999 = vadd.f32 0.0, %v3998
  %v4000 = vpop.f32.mrb[0].mxu0
  %4001 = vmatprep.mubr.f32.mxu0 0.0
  %4002 = vmatmul.mubr.f32.gmra.mrb[0].mxu0 %v3823
  %v4003 = vpop.f32.mrb[0].mxu0
  %v4004 = vadd.f32 0.0, %v4003
  %v4005 = vpop.f32.mrb[0].mxu0
  %4006 = vmatprep.mubr.f32.mxu0 0.0
  %4007 = vmatmul.mubr.f32.gmra.mrb[0].mxu0 %v3826
  %v4008 = vpop.f32.mrb[0].mxu0
  %v4009 = vadd.f32 0.0, %v4008
  %v4010 = vpop.f32.mrb[0].mxu0
  %4011 = vmatprep.mubr.f32.mxu0 0.0
  %4012 = vmatmul.mubr.f32.gmra.mrb[0].mxu0 %v3829
  %v4013 = vpop.f32.mrb[0].mxu0
  %v4014 = vadd.f32 0.0, %v4013
  %v4015 = vpop.f32.mrb[0].mxu0
  %4016 = vmatprep.mubr.f32.mxu0 0.0
  %4017 = vmatmul.mubr.f32.gmra.mrb[0].mxu0 %v3832
  %v4018 = vpop.f32.mrb[0].mxu0
  %v4019 = vadd.f32 0.0, %v4018
  %v4020 = vpop.f32.mrb[0].mxu0
  %4021 = vmatprep.mubr.f32.mxu0 0.0
  %4022 = vmatmul.mubr.f32.gmra.mrb[0].mxu0 %v3835
  %v4023 = vpop.f32.mrb[0].mxu0
  %v4024 = vadd.f32 0.0, %v4023
  %v4025 = vpop.f32.mrb[0].mxu0
  %4026 = vdwg.mxu0
  %v4027 = vadd.f32 %v3610, %v3904
  %v4028 = vadd.f32 %v3615, %v3909
  %v4029 = vadd.f32 %v3620, %v3914
  %v4030 = vadd.f32 %v3625, %v3919
  %v4031 = vadd.f32 %v3630, %v3924
  %v4032 = vadd.f32 %v3635, %v3929
  %v4033 = vadd.f32 %v3640, %v3934
  %v4034 = vadd.f32 %v3645, %v3939
  %v4035 = vadd.f32 %v3650, %v3944
  %v4036 = vadd.f32 %v3655, %v3949
  %v4037 = vadd.f32 %v3660, %v3954
  %v4038 = vadd.f32 %v3665, %v3959
  %v4039 = vadd.f32 %v3670, %v3964
  %v4040 = vadd.f32 %v3675, %v3969
  %v4041 = vadd.f32 %v3680, %v3974
  %v4042 = vadd.f32 %v3685, %v3979
  %v4043 = vadd.f32 %v3690, %v3984
  %v4044 = vadd.f32 %v3695, %v3989
  %v4045 = vadd.f32 %v3700, %v3994
  %v4046 = vadd.f32 %v3705, %v3999
  %v4047 = vadd.f32 %v3710, %v4004
  %v4048 = vadd.f32 %v3715, %v4009
  %v4049 = vadd.f32 %v3720, %v4014
  %v4050 = vadd.f32 %v3725, %v4019
  %v4051 = vadd.f32 %v3730, %v4024
  %v4052 = vld [vmem:[#allocation2 + $0xf] sm:$0xff]
  %v4053 = vld [vmem:[#allocation2 + $0x17] sm:$0xff]
  %v4054 = vld [vmem:[#allocation2 + $0x1f] sm:$0xff]
  %v4055 = vld [vmem:[#allocation2 + $0x27] sm:$0xff]
  %v4056 = vld [vmem:[#allocation2 + $0x2f] sm:$0xff]
  %v4057 = vld [vmem:[#allocation2 + $0x37] sm:$0xff]
  %v4058 = vld [vmem:[#allocation2 + $0x3f] sm:$0xff]
  %v4059 = vld [vmem:[#allocation2 + $0x47] sm:$0xff]
  %v4060 = vld [vmem:[#allocation2 + $0x4f] sm:$0xff]
  %v4061 = vld [vmem:[#allocation2 + $0x57] sm:$0xff]
  %v4062 = vld [vmem:[#allocation2 + $0x5f] sm:$0xff]
  %v4063 = vld [vmem:[#allocation2 + $0x67] sm:$0xff]
  %v4064 = vld [vmem:[#allocation2 + $0x6f] sm:$0xff]
  %v4065 = vld [vmem:[#allocation2 + $0x77] sm:$0xff]
  %v4066 = vld [vmem:[#allocation2 + $0x7f] sm:$0xff]
  %v4067 = vld [vmem:[#allocation2 + $0x87] sm:$0xff]
  %v4068 = vld [vmem:[#allocation2 + $0x8f] sm:$0xff]
  %v4069 = vld [vmem:[#allocation2 + $0x97] sm:$0xff]
  %v4070 = vld [vmem:[#allocation2 + $0x9f] sm:$0xff]
  %v4071 = vld [vmem:[#allocation2 + $0xa7] sm:$0xff]
  %v4072 = vld [vmem:[#allocation2 + $0xaf] sm:$0xff]
  %v4073 = vld [vmem:[#allocation2 + $0xb7] sm:$0xff]
  %v4074 = vld [vmem:[#allocation2 + $0xbf] sm:$0xff]
  %v4075 = vld [vmem:[#allocation2 + $0xc7] sm:$0xff]
  %v4076 = vld [vmem:[#allocation2 + $0xcf] sm:$0xff]
  %v4077 = vld [vmem:[%s4 + $0x60] sm:$0xff]
  %v4078 = vld [vmem:[%s4 + $0x68] sm:$0xff]
  %v4079 = vld [vmem:[%s4 + $0x70] sm:$0xff]
  %v4080 = vld [vmem:[%s4 + $0x78] sm:$0xff]
  %v4082 = vsel %vm2940, %v4052, 0
  %v4085 = vsel %vm2940, %v4053, 0
  %v4088 = vsel %vm2940, %v4054, 0
  %v4091 = vsel %vm2940, %v4055, 0
  %v4094 = vsel %vm2940, %v4056, 0
  %v4097 = vsel %vm2940, %v4057, 0
  %v4100 = vsel %vm2940, %v4058, 0
  %v4103 = vsel %vm2940, %v4059, 0
  %v4106 = vsel %vm2940, %v4060, 0
  %v4109 = vsel %vm2940, %v4061, 0
  %v4112 = vsel %vm2940, %v4062, 0
  %v4115 = vsel %vm2940, %v4063, 0
  %v4118 = vsel %vm2940, %v4064, 0
  %v4121 = vsel %vm2940, %v4065, 0
  %v4124 = vsel %vm2940, %v4066, 0
  %v4127 = vsel %vm2940, %v4067, 0
  %v4130 = vsel %vm2940, %v4068, 0
  %v4133 = vsel %vm2940, %v4069, 0
  %v4136 = vsel %vm2940, %v4070, 0
  %v4139 = vsel %vm2940, %v4071, 0
  %v4142 = vsel %vm2940, %v4072, 0
  %v4145 = vsel %vm2940, %v4073, 0
  %v4148 = vsel %vm2940, %v4074, 0
  %v4151 = vsel %vm2940, %v4075, 0
  %v4154 = vsel %vm2940, %v4076, 0
  %4156 = vmatprep.subr.mxu0 0.0
  %4157 = vmatpush1.msra.mxu0 %v4077
  %4158 = vmatprep.subr.mxu0 0.0
  %4159 = vmatpush1.msra.mxu0 %v4078
  %4160 = vmatprep.subr.mxu0 0.0
  %4161 = vmatpush1.msra.mxu0 %v4079
  %4162 = vmatprep.subr.mxu0 0.0
  %4163 = vmatpush1.msra.mxu0 %v4080
  %4164 = vmatprep.subr.mxu0 0.0
  %4165 = vmatpush1.msra.mxu0 0.0
  %4166 = vmatprep.subr.mxu0 0.0
  %4167 = vmatpush1.msra.mxu0 0.0
  %4168 = vmatprep.subr.mxu0 0.0
  %4169 = vmatpush1.msra.mxu0 0.0
  %4170 = vmatprep.subr.mxu0 0.0
  %4171 = vmatpush1.msra.mxu0 0.0
  %4172 = vmatprep.subr.mxu0 0.0
  %4173 = vmatpush1.msra.mxu0 0.0
  %4174 = vmatprep.subr.mxu0 0.0
  %4175 = vmatpush1.msra.mxu0 0.0
  %4176 = vmatprep.subr.mxu0 0.0
  %4177 = vmatpush1.msra.mxu0 0.0
  %4178 = vmatprep.subr.mxu0 0.0
  %4179 = vmatpush1.msra.mxu0 0.0
  %4180 = vmatprep.subr.mxu0 0.0
  %4181 = vmatpush1.msra.mxu0 0.0
  %4182 = vmatprep.subr.mxu0 0.0
  %4183 = vmatpush1.msra.mxu0 0.0
  %4184 = vmatprep.subr.mxu0 0.0
  %4185 = vmatpush1.msra.mxu0 0.0
  %4186 = vmatprep.subr.mxu0 0.0
  %4187 = vmatpush1.msra.mxu0 0.0
  %4188 = vmatprep.subr.mxu0 0.0
  %4189 = vmatpush1.msra.mxu0 0.0
  %4190 = vmatprep.subr.mxu0 0.0
  %4191 = vmatpush1.msra.mxu0 0.0
  %4192 = vmatprep.subr.mxu0 0.0
  %4193 = vmatpush1.msra.mxu0 0.0
  %4194 = vmatprep.subr.mxu0 0.0
  %4195 = vmatpush1.msra.mxu0 0.0
  %4196 = vmatprep.subr.mxu0 0.0
  %4197 = vmatpush1.msra.mxu0 0.0
  %4198 = vmatprep.subr.mxu0 0.0
  %4199 = vmatpush1.msra.mxu0 0.0
  %4200 = vmatprep.subr.mxu0 0.0
  %4201 = vmatpush1.msra.mxu0 0.0
  %4202 = vmatprep.subr.mxu0 0.0
  %4203 = vmatpush1.msra.mxu0 0.0
  %4204 = vmatprep.subr.mxu0 0.0
  %4205 = vmatpush1.msra.mxu0 0.0
  %4206 = vmatprep.subr.mxu0 0.0
  %4207 = vmatpush1.msra.mxu0 0.0
  %4208 = vmatprep.subr.mxu0 0.0
  %4209 = vmatpush1.msra.mxu0 0.0
  %4210 = vmatprep.subr.mxu0 0.0
  %4211 = vmatpush1.msra.mxu0 0.0
  %4212 = vmatprep.subr.mxu0 0.0
  %4213 = vmatpush1.msra.mxu0 0.0
  %4214 = vmatprep.subr.mxu0 0.0
  %4215 = vmatpush1.msra.mxu0 0.0
  %4216 = vmatprep.subr.mxu0 0.0
  %4217 = vmatpush1.msra.mxu0 0.0
  %4218 = vmatprep.subr.mxu0 0.0
  %4219 = vmatpush1.msra.mxu0 0.0
  %4220 = vmatprep.mubr.f32.mxu0 0.0
  %4221 = vmatmul.mubr.f32.gmra.mrb[0].mxu0 %v4082
  %v4222 = vpop.f32.mrb[0].mxu0
  %v4223 = vadd.f32 0.0, %v4222
  %v4224 = vpop.f32.mrb[0].mxu0
  %4225 = vmatprep.mubr.f32.mxu0 0.0
  %4226 = vmatmul.mubr.f32.gmra.mrb[0].mxu0 %v4085
  %v4227 = vpop.f32.mrb[0].mxu0
  %v4228 = vadd.f32 0.0, %v4227
  %v4229 = vpop.f32.mrb[0].mxu0
  %4230 = vmatprep.mubr.f32.mxu0 0.0
  %4231 = vmatmul.mubr.f32.gmra.mrb[0].mxu0 %v4088
  %v4232 = vpop.f32.mrb[0].mxu0
  %v4233 = vadd.f32 0.0, %v4232
  %v4234 = vpop.f32.mrb[0].mxu0
  %4235 = vmatprep.mubr.f32.mxu0 0.0
  %4236 = vmatmul.mubr.f32.gmra.mrb[0].mxu0 %v4091
  %v4237 = vpop.f32.mrb[0].mxu0
  %v4238 = vadd.f32 0.0, %v4237
  %v4239 = vpop.f32.mrb[0].mxu0
  %4240 = vmatprep.mubr.f32.mxu0 0.0
  %4241 = vmatmul.mubr.f32.gmra.mrb[0].mxu0 %v4094
  %v4242 = vpop.f32.mrb[0].mxu0
  %v4243 = vadd.f32 0.0, %v4242
  %v4244 = vpop.f32.mrb[0].mxu0
  %4245 = vmatprep.mubr.f32.mxu0 0.0
  %4246 = vmatmul.mubr.f32.gmra.mrb[0].mxu0 %v4097
  %v4247 = vpop.f32.mrb[0].mxu0
  %v4248 = vadd.f32 0.0, %v4247
  %v4249 = vpop.f32.mrb[0].mxu0
  %4250 = vmatprep.mubr.f32.mxu0 0.0
  %4251 = vmatmul.mubr.f32.gmra.mrb[0].mxu0 %v4100
  %v4252 = vpop.f32.mrb[0].mxu0
  %v4253 = vadd.f32 0.0, %v4252
  %v4254 = vpop.f32.mrb[0].mxu0
  %4255 = vmatprep.mubr.f32.mxu0 0.0
  %4256 = vmatmul.mubr.f32.gmra.mrb[0].mxu0 %v4103
  %v4257 = vpop.f32.mrb[0].mxu0
  %v4258 = vadd.f32 0.0, %v4257
  %v4259 = vpop.f32.mrb[0].mxu0
  %4260 = vmatprep.mubr.f32.mxu0 0.0
  %4261 = vmatmul.mubr.f32.gmra.mrb[0].mxu0 %v4106
  %v4262 = vpop.f32.mrb[0].mxu0
  %v4263 = vadd.f32 0.0, %v4262
  %v4264 = vpop.f32.mrb[0].mxu0
  %4265 = vmatprep.mubr.f32.mxu0 0.0
  %4266 = vmatmul.mubr.f32.gmra.mrb[0].mxu0 %v4109
  %v4267 = vpop.f32.mrb[0].mxu0
  %v4268 = vadd.f32 0.0, %v4267
  %v4269 = vpop.f32.mrb[0].mxu0
  %4270 = vmatprep.mubr.f32.mxu0 0.0
  %4271 = vmatmul.mubr.f32.gmra.mrb[0].mxu0 %v4112
  %v4272 = vpop.f32.mrb[0].mxu0
  %v4273 = vadd.f32 0.0, %v4272
  %v4274 = vpop.f32.mrb[0].mxu0
  %4275 = vmatprep.mubr.f32.mxu0 0.0
  %4276 = vmatmul.mubr.f32.gmra.mrb[0].mxu0 %v4115
  %v4277 = vpop.f32.mrb[0].mxu0
  %v4278 = vadd.f32 0.0, %v4277
  %v4279 = vpop.f32.mrb[0].mxu0
  %4280 = vmatprep.mubr.f32.mxu0 0.0
  %4281 = vmatmul.mubr.f32.gmra.mrb[0].mxu0 %v4118
  %v4282 = vpop.f32.mrb[0].mxu0
  %v4283 = vadd.f32 0.0, %v4282
  %v4284 = vpop.f32.mrb[0].mxu0
  %4285 = vmatprep.mubr.f32.mxu0 0.0
  %4286 = vmatmul.mubr.f32.gmra.mrb[0].mxu0 %v4121
  %v4287 = vpop.f32.mrb[0].mxu0
  %v4288 = vadd.f32 0.0, %v4287
  %v4289 = vpop.f32.mrb[0].mxu0
  %4290 = vmatprep.mubr.f32.mxu0 0.0
  %4291 = vmatmul.mubr.f32.gmra.mrb[0].mxu0 %v4124
  %v4292 = vpop.f32.mrb[0].mxu0
  %v4293 = vadd.f32 0.0, %v4292
  %v4294 = vpop.f32.mrb[0].mxu0
  %4295 = vmatprep.mubr.f32.mxu0 0.0
  %4296 = vmatmul.mubr.f32.gmra.mrb[0].mxu0 %v4127
  %v4297 = vpop.f32.mrb[0].mxu0
  %v4298 = vadd.f32 0.0, %v4297
  %v4299 = vpop.f32.mrb[0].mxu0
  %4300 = vmatprep.mubr.f32.mxu0 0.0
  %4301 = vmatmul.mubr.f32.gmra.mrb[0].mxu0 %v4130
  %v4302 = vpop.f32.mrb[0].mxu0
  %v4303 = vadd.f32 0.0, %v4302
  %v4304 = vpop.f32.mrb[0].mxu0
  %4305 = vmatprep.mubr.f32.mxu0 0.0
  %4306 = vmatmul.mubr.f32.gmra.mrb[0].mxu0 %v4133
  %v4307 = vpop.f32.mrb[0].mxu0
  %v4308 = vadd.f32 0.0, %v4307
  %v4309 = vpop.f32.mrb[0].mxu0
  %4310 = vmatprep.mubr.f32.mxu0 0.0
  %4311 = vmatmul.mubr.f32.gmra.mrb[0].mxu0 %v4136
  %v4312 = vpop.f32.mrb[0].mxu0
  %v4313 = vadd.f32 0.0, %v4312
  %v4314 = vpop.f32.mrb[0].mxu0
  %4315 = vmatprep.mubr.f32.mxu0 0.0
  %4316 = vmatmul.mubr.f32.gmra.mrb[0].mxu0 %v4139
  %v4317 = vpop.f32.mrb[0].mxu0
  %v4318 = vadd.f32 0.0, %v4317
  %v4319 = vpop.f32.mrb[0].mxu0
  %4320 = vmatprep.mubr.f32.mxu0 0.0
  %4321 = vmatmul.mubr.f32.gmra.mrb[0].mxu0 %v4142
  %v4322 = vpop.f32.mrb[0].mxu0
  %v4323 = vadd.f32 0.0, %v4322
  %v4324 = vpop.f32.mrb[0].mxu0
  %4325 = vmatprep.mubr.f32.mxu0 0.0
  %4326 = vmatmul.mubr.f32.gmra.mrb[0].mxu0 %v4145
  %v4327 = vpop.f32.mrb[0].mxu0
  %v4328 = vadd.f32 0.0, %v4327
  %v4329 = vpop.f32.mrb[0].mxu0
  %4330 = vmatprep.mubr.f32.mxu0 0.0
  %4331 = vmatmul.mubr.f32.gmra.mrb[0].mxu0 %v4148
  %v4332 = vpop.f32.mrb[0].mxu0
  %v4333 = vadd.f32 0.0, %v4332
  %v4334 = vpop.f32.mrb[0].mxu0
  %4335 = vmatprep.mubr.f32.mxu0 0.0
  %4336 = vmatmul.mubr.f32.gmra.mrb[0].mxu0 %v4151
  %v4337 = vpop.f32.mrb[0].mxu0
  %v4338 = vadd.f32 0.0, %v4337
  %v4339 = vpop.f32.mrb[0].mxu0
  %4340 = vmatprep.mubr.f32.mxu0 0.0
  %4341 = vmatmul.mubr.f32.gmra.mrb[0].mxu0 %v4154
  %v4342 = vpop.f32.mrb[0].mxu0
  %v4343 = vadd.f32 0.0, %v4342
  %v4344 = vpop.f32.mrb[0].mxu0
  %4345 = vdwg.mxu0
  %v4346 = vadd.f32 %v4027, %v4223
  %v4347 = vadd.f32 %v4028, %v4228
  %v4348 = vadd.f32 %v4029, %v4233
  %v4349 = vadd.f32 %v4030, %v4238
  %v4350 = vadd.f32 %v4031, %v4243
  %v4351 = vadd.f32 %v4032, %v4248
  %v4352 = vadd.f32 %v4033, %v4253
  %v4353 = vadd.f32 %v4034, %v4258
  %v4354 = vadd.f32 %v4035, %v4263
  %v4355 = vadd.f32 %v4036, %v4268
  %v4356 = vadd.f32 %v4037, %v4273
  %v4357 = vadd.f32 %v4038, %v4278
  %v4358 = vadd.f32 %v4039, %v4283
  %v4359 = vadd.f32 %v4040, %v4288
  %v4360 = vadd.f32 %v4041, %v4293
  %v4361 = vadd.f32 %v4042, %v4298
  %v4362 = vadd.f32 %v4043, %v4303
  %v4363 = vadd.f32 %v4044, %v4308
  %v4364 = vadd.f32 %v4045, %v4313
  %v4365 = vadd.f32 %v4046, %v4318
  %v4366 = vadd.f32 %v4047, %v4323
  %v4367 = vadd.f32 %v4048, %v4328
  %v4368 = vadd.f32 %v4049, %v4333
  %v4369 = vadd.f32 %v4050, %v4338
  %v4370 = vadd.f32 %v4051, %v4343
  %v4371 = vld [vmem:[#allocation2 + $0x10] sm:$0xff]
  %v4372 = vld [vmem:[#allocation2 + $0x18] sm:$0xff]
  %v4373 = vld [vmem:[#allocation2 + $0x20] sm:$0xff]
  %v4374 = vld [vmem:[#allocation2 + $0x28] sm:$0xff]
  %v4375 = vld [vmem:[#allocation2 + $0x30] sm:$0xff]
  %v4376 = vld [vmem:[#allocation2 + $0x38] sm:$0xff]
  %v4377 = vld [vmem:[#allocation2 + $0x40] sm:$0xff]
  %v4378 = vld [vmem:[#allocation2 + $0x48] sm:$0xff]
  %v4379 = vld [vmem:[#allocation2 + $0x50] sm:$0xff]
  %v4380 = vld [vmem:[#allocation2 + $0x58] sm:$0xff]
  %v4381 = vld [vmem:[#allocation2 + $0x60] sm:$0xff]
  %v4382 = vld [vmem:[#allocation2 + $0x68] sm:$0xff]
  %v4383 = vld [vmem:[#allocation2 + $0x70] sm:$0xff]
  %v4384 = vld [vmem:[#allocation2 + $0x78] sm:$0xff]
  %v4385 = vld [vmem:[#allocation2 + $0x80] sm:$0xff]
  %v4386 = vld [vmem:[#allocation2 + $0x88] sm:$0xff]
  %v4387 = vld [vmem:[#allocation2 + $0x90] sm:$0xff]
  %v4388 = vld [vmem:[#allocation2 + $0x98] sm:$0xff]
  %v4389 = vld [vmem:[#allocation2 + $0xa0] sm:$0xff]
  %v4390 = vld [vmem:[#allocation2 + $0xa8] sm:$0xff]
  %v4391 = vld [vmem:[#allocation2 + $0xb0] sm:$0xff]
  %v4392 = vld [vmem:[#allocation2 + $0xb8] sm:$0xff]
  %v4393 = vld [vmem:[#allocation2 + $0xc0] sm:$0xff]
  %v4394 = vld [vmem:[#allocation2 + $0xc8] sm:$0xff]
  %v4395 = vld [vmem:[#allocation2 + $0xd0] sm:$0xff]
  %v4396 = vld [vmem:[%s4 + $0x80] sm:$0xff]
  %v4397 = vld [vmem:[%s4 + $0x88] sm:$0xff]
  %v4398 = vld [vmem:[%s4 + $0x90] sm:$0xff]
  %v4399 = vld [vmem:[%s4 + $0x98] sm:$0xff]
  %v4401 = vsel %vm2940, %v4371, 0
  %v4404 = vsel %vm2940, %v4372, 0
  %v4407 = vsel %vm2940, %v4373, 0
  %v4410 = vsel %vm2940, %v4374, 0
  %v4413 = vsel %vm2940, %v4375, 0
  %v4416 = vsel %vm2940, %v4376, 0
  %v4419 = vsel %vm2940, %v4377, 0
  %v4422 = vsel %vm2940, %v4378, 0
  %v4425 = vsel %vm2940, %v4379, 0
  %v4428 = vsel %vm2940, %v4380, 0
  %v4431 = vsel %vm2940, %v4381, 0
  %v4434 = vsel %vm2940, %v4382, 0
  %v4437 = vsel %vm2940, %v4383, 0
  %v4440 = vsel %vm2940, %v4384, 0
  %v4443 = vsel %vm2940, %v4385, 0
  %v4446 = vsel %vm2940, %v4386, 0
  %v4449 = vsel %vm2940, %v4387, 0
  %v4452 = vsel %vm2940, %v4388, 0
  %v4455 = vsel %vm2940, %v4389, 0
  %v4458 = vsel %vm2940, %v4390, 0
  %v4461 = vsel %vm2940, %v4391, 0
  %v4464 = vsel %vm2940, %v4392, 0
  %v4467 = vsel %vm2940, %v4393, 0
  %v4470 = vsel %vm2940, %v4394, 0
  %v4473 = vsel %vm2940, %v4395, 0
  %4475 = vmatprep.subr.mxu0 0.0
  %4476 = vmatpush1.msra.mxu0 %v4396
  %4477 = vmatprep.subr.mxu0 0.0
  %4478 = vmatpush1.msra.mxu0 %v4397
  %4479 = vmatprep.subr.mxu0 0.0
  %4480 = vmatpush1.msra.mxu0 %v4398
  %4481 = vmatprep.subr.mxu0 0.0
  %4482 = vmatpush1.msra.mxu0 %v4399
  %4483 = vmatprep.subr.mxu0 0.0
  %4484 = vmatpush1.msra.mxu0 0.0
  %4485 = vmatprep.subr.mxu0 0.0
  %4486 = vmatpush1.msra.mxu0 0.0
  %4487 = vmatprep.subr.mxu0 0.0
  %4488 = vmatpush1.msra.mxu0 0.0
  %4489 = vmatprep.subr.mxu0 0.0
  %4490 = vmatpush1.msra.mxu0 0.0
  %4491 = vmatprep.subr.mxu0 0.0
  %4492 = vmatpush1.msra.mxu0 0.0
  %4493 = vmatprep.subr.mxu0 0.0
  %4494 = vmatpush1.msra.mxu0 0.0
  %4495 = vmatprep.subr.mxu0 0.0
  %4496 = vmatpush1.msra.mxu0 0.0
  %4497 = vmatprep.subr.mxu0 0.0
  %4498 = vmatpush1.msra.mxu0 0.0
  %4499 = vmatprep.subr.mxu0 0.0
  %4500 = vmatpush1.msra.mxu0 0.0
  %4501 = vmatprep.subr.mxu0 0.0
  %4502 = vmatpush1.msra.mxu0 0.0
  %4503 = vmatprep.subr.mxu0 0.0
  %4504 = vmatpush1.msra.mxu0 0.0
  %4505 = vmatprep.subr.mxu0 0.0
  %4506 = vmatpush1.msra.mxu0 0.0
  %4507 = vmatprep.subr.mxu0 0.0
  %4508 = vmatpush1.msra.mxu0 0.0
  %4509 = vmatprep.subr.mxu0 0.0
  %4510 = vmatpush1.msra.mxu0 0.0
  %4511 = vmatprep.subr.mxu0 0.0
  %4512 = vmatpush1.msra.mxu0 0.0
  %4513 = vmatprep.subr.mxu0 0.0
  %4514 = vmatpush1.msra.mxu0 0.0
  %4515 = vmatprep.subr.mxu0 0.0
  %4516 = vmatpush1.msra.mxu0 0.0
  %4517 = vmatprep.subr.mxu0 0.0
  %4518 = vmatpush1.msra.mxu0 0.0
  %4519 = vmatprep.subr.mxu0 0.0
  %4520 = vmatpush1.msra.mxu0 0.0
  %4521 = vmatprep.subr.mxu0 0.0
  %4522 = vmatpush1.msra.mxu0 0.0
  %4523 = vmatprep.subr.mxu0 0.0
  %4524 = vmatpush1.msra.mxu0 0.0
  %4525 = vmatprep.subr.mxu0 0.0
  %4526 = vmatpush1.msra.mxu0 0.0
  %4527 = vmatprep.subr.mxu0 0.0
  %4528 = vmatpush1.msra.mxu0 0.0
  %4529 = vmatprep.subr.mxu0 0.0
  %4530 = vmatpush1.msra.mxu0 0.0
  %4531 = vmatprep.subr.mxu0 0.0
  %4532 = vmatpush1.msra.mxu0 0.0
  %4533 = vmatprep.subr.mxu0 0.0
  %4534 = vmatpush1.msra.mxu0 0.0
  %4535 = vmatprep.subr.mxu0 0.0
  %4536 = vmatpush1.msra.mxu0 0.0
  %4537 = vmatprep.subr.mxu0 0.0
  %4538 = vmatpush1.msra.mxu0 0.0
  %4539 = vmatprep.mubr.f32.mxu0 0.0
  %4540 = vmatmul.mubr.f32.gmra.mrb[0].mxu0 %v4401
  %v4541 = vpop.f32.mrb[0].mxu0
  %v4542 = vadd.f32 0.0, %v4541
  %v4543 = vpop.f32.mrb[0].mxu0
  %4544 = vmatprep.mubr.f32.mxu0 0.0
  %4545 = vmatmul.mubr.f32.gmra.mrb[0].mxu0 %v4404
  %v4546 = vpop.f32.mrb[0].mxu0
  %v4547 = vadd.f32 0.0, %v4546
  %v4548 = vpop.f32.mrb[0].mxu0
  %4549 = vmatprep.mubr.f32.mxu0 0.0
  %4550 = vmatmul.mubr.f32.gmra.mrb[0].mxu0 %v4407
  %v4551 = vpop.f32.mrb[0].mxu0
  %v4552 = vadd.f32 0.0, %v4551
  %v4553 = vpop.f32.mrb[0].mxu0
  %4554 = vmatprep.mubr.f32.mxu0 0.0
  %4555 = vmatmul.mubr.f32.gmra.mrb[0].mxu0 %v4410
  %v4556 = vpop.f32.mrb[0].mxu0
  %v4557 = vadd.f32 0.0, %v4556
  %v4558 = vpop.f32.mrb[0].mxu0
  %4559 = vmatprep.mubr.f32.mxu0 0.0
  %4560 = vmatmul.mubr.f32.gmra.mrb[0].mxu0 %v4413
  %v4561 = vpop.f32.mrb[0].mxu0
  %v4562 = vadd.f32 0.0, %v4561
  %v4563 = vpop.f32.mrb[0].mxu0
  %4564 = vmatprep.mubr.f32.mxu0 0.0
  %4565 = vmatmul.mubr.f32.gmra.mrb[0].mxu0 %v4416
  %v4566 = vpop.f32.mrb[0].mxu0
  %v4567 = vadd.f32 0.0, %v4566
  %v4568 = vpop.f32.mrb[0].mxu0
  %4569 = vmatprep.mubr.f32.mxu0 0.0
  %4570 = vmatmul.mubr.f32.gmra.mrb[0].mxu0 %v4419
  %v4571 = vpop.f32.mrb[0].mxu0
  %v4572 = vadd.f32 0.0, %v4571
  %v4573 = vpop.f32.mrb[0].mxu0
  %4574 = vmatprep.mubr.f32.mxu0 0.0
  %4575 = vmatmul.mubr.f32.gmra.mrb[0].mxu0 %v4422
  %v4576 = vpop.f32.mrb[0].mxu0
  %v4577 = vadd.f32 0.0, %v4576
  %v4578 = vpop.f32.mrb[0].mxu0
  %4579 = vmatprep.mubr.f32.mxu0 0.0
  %4580 = vmatmul.mubr.f32.gmra.mrb[0].mxu0 %v4425
  %v4581 = vpop.f32.mrb[0].mxu0
  %v4582 = vadd.f32 0.0, %v4581
  %v4583 = vpop.f32.mrb[0].mxu0
  %4584 = vmatprep.mubr.f32.mxu0 0.0
  %4585 = vmatmul.mubr.f32.gmra.mrb[0].mxu0 %v4428
  %v4586 = vpop.f32.mrb[0].mxu0
  %v4587 = vadd.f32 0.0, %v4586
  %v4588 = vpop.f32.mrb[0].mxu0
  %4589 = vmatprep.mubr.f32.mxu0 0.0
  %4590 = vmatmul.mubr.f32.gmra.mrb[0].mxu0 %v4431
  %v4591 = vpop.f32.mrb[0].mxu0
  %v4592 = vadd.f32 0.0, %v4591
  %v4593 = vpop.f32.mrb[0].mxu0
  %4594 = vmatprep.mubr.f32.mxu0 0.0
  %4595 = vmatmul.mubr.f32.gmra.mrb[0].mxu0 %v4434
  %v4596 = vpop.f32.mrb[0].mxu0
  %v4597 = vadd.f32 0.0, %v4596
  %v4598 = vpop.f32.mrb[0].mxu0
  %4599 = vmatprep.mubr.f32.mxu0 0.0
  %4600 = vmatmul.mubr.f32.gmra.mrb[0].mxu0 %v4437
  %v4601 = vpop.f32.mrb[0].mxu0
  %v4602 = vadd.f32 0.0, %v4601
  %v4603 = vpop.f32.mrb[0].mxu0
  %4604 = vmatprep.mubr.f32.mxu0 0.0
  %4605 = vmatmul.mubr.f32.gmra.mrb[0].mxu0 %v4440
  %v4606 = vpop.f32.mrb[0].mxu0
  %v4607 = vadd.f32 0.0, %v4606
  %v4608 = vpop.f32.mrb[0].mxu0
  %4609 = vmatprep.mubr.f32.mxu0 0.0
  %4610 = vmatmul.mubr.f32.gmra.mrb[0].mxu0 %v4443
  %v4611 = vpop.f32.mrb[0].mxu0
  %v4612 = vadd.f32 0.0, %v4611
  %v4613 = vpop.f32.mrb[0].mxu0
  %4614 = vmatprep.mubr.f32.mxu0 0.0
  %4615 = vmatmul.mubr.f32.gmra.mrb[0].mxu0 %v4446
  %v4616 = vpop.f32.mrb[0].mxu0
  %v4617 = vadd.f32 0.0, %v4616
  %v4618 = vpop.f32.mrb[0].mxu0
  %4619 = vmatprep.mubr.f32.mxu0 0.0
  %4620 = vmatmul.mubr.f32.gmra.mrb[0].mxu0 %v4449
  %v4621 = vpop.f32.mrb[0].mxu0
  %v4622 = vadd.f32 0.0, %v4621
  %v4623 = vpop.f32.mrb[0].mxu0
  %4624 = vmatprep.mubr.f32.mxu0 0.0
  %4625 = vmatmul.mubr.f32.gmra.mrb[0].mxu0 %v4452
  %v4626 = vpop.f32.mrb[0].mxu0
  %v4627 = vadd.f32 0.0, %v4626
  %v4628 = vpop.f32.mrb[0].mxu0
  %4629 = vmatprep.mubr.f32.mxu0 0.0
  %4630 = vmatmul.mubr.f32.gmra.mrb[0].mxu0 %v4455
  %v4631 = vpop.f32.mrb[0].mxu0
  %v4632 = vadd.f32 0.0, %v4631
  %v4633 = vpop.f32.mrb[0].mxu0
  %4634 = vmatprep.mubr.f32.mxu0 0.0
  %4635 = vmatmul.mubr.f32.gmra.mrb[0].mxu0 %v4458
  %v4636 = vpop.f32.mrb[0].mxu0
  %v4637 = vadd.f32 0.0, %v4636
  %v4638 = vpop.f32.mrb[0].mxu0
  %4639 = vmatprep.mubr.f32.mxu0 0.0
  %4640 = vmatmul.mubr.f32.gmra.mrb[0].mxu0 %v4461
  %v4641 = vpop.f32.mrb[0].mxu0
  %v4642 = vadd.f32 0.0, %v4641
  %v4643 = vpop.f32.mrb[0].mxu0
  %4644 = vmatprep.mubr.f32.mxu0 0.0
  %4645 = vmatmul.mubr.f32.gmra.mrb[0].mxu0 %v4464
  %v4646 = vpop.f32.mrb[0].mxu0
  %v4647 = vadd.f32 0.0, %v4646
  %v4648 = vpop.f32.mrb[0].mxu0
  %4649 = vmatprep.mubr.f32.mxu0 0.0
  %4650 = vmatmul.mubr.f32.gmra.mrb[0].mxu0 %v4467
  %v4651 = vpop.f32.mrb[0].mxu0
  %v4652 = vadd.f32 0.0, %v4651
  %v4653 = vpop.f32.mrb[0].mxu0
  %4654 = vmatprep.mubr.f32.mxu0 0.0
  %4655 = vmatmul.mubr.f32.gmra.mrb[0].mxu0 %v4470
  %v4656 = vpop.f32.mrb[0].mxu0
  %v4657 = vadd.f32 0.0, %v4656
  %v4658 = vpop.f32.mrb[0].mxu0
  %4659 = vmatprep.mubr.f32.mxu0 0.0
  %4660 = vmatmul.mubr.f32.gmra.mrb[0].mxu0 %v4473
  %v4661 = vpop.f32.mrb[0].mxu0
  %v4662 = vadd.f32 0.0, %v4661
  %v4663 = vpop.f32.mrb[0].mxu0
  %4664 = vdwg.mxu0
  %v4665 = vadd.f32 %v4346, %v4542
  %v4666 = vadd.f32 %v4347, %v4547
  %v4667 = vadd.f32 %v4348, %v4552
  %v4668 = vadd.f32 %v4349, %v4557
  %v4669 = vadd.f32 %v4350, %v4562
  %v4670 = vadd.f32 %v4351, %v4567
  %v4671 = vadd.f32 %v4352, %v4572
  %v4672 = vadd.f32 %v4353, %v4577
  %v4673 = vadd.f32 %v4354, %v4582
  %v4674 = vadd.f32 %v4355, %v4587
  %v4675 = vadd.f32 %v4356, %v4592
  %v4676 = vadd.f32 %v4357, %v4597
  %v4677 = vadd.f32 %v4358, %v4602
  %v4678 = vadd.f32 %v4359, %v4607
  %v4679 = vadd.f32 %v4360, %v4612
  %v4680 = vadd.f32 %v4361, %v4617
  %v4681 = vadd.f32 %v4362, %v4622
  %v4682 = vadd.f32 %v4363, %v4627
  %v4683 = vadd.f32 %v4364, %v4632
  %v4684 = vadd.f32 %v4365, %v4637
  %v4685 = vadd.f32 %v4366, %v4642
  %v4686 = vadd.f32 %v4367, %v4647
  %v4687 = vadd.f32 %v4368, %v4652
  %v4688 = vadd.f32 %v4369, %v4657
  %v4689 = vadd.f32 %v4370, %v4662
  %v4690 = vld [vmem:[#allocation2 + $0x11] sm:$0xff]
  %v4691 = vld [vmem:[#allocation2 + $0x19] sm:$0xff]
  %v4692 = vld [vmem:[#allocation2 + $0x21] sm:$0xff]
  %v4693 = vld [vmem:[#allocation2 + $0x29] sm:$0xff]
  %v4694 = vld [vmem:[#allocation2 + $0x31] sm:$0xff]
  %v4695 = vld [vmem:[#allocation2 + $0x39] sm:$0xff]
  %v4696 = vld [vmem:[#allocation2 + $0x41] sm:$0xff]
  %v4697 = vld [vmem:[#allocation2 + $0x49] sm:$0xff]
  %v4698 = vld [vmem:[#allocation2 + $0x51] sm:$0xff]
  %v4699 = vld [vmem:[#allocation2 + $0x59] sm:$0xff]
  %v4700 = vld [vmem:[#allocation2 + $0x61] sm:$0xff]
  %v4701 = vld [vmem:[#allocation2 + $0x69] sm:$0xff]
  %v4702 = vld [vmem:[#allocation2 + $0x71] sm:$0xff]
  %v4703 = vld [vmem:[#allocation2 + $0x79] sm:$0xff]
  %v4704 = vld [vmem:[#allocation2 + $0x81] sm:$0xff]
  %v4705 = vld [vmem:[#allocation2 + $0x89] sm:$0xff]
  %v4706 = vld [vmem:[#allocation2 + $0x91] sm:$0xff]
  %v4707 = vld [vmem:[#allocation2 + $0x99] sm:$0xff]
  %v4708 = vld [vmem:[#allocation2 + $0xa1] sm:$0xff]
  %v4709 = vld [vmem:[#allocation2 + $0xa9] sm:$0xff]
  %v4710 = vld [vmem:[#allocation2 + $0xb1] sm:$0xff]
  %v4711 = vld [vmem:[#allocation2 + $0xb9] sm:$0xff]
  %v4712 = vld [vmem:[#allocation2 + $0xc1] sm:$0xff]
  %v4713 = vld [vmem:[#allocation2 + $0xc9] sm:$0xff]
  %v4714 = vld [vmem:[#allocation2 + $0xd1] sm:$0xff]
  %v4715 = vld [vmem:[%s4 + $0xa0] sm:$0xff]
  %v4716 = vld [vmem:[%s4 + $0xa8] sm:$0xff]
  %v4717 = vld [vmem:[%s4 + $0xb0] sm:$0xff]
  %v4718 = vld [vmem:[%s4 + $0xb8] sm:$0xff]
  %v4720 = vsel %vm2940, %v4690, 0
  %v4723 = vsel %vm2940, %v4691, 0
  %v4726 = vsel %vm2940, %v4692, 0
  %v4729 = vsel %vm2940, %v4693, 0
  %v4732 = vsel %vm2940, %v4694, 0
  %v4735 = vsel %vm2940, %v4695, 0
  %v4738 = vsel %vm2940, %v4696, 0
  %v4741 = vsel %vm2940, %v4697, 0
  %v4744 = vsel %vm2940, %v4698, 0
  %v4747 = vsel %vm2940, %v4699, 0
  %v4750 = vsel %vm2940, %v4700, 0
  %v4753 = vsel %vm2940, %v4701, 0
  %v4756 = vsel %vm2940, %v4702, 0
  %v4759 = vsel %vm2940, %v4703, 0
  %v4762 = vsel %vm2940, %v4704, 0
  %v4765 = vsel %vm2940, %v4705, 0
  %v4768 = vsel %vm2940, %v4706, 0
  %v4771 = vsel %vm2940, %v4707, 0
  %v4774 = vsel %vm2940, %v4708, 0
  %v4777 = vsel %vm2940, %v4709, 0
  %v4780 = vsel %vm2940, %v4710, 0
  %v4783 = vsel %vm2940, %v4711, 0
  %v4786 = vsel %vm2940, %v4712, 0
  %v4789 = vsel %vm2940, %v4713, 0
  %v4792 = vsel %vm2940, %v4714, 0
  %4794 = vmatprep.subr.mxu0 0.0
  %4795 = vmatpush1.msra.mxu0 %v4715
  %4796 = vmatprep.subr.mxu0 0.0
  %4797 = vmatpush1.msra.mxu0 %v4716
  %4798 = vmatprep.subr.mxu0 0.0
  %4799 = vmatpush1.msra.mxu0 %v4717
  %4800 = vmatprep.subr.mxu0 0.0
  %4801 = vmatpush1.msra.mxu0 %v4718
  %4802 = vmatprep.subr.mxu0 0.0
  %4803 = vmatpush1.msra.mxu0 0.0
  %4804 = vmatprep.subr.mxu0 0.0
  %4805 = vmatpush1.msra.mxu0 0.0
  %4806 = vmatprep.subr.mxu0 0.0
  %4807 = vmatpush1.msra.mxu0 0.0
  %4808 = vmatprep.subr.mxu0 0.0
  %4809 = vmatpush1.msra.mxu0 0.0
  %4810 = vmatprep.subr.mxu0 0.0
  %4811 = vmatpush1.msra.mxu0 0.0
  %4812 = vmatprep.subr.mxu0 0.0
  %4813 = vmatpush1.msra.mxu0 0.0
  %4814 = vmatprep.subr.mxu0 0.0
  %4815 = vmatpush1.msra.mxu0 0.0
  %4816 = vmatprep.subr.mxu0 0.0
  %4817 = vmatpush1.msra.mxu0 0.0
  %4818 = vmatprep.subr.mxu0 0.0
  %4819 = vmatpush1.msra.mxu0 0.0
  %4820 = vmatprep.subr.mxu0 0.0
  %4821 = vmatpush1.msra.mxu0 0.0
  %4822 = vmatprep.subr.mxu0 0.0
  %4823 = vmatpush1.msra.mxu0 0.0
  %4824 = vmatprep.subr.mxu0 0.0
  %4825 = vmatpush1.msra.mxu0 0.0
  %4826 = vmatprep.subr.mxu0 0.0
  %4827 = vmatpush1.msra.mxu0 0.0
  %4828 = vmatprep.subr.mxu0 0.0
  %4829 = vmatpush1.msra.mxu0 0.0
  %4830 = vmatprep.subr.mxu0 0.0
  %4831 = vmatpush1.msra.mxu0 0.0
  %4832 = vmatprep.subr.mxu0 0.0
  %4833 = vmatpush1.msra.mxu0 0.0
  %4834 = vmatprep.subr.mxu0 0.0
  %4835 = vmatpush1.msra.mxu0 0.0
  %4836 = vmatprep.subr.mxu0 0.0
  %4837 = vmatpush1.msra.mxu0 0.0
  %4838 = vmatprep.subr.mxu0 0.0
  %4839 = vmatpush1.msra.mxu0 0.0
  %4840 = vmatprep.subr.mxu0 0.0
  %4841 = vmatpush1.msra.mxu0 0.0
  %4842 = vmatprep.subr.mxu0 0.0
  %4843 = vmatpush1.msra.mxu0 0.0
  %4844 = vmatprep.subr.mxu0 0.0
  %4845 = vmatpush1.msra.mxu0 0.0
  %4846 = vmatprep.subr.mxu0 0.0
  %4847 = vmatpush1.msra.mxu0 0.0
  %4848 = vmatprep.subr.mxu0 0.0
  %4849 = vmatpush1.msra.mxu0 0.0
  %4850 = vmatprep.subr.mxu0 0.0
  %4851 = vmatpush1.msra.mxu0 0.0
  %4852 = vmatprep.subr.mxu0 0.0
  %4853 = vmatpush1.msra.mxu0 0.0
  %4854 = vmatprep.subr.mxu0 0.0
  %4855 = vmatpush1.msra.mxu0 0.0
  %4856 = vmatprep.subr.mxu0 0.0
  %4857 = vmatpush1.msra.mxu0 0.0
  %4858 = vmatprep.mubr.f32.mxu0 0.0
  %4859 = vmatmul.mubr.f32.gmra.mrb[0].mxu0 %v4720
  %v4860 = vpop.f32.mrb[0].mxu0
  %v4861 = vadd.f32 0.0, %v4860
  %v4862 = vpop.f32.mrb[0].mxu0
  %4863 = vmatprep.mubr.f32.mxu0 0.0
  %4864 = vmatmul.mubr.f32.gmra.mrb[0].mxu0 %v4723
  %v4865 = vpop.f32.mrb[0].mxu0
  %v4866 = vadd.f32 0.0, %v4865
  %v4867 = vpop.f32.mrb[0].mxu0
  %4868 = vmatprep.mubr.f32.mxu0 0.0
  %4869 = vmatmul.mubr.f32.gmra.mrb[0].mxu0 %v4726
  %v4870 = vpop.f32.mrb[0].mxu0
  %v4871 = vadd.f32 0.0, %v4870
  %v4872 = vpop.f32.mrb[0].mxu0
  %4873 = vmatprep.mubr.f32.mxu0 0.0
  %4874 = vmatmul.mubr.f32.gmra.mrb[0].mxu0 %v4729
  %v4875 = vpop.f32.mrb[0].mxu0
  %v4876 = vadd.f32 0.0, %v4875
  %v4877 = vpop.f32.mrb[0].mxu0
  %4878 = vmatprep.mubr.f32.mxu0 0.0
  %4879 = vmatmul.mubr.f32.gmra.mrb[0].mxu0 %v4732
  %v4880 = vpop.f32.mrb[0].mxu0
  %v4881 = vadd.f32 0.0, %v4880
  %v4882 = vpop.f32.mrb[0].mxu0
  %4883 = vmatprep.mubr.f32.mxu0 0.0
  %4884 = vmatmul.mubr.f32.gmra.mrb[0].mxu0 %v4735
  %v4885 = vpop.f32.mrb[0].mxu0
  %v4886 = vadd.f32 0.0, %v4885
  %v4887 = vpop.f32.mrb[0].mxu0
  %4888 = vmatprep.mubr.f32.mxu0 0.0
  %4889 = vmatmul.mubr.f32.gmra.mrb[0].mxu0 %v4738
  %v4890 = vpop.f32.mrb[0].mxu0
  %v4891 = vadd.f32 0.0, %v4890
  %v4892 = vpop.f32.mrb[0].mxu0
  %4893 = vmatprep.mubr.f32.mxu0 0.0
  %4894 = vmatmul.mubr.f32.gmra.mrb[0].mxu0 %v4741
  %v4895 = vpop.f32.mrb[0].mxu0
  %v4896 = vadd.f32 0.0, %v4895
  %v4897 = vpop.f32.mrb[0].mxu0
  %4898 = vmatprep.mubr.f32.mxu0 0.0
  %4899 = vmatmul.mubr.f32.gmra.mrb[0].mxu0 %v4744
  %v4900 = vpop.f32.mrb[0].mxu0
  %v4901 = vadd.f32 0.0, %v4900
  %v4902 = vpop.f32.mrb[0].mxu0
  %4903 = vmatprep.mubr.f32.mxu0 0.0
  %4904 = vmatmul.mubr.f32.gmra.mrb[0].mxu0 %v4747
  %v4905 = vpop.f32.mrb[0].mxu0
  %v4906 = vadd.f32 0.0, %v4905
  %v4907 = vpop.f32.mrb[0].mxu0
  %4908 = vmatprep.mubr.f32.mxu0 0.0
  %4909 = vmatmul.mubr.f32.gmra.mrb[0].mxu0 %v4750
  %v4910 = vpop.f32.mrb[0].mxu0
  %v4911 = vadd.f32 0.0, %v4910
  %v4912 = vpop.f32.mrb[0].mxu0
  %4913 = vmatprep.mubr.f32.mxu0 0.0
  %4914 = vmatmul.mubr.f32.gmra.mrb[0].mxu0 %v4753
  %v4915 = vpop.f32.mrb[0].mxu0
  %v4916 = vadd.f32 0.0, %v4915
  %v4917 = vpop.f32.mrb[0].mxu0
  %4918 = vmatprep.mubr.f32.mxu0 0.0
  %4919 = vmatmul.mubr.f32.gmra.mrb[0].mxu0 %v4756
  %v4920 = vpop.f32.mrb[0].mxu0
  %v4921 = vadd.f32 0.0, %v4920
  %v4922 = vpop.f32.mrb[0].mxu0
  %4923 = vmatprep.mubr.f32.mxu0 0.0
  %4924 = vmatmul.mubr.f32.gmra.mrb[0].mxu0 %v4759
  %v4925 = vpop.f32.mrb[0].mxu0
  %v4926 = vadd.f32 0.0, %v4925
  %v4927 = vpop.f32.mrb[0].mxu0
  %4928 = vmatprep.mubr.f32.mxu0 0.0
  %4929 = vmatmul.mubr.f32.gmra.mrb[0].mxu0 %v4762
  %v4930 = vpop.f32.mrb[0].mxu0
  %v4931 = vadd.f32 0.0, %v4930
  %v4932 = vpop.f32.mrb[0].mxu0
  %4933 = vmatprep.mubr.f32.mxu0 0.0
  %4934 = vmatmul.mubr.f32.gmra.mrb[0].mxu0 %v4765
  %v4935 = vpop.f32.mrb[0].mxu0
  %v4936 = vadd.f32 0.0, %v4935
  %v4937 = vpop.f32.mrb[0].mxu0
  %4938 = vmatprep.mubr.f32.mxu0 0.0
  %4939 = vmatmul.mubr.f32.gmra.mrb[0].mxu0 %v4768
  %v4940 = vpop.f32.mrb[0].mxu0
  %v4941 = vadd.f32 0.0, %v4940
  %v4942 = vpop.f32.mrb[0].mxu0
  %4943 = vmatprep.mubr.f32.mxu0 0.0
  %4944 = vmatmul.mubr.f32.gmra.mrb[0].mxu0 %v4771
  %v4945 = vpop.f32.mrb[0].mxu0
  %v4946 = vadd.f32 0.0, %v4945
  %v4947 = vpop.f32.mrb[0].mxu0
  %4948 = vmatprep.mubr.f32.mxu0 0.0
  %4949 = vmatmul.mubr.f32.gmra.mrb[0].mxu0 %v4774
  %v4950 = vpop.f32.mrb[0].mxu0
  %v4951 = vadd.f32 0.0, %v4950
  %v4952 = vpop.f32.mrb[0].mxu0
  %4953 = vmatprep.mubr.f32.mxu0 0.0
  %4954 = vmatmul.mubr.f32.gmra.mrb[0].mxu0 %v4777
  %v4955 = vpop.f32.mrb[0].mxu0
  %v4956 = vadd.f32 0.0, %v4955
  %v4957 = vpop.f32.mrb[0].mxu0
  %4958 = vmatprep.mubr.f32.mxu0 0.0
  %4959 = vmatmul.mubr.f32.gmra.mrb[0].mxu0 %v4780
  %v4960 = vpop.f32.mrb[0].mxu0
  %v4961 = vadd.f32 0.0, %v4960
  %v4962 = vpop.f32.mrb[0].mxu0
  %4963 = vmatprep.mubr.f32.mxu0 0.0
  %4964 = vmatmul.mubr.f32.gmra.mrb[0].mxu0 %v4783
  %v4965 = vpop.f32.mrb[0].mxu0
  %v4966 = vadd.f32 0.0, %v4965
  %v4967 = vpop.f32.mrb[0].mxu0
  %4968 = vmatprep.mubr.f32.mxu0 0.0
  %4969 = vmatmul.mubr.f32.gmra.mrb[0].mxu0 %v4786
  %v4970 = vpop.f32.mrb[0].mxu0
  %v4971 = vadd.f32 0.0, %v4970
  %v4972 = vpop.f32.mrb[0].mxu0
  %4973 = vmatprep.mubr.f32.mxu0 0.0
  %4974 = vmatmul.mubr.f32.gmra.mrb[0].mxu0 %v4789
  %v4975 = vpop.f32.mrb[0].mxu0
  %v4976 = vadd.f32 0.0, %v4975
  %v4977 = vpop.f32.mrb[0].mxu0
  %4978 = vmatprep.mubr.f32.mxu0 0.0
  %4979 = vmatmul.mubr.f32.gmra.mrb[0].mxu0 %v4792
  %v4980 = vpop.f32.mrb[0].mxu0
  %v4981 = vadd.f32 0.0, %v4980
  %v4982 = vpop.f32.mrb[0].mxu0
  %4983 = vdwg.mxu0
  %v4984 = vadd.f32 %v4665, %v4861
  %v4985 = vadd.f32 %v4666, %v4866
  %v4986 = vadd.f32 %v4667, %v4871
  %v4987 = vadd.f32 %v4668, %v4876
  %v4988 = vadd.f32 %v4669, %v4881
  %v4989 = vadd.f32 %v4670, %v4886
  %v4990 = vadd.f32 %v4671, %v4891
  %v4991 = vadd.f32 %v4672, %v4896
  %v4992 = vadd.f32 %v4673, %v4901
  %v4993 = vadd.f32 %v4674, %v4906
  %v4994 = vadd.f32 %v4675, %v4911
  %v4995 = vadd.f32 %v4676, %v4916
  %v4996 = vadd.f32 %v4677, %v4921
  %v4997 = vadd.f32 %v4678, %v4926
  %v4998 = vadd.f32 %v4679, %v4931
  %v4999 = vadd.f32 %v4680, %v4936
  %v5000 = vadd.f32 %v4681, %v4941
  %v5001 = vadd.f32 %v4682, %v4946
  %v5002 = vadd.f32 %v4683, %v4951
  %v5003 = vadd.f32 %v4684, %v4956
  %v5004 = vadd.f32 %v4685, %v4961
  %v5005 = vadd.f32 %v4686, %v4966
  %v5006 = vadd.f32 %v4687, %v4971
  %v5007 = vadd.f32 %v4688, %v4976
  %v5008 = vadd.f32 %v4689, %v4981
  %v5009 = vld [vmem:[#allocation2 + $0x19] sm:$0xff]
  %v5010 = vld [vmem:[#allocation2 + $0x21] sm:$0xff]
  %v5011 = vld [vmem:[#allocation2 + $0x29] sm:$0xff]
  %v5012 = vld [vmem:[#allocation2 + $0x31] sm:$0xff]
  %v5013 = vld [vmem:[#allocation2 + $0x39] sm:$0xff]
  %v5014 = vld [vmem:[#allocation2 + $0x41] sm:$0xff]
  %v5015 = vld [vmem:[#allocation2 + $0x49] sm:$0xff]
  %v5016 = vld [vmem:[#allocation2 + $0x51] sm:$0xff]
  %v5017 = vld [vmem:[#allocation2 + $0x59] sm:$0xff]
  %v5018 = vld [vmem:[#allocation2 + $0x61] sm:$0xff]
  %v5019 = vld [vmem:[#allocation2 + $0x69] sm:$0xff]
  %v5020 = vld [vmem:[#allocation2 + $0x71] sm:$0xff]
  %v5021 = vld [vmem:[#allocation2 + $0x79] sm:$0xff]
  %v5022 = vld [vmem:[#allocation2 + $0x81] sm:$0xff]
  %v5023 = vld [vmem:[#allocation2 + $0x89] sm:$0xff]
  %v5024 = vld [vmem:[#allocation2 + $0x91] sm:$0xff]
  %v5025 = vld [vmem:[#allocation2 + $0x99] sm:$0xff]
  %v5026 = vld [vmem:[#allocation2 + $0xa1] sm:$0xff]
  %v5027 = vld [vmem:[#allocation2 + $0xa9] sm:$0xff]
  %v5028 = vld [vmem:[#allocation2 + $0xb1] sm:$0xff]
  %v5029 = vld [vmem:[#allocation2 + $0xb9] sm:$0xff]
  %v5030 = vld [vmem:[#allocation2 + $0xc1] sm:$0xff]
  %v5031 = vld [vmem:[#allocation2 + $0xc9] sm:$0xff]
  %v5032 = vld [vmem:[#allocation2 + $0xd1] sm:$0xff]
  %v5033 = vld [vmem:[#allocation2 + $0xd9] sm:$0xff]
  %v5034 = vld [vmem:[%s4 + $0xc0] sm:$0xff]
  %v5035 = vld [vmem:[%s4 + $0xc8] sm:$0xff]
  %v5036 = vld [vmem:[%s4 + $0xd0] sm:$0xff]
  %v5037 = vld [vmem:[%s4 + $0xd8] sm:$0xff]
  %v5039 = vsel %vm2940, %v5009, 0
  %v5042 = vsel %vm2940, %v5010, 0
  %v5045 = vsel %vm2940, %v5011, 0
  %v5048 = vsel %vm2940, %v5012, 0
  %v5051 = vsel %vm2940, %v5013, 0
  %v5054 = vsel %vm2940, %v5014, 0
  %v5057 = vsel %vm2940, %v5015, 0
  %v5060 = vsel %vm2940, %v5016, 0
  %v5063 = vsel %vm2940, %v5017, 0
  %v5066 = vsel %vm2940, %v5018, 0
  %v5069 = vsel %vm2940, %v5019, 0
  %v5072 = vsel %vm2940, %v5020, 0
  %v5075 = vsel %vm2940, %v5021, 0
  %v5078 = vsel %vm2940, %v5022, 0
  %v5081 = vsel %vm2940, %v5023, 0
  %v5084 = vsel %vm2940, %v5024, 0
  %v5087 = vsel %vm2940, %v5025, 0
  %v5090 = vsel %vm2940, %v5026, 0
  %v5093 = vsel %vm2940, %v5027, 0
  %v5096 = vsel %vm2940, %v5028, 0
  %v5099 = vsel %vm2940, %v5029, 0
  %v5102 = vsel %vm2940, %v5030, 0
  %v5105 = vsel %vm2940, %v5031, 0
  %v5108 = vsel %vm2940, %v5032, 0
  %v5111 = vsel %vm2940, %v5033, 0
  %5113 = vmatprep.subr.mxu0 0.0
  %5114 = vmatpush1.msra.mxu0 %v5034
  %5115 = vmatprep.subr.mxu0 0.0
  %5116 = vmatpush1.msra.mxu0 %v5035
  %5117 = vmatprep.subr.mxu0 0.0
  %5118 = vmatpush1.msra.mxu0 %v5036
  %5119 = vmatprep.subr.mxu0 0.0
  %5120 = vmatpush1.msra.mxu0 %v5037
  %5121 = vmatprep.subr.mxu0 0.0
  %5122 = vmatpush1.msra.mxu0 0.0
  %5123 = vmatprep.subr.mxu0 0.0
  %5124 = vmatpush1.msra.mxu0 0.0
  %5125 = vmatprep.subr.mxu0 0.0
  %5126 = vmatpush1.msra.mxu0 0.0
  %5127 = vmatprep.subr.mxu0 0.0
  %5128 = vmatpush1.msra.mxu0 0.0
  %5129 = vmatprep.subr.mxu0 0.0
  %5130 = vmatpush1.msra.mxu0 0.0
  %5131 = vmatprep.subr.mxu0 0.0
  %5132 = vmatpush1.msra.mxu0 0.0
  %5133 = vmatprep.subr.mxu0 0.0
  %5134 = vmatpush1.msra.mxu0 0.0
  %5135 = vmatprep.subr.mxu0 0.0
  %5136 = vmatpush1.msra.mxu0 0.0
  %5137 = vmatprep.subr.mxu0 0.0
  %5138 = vmatpush1.msra.mxu0 0.0
  %5139 = vmatprep.subr.mxu0 0.0
  %5140 = vmatpush1.msra.mxu0 0.0
  %5141 = vmatprep.subr.mxu0 0.0
  %5142 = vmatpush1.msra.mxu0 0.0
  %5143 = vmatprep.subr.mxu0 0.0
  %5144 = vmatpush1.msra.mxu0 0.0
  %5145 = vmatprep.subr.mxu0 0.0
  %5146 = vmatpush1.msra.mxu0 0.0
  %5147 = vmatprep.subr.mxu0 0.0
  %5148 = vmatpush1.msra.mxu0 0.0
  %5149 = vmatprep.subr.mxu0 0.0
  %5150 = vmatpush1.msra.mxu0 0.0
  %5151 = vmatprep.subr.mxu0 0.0
  %5152 = vmatpush1.msra.mxu0 0.0
  %5153 = vmatprep.subr.mxu0 0.0
  %5154 = vmatpush1.msra.mxu0 0.0
  %5155 = vmatprep.subr.mxu0 0.0
  %5156 = vmatpush1.msra.mxu0 0.0
  %5157 = vmatprep.subr.mxu0 0.0
  %5158 = vmatpush1.msra.mxu0 0.0
  %5159 = vmatprep.subr.mxu0 0.0
  %5160 = vmatpush1.msra.mxu0 0.0
  %5161 = vmatprep.subr.mxu0 0.0
  %5162 = vmatpush1.msra.mxu0 0.0
  %5163 = vmatprep.subr.mxu0 0.0
  %5164 = vmatpush1.msra.mxu0 0.0
  %5165 = vmatprep.subr.mxu0 0.0
  %5166 = vmatpush1.msra.mxu0 0.0
  %5167 = vmatprep.subr.mxu0 0.0
  %5168 = vmatpush1.msra.mxu0 0.0
  %5169 = vmatprep.subr.mxu0 0.0
  %5170 = vmatpush1.msra.mxu0 0.0
  %5171 = vmatprep.subr.mxu0 0.0
  %5172 = vmatpush1.msra.mxu0 0.0
  %5173 = vmatprep.subr.mxu0 0.0
  %5174 = vmatpush1.msra.mxu0 0.0
  %5175 = vmatprep.subr.mxu0 0.0
  %5176 = vmatpush1.msra.mxu0 0.0
  %5177 = vmatprep.mubr.f32.mxu0 0.0
  %5178 = vmatmul.mubr.f32.gmra.mrb[0].mxu0 %v5039
  %v5179 = vpop.f32.mrb[0].mxu0
  %v5180 = vadd.f32 0.0, %v5179
  %v5181 = vpop.f32.mrb[0].mxu0
  %5182 = vmatprep.mubr.f32.mxu0 0.0
  %5183 = vmatmul.mubr.f32.gmra.mrb[0].mxu0 %v5042
  %v5184 = vpop.f32.mrb[0].mxu0
  %v5185 = vadd.f32 0.0, %v5184
  %v5186 = vpop.f32.mrb[0].mxu0
  %5187 = vmatprep.mubr.f32.mxu0 0.0
  %5188 = vmatmul.mubr.f32.gmra.mrb[0].mxu0 %v5045
  %v5189 = vpop.f32.mrb[0].mxu0
  %v5190 = vadd.f32 0.0, %v5189
  %v5191 = vpop.f32.mrb[0].mxu0
  %5192 = vmatprep.mubr.f32.mxu0 0.0
  %5193 = vmatmul.mubr.f32.gmra.mrb[0].mxu0 %v5048
  %v5194 = vpop.f32.mrb[0].mxu0
  %v5195 = vadd.f32 0.0, %v5194
  %v5196 = vpop.f32.mrb[0].mxu0
  %5197 = vmatprep.mubr.f32.mxu0 0.0
  %5198 = vmatmul.mubr.f32.gmra.mrb[0].mxu0 %v5051
  %v5199 = vpop.f32.mrb[0].mxu0
  %v5200 = vadd.f32 0.0, %v5199
  %v5201 = vpop.f32.mrb[0].mxu0
  %5202 = vmatprep.mubr.f32.mxu0 0.0
  %5203 = vmatmul.mubr.f32.gmra.mrb[0].mxu0 %v5054
  %v5204 = vpop.f32.mrb[0].mxu0
  %v5205 = vadd.f32 0.0, %v5204
  %v5206 = vpop.f32.mrb[0].mxu0
  %5207 = vmatprep.mubr.f32.mxu0 0.0
  %5208 = vmatmul.mubr.f32.gmra.mrb[0].mxu0 %v5057
  %v5209 = vpop.f32.mrb[0].mxu0
  %v5210 = vadd.f32 0.0, %v5209
  %v5211 = vpop.f32.mrb[0].mxu0
  %5212 = vmatprep.mubr.f32.mxu0 0.0
  %5213 = vmatmul.mubr.f32.gmra.mrb[0].mxu0 %v5060
  %v5214 = vpop.f32.mrb[0].mxu0
  %v5215 = vadd.f32 0.0, %v5214
  %v5216 = vpop.f32.mrb[0].mxu0
  %5217 = vmatprep.mubr.f32.mxu0 0.0
  %5218 = vmatmul.mubr.f32.gmra.mrb[0].mxu0 %v5063
  %v5219 = vpop.f32.mrb[0].mxu0
  %v5220 = vadd.f32 0.0, %v5219
  %v5221 = vpop.f32.mrb[0].mxu0
  %5222 = vmatprep.mubr.f32.mxu0 0.0
  %5223 = vmatmul.mubr.f32.gmra.mrb[0].mxu0 %v5066
  %v5224 = vpop.f32.mrb[0].mxu0
  %v5225 = vadd.f32 0.0, %v5224
  %v5226 = vpop.f32.mrb[0].mxu0
  %5227 = vmatprep.mubr.f32.mxu0 0.0
  %5228 = vmatmul.mubr.f32.gmra.mrb[0].mxu0 %v5069
  %v5229 = vpop.f32.mrb[0].mxu0
  %v5230 = vadd.f32 0.0, %v5229
  %v5231 = vpop.f32.mrb[0].mxu0
  %5232 = vmatprep.mubr.f32.mxu0 0.0
  %5233 = vmatmul.mubr.f32.gmra.mrb[0].mxu0 %v5072
  %v5234 = vpop.f32.mrb[0].mxu0
  %v5235 = vadd.f32 0.0, %v5234
  %v5236 = vpop.f32.mrb[0].mxu0
  %5237 = vmatprep.mubr.f32.mxu0 0.0
  %5238 = vmatmul.mubr.f32.gmra.mrb[0].mxu0 %v5075
  %v5239 = vpop.f32.mrb[0].mxu0
  %v5240 = vadd.f32 0.0, %v5239
  %v5241 = vpop.f32.mrb[0].mxu0
  %5242 = vmatprep.mubr.f32.mxu0 0.0
  %5243 = vmatmul.mubr.f32.gmra.mrb[0].mxu0 %v5078
  %v5244 = vpop.f32.mrb[0].mxu0
  %v5245 = vadd.f32 0.0, %v5244
  %v5246 = vpop.f32.mrb[0].mxu0
  %5247 = vmatprep.mubr.f32.mxu0 0.0
  %5248 = vmatmul.mubr.f32.gmra.mrb[0].mxu0 %v5081
  %v5249 = vpop.f32.mrb[0].mxu0
  %v5250 = vadd.f32 0.0, %v5249
  %v5251 = vpop.f32.mrb[0].mxu0
  %5252 = vmatprep.mubr.f32.mxu0 0.0
  %5253 = vmatmul.mubr.f32.gmra.mrb[0].mxu0 %v5084
  %v5254 = vpop.f32.mrb[0].mxu0
  %v5255 = vadd.f32 0.0, %v5254
  %v5256 = vpop.f32.mrb[0].mxu0
  %5257 = vmatprep.mubr.f32.mxu0 0.0
  %5258 = vmatmul.mubr.f32.gmra.mrb[0].mxu0 %v5087
  %v5259 = vpop.f32.mrb[0].mxu0
  %v5260 = vadd.f32 0.0, %v5259
  %v5261 = vpop.f32.mrb[0].mxu0
  %5262 = vmatprep.mubr.f32.mxu0 0.0
  %5263 = vmatmul.mubr.f32.gmra.mrb[0].mxu0 %v5090
  %v5264 = vpop.f32.mrb[0].mxu0
  %v5265 = vadd.f32 0.0, %v5264
  %v5266 = vpop.f32.mrb[0].mxu0
  %5267 = vmatprep.mubr.f32.mxu0 0.0
  %5268 = vmatmul.mubr.f32.gmra.mrb[0].mxu0 %v5093
  %v5269 = vpop.f32.mrb[0].mxu0
  %v5270 = vadd.f32 0.0, %v5269
  %v5271 = vpop.f32.mrb[0].mxu0
  %5272 = vmatprep.mubr.f32.mxu0 0.0
  %5273 = vmatmul.mubr.f32.gmra.mrb[0].mxu0 %v5096
  %v5274 = vpop.f32.mrb[0].mxu0
  %v5275 = vadd.f32 0.0, %v5274
  %v5276 = vpop.f32.mrb[0].mxu0
  %5277 = vmatprep.mubr.f32.mxu0 0.0
  %5278 = vmatmul.mubr.f32.gmra.mrb[0].mxu0 %v5099
  %v5279 = vpop.f32.mrb[0].mxu0
  %v5280 = vadd.f32 0.0, %v5279
  %v5281 = vpop.f32.mrb[0].mxu0
  %5282 = vmatprep.mubr.f32.mxu0 0.0
  %5283 = vmatmul.mubr.f32.gmra.mrb[0].mxu0 %v5102
  %v5284 = vpop.f32.mrb[0].mxu0
  %v5285 = vadd.f32 0.0, %v5284
  %v5286 = vpop.f32.mrb[0].mxu0
  %5287 = vmatprep.mubr.f32.mxu0 0.0
  %5288 = vmatmul.mubr.f32.gmra.mrb[0].mxu0 %v5105
  %v5289 = vpop.f32.mrb[0].mxu0
  %v5290 = vadd.f32 0.0, %v5289
  %v5291 = vpop.f32.mrb[0].mxu0
  %5292 = vmatprep.mubr.f32.mxu0 0.0
  %5293 = vmatmul.mubr.f32.gmra.mrb[0].mxu0 %v5108
  %v5294 = vpop.f32.mrb[0].mxu0
  %v5295 = vadd.f32 0.0, %v5294
  %v5296 = vpop.f32.mrb[0].mxu0
  %5297 = vmatprep.mubr.f32.mxu0 0.0
  %5298 = vmatmul.mubr.f32.gmra.mrb[0].mxu0 %v5111
  %v5299 = vpop.f32.mrb[0].mxu0
  %v5300 = vadd.f32 0.0, %v5299
  %v5301 = vpop.f32.mrb[0].mxu0
  %5302 = vdwg.mxu0
  %v5303 = vadd.f32 %v4984, %v5180
  %v5304 = vadd.f32 %v4985, %v5185
  %v5305 = vadd.f32 %v4986, %v5190
  %v5306 = vadd.f32 %v4987, %v5195
  %v5307 = vadd.f32 %v4988, %v5200
  %v5308 = vadd.f32 %v4989, %v5205
  %v5309 = vadd.f32 %v4990, %v5210
  %v5310 = vadd.f32 %v4991, %v5215
  %v5311 = vadd.f32 %v4992, %v5220
  %v5312 = vadd.f32 %v4993, %v5225
  %v5313 = vadd.f32 %v4994, %v5230
  %v5314 = vadd.f32 %v4995, %v5235
  %v5315 = vadd.f32 %v4996, %v5240
  %v5316 = vadd.f32 %v4997, %v5245
  %v5317 = vadd.f32 %v4998, %v5250
  %v5318 = vadd.f32 %v4999, %v5255
  %v5319 = vadd.f32 %v5000, %v5260
  %v5320 = vadd.f32 %v5001, %v5265
  %v5321 = vadd.f32 %v5002, %v5270
  %v5322 = vadd.f32 %v5003, %v5275
  %v5323 = vadd.f32 %v5004, %v5280
  %v5324 = vadd.f32 %v5005, %v5285
  %v5325 = vadd.f32 %v5006, %v5290
  %v5326 = vadd.f32 %v5007, %v5295
  %v5327 = vadd.f32 %v5008, %v5300
  %v5328 = vld [vmem:[#allocation2 + $0x1a] sm:$0xff]
  %v5329 = vld [vmem:[#allocation2 + $0x22] sm:$0xff]
  %v5330 = vld [vmem:[#allocation2 + $0x2a] sm:$0xff]
  %v5331 = vld [vmem:[#allocation2 + $0x32] sm:$0xff]
  %v5332 = vld [vmem:[#allocation2 + $0x3a] sm:$0xff]
  %v5333 = vld [vmem:[#allocation2 + $0x42] sm:$0xff]
  %v5334 = vld [vmem:[#allocation2 + $0x4a] sm:$0xff]
  %v5335 = vld [vmem:[#allocation2 + $0x52] sm:$0xff]
  %v5336 = vld [vmem:[#allocation2 + $0x5a] sm:$0xff]
  %v5337 = vld [vmem:[#allocation2 + $0x62] sm:$0xff]
  %v5338 = vld [vmem:[#allocation2 + $0x6a] sm:$0xff]
  %v5339 = vld [vmem:[#allocation2 + $0x72] sm:$0xff]
  %v5340 = vld [vmem:[#allocation2 + $0x7a] sm:$0xff]
  %v5341 = vld [vmem:[#allocation2 + $0x82] sm:$0xff]
  %v5342 = vld [vmem:[#allocation2 + $0x8a] sm:$0xff]
  %v5343 = vld [vmem:[#allocation2 + $0x92] sm:$0xff]
  %v5344 = vld [vmem:[#allocation2 + $0x9a] sm:$0xff]
  %v5345 = vld [vmem:[#allocation2 + $0xa2] sm:$0xff]
  %v5346 = vld [vmem:[#allocation2 + $0xaa] sm:$0xff]
  %v5347 = vld [vmem:[#allocation2 + $0xb2] sm:$0xff]
  %v5348 = vld [vmem:[#allocation2 + $0xba] sm:$0xff]
  %v5349 = vld [vmem:[#allocation2 + $0xc2] sm:$0xff]
  %v5350 = vld [vmem:[#allocation2 + $0xca] sm:$0xff]
  %v5351 = vld [vmem:[#allocation2 + $0xd2] sm:$0xff]
  %v5352 = vld [vmem:[#allocation2 + $0xda] sm:$0xff]
  %v5353 = vld [vmem:[%s4 + $0xe0] sm:$0xff]
  %v5354 = vld [vmem:[%s4 + $0xe8] sm:$0xff]
  %v5355 = vld [vmem:[%s4 + $0xf0] sm:$0xff]
  %v5356 = vld [vmem:[%s4 + $0xf8] sm:$0xff]
  %v5358 = vsel %vm2940, %v5328, 0
  %v5361 = vsel %vm2940, %v5329, 0
  %v5364 = vsel %vm2940, %v5330, 0
  %v5367 = vsel %vm2940, %v5331, 0
  %v5370 = vsel %vm2940, %v5332, 0
  %v5373 = vsel %vm2940, %v5333, 0
  %v5376 = vsel %vm2940, %v5334, 0
  %v5379 = vsel %vm2940, %v5335, 0
  %v5382 = vsel %vm2940, %v5336, 0
  %v5385 = vsel %vm2940, %v5337, 0
  %v5388 = vsel %vm2940, %v5338, 0
  %v5391 = vsel %vm2940, %v5339, 0
  %v5394 = vsel %vm2940, %v5340, 0
  %v5397 = vsel %vm2940, %v5341, 0
  %v5400 = vsel %vm2940, %v5342, 0
  %v5403 = vsel %vm2940, %v5343, 0
  %v5406 = vsel %vm2940, %v5344, 0
  %v5409 = vsel %vm2940, %v5345, 0
  %v5412 = vsel %vm2940, %v5346, 0
  %v5415 = vsel %vm2940, %v5347, 0
  %v5418 = vsel %vm2940, %v5348, 0
  %v5421 = vsel %vm2940, %v5349, 0
  %v5424 = vsel %vm2940, %v5350, 0
  %v5427 = vsel %vm2940, %v5351, 0
  %v5430 = vsel %vm2940, %v5352, 0
  %5432 = vmatprep.subr.mxu0 0.0
  %5433 = vmatpush1.msra.mxu0 %v5353
  %5434 = vmatprep.subr.mxu0 0.0
  %5435 = vmatpush1.msra.mxu0 %v5354
  %5436 = vmatprep.subr.mxu0 0.0
  %5437 = vmatpush1.msra.mxu0 %v5355
  %5438 = vmatprep.subr.mxu0 0.0
  %5439 = vmatpush1.msra.mxu0 %v5356
  %5440 = vmatprep.subr.mxu0 0.0
  %5441 = vmatpush1.msra.mxu0 0.0
  %5442 = vmatprep.subr.mxu0 0.0
  %5443 = vmatpush1.msra.mxu0 0.0
  %5444 = vmatprep.subr.mxu0 0.0
  %5445 = vmatpush1.msra.mxu0 0.0
  %5446 = vmatprep.subr.mxu0 0.0
  %5447 = vmatpush1.msra.mxu0 0.0
  %5448 = vmatprep.subr.mxu0 0.0
  %5449 = vmatpush1.msra.mxu0 0.0
  %5450 = vmatprep.subr.mxu0 0.0
  %5451 = vmatpush1.msra.mxu0 0.0
  %5452 = vmatprep.subr.mxu0 0.0
  %5453 = vmatpush1.msra.mxu0 0.0
  %5454 = vmatprep.subr.mxu0 0.0
  %5455 = vmatpush1.msra.mxu0 0.0
  %5456 = vmatprep.subr.mxu0 0.0
  %5457 = vmatpush1.msra.mxu0 0.0
  %5458 = vmatprep.subr.mxu0 0.0
  %5459 = vmatpush1.msra.mxu0 0.0
  %5460 = vmatprep.subr.mxu0 0.0
  %5461 = vmatpush1.msra.mxu0 0.0
  %5462 = vmatprep.subr.mxu0 0.0
  %5463 = vmatpush1.msra.mxu0 0.0
  %5464 = vmatprep.subr.mxu0 0.0
  %5465 = vmatpush1.msra.mxu0 0.0
  %5466 = vmatprep.subr.mxu0 0.0
  %5467 = vmatpush1.msra.mxu0 0.0
  %5468 = vmatprep.subr.mxu0 0.0
  %5469 = vmatpush1.msra.mxu0 0.0
  %5470 = vmatprep.subr.mxu0 0.0
  %5471 = vmatpush1.msra.mxu0 0.0
  %5472 = vmatprep.subr.mxu0 0.0
  %5473 = vmatpush1.msra.mxu0 0.0
  %5474 = vmatprep.subr.mxu0 0.0
  %5475 = vmatpush1.msra.mxu0 0.0
  %5476 = vmatprep.subr.mxu0 0.0
  %5477 = vmatpush1.msra.mxu0 0.0
  %5478 = vmatprep.subr.mxu0 0.0
  %5479 = vmatpush1.msra.mxu0 0.0
  %5480 = vmatprep.subr.mxu0 0.0
  %5481 = vmatpush1.msra.mxu0 0.0
  %5482 = vmatprep.subr.mxu0 0.0
  %5483 = vmatpush1.msra.mxu0 0.0
  %5484 = vmatprep.subr.mxu0 0.0
  %5485 = vmatpush1.msra.mxu0 0.0
  %5486 = vmatprep.subr.mxu0 0.0
  %5487 = vmatpush1.msra.mxu0 0.0
  %5488 = vmatprep.subr.mxu0 0.0
  %5489 = vmatpush1.msra.mxu0 0.0
  %5490 = vmatprep.subr.mxu0 0.0
  %5491 = vmatpush1.msra.mxu0 0.0
  %5492 = vmatprep.subr.mxu0 0.0
  %5493 = vmatpush1.msra.mxu0 0.0
  %5494 = vmatprep.subr.mxu0 0.0
  %5495 = vmatpush1.msra.mxu0 0.0
  %5496 = vmatprep.mubr.f32.mxu0 0.0
  %5497 = vmatmul.mubr.f32.gmra.mrb[0].mxu0 %v5358
  %v5498 = vpop.f32.mrb[0].mxu0
  %v5499 = vadd.f32 0.0, %v5498
  %v5500 = vpop.f32.mrb[0].mxu0
  %5501 = vmatprep.mubr.f32.mxu0 0.0
  %5502 = vmatmul.mubr.f32.gmra.mrb[0].mxu0 %v5361
  %v5503 = vpop.f32.mrb[0].mxu0
  %v5504 = vadd.f32 0.0, %v5503
  %v5505 = vpop.f32.mrb[0].mxu0
  %5506 = vmatprep.mubr.f32.mxu0 0.0
  %5507 = vmatmul.mubr.f32.gmra.mrb[0].mxu0 %v5364
  %v5508 = vpop.f32.mrb[0].mxu0
  %v5509 = vadd.f32 0.0, %v5508
  %v5510 = vpop.f32.mrb[0].mxu0
  %5511 = vmatprep.mubr.f32.mxu0 0.0
  %5512 = vmatmul.mubr.f32.gmra.mrb[0].mxu0 %v5367
  %v5513 = vpop.f32.mrb[0].mxu0
  %v5514 = vadd.f32 0.0, %v5513
  %v5515 = vpop.f32.mrb[0].mxu0
  %5516 = vmatprep.mubr.f32.mxu0 0.0
  %5517 = vmatmul.mubr.f32.gmra.mrb[0].mxu0 %v5370
  %v5518 = vpop.f32.mrb[0].mxu0
  %v5519 = vadd.f32 0.0, %v5518
  %v5520 = vpop.f32.mrb[0].mxu0
  %5521 = vmatprep.mubr.f32.mxu0 0.0
  %5522 = vmatmul.mubr.f32.gmra.mrb[0].mxu0 %v5373
  %v5523 = vpop.f32.mrb[0].mxu0
  %v5524 = vadd.f32 0.0, %v5523
  %v5525 = vpop.f32.mrb[0].mxu0
  %5526 = vmatprep.mubr.f32.mxu0 0.0
  %5527 = vmatmul.mubr.f32.gmra.mrb[0].mxu0 %v5376
  %v5528 = vpop.f32.mrb[0].mxu0
  %v5529 = vadd.f32 0.0, %v5528
  %v5530 = vpop.f32.mrb[0].mxu0
  %5531 = vmatprep.mubr.f32.mxu0 0.0
  %5532 = vmatmul.mubr.f32.gmra.mrb[0].mxu0 %v5379
  %v5533 = vpop.f32.mrb[0].mxu0
  %v5534 = vadd.f32 0.0, %v5533
  %v5535 = vpop.f32.mrb[0].mxu0
  %5536 = vmatprep.mubr.f32.mxu0 0.0
  %5537 = vmatmul.mubr.f32.gmra.mrb[0].mxu0 %v5382
  %v5538 = vpop.f32.mrb[0].mxu0
  %v5539 = vadd.f32 0.0, %v5538
  %v5540 = vpop.f32.mrb[0].mxu0
  %5541 = vmatprep.mubr.f32.mxu0 0.0
  %5542 = vmatmul.mubr.f32.gmra.mrb[0].mxu0 %v5385
  %v5543 = vpop.f32.mrb[0].mxu0
  %v5544 = vadd.f32 0.0, %v5543
  %v5545 = vpop.f32.mrb[0].mxu0
  %5546 = vmatprep.mubr.f32.mxu0 0.0
  %5547 = vmatmul.mubr.f32.gmra.mrb[0].mxu0 %v5388
  %v5548 = vpop.f32.mrb[0].mxu0
  %v5549 = vadd.f32 0.0, %v5548
  %v5550 = vpop.f32.mrb[0].mxu0
  %5551 = vmatprep.mubr.f32.mxu0 0.0
  %5552 = vmatmul.mubr.f32.gmra.mrb[0].mxu0 %v5391
  %v5553 = vpop.f32.mrb[0].mxu0
  %v5554 = vadd.f32 0.0, %v5553
  %v5555 = vpop.f32.mrb[0].mxu0
  %5556 = vmatprep.mubr.f32.mxu0 0.0
  %5557 = vmatmul.mubr.f32.gmra.mrb[0].mxu0 %v5394
  %v5558 = vpop.f32.mrb[0].mxu0
  %v5559 = vadd.f32 0.0, %v5558
  %v5560 = vpop.f32.mrb[0].mxu0
  %5561 = vmatprep.mubr.f32.mxu0 0.0
  %5562 = vmatmul.mubr.f32.gmra.mrb[0].mxu0 %v5397
  %v5563 = vpop.f32.mrb[0].mxu0
  %v5564 = vadd.f32 0.0, %v5563
  %v5565 = vpop.f32.mrb[0].mxu0
  %5566 = vmatprep.mubr.f32.mxu0 0.0
  %5567 = vmatmul.mubr.f32.gmra.mrb[0].mxu0 %v5400
  %v5568 = vpop.f32.mrb[0].mxu0
  %v5569 = vadd.f32 0.0, %v5568
  %v5570 = vpop.f32.mrb[0].mxu0
  %5571 = vmatprep.mubr.f32.mxu0 0.0
  %5572 = vmatmul.mubr.f32.gmra.mrb[0].mxu0 %v5403
  %v5573 = vpop.f32.mrb[0].mxu0
  %v5574 = vadd.f32 0.0, %v5573
  %v5575 = vpop.f32.mrb[0].mxu0
  %5576 = vmatprep.mubr.f32.mxu0 0.0
  %5577 = vmatmul.mubr.f32.gmra.mrb[0].mxu0 %v5406
  %v5578 = vpop.f32.mrb[0].mxu0
  %v5579 = vadd.f32 0.0, %v5578
  %v5580 = vpop.f32.mrb[0].mxu0
  %5581 = vmatprep.mubr.f32.mxu0 0.0
  %5582 = vmatmul.mubr.f32.gmra.mrb[0].mxu0 %v5409
  %v5583 = vpop.f32.mrb[0].mxu0
  %v5584 = vadd.f32 0.0, %v5583
  %v5585 = vpop.f32.mrb[0].mxu0
  %5586 = vmatprep.mubr.f32.mxu0 0.0
  %5587 = vmatmul.mubr.f32.gmra.mrb[0].mxu0 %v5412
  %v5588 = vpop.f32.mrb[0].mxu0
  %v5589 = vadd.f32 0.0, %v5588
  %v5590 = vpop.f32.mrb[0].mxu0
  %5591 = vmatprep.mubr.f32.mxu0 0.0
  %5592 = vmatmul.mubr.f32.gmra.mrb[0].mxu0 %v5415
  %v5593 = vpop.f32.mrb[0].mxu0
  %v5594 = vadd.f32 0.0, %v5593
  %v5595 = vpop.f32.mrb[0].mxu0
  %5596 = vmatprep.mubr.f32.mxu0 0.0
  %5597 = vmatmul.mubr.f32.gmra.mrb[0].mxu0 %v5418
  %v5598 = vpop.f32.mrb[0].mxu0
  %v5599 = vadd.f32 0.0, %v5598
  %v5600 = vpop.f32.mrb[0].mxu0
  %5601 = vmatprep.mubr.f32.mxu0 0.0
  %5602 = vmatmul.mubr.f32.gmra.mrb[0].mxu0 %v5421
  %v5603 = vpop.f32.mrb[0].mxu0
  %v5604 = vadd.f32 0.0, %v5603
  %v5605 = vpop.f32.mrb[0].mxu0
  %5606 = vmatprep.mubr.f32.mxu0 0.0
  %5607 = vmatmul.mubr.f32.gmra.mrb[0].mxu0 %v5424
  %v5608 = vpop.f32.mrb[0].mxu0
  %v5609 = vadd.f32 0.0, %v5608
  %v5610 = vpop.f32.mrb[0].mxu0
  %5611 = vmatprep.mubr.f32.mxu0 0.0
  %5612 = vmatmul.mubr.f32.gmra.mrb[0].mxu0 %v5427
  %v5613 = vpop.f32.mrb[0].mxu0
  %v5614 = vadd.f32 0.0, %v5613
  %v5615 = vpop.f32.mrb[0].mxu0
  %5616 = vmatprep.mubr.f32.mxu0 0.0
  %5617 = vmatmul.mubr.f32.gmra.mrb[0].mxu0 %v5430
  %v5618 = vpop.f32.mrb[0].mxu0
  %v5619 = vadd.f32 0.0, %v5618
  %v5620 = vpop.f32.mrb[0].mxu0
  %5621 = vdwg.mxu0
  %v5622 = vadd.f32 %v5303, %v5499
  %v5623 = vadd.f32 %v5304, %v5504
  %v5624 = vadd.f32 %v5305, %v5509
  %v5625 = vadd.f32 %v5306, %v5514
  %v5626 = vadd.f32 %v5307, %v5519
  %v5627 = vadd.f32 %v5308, %v5524
  %v5628 = vadd.f32 %v5309, %v5529
  %v5629 = vadd.f32 %v5310, %v5534
  %v5630 = vadd.f32 %v5311, %v5539
  %v5631 = vadd.f32 %v5312, %v5544
  %v5632 = vadd.f32 %v5313, %v5549
  %v5633 = vadd.f32 %v5314, %v5554
  %v5634 = vadd.f32 %v5315, %v5559
  %v5635 = vadd.f32 %v5316, %v5564
  %v5636 = vadd.f32 %v5317, %v5569
  %v5637 = vadd.f32 %v5318, %v5574
  %v5638 = vadd.f32 %v5319, %v5579
  %v5639 = vadd.f32 %v5320, %v5584
  %v5640 = vadd.f32 %v5321, %v5589
  %v5641 = vadd.f32 %v5322, %v5594
  %v5642 = vadd.f32 %v5323, %v5599
  %v5643 = vadd.f32 %v5324, %v5604
  %v5644 = vadd.f32 %v5325, %v5609
  %v5645 = vadd.f32 %v5326, %v5614
  %v5646 = vadd.f32 %v5327, %v5619
  %v5647 = vld [vmem:[#allocation2 + $0x1b] sm:$0xff]
  %v5648 = vld [vmem:[#allocation2 + $0x23] sm:$0xff]
  %v5649 = vld [vmem:[#allocation2 + $0x2b] sm:$0xff]
  %v5650 = vld [vmem:[#allocation2 + $0x33] sm:$0xff]
  %v5651 = vld [vmem:[#allocation2 + $0x3b] sm:$0xff]
  %v5652 = vld [vmem:[#allocation2 + $0x43] sm:$0xff]
  %v5653 = vld [vmem:[#allocation2 + $0x4b] sm:$0xff]
  %v5654 = vld [vmem:[#allocation2 + $0x53] sm:$0xff]
  %v5655 = vld [vmem:[#allocation2 + $0x5b] sm:$0xff]
  %v5656 = vld [vmem:[#allocation2 + $0x63] sm:$0xff]
  %v5657 = vld [vmem:[#allocation2 + $0x6b] sm:$0xff]
  %v5658 = vld [vmem:[#allocation2 + $0x73] sm:$0xff]
  %v5659 = vld [vmem:[#allocation2 + $0x7b] sm:$0xff]
  %v5660 = vld [vmem:[#allocation2 + $0x83] sm:$0xff]
  %v5661 = vld [vmem:[#allocation2 + $0x8b] sm:$0xff]
  %v5662 = vld [vmem:[#allocation2 + $0x93] sm:$0xff]
  %v5663 = vld [vmem:[#allocation2 + $0x9b] sm:$0xff]
  %v5664 = vld [vmem:[#allocation2 + $0xa3] sm:$0xff]
  %v5665 = vld [vmem:[#allocation2 + $0xab] sm:$0xff]
  %v5666 = vld [vmem:[#allocation2 + $0xb3] sm:$0xff]
  %v5667 = vld [vmem:[#allocation2 + $0xbb] sm:$0xff]
  %v5668 = vld [vmem:[#allocation2 + $0xc3] sm:$0xff]
  %v5669 = vld [vmem:[#allocation2 + $0xcb] sm:$0xff]
  %v5670 = vld [vmem:[#allocation2 + $0xd3] sm:$0xff]
  %v5671 = vld [vmem:[#allocation2 + $0xdb] sm:$0xff]
  %v5672 = vld [vmem:[%s4 + $0x100] sm:$0xff]
  %v5673 = vld [vmem:[%s4 + $0x108] sm:$0xff]
  %v5674 = vld [vmem:[%s4 + $0x110] sm:$0xff]
  %v5675 = vld [vmem:[%s4 + $0x118] sm:$0xff]
  %v5677 = vsel %vm2940, %v5647, 0
  %v5680 = vsel %vm2940, %v5648, 0
  %v5683 = vsel %vm2940, %v5649, 0
  %v5686 = vsel %vm2940, %v5650, 0
  %v5689 = vsel %vm2940, %v5651, 0
  %v5692 = vsel %vm2940, %v5652, 0
  %v5695 = vsel %vm2940, %v5653, 0
  %v5698 = vsel %vm2940, %v5654, 0
  %v5701 = vsel %vm2940, %v5655, 0
  %v5704 = vsel %vm2940, %v5656, 0
  %v5707 = vsel %vm2940, %v5657, 0
  %v5710 = vsel %vm2940, %v5658, 0
  %v5713 = vsel %vm2940, %v5659, 0
  %v5716 = vsel %vm2940, %v5660, 0
  %v5719 = vsel %vm2940, %v5661, 0
  %v5722 = vsel %vm2940, %v5662, 0
  %v5725 = vsel %vm2940, %v5663, 0
  %v5728 = vsel %vm2940, %v5664, 0
  %v5731 = vsel %vm2940, %v5665, 0
  %v5734 = vsel %vm2940, %v5666, 0
  %v5737 = vsel %vm2940, %v5667, 0
  %v5740 = vsel %vm2940, %v5668, 0
  %v5743 = vsel %vm2940, %v5669, 0
  %v5746 = vsel %vm2940, %v5670, 0
  %v5749 = vsel %vm2940, %v5671, 0
  %5751 = vmatprep.subr.mxu0 0.0
  %5752 = vmatpush1.msra.mxu0 %v5672
  %5753 = vmatprep.subr.mxu0 0.0
  %5754 = vmatpush1.msra.mxu0 %v5673
  %5755 = vmatprep.subr.mxu0 0.0
  %5756 = vmatpush1.msra.mxu0 %v5674
  %5757 = vmatprep.subr.mxu0 0.0
  %5758 = vmatpush1.msra.mxu0 %v5675
  %5759 = vmatprep.subr.mxu0 0.0
  %5760 = vmatpush1.msra.mxu0 0.0
  %5761 = vmatprep.subr.mxu0 0.0
  %5762 = vmatpush1.msra.mxu0 0.0
  %5763 = vmatprep.subr.mxu0 0.0
  %5764 = vmatpush1.msra.mxu0 0.0
  %5765 = vmatprep.subr.mxu0 0.0
  %5766 = vmatpush1.msra.mxu0 0.0
  %5767 = vmatprep.subr.mxu0 0.0
  %5768 = vmatpush1.msra.mxu0 0.0
  %5769 = vmatprep.subr.mxu0 0.0
  %5770 = vmatpush1.msra.mxu0 0.0
  %5771 = vmatprep.subr.mxu0 0.0
  %5772 = vmatpush1.msra.mxu0 0.0
  %5773 = vmatprep.subr.mxu0 0.0
  %5774 = vmatpush1.msra.mxu0 0.0
  %5775 = vmatprep.subr.mxu0 0.0
  %5776 = vmatpush1.msra.mxu0 0.0
  %5777 = vmatprep.subr.mxu0 0.0
  %5778 = vmatpush1.msra.mxu0 0.0
  %5779 = vmatprep.subr.mxu0 0.0
  %5780 = vmatpush1.msra.mxu0 0.0
  %5781 = vmatprep.subr.mxu0 0.0
  %5782 = vmatpush1.msra.mxu0 0.0
  %5783 = vmatprep.subr.mxu0 0.0
  %5784 = vmatpush1.msra.mxu0 0.0
  %5785 = vmatprep.subr.mxu0 0.0
  %5786 = vmatpush1.msra.mxu0 0.0
  %5787 = vmatprep.subr.mxu0 0.0
  %5788 = vmatpush1.msra.mxu0 0.0
  %5789 = vmatprep.subr.mxu0 0.0
  %5790 = vmatpush1.msra.mxu0 0.0
  %5791 = vmatprep.subr.mxu0 0.0
  %5792 = vmatpush1.msra.mxu0 0.0
  %5793 = vmatprep.subr.mxu0 0.0
  %5794 = vmatpush1.msra.mxu0 0.0
  %5795 = vmatprep.subr.mxu0 0.0
  %5796 = vmatpush1.msra.mxu0 0.0
  %5797 = vmatprep.subr.mxu0 0.0
  %5798 = vmatpush1.msra.mxu0 0.0
  %5799 = vmatprep.subr.mxu0 0.0
  %5800 = vmatpush1.msra.mxu0 0.0
  %5801 = vmatprep.subr.mxu0 0.0
  %5802 = vmatpush1.msra.mxu0 0.0
  %5803 = vmatprep.subr.mxu0 0.0
  %5804 = vmatpush1.msra.mxu0 0.0
  %5805 = vmatprep.subr.mxu0 0.0
  %5806 = vmatpush1.msra.mxu0 0.0
  %5807 = vmatprep.subr.mxu0 0.0
  %5808 = vmatpush1.msra.mxu0 0.0
  %5809 = vmatprep.subr.mxu0 0.0
  %5810 = vmatpush1.msra.mxu0 0.0
  %5811 = vmatprep.subr.mxu0 0.0
  %5812 = vmatpush1.msra.mxu0 0.0
  %5813 = vmatprep.subr.mxu0 0.0
  %5814 = vmatpush1.msra.mxu0 0.0
  %5815 = vmatprep.mubr.f32.mxu0 0.0
  %5816 = vmatmul.mubr.f32.gmra.mrb[0].mxu0 %v5677
  %v5817 = vpop.f32.mrb[0].mxu0
  %v5818 = vadd.f32 0.0, %v5817
  %v5819 = vpop.f32.mrb[0].mxu0
  %5820 = vmatprep.mubr.f32.mxu0 0.0
  %5821 = vmatmul.mubr.f32.gmra.mrb[0].mxu0 %v5680
  %v5822 = vpop.f32.mrb[0].mxu0
  %v5823 = vadd.f32 0.0, %v5822
  %v5824 = vpop.f32.mrb[0].mxu0
  %5825 = vmatprep.mubr.f32.mxu0 0.0
  %5826 = vmatmul.mubr.f32.gmra.mrb[0].mxu0 %v5683
  %v5827 = vpop.f32.mrb[0].mxu0
  %v5828 = vadd.f32 0.0, %v5827
  %v5829 = vpop.f32.mrb[0].mxu0
  %5830 = vmatprep.mubr.f32.mxu0 0.0
  %5831 = vmatmul.mubr.f32.gmra.mrb[0].mxu0 %v5686
  %v5832 = vpop.f32.mrb[0].mxu0
  %v5833 = vadd.f32 0.0, %v5832
  %v5834 = vpop.f32.mrb[0].mxu0
  %5835 = vmatprep.mubr.f32.mxu0 0.0
  %5836 = vmatmul.mubr.f32.gmra.mrb[0].mxu0 %v5689
  %v5837 = vpop.f32.mrb[0].mxu0
  %v5838 = vadd.f32 0.0, %v5837
  %v5839 = vpop.f32.mrb[0].mxu0
  %5840 = vmatprep.mubr.f32.mxu0 0.0
  %5841 = vmatmul.mubr.f32.gmra.mrb[0].mxu0 %v5692
  %v5842 = vpop.f32.mrb[0].mxu0
  %v5843 = vadd.f32 0.0, %v5842
  %v5844 = vpop.f32.mrb[0].mxu0
  %5845 = vmatprep.mubr.f32.mxu0 0.0
  %5846 = vmatmul.mubr.f32.gmra.mrb[0].mxu0 %v5695
  %v5847 = vpop.f32.mrb[0].mxu0
  %v5848 = vadd.f32 0.0, %v5847
  %v5849 = vpop.f32.mrb[0].mxu0
  %5850 = vmatprep.mubr.f32.mxu0 0.0
  %5851 = vmatmul.mubr.f32.gmra.mrb[0].mxu0 %v5698
  %v5852 = vpop.f32.mrb[0].mxu0
  %v5853 = vadd.f32 0.0, %v5852
  %v5854 = vpop.f32.mrb[0].mxu0
  %5855 = vmatprep.mubr.f32.mxu0 0.0
  %5856 = vmatmul.mubr.f32.gmra.mrb[0].mxu0 %v5701
  %v5857 = vpop.f32.mrb[0].mxu0
  %v5858 = vadd.f32 0.0, %v5857
  %v5859 = vpop.f32.mrb[0].mxu0
  %5860 = vmatprep.mubr.f32.mxu0 0.0
  %5861 = vmatmul.mubr.f32.gmra.mrb[0].mxu0 %v5704
  %v5862 = vpop.f32.mrb[0].mxu0
  %v5863 = vadd.f32 0.0, %v5862
  %v5864 = vpop.f32.mrb[0].mxu0
  %5865 = vmatprep.mubr.f32.mxu0 0.0
  %5866 = vmatmul.mubr.f32.gmra.mrb[0].mxu0 %v5707
  %v5867 = vpop.f32.mrb[0].mxu0
  %v5868 = vadd.f32 0.0, %v5867
  %v5869 = vpop.f32.mrb[0].mxu0
  %5870 = vmatprep.mubr.f32.mxu0 0.0
  %5871 = vmatmul.mubr.f32.gmra.mrb[0].mxu0 %v5710
  %v5872 = vpop.f32.mrb[0].mxu0
  %v5873 = vadd.f32 0.0, %v5872
  %v5874 = vpop.f32.mrb[0].mxu0
  %5875 = vmatprep.mubr.f32.mxu0 0.0
  %5876 = vmatmul.mubr.f32.gmra.mrb[0].mxu0 %v5713
  %v5877 = vpop.f32.mrb[0].mxu0
  %v5878 = vadd.f32 0.0, %v5877
  %v5879 = vpop.f32.mrb[0].mxu0
  %5880 = vmatprep.mubr.f32.mxu0 0.0
  %5881 = vmatmul.mubr.f32.gmra.mrb[0].mxu0 %v5716
  %v5882 = vpop.f32.mrb[0].mxu0
  %v5883 = vadd.f32 0.0, %v5882
  %v5884 = vpop.f32.mrb[0].mxu0
  %5885 = vmatprep.mubr.f32.mxu0 0.0
  %5886 = vmatmul.mubr.f32.gmra.mrb[0].mxu0 %v5719
  %v5887 = vpop.f32.mrb[0].mxu0
  %v5888 = vadd.f32 0.0, %v5887
  %v5889 = vpop.f32.mrb[0].mxu0
  %5890 = vmatprep.mubr.f32.mxu0 0.0
  %5891 = vmatmul.mubr.f32.gmra.mrb[0].mxu0 %v5722
  %v5892 = vpop.f32.mrb[0].mxu0
  %v5893 = vadd.f32 0.0, %v5892
  %v5894 = vpop.f32.mrb[0].mxu0
  %5895 = vmatprep.mubr.f32.mxu0 0.0
  %5896 = vmatmul.mubr.f32.gmra.mrb[0].mxu0 %v5725
  %v5897 = vpop.f32.mrb[0].mxu0
  %v5898 = vadd.f32 0.0, %v5897
  %v5899 = vpop.f32.mrb[0].mxu0
  %5900 = vmatprep.mubr.f32.mxu0 0.0
  %5901 = vmatmul.mubr.f32.gmra.mrb[0].mxu0 %v5728
  %v5902 = vpop.f32.mrb[0].mxu0
  %v5903 = vadd.f32 0.0, %v5902
  %v5904 = vpop.f32.mrb[0].mxu0
  %5905 = vmatprep.mubr.f32.mxu0 0.0
  %5906 = vmatmul.mubr.f32.gmra.mrb[0].mxu0 %v5731
  %v5907 = vpop.f32.mrb[0].mxu0
  %v5908 = vadd.f32 0.0, %v5907
  %v5909 = vpop.f32.mrb[0].mxu0
  %5910 = vmatprep.mubr.f32.mxu0 0.0
  %5911 = vmatmul.mubr.f32.gmra.mrb[0].mxu0 %v5734
  %v5912 = vpop.f32.mrb[0].mxu0
  %v5913 = vadd.f32 0.0, %v5912
  %v5914 = vpop.f32.mrb[0].mxu0
  %5915 = vmatprep.mubr.f32.mxu0 0.0
  %5916 = vmatmul.mubr.f32.gmra.mrb[0].mxu0 %v5737
  %v5917 = vpop.f32.mrb[0].mxu0
  %v5918 = vadd.f32 0.0, %v5917
  %v5919 = vpop.f32.mrb[0].mxu0
  %5920 = vmatprep.mubr.f32.mxu0 0.0
  %5921 = vmatmul.mubr.f32.gmra.mrb[0].mxu0 %v5740
  %v5922 = vpop.f32.mrb[0].mxu0
  %v5923 = vadd.f32 0.0, %v5922
  %v5924 = vpop.f32.mrb[0].mxu0
  %5925 = vmatprep.mubr.f32.mxu0 0.0
  %5926 = vmatmul.mubr.f32.gmra.mrb[0].mxu0 %v5743
  %v5927 = vpop.f32.mrb[0].mxu0
  %v5928 = vadd.f32 0.0, %v5927
  %v5929 = vpop.f32.mrb[0].mxu0
  %5930 = vmatprep.mubr.f32.mxu0 0.0
  %5931 = vmatmul.mubr.f32.gmra.mrb[0].mxu0 %v5746
  %v5932 = vpop.f32.mrb[0].mxu0
  %v5933 = vadd.f32 0.0, %v5932
  %v5934 = vpop.f32.mrb[0].mxu0
  %5935 = vmatprep.mubr.f32.mxu0 0.0
  %5936 = vmatmul.mubr.f32.gmra.mrb[0].mxu0 %v5749
  %v5937 = vpop.f32.mrb[0].mxu0
  %v5938 = vadd.f32 0.0, %v5937
  %v5939 = vpop.f32.mrb[0].mxu0
  %5940 = vdwg.mxu0
  %v5941 = vadd.f32 %v5622, %v5818
  %v5942 = vadd.f32 %v5623, %v5823
  %v5943 = vadd.f32 %v5624, %v5828
  %v5944 = vadd.f32 %v5625, %v5833
  %v5945 = vadd.f32 %v5626, %v5838
  %v5946 = vadd.f32 %v5627, %v5843
  %v5947 = vadd.f32 %v5628, %v5848
  %v5948 = vadd.f32 %v5629, %v5853
  %v5949 = vadd.f32 %v5630, %v5858
  %v5950 = vadd.f32 %v5631, %v5863
  %v5951 = vadd.f32 %v5632, %v5868
  %v5952 = vadd.f32 %v5633, %v5873
  %v5953 = vadd.f32 %v5634, %v5878
  %v5954 = vadd.f32 %v5635, %v5883
  %v5955 = vadd.f32 %v5636, %v5888
  %v5956 = vadd.f32 %v5637, %v5893
  %v5957 = vadd.f32 %v5638, %v5898
  %v5958 = vadd.f32 %v5639, %v5903
  %v5959 = vadd.f32 %v5640, %v5908
  %v5960 = vadd.f32 %v5641, %v5913
  %v5961 = vadd.f32 %v5642, %v5918
  %v5962 = vadd.f32 %v5643, %v5923
  %v5963 = vadd.f32 %v5644, %v5928
  %v5964 = vadd.f32 %v5645, %v5933
  %v5965 = vadd.f32 %v5646, %v5938
  %v5966 = vld [vmem:[%s5] sm:$0x1]
  %v5968 = vlaneseq
  %v5969 = vshrl.u32 %v5968, 7
  %v5970 = vsub.s32 0, %v5969
  %v5971 = vrot.slane %v5966, %v5970
  %v5973 = vadd.f32 %v5941, %v5971
  %v5974 = vadd.f32 %v5942, %v5971
  %v5975 = vadd.f32 %v5943, %v5971
  %v5976 = vadd.f32 %v5944, %v5971
  %v5977 = vadd.f32 %v5945, %v5971
  %v5978 = vadd.f32 %v5946, %v5971
  %v5979 = vadd.f32 %v5947, %v5971
  %v5980 = vadd.f32 %v5948, %v5971
  %v5981 = vadd.f32 %v5949, %v5971
  %v5982 = vadd.f32 %v5950, %v5971
  %v5983 = vadd.f32 %v5951, %v5971
  %v5984 = vadd.f32 %v5952, %v5971
  %v5985 = vadd.f32 %v5953, %v5971
  %v5986 = vadd.f32 %v5954, %v5971
  %v5987 = vadd.f32 %v5955, %v5971
  %v5988 = vadd.f32 %v5956, %v5971
  %v5989 = vadd.f32 %v5957, %v5971
  %v5990 = vadd.f32 %v5958, %v5971
  %v5991 = vadd.f32 %v5959, %v5971
  %v5992 = vadd.f32 %v5960, %v5971
  %v5993 = vadd.f32 %v5961, %v5971
  %v5994 = vadd.f32 %v5962, %v5971
  %v5995 = vadd.f32 %v5963, %v5971
  %v5996 = vadd.f32 %v5964, %v5971
  %v5997 = vadd.f32 %v5965, %v5971
  %v5998 = vmax.f32 %v5973, 0.0
  %v5999 = vmax.f32 %v5974, 0.0
  %v6000 = vmax.f32 %v5975, 0.0
  %v6001 = vmax.f32 %v5976, 0.0
  %v6002 = vmax.f32 %v5977, 0.0
  %v6003 = vmax.f32 %v5978, 0.0
  %v6004 = vmax.f32 %v5979, 0.0
  %v6005 = vmax.f32 %v5980, 0.0
  %v6006 = vmax.f32 %v5981, 0.0
  %v6007 = vmax.f32 %v5982, 0.0
  %v6008 = vmax.f32 %v5983, 0.0
  %v6009 = vmax.f32 %v5984, 0.0
  %v6010 = vmax.f32 %v5985, 0.0
  %v6011 = vmax.f32 %v5986, 0.0
  %v6012 = vmax.f32 %v5987, 0.0
  %v6013 = vmax.f32 %v5988, 0.0
  %v6014 = vmax.f32 %v5989, 0.0
  %v6015 = vmax.f32 %v5990, 0.0
  %v6016 = vmax.f32 %v5991, 0.0
  %v6017 = vmax.f32 %v5992, 0.0
  %v6018 = vmax.f32 %v5993, 0.0
  %v6019 = vmax.f32 %v5994, 0.0
  %v6020 = vmax.f32 %v5995, 0.0
  %v6021 = vmax.f32 %v5996, 0.0
  %v6022 = vmax.f32 %v5997, 0.0
  %vm6023 = vcmask 523264
  %6024 = vst.msk [vmem:[#allocation3] sm:$0xff] %vm6023, 0.0
  %6025 = vst.msk [vmem:[#allocation3 + $0x8] sm:$0xff] %vm6023, 0.0
  %6026 = vst.msk [vmem:[#allocation3 + $0x10] sm:$0xff] %vm6023, 0.0
  %6027 = vst.msk [vmem:[#allocation3 + $0x18] sm:$0xff] %vm6023, 0.0
  %6028 = vst.msk [vmem:[#allocation3 + $0x20] sm:$0xff] %vm6023, 0.0
  %6029 = vst.msk [vmem:[#allocation3 + $0x28] sm:$0xff] %vm6023, 0.0
  %6030 = vst.msk [vmem:[#allocation3 + $0x30] sm:$0xff] %vm6023, 0.0
  %6031 = vst.msk [vmem:[#allocation3 + $0x38] sm:$0xff] %vm6023, 0.0
  %6032 = vst.msk [vmem:[#allocation3 + $0x40] sm:$0xff] %vm6023, 0.0
  %6033 = vst.msk [vmem:[#allocation3 + $0x48] sm:$0xff] %vm6023, 0.0
  %6034 = vst.msk [vmem:[#allocation3 + $0x50] sm:$0xff] %vm6023, 0.0
  %6035 = vst.msk [vmem:[#allocation3 + $0x58] sm:$0xff] %vm6023, 0.0
  %6036 = vst.msk [vmem:[#allocation3 + $0x60] sm:$0xff] %vm6023, 0.0
  %6037 = vst.msk [vmem:[#allocation3 + $0x68] sm:$0xff] %vm6023, 0.0
  %6038 = vst.msk [vmem:[#allocation3 + $0x70] sm:$0xff] %vm6023, 0.0
  %6039 = vst.msk [vmem:[#allocation3 + $0x78] sm:$0xff] %vm6023, 0.0
  %6040 = vst.msk [vmem:[#allocation3 + $0x80] sm:$0xff] %vm6023, 0.0
  %6041 = vst.msk [vmem:[#allocation3 + $0x88] sm:$0xff] %vm6023, 0.0
  %6042 = vst.msk [vmem:[#allocation3 + $0x90] sm:$0xff] %vm6023, 0.0
  %6043 = vst.msk [vmem:[#allocation3 + $0x98] sm:$0xff] %vm6023, 0.0
  %6044 = vst.msk [vmem:[#allocation3 + $0xa0] sm:$0xff] %vm6023, 0.0
  %6045 = vst.msk [vmem:[#allocation3 + $0xa8] sm:$0xff] %vm6023, 0.0
  %6046 = vst.msk [vmem:[#allocation3 + $0xb0] sm:$0xff] %vm6023, 0.0
  %6047 = vst.msk [vmem:[#allocation3 + $0xb8] sm:$0xff] %vm6023, 0.0
  %6048 = vst.msk [vmem:[#allocation3 + $0xc0] sm:$0xff] %vm6023, 0.0
  %6049 = vst.msk [vmem:[#allocation3 + $0xc8] sm:$0xff] %vm6023, 0.0
  %6050 = vst.msk [vmem:[#allocation3 + $0xd0] sm:$0xff] %vm6023, 0.0
  %6051 = vst.msk [vmem:[#allocation3 + $0xd8] sm:$0xff] %vm6023, 0.0
  %6052 = vst.msk [vmem:[#allocation3 + $0xe0] sm:$0xff] %vm6023, 0.0
  %v6053 = vmul.f32 %v5998, %v2973
  %v6054 = vmul.f32 %v5999, %v2978
  %v6055 = vmul.f32 %v6000, %v2983
  %v6056 = vmul.f32 %v6001, %v2988
  %v6057 = vmul.f32 %v6002, %v2993
  %v6058 = vmul.f32 %v6003, %v2998
  %v6059 = vmul.f32 %v6004, %v3003
  %v6060 = vmul.f32 %v6005, %v3008
  %v6061 = vmul.f32 %v6006, %v3013
  %v6062 = vmul.f32 %v6007, %v3018
  %v6063 = vmul.f32 %v6008, %v3023
  %v6064 = vmul.f32 %v6009, %v3028
  %v6065 = vmul.f32 %v6010, %v3033
  %v6066 = vmul.f32 %v6011, %v3038
  %v6067 = vmul.f32 %v6012, %v3043
  %v6068 = vmul.f32 %v6013, %v3048
  %v6069 = vmul.f32 %v6014, %v3053
  %v6070 = vmul.f32 %v6015, %v3058
  %v6071 = vmul.f32 %v6016, %v3063
  %v6072 = vmul.f32 %v6017, %v3068
  %v6073 = vmul.f32 %v6018, %v3073
  %v6074 = vmul.f32 %v6019, %v3078
  %v6075 = vmul.f32 %v6020, %v3083
  %v6076 = vmul.f32 %v6021, %v3088
  %v6077 = vmul.f32 %v6022, %v3093
  %6078 = vst.msk [vmem:[#allocation3 + $0x10] sm:$0xff] %vm6023, %v6053
  %6079 = vst.msk [vmem:[#allocation3 + $0x18] sm:$0xff] %vm6023, %v6054
  %6080 = vst.msk [vmem:[#allocation3 + $0x20] sm:$0xff] %vm6023, %v6055
  %6081 = vst.msk [vmem:[#allocation3 + $0x28] sm:$0xff] %vm6023, %v6056
  %6082 = vst.msk [vmem:[#allocation3 + $0x30] sm:$0xff] %vm6023, %v6057
  %6083 = vst.msk [vmem:[#allocation3 + $0x38] sm:$0xff] %vm6023, %v6058
  %6084 = vst.msk [vmem:[#allocation3 + $0x40] sm:$0xff] %vm6023, %v6059
  %6085 = vst.msk [vmem:[#allocation3 + $0x48] sm:$0xff] %vm6023, %v6060
  %6086 = vst.msk [vmem:[#allocation3 + $0x50] sm:$0xff] %vm6023, %v6061
  %6087 = vst.msk [vmem:[#allocation3 + $0x58] sm:$0xff] %vm6023, %v6062
  %6088 = vst.msk [vmem:[#allocation3 + $0x60] sm:$0xff] %vm6023, %v6063
  %6089 = vst.msk [vmem:[#allocation3 + $0x68] sm:$0xff] %vm6023, %v6064
  %6090 = vst.msk [vmem:[#allocation3 + $0x70] sm:$0xff] %vm6023, %v6065
  %6091 = vst.msk [vmem:[#allocation3 + $0x78] sm:$0xff] %vm6023, %v6066
  %6092 = vst.msk [vmem:[#allocation3 + $0x80] sm:$0xff] %vm6023, %v6067
  %6093 = vst.msk [vmem:[#allocation3 + $0x88] sm:$0xff] %vm6023, %v6068
  %6094 = vst.msk [vmem:[#allocation3 + $0x90] sm:$0xff] %vm6023, %v6069
  %6095 = vst.msk [vmem:[#allocation3 + $0x98] sm:$0xff] %vm6023, %v6070
  %6096 = vst.msk [vmem:[#allocation3 + $0xa0] sm:$0xff] %vm6023, %v6071
  %6097 = vst.msk [vmem:[#allocation3 + $0xa8] sm:$0xff] %vm6023, %v6072
  %6098 = vst.msk [vmem:[#allocation3 + $0xb0] sm:$0xff] %vm6023, %v6073
  %6099 = vst.msk [vmem:[#allocation3 + $0xb8] sm:$0xff] %vm6023, %v6074
  %6100 = vst.msk [vmem:[#allocation3 + $0xc0] sm:$0xff] %vm6023, %v6075
  %6101 = vst.msk [vmem:[#allocation3 + $0xc8] sm:$0xff] %vm6023, %v6076
  %6102 = vst.msk [vmem:[#allocation3 + $0xd0] sm:$0xff] %vm6023, %v6077
  %v6103 = vld [vmem:[#allocation3 + $0x5] sm:$0xff]
  %v6104 = vld [vmem:[#allocation3 + $0xd] sm:$0xff]
  %v6105 = vld [vmem:[#allocation3 + $0x15] sm:$0xff]
  %v6106 = vld [vmem:[#allocation3 + $0x1d] sm:$0xff]
  %v6107 = vld [vmem:[#allocation3 + $0x25] sm:$0xff]
  %v6108 = vld [vmem:[#allocation3 + $0x2d] sm:$0xff]
  %v6109 = vld [vmem:[#allocation3 + $0x35] sm:$0xff]
  %v6110 = vld [vmem:[#allocation3 + $0x3d] sm:$0xff]
  %v6111 = vld [vmem:[#allocation3 + $0x45] sm:$0xff]
  %v6112 = vld [vmem:[#allocation3 + $0x4d] sm:$0xff]
  %v6113 = vld [vmem:[#allocation3 + $0x55] sm:$0xff]
  %v6114 = vld [vmem:[#allocation3 + $0x5d] sm:$0xff]
  %v6115 = vld [vmem:[#allocation3 + $0x65] sm:$0xff]
  %v6116 = vld [vmem:[#allocation3 + $0x6d] sm:$0xff]
  %v6117 = vld [vmem:[#allocation3 + $0x75] sm:$0xff]
  %v6118 = vld [vmem:[#allocation3 + $0x7d] sm:$0xff]
  %v6119 = vld [vmem:[#allocation3 + $0x85] sm:$0xff]
  %v6120 = vld [vmem:[#allocation3 + $0x8d] sm:$0xff]
  %v6121 = vld [vmem:[#allocation3 + $0x95] sm:$0xff]
  %v6122 = vld [vmem:[#allocation3 + $0x9d] sm:$0xff]
  %v6123 = vld [vmem:[#allocation3 + $0xa5] sm:$0xff]
  %v6124 = vld [vmem:[#allocation3 + $0xad] sm:$0xff]
  %v6125 = vld [vmem:[#allocation3 + $0xb5] sm:$0xff]
  %v6126 = vld [vmem:[#allocation3 + $0xbd] sm:$0xff]
  %v6127 = vld [vmem:[#allocation3 + $0xc5] sm:$0xff]
  %v6128 = vld [vmem:[%s6] sm:$0xff]
  %v6129 = vld [vmem:[%s6 + $0x8] sm:$0xff]
  %v6130 = vld [vmem:[%s6 + $0x10] sm:$0xff]
  %v6131 = vld [vmem:[%s6 + $0x18] sm:$0xff]
  %v6132 = vld [vmem:[%s6 + $0x20] sm:$0xff]
  %v6133 = vld [vmem:[%s6 + $0x28] sm:$0xff]
  %v6134 = vld [vmem:[%s6 + $0x30] sm:$0xff]
  %v6135 = vld [vmem:[%s6 + $0x38] sm:$0xff]
  %v6136 = vld [vmem:[#allocation3 + $0x6] sm:$0xff]
  %v6137 = vld [vmem:[#allocation3 + $0xe] sm:$0xff]
  %v6138 = vld [vmem:[#allocation3 + $0x16] sm:$0xff]
  %v6139 = vld [vmem:[#allocation3 + $0x1e] sm:$0xff]
  %v6140 = vld [vmem:[#allocation3 + $0x26] sm:$0xff]
  %v6141 = vld [vmem:[#allocation3 + $0x2e] sm:$0xff]
  %v6142 = vld [vmem:[#allocation3 + $0x36] sm:$0xff]
  %v6143 = vld [vmem:[#allocation3 + $0x3e] sm:$0xff]
  %v6144 = vld [vmem:[#allocation3 + $0x46] sm:$0xff]
  %v6145 = vld [vmem:[#allocation3 + $0x4e] sm:$0xff]
  %v6146 = vld [vmem:[#allocation3 + $0x56] sm:$0xff]
  %v6147 = vld [vmem:[#allocation3 + $0x5e] sm:$0xff]
  %v6148 = vld [vmem:[#allocation3 + $0x66] sm:$0xff]
  %v6149 = vld [vmem:[#allocation3 + $0x6e] sm:$0xff]
  %v6150 = vld [vmem:[#allocation3 + $0x76] sm:$0xff]
  %v6151 = vld [vmem:[#allocation3 + $0x7e] sm:$0xff]
  %v6152 = vld [vmem:[#allocation3 + $0x86] sm:$0xff]
  %v6153 = vld [vmem:[#allocation3 + $0x8e] sm:$0xff]
  %v6154 = vld [vmem:[#allocation3 + $0x96] sm:$0xff]
  %v6155 = vld [vmem:[#allocation3 + $0x9e] sm:$0xff]
  %v6156 = vld [vmem:[#allocation3 + $0xa6] sm:$0xff]
  %v6157 = vld [vmem:[#allocation3 + $0xae] sm:$0xff]
  %v6158 = vld [vmem:[#allocation3 + $0xb6] sm:$0xff]
  %v6159 = vld [vmem:[#allocation3 + $0xbe] sm:$0xff]
  %v6160 = vld [vmem:[#allocation3 + $0xc6] sm:$0xff]
  %v6161 = vld [vmem:[%s6 + $0x40] sm:$0xff]
  %v6162 = vld [vmem:[%s6 + $0x48] sm:$0xff]
  %v6163 = vld [vmem:[%s6 + $0x50] sm:$0xff]
  %v6164 = vld [vmem:[%s6 + $0x58] sm:$0xff]
  %v6165 = vld [vmem:[%s6 + $0x60] sm:$0xff]
  %v6166 = vld [vmem:[%s6 + $0x68] sm:$0xff]
  %v6167 = vld [vmem:[%s6 + $0x70] sm:$0xff]
  %v6168 = vld [vmem:[%s6 + $0x78] sm:$0xff]
  %v6170 = vsel %vm6023, %v6136, 0
  %v6173 = vsel %vm6023, %v6137, 0
  %v6176 = vsel %vm6023, %v6138, 0
  %v6179 = vsel %vm6023, %v6139, 0
  %v6182 = vsel %vm6023, %v6140, 0
  %v6185 = vsel %vm6023, %v6141, 0
  %v6188 = vsel %vm6023, %v6142, 0
  %v6191 = vsel %vm6023, %v6143, 0
  %v6194 = vsel %vm6023, %v6144, 0
  %v6197 = vsel %vm6023, %v6145, 0
  %v6200 = vsel %vm6023, %v6146, 0
  %v6203 = vsel %vm6023, %v6147, 0
  %v6206 = vsel %vm6023, %v6148, 0
  %v6209 = vsel %vm6023, %v6149, 0
  %v6212 = vsel %vm6023, %v6150, 0
  %v6215 = vsel %vm6023, %v6151, 0
  %v6218 = vsel %vm6023, %v6152, 0
  %v6221 = vsel %vm6023, %v6153, 0
  %v6224 = vsel %vm6023, %v6154, 0
  %v6227 = vsel %vm6023, %v6155, 0
  %v6230 = vsel %vm6023, %v6156, 0
  %v6233 = vsel %vm6023, %v6157, 0
  %v6236 = vsel %vm6023, %v6158, 0
  %v6239 = vsel %vm6023, %v6159, 0
  %v6242 = vsel %vm6023, %v6160, 0
  %6244 = vmatprep.subr.mxu0 0.0
  %6245 = vmatpush1.msra.mxu0 %v6161
  %6246 = vmatprep.subr.mxu0 0.0
  %6247 = vmatpush1.msra.mxu0 %v6162
  %6248 = vmatprep.subr.mxu0 0.0
  %6249 = vmatpush1.msra.mxu0 %v6163
  %6250 = vmatprep.subr.mxu0 0.0
  %6251 = vmatpush1.msra.mxu0 %v6164
  %6252 = vmatprep.subr.mxu0 0.0
  %6253 = vmatpush1.msra.mxu0 %v6165
  %6254 = vmatprep.subr.mxu0 0.0
  %6255 = vmatpush1.msra.mxu0 %v6166
  %6256 = vmatprep.subr.mxu0 0.0
  %6257 = vmatpush1.msra.mxu0 %v6167
  %6258 = vmatprep.subr.mxu0 0.0
  %6259 = vmatpush1.msra.mxu0 %v6168
  %6260 = vmatprep.subr.mxu0 0.0
  %6261 = vmatpush1.msra.mxu0 0.0
  %6262 = vmatprep.subr.mxu0 0.0
  %6263 = vmatpush1.msra.mxu0 0.0
  %6264 = vmatprep.subr.mxu0 0.0
  %6265 = vmatpush1.msra.mxu0 0.0
  %6266 = vmatprep.subr.mxu0 0.0
  %6267 = vmatpush1.msra.mxu0 0.0
  %6268 = vmatprep.subr.mxu0 0.0
  %6269 = vmatpush1.msra.mxu0 0.0
  %6270 = vmatprep.subr.mxu0 0.0
  %6271 = vmatpush1.msra.mxu0 0.0
  %6272 = vmatprep.subr.mxu0 0.0
  %6273 = vmatpush1.msra.mxu0 0.0
  %6274 = vmatprep.subr.mxu0 0.0
  %6275 = vmatpush1.msra.mxu0 0.0
  %6276 = vmatprep.subr.mxu0 0.0
  %6277 = vmatpush1.msra.mxu0 0.0
  %6278 = vmatprep.subr.mxu0 0.0
  %6279 = vmatpush1.msra.mxu0 0.0
  %6280 = vmatprep.subr.mxu0 0.0
  %6281 = vmatpush1.msra.mxu0 0.0
  %6282 = vmatprep.subr.mxu0 0.0
  %6283 = vmatpush1.msra.mxu0 0.0
  %6284 = vmatprep.subr.mxu0 0.0
  %6285 = vmatpush1.msra.mxu0 0.0
  %6286 = vmatprep.subr.mxu0 0.0
  %6287 = vmatpush1.msra.mxu0 0.0
  %6288 = vmatprep.subr.mxu0 0.0
  %6289 = vmatpush1.msra.mxu0 0.0
  %6290 = vmatprep.subr.mxu0 0.0
  %6291 = vmatpush1.msra.mxu0 0.0
  %6292 = vmatprep.subr.mxu0 0.0
  %6293 = vmatpush1.msra.mxu0 0.0
  %6294 = vmatprep.subr.mxu0 0.0
  %6295 = vmatpush1.msra.mxu0 0.0
  %6296 = vmatprep.subr.mxu0 0.0
  %6297 = vmatpush1.msra.mxu0 0.0
  %6298 = vmatprep.subr.mxu0 0.0
  %6299 = vmatpush1.msra.mxu0 0.0
  %6300 = vmatprep.subr.mxu0 0.0
  %6301 = vmatpush1.msra.mxu0 0.0
  %6302 = vmatprep.subr.mxu0 0.0
  %6303 = vmatpush1.msra.mxu0 0.0
  %6304 = vmatprep.subr.mxu0 0.0
  %6305 = vmatpush1.msra.mxu0 0.0
  %6306 = vmatprep.subr.mxu0 0.0
  %6307 = vmatpush1.msra.mxu0 0.0
  %6308 = vmatprep.mubr.f32.mxu0 0.0
  %6309 = vmatmul.mubr.f32.gmra.mrb[0].mxu0 %v6170
  %v6310 = vpop.f32.mrb[0].mxu0
  %v6311 = vadd.f32 0.0, %v6310
  %v6312 = vpop.f32.mrb[0].mxu0
  %6313 = vmatprep.mubr.f32.mxu0 0.0
  %6314 = vmatmul.mubr.f32.gmra.mrb[0].mxu0 %v6173
  %v6315 = vpop.f32.mrb[0].mxu0
  %v6316 = vadd.f32 0.0, %v6315
  %v6317 = vpop.f32.mrb[0].mxu0
  %6318 = vmatprep.mubr.f32.mxu0 0.0
  %6319 = vmatmul.mubr.f32.gmra.mrb[0].mxu0 %v6176
  %v6320 = vpop.f32.mrb[0].mxu0
  %v6321 = vadd.f32 0.0, %v6320
  %v6322 = vpop.f32.mrb[0].mxu0
  %6323 = vmatprep.mubr.f32.mxu0 0.0
  %6324 = vmatmul.mubr.f32.gmra.mrb[0].mxu0 %v6179
  %v6325 = vpop.f32.mrb[0].mxu0
  %v6326 = vadd.f32 0.0, %v6325
  %v6327 = vpop.f32.mrb[0].mxu0
  %6328 = vmatprep.mubr.f32.mxu0 0.0
  %6329 = vmatmul.mubr.f32.gmra.mrb[0].mxu0 %v6182
  %v6330 = vpop.f32.mrb[0].mxu0
  %v6331 = vadd.f32 0.0, %v6330
  %v6332 = vpop.f32.mrb[0].mxu0
  %6333 = vmatprep.mubr.f32.mxu0 0.0
  %6334 = vmatmul.mubr.f32.gmra.mrb[0].mxu0 %v6185
  %v6335 = vpop.f32.mrb[0].mxu0
  %v6336 = vadd.f32 0.0, %v6335
  %v6337 = vpop.f32.mrb[0].mxu0
  %6338 = vmatprep.mubr.f32.mxu0 0.0
  %6339 = vmatmul.mubr.f32.gmra.mrb[0].mxu0 %v6188
  %v6340 = vpop.f32.mrb[0].mxu0
  %v6341 = vadd.f32 0.0, %v6340
  %v6342 = vpop.f32.mrb[0].mxu0
  %6343 = vmatprep.mubr.f32.mxu0 0.0
  %6344 = vmatmul.mubr.f32.gmra.mrb[0].mxu0 %v6191
  %v6345 = vpop.f32.mrb[0].mxu0
  %v6346 = vadd.f32 0.0, %v6345
  %v6347 = vpop.f32.mrb[0].mxu0
  %6348 = vmatprep.mubr.f32.mxu0 0.0
  %6349 = vmatmul.mubr.f32.gmra.mrb[0].mxu0 %v6194
  %v6350 = vpop.f32.mrb[0].mxu0
  %v6351 = vadd.f32 0.0, %v6350
  %v6352 = vpop.f32.mrb[0].mxu0
  %6353 = vmatprep.mubr.f32.mxu0 0.0
  %6354 = vmatmul.mubr.f32.gmra.mrb[0].mxu0 %v6197
  %v6355 = vpop.f32.mrb[0].mxu0
  %v6356 = vadd.f32 0.0, %v6355
  %v6357 = vpop.f32.mrb[0].mxu0
  %6358 = vmatprep.mubr.f32.mxu0 0.0
  %6359 = vmatmul.mubr.f32.gmra.mrb[0].mxu0 %v6200
  %v6360 = vpop.f32.mrb[0].mxu0
  %v6361 = vadd.f32 0.0, %v6360
  %v6362 = vpop.f32.mrb[0].mxu0
  %6363 = vmatprep.mubr.f32.mxu0 0.0
  %6364 = vmatmul.mubr.f32.gmra.mrb[0].mxu0 %v6203
  %v6365 = vpop.f32.mrb[0].mxu0
  %v6366 = vadd.f32 0.0, %v6365
  %v6367 = vpop.f32.mrb[0].mxu0
  %6368 = vmatprep.mubr.f32.mxu0 0.0
  %6369 = vmatmul.mubr.f32.gmra.mrb[0].mxu0 %v6206
  %v6370 = vpop.f32.mrb[0].mxu0
  %v6371 = vadd.f32 0.0, %v6370
  %v6372 = vpop.f32.mrb[0].mxu0
  %6373 = vmatprep.mubr.f32.mxu0 0.0
  %6374 = vmatmul.mubr.f32.gmra.mrb[0].mxu0 %v6209
  %v6375 = vpop.f32.mrb[0].mxu0
  %v6376 = vadd.f32 0.0, %v6375
  %v6377 = vpop.f32.mrb[0].mxu0
  %6378 = vmatprep.mubr.f32.mxu0 0.0
  %6379 = vmatmul.mubr.f32.gmra.mrb[0].mxu0 %v6212
  %v6380 = vpop.f32.mrb[0].mxu0
  %v6381 = vadd.f32 0.0, %v6380
  %v6382 = vpop.f32.mrb[0].mxu0
  %6383 = vmatprep.mubr.f32.mxu0 0.0
  %6384 = vmatmul.mubr.f32.gmra.mrb[0].mxu0 %v6215
  %v6385 = vpop.f32.mrb[0].mxu0
  %v6386 = vadd.f32 0.0, %v6385
  %v6387 = vpop.f32.mrb[0].mxu0
  %6388 = vmatprep.mubr.f32.mxu0 0.0
  %6389 = vmatmul.mubr.f32.gmra.mrb[0].mxu0 %v6218
  %v6390 = vpop.f32.mrb[0].mxu0
  %v6391 = vadd.f32 0.0, %v6390
  %v6392 = vpop.f32.mrb[0].mxu0
  %6393 = vmatprep.mubr.f32.mxu0 0.0
  %6394 = vmatmul.mubr.f32.gmra.mrb[0].mxu0 %v6221
  %v6395 = vpop.f32.mrb[0].mxu0
  %v6396 = vadd.f32 0.0, %v6395
  %v6397 = vpop.f32.mrb[0].mxu0
  %6398 = vmatprep.mubr.f32.mxu0 0.0
  %6399 = vmatmul.mubr.f32.gmra.mrb[0].mxu0 %v6224
  %v6400 = vpop.f32.mrb[0].mxu0
  %v6401 = vadd.f32 0.0, %v6400
  %v6402 = vpop.f32.mrb[0].mxu0
  %6403 = vmatprep.mubr.f32.mxu0 0.0
  %6404 = vmatmul.mubr.f32.gmra.mrb[0].mxu0 %v6227
  %v6405 = vpop.f32.mrb[0].mxu0
  %v6406 = vadd.f32 0.0, %v6405
  %v6407 = vpop.f32.mrb[0].mxu0
  %6408 = vmatprep.mubr.f32.mxu0 0.0
  %6409 = vmatmul.mubr.f32.gmra.mrb[0].mxu0 %v6230
  %v6410 = vpop.f32.mrb[0].mxu0
  %v6411 = vadd.f32 0.0, %v6410
  %v6412 = vpop.f32.mrb[0].mxu0
  %6413 = vmatprep.mubr.f32.mxu0 0.0
  %6414 = vmatmul.mubr.f32.gmra.mrb[0].mxu0 %v6233
  %v6415 = vpop.f32.mrb[0].mxu0
  %v6416 = vadd.f32 0.0, %v6415
  %v6417 = vpop.f32.mrb[0].mxu0
  %6418 = vmatprep.mubr.f32.mxu0 0.0
  %6419 = vmatmul.mubr.f32.gmra.mrb[0].mxu0 %v6236
  %v6420 = vpop.f32.mrb[0].mxu0
  %v6421 = vadd.f32 0.0, %v6420
  %v6422 = vpop.f32.mrb[0].mxu0
  %6423 = vmatprep.mubr.f32.mxu0 0.0
  %6424 = vmatmul.mubr.f32.gmra.mrb[0].mxu0 %v6239
  %v6425 = vpop.f32.mrb[0].mxu0
  %v6426 = vadd.f32 0.0, %v6425
  %v6427 = vpop.f32.mrb[0].mxu0
  %6428 = vmatprep.mubr.f32.mxu0 0.0
  %6429 = vmatmul.mubr.f32.gmra.mrb[0].mxu0 %v6242
  %v6430 = vpop.f32.mrb[0].mxu0
  %v6431 = vadd.f32 0.0, %v6430
  %v6432 = vpop.f32.mrb[0].mxu0
  %6433 = vdwg.mxu0
  %v6435 = vsel %vm6023, %v6103, 0
  %v6438 = vsel %vm6023, %v6104, 0
  %v6441 = vsel %vm6023, %v6105, 0
  %v6444 = vsel %vm6023, %v6106, 0
  %v6447 = vsel %vm6023, %v6107, 0
  %v6450 = vsel %vm6023, %v6108, 0
  %v6453 = vsel %vm6023, %v6109, 0
  %v6456 = vsel %vm6023, %v6110, 0
  %v6459 = vsel %vm6023, %v6111, 0
  %v6462 = vsel %vm6023, %v6112, 0
  %v6465 = vsel %vm6023, %v6113, 0
  %v6468 = vsel %vm6023, %v6114, 0
  %v6471 = vsel %vm6023, %v6115, 0
  %v6474 = vsel %vm6023, %v6116, 0
  %v6477 = vsel %vm6023, %v6117, 0
  %v6480 = vsel %vm6023, %v6118, 0
  %v6483 = vsel %vm6023, %v6119, 0
  %v6486 = vsel %vm6023, %v6120, 0
  %v6489 = vsel %vm6023, %v6121, 0
  %v6492 = vsel %vm6023, %v6122, 0
  %v6495 = vsel %vm6023, %v6123, 0
  %v6498 = vsel %vm6023, %v6124, 0
  %v6501 = vsel %vm6023, %v6125, 0
  %v6504 = vsel %vm6023, %v6126, 0
  %v6507 = vsel %vm6023, %v6127, 0
  %6509 = vmatprep.subr.mxu0 0.0
  %6510 = vmatpush1.msra.mxu0 %v6128
  %6511 = vmatprep.subr.mxu0 0.0
  %6512 = vmatpush1.msra.mxu0 %v6129
  %6513 = vmatprep.subr.mxu0 0.0
  %6514 = vmatpush1.msra.mxu0 %v6130
  %6515 = vmatprep.subr.mxu0 0.0
  %6516 = vmatpush1.msra.mxu0 %v6131
  %6517 = vmatprep.subr.mxu0 0.0
  %6518 = vmatpush1.msra.mxu0 %v6132
  %6519 = vmatprep.subr.mxu0 0.0
  %6520 = vmatpush1.msra.mxu0 %v6133
  %6521 = vmatprep.subr.mxu0 0.0
  %6522 = vmatpush1.msra.mxu0 %v6134
  %6523 = vmatprep.subr.mxu0 0.0
  %6524 = vmatpush1.msra.mxu0 %v6135
  %6525 = vmatprep.subr.mxu0 0.0
  %6526 = vmatpush1.msra.mxu0 0.0
  %6527 = vmatprep.subr.mxu0 0.0
  %6528 = vmatpush1.msra.mxu0 0.0
  %6529 = vmatprep.subr.mxu0 0.0
  %6530 = vmatpush1.msra.mxu0 0.0
  %6531 = vmatprep.subr.mxu0 0.0
  %6532 = vmatpush1.msra.mxu0 0.0
  %6533 = vmatprep.subr.mxu0 0.0
  %6534 = vmatpush1.msra.mxu0 0.0
  %6535 = vmatprep.subr.mxu0 0.0
  %6536 = vmatpush1.msra.mxu0 0.0
  %6537 = vmatprep.subr.mxu0 0.0
  %6538 = vmatpush1.msra.mxu0 0.0
  %6539 = vmatprep.subr.mxu0 0.0
  %6540 = vmatpush1.msra.mxu0 0.0
  %6541 = vmatprep.subr.mxu0 0.0
  %6542 = vmatpush1.msra.mxu0 0.0
  %6543 = vmatprep.subr.mxu0 0.0
  %6544 = vmatpush1.msra.mxu0 0.0
  %6545 = vmatprep.subr.mxu0 0.0
  %6546 = vmatpush1.msra.mxu0 0.0
  %6547 = vmatprep.subr.mxu0 0.0
  %6548 = vmatpush1.msra.mxu0 0.0
  %6549 = vmatprep.subr.mxu0 0.0
  %6550 = vmatpush1.msra.mxu0 0.0
  %6551 = vmatprep.subr.mxu0 0.0
  %6552 = vmatpush1.msra.mxu0 0.0
  %6553 = vmatprep.subr.mxu0 0.0
  %6554 = vmatpush1.msra.mxu0 0.0
  %6555 = vmatprep.subr.mxu0 0.0
  %6556 = vmatpush1.msra.mxu0 0.0
  %6557 = vmatprep.subr.mxu0 0.0
  %6558 = vmatpush1.msra.mxu0 0.0
  %6559 = vmatprep.subr.mxu0 0.0
  %6560 = vmatpush1.msra.mxu0 0.0
  %6561 = vmatprep.subr.mxu0 0.0
  %6562 = vmatpush1.msra.mxu0 0.0
  %6563 = vmatprep.subr.mxu0 0.0
  %6564 = vmatpush1.msra.mxu0 0.0
  %6565 = vmatprep.subr.mxu0 0.0
  %6566 = vmatpush1.msra.mxu0 0.0
  %6567 = vmatprep.subr.mxu0 0.0
  %6568 = vmatpush1.msra.mxu0 0.0
  %6569 = vmatprep.subr.mxu0 0.0
  %6570 = vmatpush1.msra.mxu0 0.0
  %6571 = vmatprep.subr.mxu0 0.0
  %6572 = vmatpush1.msra.mxu0 0.0
  %6573 = vmatprep.mubr.f32.mxu0 0.0
  %6574 = vmatmul.mubr.f32.gmra.mrb[0].mxu0 %v6435
  %v6575 = vpop.f32.mrb[0].mxu0
  %v6576 = vadd.f32 %v6311, %v6575
  %v6577 = vpop.f32.mrb[0].mxu0
  %6578 = vmatprep.mubr.f32.mxu0 0.0
  %6579 = vmatmul.mubr.f32.gmra.mrb[0].mxu0 %v6438
  %v6580 = vpop.f32.mrb[0].mxu0
  %v6581 = vadd.f32 %v6316, %v6580
  %v6582 = vpop.f32.mrb[0].mxu0
  %6583 = vmatprep.mubr.f32.mxu0 0.0
  %6584 = vmatmul.mubr.f32.gmra.mrb[0].mxu0 %v6441
  %v6585 = vpop.f32.mrb[0].mxu0
  %v6586 = vadd.f32 %v6321, %v6585
  %v6587 = vpop.f32.mrb[0].mxu0
  %6588 = vmatprep.mubr.f32.mxu0 0.0
  %6589 = vmatmul.mubr.f32.gmra.mrb[0].mxu0 %v6444
  %v6590 = vpop.f32.mrb[0].mxu0
  %v6591 = vadd.f32 %v6326, %v6590
  %v6592 = vpop.f32.mrb[0].mxu0
  %6593 = vmatprep.mubr.f32.mxu0 0.0
  %6594 = vmatmul.mubr.f32.gmra.mrb[0].mxu0 %v6447
  %v6595 = vpop.f32.mrb[0].mxu0
  %v6596 = vadd.f32 %v6331, %v6595
  %v6597 = vpop.f32.mrb[0].mxu0
  %6598 = vmatprep.mubr.f32.mxu0 0.0
  %6599 = vmatmul.mubr.f32.gmra.mrb[0].mxu0 %v6450
  %v6600 = vpop.f32.mrb[0].mxu0
  %v6601 = vadd.f32 %v6336, %v6600
  %v6602 = vpop.f32.mrb[0].mxu0
  %6603 = vmatprep.mubr.f32.mxu0 0.0
  %6604 = vmatmul.mubr.f32.gmra.mrb[0].mxu0 %v6453
  %v6605 = vpop.f32.mrb[0].mxu0
  %v6606 = vadd.f32 %v6341, %v6605
  %v6607 = vpop.f32.mrb[0].mxu0
  %6608 = vmatprep.mubr.f32.mxu0 0.0
  %6609 = vmatmul.mubr.f32.gmra.mrb[0].mxu0 %v6456
  %v6610 = vpop.f32.mrb[0].mxu0
  %v6611 = vadd.f32 %v6346, %v6610
  %v6612 = vpop.f32.mrb[0].mxu0
  %6613 = vmatprep.mubr.f32.mxu0 0.0
  %6614 = vmatmul.mubr.f32.gmra.mrb[0].mxu0 %v6459
  %v6615 = vpop.f32.mrb[0].mxu0
  %v6616 = vadd.f32 %v6351, %v6615
  %v6617 = vpop.f32.mrb[0].mxu0
  %6618 = vmatprep.mubr.f32.mxu0 0.0
  %6619 = vmatmul.mubr.f32.gmra.mrb[0].mxu0 %v6462
  %v6620 = vpop.f32.mrb[0].mxu0
  %v6621 = vadd.f32 %v6356, %v6620
  %v6622 = vpop.f32.mrb[0].mxu0
  %6623 = vmatprep.mubr.f32.mxu0 0.0
  %6624 = vmatmul.mubr.f32.gmra.mrb[0].mxu0 %v6465
  %v6625 = vpop.f32.mrb[0].mxu0
  %v6626 = vadd.f32 %v6361, %v6625
  %v6627 = vpop.f32.mrb[0].mxu0
  %6628 = vmatprep.mubr.f32.mxu0 0.0
  %6629 = vmatmul.mubr.f32.gmra.mrb[0].mxu0 %v6468
  %v6630 = vpop.f32.mrb[0].mxu0
  %v6631 = vadd.f32 %v6366, %v6630
  %v6632 = vpop.f32.mrb[0].mxu0
  %6633 = vmatprep.mubr.f32.mxu0 0.0
  %6634 = vmatmul.mubr.f32.gmra.mrb[0].mxu0 %v6471
  %v6635 = vpop.f32.mrb[0].mxu0
  %v6636 = vadd.f32 %v6371, %v6635
  %v6637 = vpop.f32.mrb[0].mxu0
  %6638 = vmatprep.mubr.f32.mxu0 0.0
  %6639 = vmatmul.mubr.f32.gmra.mrb[0].mxu0 %v6474
  %v6640 = vpop.f32.mrb[0].mxu0
  %v6641 = vadd.f32 %v6376, %v6640
  %v6642 = vpop.f32.mrb[0].mxu0
  %6643 = vmatprep.mubr.f32.mxu0 0.0
  %6644 = vmatmul.mubr.f32.gmra.mrb[0].mxu0 %v6477
  %v6645 = vpop.f32.mrb[0].mxu0
  %v6646 = vadd.f32 %v6381, %v6645
  %v6647 = vpop.f32.mrb[0].mxu0
  %6648 = vmatprep.mubr.f32.mxu0 0.0
  %6649 = vmatmul.mubr.f32.gmra.mrb[0].mxu0 %v6480
  %v6650 = vpop.f32.mrb[0].mxu0
  %v6651 = vadd.f32 %v6386, %v6650
  %v6652 = vpop.f32.mrb[0].mxu0
  %6653 = vmatprep.mubr.f32.mxu0 0.0
  %6654 = vmatmul.mubr.f32.gmra.mrb[0].mxu0 %v6483
  %v6655 = vpop.f32.mrb[0].mxu0
  %v6656 = vadd.f32 %v6391, %v6655
  %v6657 = vpop.f32.mrb[0].mxu0
  %6658 = vmatprep.mubr.f32.mxu0 0.0
  %6659 = vmatmul.mubr.f32.gmra.mrb[0].mxu0 %v6486
  %v6660 = vpop.f32.mrb[0].mxu0
  %v6661 = vadd.f32 %v6396, %v6660
  %v6662 = vpop.f32.mrb[0].mxu0
  %6663 = vmatprep.mubr.f32.mxu0 0.0
  %6664 = vmatmul.mubr.f32.gmra.mrb[0].mxu0 %v6489
  %v6665 = vpop.f32.mrb[0].mxu0
  %v6666 = vadd.f32 %v6401, %v6665
  %v6667 = vpop.f32.mrb[0].mxu0
  %6668 = vmatprep.mubr.f32.mxu0 0.0
  %6669 = vmatmul.mubr.f32.gmra.mrb[0].mxu0 %v6492
  %v6670 = vpop.f32.mrb[0].mxu0
  %v6671 = vadd.f32 %v6406, %v6670
  %v6672 = vpop.f32.mrb[0].mxu0
  %6673 = vmatprep.mubr.f32.mxu0 0.0
  %6674 = vmatmul.mubr.f32.gmra.mrb[0].mxu0 %v6495
  %v6675 = vpop.f32.mrb[0].mxu0
  %v6676 = vadd.f32 %v6411, %v6675
  %v6677 = vpop.f32.mrb[0].mxu0
  %6678 = vmatprep.mubr.f32.mxu0 0.0
  %6679 = vmatmul.mubr.f32.gmra.mrb[0].mxu0 %v6498
  %v6680 = vpop.f32.mrb[0].mxu0
  %v6681 = vadd.f32 %v6416, %v6680
  %v6682 = vpop.f32.mrb[0].mxu0
  %6683 = vmatprep.mubr.f32.mxu0 0.0
  %6684 = vmatmul.mubr.f32.gmra.mrb[0].mxu0 %v6501
  %v6685 = vpop.f32.mrb[0].mxu0
  %v6686 = vadd.f32 %v6421, %v6685
  %v6687 = vpop.f32.mrb[0].mxu0
  %6688 = vmatprep.mubr.f32.mxu0 0.0
  %6689 = vmatmul.mubr.f32.gmra.mrb[0].mxu0 %v6504
  %v6690 = vpop.f32.mrb[0].mxu0
  %v6691 = vadd.f32 %v6426, %v6690
  %v6692 = vpop.f32.mrb[0].mxu0
  %6693 = vmatprep.mubr.f32.mxu0 0.0
  %6694 = vmatmul.mubr.f32.gmra.mrb[0].mxu0 %v6507
  %v6695 = vpop.f32.mrb[0].mxu0
  %v6696 = vadd.f32 %v6431, %v6695
  %v6697 = vpop.f32.mrb[0].mxu0
  %6698 = vdwg.mxu0
  %v6699 = vld [vmem:[#allocation3 + $0x7] sm:$0xff]
  %v6700 = vld [vmem:[#allocation3 + $0xf] sm:$0xff]
  %v6701 = vld [vmem:[#allocation3 + $0x17] sm:$0xff]
  %v6702 = vld [vmem:[#allocation3 + $0x1f] sm:$0xff]
  %v6703 = vld [vmem:[#allocation3 + $0x27] sm:$0xff]
  %v6704 = vld [vmem:[#allocation3 + $0x2f] sm:$0xff]
  %v6705 = vld [vmem:[#allocation3 + $0x37] sm:$0xff]
  %v6706 = vld [vmem:[#allocation3 + $0x3f] sm:$0xff]
  %v6707 = vld [vmem:[#allocation3 + $0x47] sm:$0xff]
  %v6708 = vld [vmem:[#allocation3 + $0x4f] sm:$0xff]
  %v6709 = vld [vmem:[#allocation3 + $0x57] sm:$0xff]
  %v6710 = vld [vmem:[#allocation3 + $0x5f] sm:$0xff]
  %v6711 = vld [vmem:[#allocation3 + $0x67] sm:$0xff]
  %v6712 = vld [vmem:[#allocation3 + $0x6f] sm:$0xff]
  %v6713 = vld [vmem:[#allocation3 + $0x77] sm:$0xff]
  %v6714 = vld [vmem:[#allocation3 + $0x7f] sm:$0xff]
  %v6715 = vld [vmem:[#allocation3 + $0x87] sm:$0xff]
  %v6716 = vld [vmem:[#allocation3 + $0x8f] sm:$0xff]
  %v6717 = vld [vmem:[#allocation3 + $0x97] sm:$0xff]
  %v6718 = vld [vmem:[#allocation3 + $0x9f] sm:$0xff]
  %v6719 = vld [vmem:[#allocation3 + $0xa7] sm:$0xff]
  %v6720 = vld [vmem:[#allocation3 + $0xaf] sm:$0xff]
  %v6721 = vld [vmem:[#allocation3 + $0xb7] sm:$0xff]
  %v6722 = vld [vmem:[#allocation3 + $0xbf] sm:$0xff]
  %v6723 = vld [vmem:[#allocation3 + $0xc7] sm:$0xff]
  %v6724 = vld [vmem:[%s6 + $0x80] sm:$0xff]
  %v6725 = vld [vmem:[%s6 + $0x88] sm:$0xff]
  %v6726 = vld [vmem:[%s6 + $0x90] sm:$0xff]
  %v6727 = vld [vmem:[%s6 + $0x98] sm:$0xff]
  %v6728 = vld [vmem:[%s6 + $0xa0] sm:$0xff]
  %v6729 = vld [vmem:[%s6 + $0xa8] sm:$0xff]
  %v6730 = vld [vmem:[%s6 + $0xb0] sm:$0xff]
  %v6731 = vld [vmem:[%s6 + $0xb8] sm:$0xff]
  %v6733 = vsel %vm6023, %v6699, 0
  %v6736 = vsel %vm6023, %v6700, 0
  %v6739 = vsel %vm6023, %v6701, 0
  %v6742 = vsel %vm6023, %v6702, 0
  %v6745 = vsel %vm6023, %v6703, 0
  %v6748 = vsel %vm6023, %v6704, 0
  %v6751 = vsel %vm6023, %v6705, 0
  %v6754 = vsel %vm6023, %v6706, 0
  %v6757 = vsel %vm6023, %v6707, 0
  %v6760 = vsel %vm6023, %v6708, 0
  %v6763 = vsel %vm6023, %v6709, 0
  %v6766 = vsel %vm6023, %v6710, 0
  %v6769 = vsel %vm6023, %v6711, 0
  %v6772 = vsel %vm6023, %v6712, 0
  %v6775 = vsel %vm6023, %v6713, 0
  %v6778 = vsel %vm6023, %v6714, 0
  %v6781 = vsel %vm6023, %v6715, 0
  %v6784 = vsel %vm6023, %v6716, 0
  %v6787 = vsel %vm6023, %v6717, 0
  %v6790 = vsel %vm6023, %v6718, 0
  %v6793 = vsel %vm6023, %v6719, 0
  %v6796 = vsel %vm6023, %v6720, 0
  %v6799 = vsel %vm6023, %v6721, 0
  %v6802 = vsel %vm6023, %v6722, 0
  %v6805 = vsel %vm6023, %v6723, 0
  %6807 = vmatprep.subr.mxu0 0.0
  %6808 = vmatpush1.msra.mxu0 %v6724
  %6809 = vmatprep.subr.mxu0 0.0
  %6810 = vmatpush1.msra.mxu0 %v6725
  %6811 = vmatprep.subr.mxu0 0.0
  %6812 = vmatpush1.msra.mxu0 %v6726
  %6813 = vmatprep.subr.mxu0 0.0
  %6814 = vmatpush1.msra.mxu0 %v6727
  %6815 = vmatprep.subr.mxu0 0.0
  %6816 = vmatpush1.msra.mxu0 %v6728
  %6817 = vmatprep.subr.mxu0 0.0
  %6818 = vmatpush1.msra.mxu0 %v6729
  %6819 = vmatprep.subr.mxu0 0.0
  %6820 = vmatpush1.msra.mxu0 %v6730
  %6821 = vmatprep.subr.mxu0 0.0
  %6822 = vmatpush1.msra.mxu0 %v6731
  %6823 = vmatprep.subr.mxu0 0.0
  %6824 = vmatpush1.msra.mxu0 0.0
  %6825 = vmatprep.subr.mxu0 0.0
  %6826 = vmatpush1.msra.mxu0 0.0
  %6827 = vmatprep.subr.mxu0 0.0
  %6828 = vmatpush1.msra.mxu0 0.0
  %6829 = vmatprep.subr.mxu0 0.0
  %6830 = vmatpush1.msra.mxu0 0.0
  %6831 = vmatprep.subr.mxu0 0.0
  %6832 = vmatpush1.msra.mxu0 0.0
  %6833 = vmatprep.subr.mxu0 0.0
  %6834 = vmatpush1.msra.mxu0 0.0
  %6835 = vmatprep.subr.mxu0 0.0
  %6836 = vmatpush1.msra.mxu0 0.0
  %6837 = vmatprep.subr.mxu0 0.0
  %6838 = vmatpush1.msra.mxu0 0.0
  %6839 = vmatprep.subr.mxu0 0.0
  %6840 = vmatpush1.msra.mxu0 0.0
  %6841 = vmatprep.subr.mxu0 0.0
  %6842 = vmatpush1.msra.mxu0 0.0
  %6843 = vmatprep.subr.mxu0 0.0
  %6844 = vmatpush1.msra.mxu0 0.0
  %6845 = vmatprep.subr.mxu0 0.0
  %6846 = vmatpush1.msra.mxu0 0.0
  %6847 = vmatprep.subr.mxu0 0.0
  %6848 = vmatpush1.msra.mxu0 0.0
  %6849 = vmatprep.subr.mxu0 0.0
  %6850 = vmatpush1.msra.mxu0 0.0
  %6851 = vmatprep.subr.mxu0 0.0
  %6852 = vmatpush1.msra.mxu0 0.0
  %6853 = vmatprep.subr.mxu0 0.0
  %6854 = vmatpush1.msra.mxu0 0.0
  %6855 = vmatprep.subr.mxu0 0.0
  %6856 = vmatpush1.msra.mxu0 0.0
  %6857 = vmatprep.subr.mxu0 0.0
  %6858 = vmatpush1.msra.mxu0 0.0
  %6859 = vmatprep.subr.mxu0 0.0
  %6860 = vmatpush1.msra.mxu0 0.0
  %6861 = vmatprep.subr.mxu0 0.0
  %6862 = vmatpush1.msra.mxu0 0.0
  %6863 = vmatprep.subr.mxu0 0.0
  %6864 = vmatpush1.msra.mxu0 0.0
  %6865 = vmatprep.subr.mxu0 0.0
  %6866 = vmatpush1.msra.mxu0 0.0
  %6867 = vmatprep.subr.mxu0 0.0
  %6868 = vmatpush1.msra.mxu0 0.0
  %6869 = vmatprep.subr.mxu0 0.0
  %6870 = vmatpush1.msra.mxu0 0.0
  %6871 = vmatprep.mubr.f32.mxu0 0.0
  %6872 = vmatmul.mubr.f32.gmra.mrb[0].mxu0 %v6733
  %v6873 = vpop.f32.mrb[0].mxu0
  %v6874 = vadd.f32 0.0, %v6873
  %v6875 = vpop.f32.mrb[0].mxu0
  %6876 = vmatprep.mubr.f32.mxu0 0.0
  %6877 = vmatmul.mubr.f32.gmra.mrb[0].mxu0 %v6736
  %v6878 = vpop.f32.mrb[0].mxu0
  %v6879 = vadd.f32 0.0, %v6878
  %v6880 = vpop.f32.mrb[0].mxu0
  %6881 = vmatprep.mubr.f32.mxu0 0.0
  %6882 = vmatmul.mubr.f32.gmra.mrb[0].mxu0 %v6739
  %v6883 = vpop.f32.mrb[0].mxu0
  %v6884 = vadd.f32 0.0, %v6883
  %v6885 = vpop.f32.mrb[0].mxu0
  %6886 = vmatprep.mubr.f32.mxu0 0.0
  %6887 = vmatmul.mubr.f32.gmra.mrb[0].mxu0 %v6742
  %v6888 = vpop.f32.mrb[0].mxu0
  %v6889 = vadd.f32 0.0, %v6888
  %v6890 = vpop.f32.mrb[0].mxu0
  %6891 = vmatprep.mubr.f32.mxu0 0.0
  %6892 = vmatmul.mubr.f32.gmra.mrb[0].mxu0 %v6745
  %v6893 = vpop.f32.mrb[0].mxu0
  %v6894 = vadd.f32 0.0, %v6893
  %v6895 = vpop.f32.mrb[0].mxu0
  %6896 = vmatprep.mubr.f32.mxu0 0.0
  %6897 = vmatmul.mubr.f32.gmra.mrb[0].mxu0 %v6748
  %v6898 = vpop.f32.mrb[0].mxu0
  %v6899 = vadd.f32 0.0, %v6898
  %v6900 = vpop.f32.mrb[0].mxu0
  %6901 = vmatprep.mubr.f32.mxu0 0.0
  %6902 = vmatmul.mubr.f32.gmra.mrb[0].mxu0 %v6751
  %v6903 = vpop.f32.mrb[0].mxu0
  %v6904 = vadd.f32 0.0, %v6903
  %v6905 = vpop.f32.mrb[0].mxu0
  %6906 = vmatprep.mubr.f32.mxu0 0.0
  %6907 = vmatmul.mubr.f32.gmra.mrb[0].mxu0 %v6754
  %v6908 = vpop.f32.mrb[0].mxu0
  %v6909 = vadd.f32 0.0, %v6908
  %v6910 = vpop.f32.mrb[0].mxu0
  %6911 = vmatprep.mubr.f32.mxu0 0.0
  %6912 = vmatmul.mubr.f32.gmra.mrb[0].mxu0 %v6757
  %v6913 = vpop.f32.mrb[0].mxu0
  %v6914 = vadd.f32 0.0, %v6913
  %v6915 = vpop.f32.mrb[0].mxu0
  %6916 = vmatprep.mubr.f32.mxu0 0.0
  %6917 = vmatmul.mubr.f32.gmra.mrb[0].mxu0 %v6760
  %v6918 = vpop.f32.mrb[0].mxu0
  %v6919 = vadd.f32 0.0, %v6918
  %v6920 = vpop.f32.mrb[0].mxu0
  %6921 = vmatprep.mubr.f32.mxu0 0.0
  %6922 = vmatmul.mubr.f32.gmra.mrb[0].mxu0 %v6763
  %v6923 = vpop.f32.mrb[0].mxu0
  %v6924 = vadd.f32 0.0, %v6923
  %v6925 = vpop.f32.mrb[0].mxu0
  %6926 = vmatprep.mubr.f32.mxu0 0.0
  %6927 = vmatmul.mubr.f32.gmra.mrb[0].mxu0 %v6766
  %v6928 = vpop.f32.mrb[0].mxu0
  %v6929 = vadd.f32 0.0, %v6928
  %v6930 = vpop.f32.mrb[0].mxu0
  %6931 = vmatprep.mubr.f32.mxu0 0.0
  %6932 = vmatmul.mubr.f32.gmra.mrb[0].mxu0 %v6769
  %v6933 = vpop.f32.mrb[0].mxu0
  %v6934 = vadd.f32 0.0, %v6933
  %v6935 = vpop.f32.mrb[0].mxu0
  %6936 = vmatprep.mubr.f32.mxu0 0.0
  %6937 = vmatmul.mubr.f32.gmra.mrb[0].mxu0 %v6772
  %v6938 = vpop.f32.mrb[0].mxu0
  %v6939 = vadd.f32 0.0, %v6938
  %v6940 = vpop.f32.mrb[0].mxu0
  %6941 = vmatprep.mubr.f32.mxu0 0.0
  %6942 = vmatmul.mubr.f32.gmra.mrb[0].mxu0 %v6775
  %v6943 = vpop.f32.mrb[0].mxu0
  %v6944 = vadd.f32 0.0, %v6943
  %v6945 = vpop.f32.mrb[0].mxu0
  %6946 = vmatprep.mubr.f32.mxu0 0.0
  %6947 = vmatmul.mubr.f32.gmra.mrb[0].mxu0 %v6778
  %v6948 = vpop.f32.mrb[0].mxu0
  %v6949 = vadd.f32 0.0, %v6948
  %v6950 = vpop.f32.mrb[0].mxu0
  %6951 = vmatprep.mubr.f32.mxu0 0.0
  %6952 = vmatmul.mubr.f32.gmra.mrb[0].mxu0 %v6781
  %v6953 = vpop.f32.mrb[0].mxu0
  %v6954 = vadd.f32 0.0, %v6953
  %v6955 = vpop.f32.mrb[0].mxu0
  %6956 = vmatprep.mubr.f32.mxu0 0.0
  %6957 = vmatmul.mubr.f32.gmra.mrb[0].mxu0 %v6784
  %v6958 = vpop.f32.mrb[0].mxu0
  %v6959 = vadd.f32 0.0, %v6958
  %v6960 = vpop.f32.mrb[0].mxu0
  %6961 = vmatprep.mubr.f32.mxu0 0.0
  %6962 = vmatmul.mubr.f32.gmra.mrb[0].mxu0 %v6787
  %v6963 = vpop.f32.mrb[0].mxu0
  %v6964 = vadd.f32 0.0, %v6963
  %v6965 = vpop.f32.mrb[0].mxu0
  %6966 = vmatprep.mubr.f32.mxu0 0.0
  %6967 = vmatmul.mubr.f32.gmra.mrb[0].mxu0 %v6790
  %v6968 = vpop.f32.mrb[0].mxu0
  %v6969 = vadd.f32 0.0, %v6968
  %v6970 = vpop.f32.mrb[0].mxu0
  %6971 = vmatprep.mubr.f32.mxu0 0.0
  %6972 = vmatmul.mubr.f32.gmra.mrb[0].mxu0 %v6793
  %v6973 = vpop.f32.mrb[0].mxu0
  %v6974 = vadd.f32 0.0, %v6973
  %v6975 = vpop.f32.mrb[0].mxu0
  %6976 = vmatprep.mubr.f32.mxu0 0.0
  %6977 = vmatmul.mubr.f32.gmra.mrb[0].mxu0 %v6796
  %v6978 = vpop.f32.mrb[0].mxu0
  %v6979 = vadd.f32 0.0, %v6978
  %v6980 = vpop.f32.mrb[0].mxu0
  %6981 = vmatprep.mubr.f32.mxu0 0.0
  %6982 = vmatmul.mubr.f32.gmra.mrb[0].mxu0 %v6799
  %v6983 = vpop.f32.mrb[0].mxu0
  %v6984 = vadd.f32 0.0, %v6983
  %v6985 = vpop.f32.mrb[0].mxu0
  %6986 = vmatprep.mubr.f32.mxu0 0.0
  %6987 = vmatmul.mubr.f32.gmra.mrb[0].mxu0 %v6802
  %v6988 = vpop.f32.mrb[0].mxu0
  %v6989 = vadd.f32 0.0, %v6988
  %v6990 = vpop.f32.mrb[0].mxu0
  %6991 = vmatprep.mubr.f32.mxu0 0.0
  %6992 = vmatmul.mubr.f32.gmra.mrb[0].mxu0 %v6805
  %v6993 = vpop.f32.mrb[0].mxu0
  %v6994 = vadd.f32 0.0, %v6993
  %v6995 = vpop.f32.mrb[0].mxu0
  %6996 = vdwg.mxu0
  %v6997 = vadd.f32 %v6576, %v6874
  %v6998 = vadd.f32 %v6581, %v6879
  %v6999 = vadd.f32 %v6586, %v6884
  %v7000 = vadd.f32 %v6591, %v6889
  %v7001 = vadd.f32 %v6596, %v6894
  %v7002 = vadd.f32 %v6601, %v6899
  %v7003 = vadd.f32 %v6606, %v6904
  %v7004 = vadd.f32 %v6611, %v6909
  %v7005 = vadd.f32 %v6616, %v6914
  %v7006 = vadd.f32 %v6621, %v6919
  %v7007 = vadd.f32 %v6626, %v6924
  %v7008 = vadd.f32 %v6631, %v6929
  %v7009 = vadd.f32 %v6636, %v6934
  %v7010 = vadd.f32 %v6641, %v6939
  %v7011 = vadd.f32 %v6646, %v6944
  %v7012 = vadd.f32 %v6651, %v6949
  %v7013 = vadd.f32 %v6656, %v6954
  %v7014 = vadd.f32 %v6661, %v6959
  %v7015 = vadd.f32 %v6666, %v6964
  %v7016 = vadd.f32 %v6671, %v6969
  %v7017 = vadd.f32 %v6676, %v6974
  %v7018 = vadd.f32 %v6681, %v6979
  %v7019 = vadd.f32 %v6686, %v6984
  %v7020 = vadd.f32 %v6691, %v6989
  %v7021 = vadd.f32 %v6696, %v6994
  %v7022 = vld [vmem:[#allocation3 + $0xf] sm:$0xff]
  %v7023 = vld [vmem:[#allocation3 + $0x17] sm:$0xff]
  %v7024 = vld [vmem:[#allocation3 + $0x1f] sm:$0xff]
  %v7025 = vld [vmem:[#allocation3 + $0x27] sm:$0xff]
  %v7026 = vld [vmem:[#allocation3 + $0x2f] sm:$0xff]
  %v7027 = vld [vmem:[#allocation3 + $0x37] sm:$0xff]
  %v7028 = vld [vmem:[#allocation3 + $0x3f] sm:$0xff]
  %v7029 = vld [vmem:[#allocation3 + $0x47] sm:$0xff]
  %v7030 = vld [vmem:[#allocation3 + $0x4f] sm:$0xff]
  %v7031 = vld [vmem:[#allocation3 + $0x57] sm:$0xff]
  %v7032 = vld [vmem:[#allocation3 + $0x5f] sm:$0xff]
  %v7033 = vld [vmem:[#allocation3 + $0x67] sm:$0xff]
  %v7034 = vld [vmem:[#allocation3 + $0x6f] sm:$0xff]
  %v7035 = vld [vmem:[#allocation3 + $0x77] sm:$0xff]
  %v7036 = vld [vmem:[#allocation3 + $0x7f] sm:$0xff]
  %v7037 = vld [vmem:[#allocation3 + $0x87] sm:$0xff]
  %v7038 = vld [vmem:[#allocation3 + $0x8f] sm:$0xff]
  %v7039 = vld [vmem:[#allocation3 + $0x97] sm:$0xff]
  %v7040 = vld [vmem:[#allocation3 + $0x9f] sm:$0xff]
  %v7041 = vld [vmem:[#allocation3 + $0xa7] sm:$0xff]
  %v7042 = vld [vmem:[#allocation3 + $0xaf] sm:$0xff]
  %v7043 = vld [vmem:[#allocation3 + $0xb7] sm:$0xff]
  %v7044 = vld [vmem:[#allocation3 + $0xbf] sm:$0xff]
  %v7045 = vld [vmem:[#allocation3 + $0xc7] sm:$0xff]
  %v7046 = vld [vmem:[#allocation3 + $0xcf] sm:$0xff]
  %v7047 = vld [vmem:[%s6 + $0xc0] sm:$0xff]
  %v7048 = vld [vmem:[%s6 + $0xc8] sm:$0xff]
  %v7049 = vld [vmem:[%s6 + $0xd0] sm:$0xff]
  %v7050 = vld [vmem:[%s6 + $0xd8] sm:$0xff]
  %v7051 = vld [vmem:[%s6 + $0xe0] sm:$0xff]
  %v7052 = vld [vmem:[%s6 + $0xe8] sm:$0xff]
  %v7053 = vld [vmem:[%s6 + $0xf0] sm:$0xff]
  %v7054 = vld [vmem:[%s6 + $0xf8] sm:$0xff]
  %v7056 = vsel %vm6023, %v7022, 0
  %v7059 = vsel %vm6023, %v7023, 0
  %v7062 = vsel %vm6023, %v7024, 0
  %v7065 = vsel %vm6023, %v7025, 0
  %v7068 = vsel %vm6023, %v7026, 0
  %v7071 = vsel %vm6023, %v7027, 0
  %v7074 = vsel %vm6023, %v7028, 0
  %v7077 = vsel %vm6023, %v7029, 0
  %v7080 = vsel %vm6023, %v7030, 0
  %v7083 = vsel %vm6023, %v7031, 0
  %v7086 = vsel %vm6023, %v7032, 0
  %v7089 = vsel %vm6023, %v7033, 0
  %v7092 = vsel %vm6023, %v7034, 0
  %v7095 = vsel %vm6023, %v7035, 0
  %v7098 = vsel %vm6023, %v7036, 0
  %v7101 = vsel %vm6023, %v7037, 0
  %v7104 = vsel %vm6023, %v7038, 0
  %v7107 = vsel %vm6023, %v7039, 0
  %v7110 = vsel %vm6023, %v7040, 0
  %v7113 = vsel %vm6023, %v7041, 0
  %v7116 = vsel %vm6023, %v7042, 0
  %v7119 = vsel %vm6023, %v7043, 0
  %v7122 = vsel %vm6023, %v7044, 0
  %v7125 = vsel %vm6023, %v7045, 0
  %v7128 = vsel %vm6023, %v7046, 0
  %7130 = vmatprep.subr.mxu0 0.0
  %7131 = vmatpush1.msra.mxu0 %v7047
  %7132 = vmatprep.subr.mxu0 0.0
  %7133 = vmatpush1.msra.mxu0 %v7048
  %7134 = vmatprep.subr.mxu0 0.0
  %7135 = vmatpush1.msra.mxu0 %v7049
  %7136 = vmatprep.subr.mxu0 0.0
  %7137 = vmatpush1.msra.mxu0 %v7050
  %7138 = vmatprep.subr.mxu0 0.0
  %7139 = vmatpush1.msra.mxu0 %v7051
  %7140 = vmatprep.subr.mxu0 0.0
  %7141 = vmatpush1.msra.mxu0 %v7052
  %7142 = vmatprep.subr.mxu0 0.0
  %7143 = vmatpush1.msra.mxu0 %v7053
  %7144 = vmatprep.subr.mxu0 0.0
  %7145 = vmatpush1.msra.mxu0 %v7054
  %7146 = vmatprep.subr.mxu0 0.0
  %7147 = vmatpush1.msra.mxu0 0.0
  %7148 = vmatprep.subr.mxu0 0.0
  %7149 = vmatpush1.msra.mxu0 0.0
  %7150 = vmatprep.subr.mxu0 0.0
  %7151 = vmatpush1.msra.mxu0 0.0
  %7152 = vmatprep.subr.mxu0 0.0
  %7153 = vmatpush1.msra.mxu0 0.0
  %7154 = vmatprep.subr.mxu0 0.0
  %7155 = vmatpush1.msra.mxu0 0.0
  %7156 = vmatprep.subr.mxu0 0.0
  %7157 = vmatpush1.msra.mxu0 0.0
  %7158 = vmatprep.subr.mxu0 0.0
  %7159 = vmatpush1.msra.mxu0 0.0
  %7160 = vmatprep.subr.mxu0 0.0
  %7161 = vmatpush1.msra.mxu0 0.0
  %7162 = vmatprep.subr.mxu0 0.0
  %7163 = vmatpush1.msra.mxu0 0.0
  %7164 = vmatprep.subr.mxu0 0.0
  %7165 = vmatpush1.msra.mxu0 0.0
  %7166 = vmatprep.subr.mxu0 0.0
  %7167 = vmatpush1.msra.mxu0 0.0
  %7168 = vmatprep.subr.mxu0 0.0
  %7169 = vmatpush1.msra.mxu0 0.0
  %7170 = vmatprep.subr.mxu0 0.0
  %7171 = vmatpush1.msra.mxu0 0.0
  %7172 = vmatprep.subr.mxu0 0.0
  %7173 = vmatpush1.msra.mxu0 0.0
  %7174 = vmatprep.subr.mxu0 0.0
  %7175 = vmatpush1.msra.mxu0 0.0
  %7176 = vmatprep.subr.mxu0 0.0
  %7177 = vmatpush1.msra.mxu0 0.0
  %7178 = vmatprep.subr.mxu0 0.0
  %7179 = vmatpush1.msra.mxu0 0.0
  %7180 = vmatprep.subr.mxu0 0.0
  %7181 = vmatpush1.msra.mxu0 0.0
  %7182 = vmatprep.subr.mxu0 0.0
  %7183 = vmatpush1.msra.mxu0 0.0
  %7184 = vmatprep.subr.mxu0 0.0
  %7185 = vmatpush1.msra.mxu0 0.0
  %7186 = vmatprep.subr.mxu0 0.0
  %7187 = vmatpush1.msra.mxu0 0.0
  %7188 = vmatprep.subr.mxu0 0.0
  %7189 = vmatpush1.msra.mxu0 0.0
  %7190 = vmatprep.subr.mxu0 0.0
  %7191 = vmatpush1.msra.mxu0 0.0
  %7192 = vmatprep.subr.mxu0 0.0
  %7193 = vmatpush1.msra.mxu0 0.0
  %7194 = vmatprep.mubr.f32.mxu0 0.0
  %7195 = vmatmul.mubr.f32.gmra.mrb[0].mxu0 %v7056
  %v7196 = vpop.f32.mrb[0].mxu0
  %v7197 = vadd.f32 0.0, %v7196
  %v7198 = vpop.f32.mrb[0].mxu0
  %7199 = vmatprep.mubr.f32.mxu0 0.0
  %7200 = vmatmul.mubr.f32.gmra.mrb[0].mxu0 %v7059
  %v7201 = vpop.f32.mrb[0].mxu0
  %v7202 = vadd.f32 0.0, %v7201
  %v7203 = vpop.f32.mrb[0].mxu0
  %7204 = vmatprep.mubr.f32.mxu0 0.0
  %7205 = vmatmul.mubr.f32.gmra.mrb[0].mxu0 %v7062
  %v7206 = vpop.f32.mrb[0].mxu0
  %v7207 = vadd.f32 0.0, %v7206
  %v7208 = vpop.f32.mrb[0].mxu0
  %7209 = vmatprep.mubr.f32.mxu0 0.0
  %7210 = vmatmul.mubr.f32.gmra.mrb[0].mxu0 %v7065
  %v7211 = vpop.f32.mrb[0].mxu0
  %v7212 = vadd.f32 0.0, %v7211
  %v7213 = vpop.f32.mrb[0].mxu0
  %7214 = vmatprep.mubr.f32.mxu0 0.0
  %7215 = vmatmul.mubr.f32.gmra.mrb[0].mxu0 %v7068
  %v7216 = vpop.f32.mrb[0].mxu0
  %v7217 = vadd.f32 0.0, %v7216
  %v7218 = vpop.f32.mrb[0].mxu0
  %7219 = vmatprep.mubr.f32.mxu0 0.0
  %7220 = vmatmul.mubr.f32.gmra.mrb[0].mxu0 %v7071
  %v7221 = vpop.f32.mrb[0].mxu0
  %v7222 = vadd.f32 0.0, %v7221
  %v7223 = vpop.f32.mrb[0].mxu0
  %7224 = vmatprep.mubr.f32.mxu0 0.0
  %7225 = vmatmul.mubr.f32.gmra.mrb[0].mxu0 %v7074
  %v7226 = vpop.f32.mrb[0].mxu0
  %v7227 = vadd.f32 0.0, %v7226
  %v7228 = vpop.f32.mrb[0].mxu0
  %7229 = vmatprep.mubr.f32.mxu0 0.0
  %7230 = vmatmul.mubr.f32.gmra.mrb[0].mxu0 %v7077
  %v7231 = vpop.f32.mrb[0].mxu0
  %v7232 = vadd.f32 0.0, %v7231
  %v7233 = vpop.f32.mrb[0].mxu0
  %7234 = vmatprep.mubr.f32.mxu0 0.0
  %7235 = vmatmul.mubr.f32.gmra.mrb[0].mxu0 %v7080
  %v7236 = vpop.f32.mrb[0].mxu0
  %v7237 = vadd.f32 0.0, %v7236
  %v7238 = vpop.f32.mrb[0].mxu0
  %7239 = vmatprep.mubr.f32.mxu0 0.0
  %7240 = vmatmul.mubr.f32.gmra.mrb[0].mxu0 %v7083
  %v7241 = vpop.f32.mrb[0].mxu0
  %v7242 = vadd.f32 0.0, %v7241
  %v7243 = vpop.f32.mrb[0].mxu0
  %7244 = vmatprep.mubr.f32.mxu0 0.0
  %7245 = vmatmul.mubr.f32.gmra.mrb[0].mxu0 %v7086
  %v7246 = vpop.f32.mrb[0].mxu0
  %v7247 = vadd.f32 0.0, %v7246
  %v7248 = vpop.f32.mrb[0].mxu0
  %7249 = vmatprep.mubr.f32.mxu0 0.0
  %7250 = vmatmul.mubr.f32.gmra.mrb[0].mxu0 %v7089
  %v7251 = vpop.f32.mrb[0].mxu0
  %v7252 = vadd.f32 0.0, %v7251
  %v7253 = vpop.f32.mrb[0].mxu0
  %7254 = vmatprep.mubr.f32.mxu0 0.0
  %7255 = vmatmul.mubr.f32.gmra.mrb[0].mxu0 %v7092
  %v7256 = vpop.f32.mrb[0].mxu0
  %v7257 = vadd.f32 0.0, %v7256
  %v7258 = vpop.f32.mrb[0].mxu0
  %7259 = vmatprep.mubr.f32.mxu0 0.0
  %7260 = vmatmul.mubr.f32.gmra.mrb[0].mxu0 %v7095
  %v7261 = vpop.f32.mrb[0].mxu0
  %v7262 = vadd.f32 0.0, %v7261
  %v7263 = vpop.f32.mrb[0].mxu0
  %7264 = vmatprep.mubr.f32.mxu0 0.0
  %7265 = vmatmul.mubr.f32.gmra.mrb[0].mxu0 %v7098
  %v7266 = vpop.f32.mrb[0].mxu0
  %v7267 = vadd.f32 0.0, %v7266
  %v7268 = vpop.f32.mrb[0].mxu0
  %7269 = vmatprep.mubr.f32.mxu0 0.0
  %7270 = vmatmul.mubr.f32.gmra.mrb[0].mxu0 %v7101
  %v7271 = vpop.f32.mrb[0].mxu0
  %v7272 = vadd.f32 0.0, %v7271
  %v7273 = vpop.f32.mrb[0].mxu0
  %7274 = vmatprep.mubr.f32.mxu0 0.0
  %7275 = vmatmul.mubr.f32.gmra.mrb[0].mxu0 %v7104
  %v7276 = vpop.f32.mrb[0].mxu0
  %v7277 = vadd.f32 0.0, %v7276
  %v7278 = vpop.f32.mrb[0].mxu0
  %7279 = vmatprep.mubr.f32.mxu0 0.0
  %7280 = vmatmul.mubr.f32.gmra.mrb[0].mxu0 %v7107
  %v7281 = vpop.f32.mrb[0].mxu0
  %v7282 = vadd.f32 0.0, %v7281
  %v7283 = vpop.f32.mrb[0].mxu0
  %7284 = vmatprep.mubr.f32.mxu0 0.0
  %7285 = vmatmul.mubr.f32.gmra.mrb[0].mxu0 %v7110
  %v7286 = vpop.f32.mrb[0].mxu0
  %v7287 = vadd.f32 0.0, %v7286
  %v7288 = vpop.f32.mrb[0].mxu0
  %7289 = vmatprep.mubr.f32.mxu0 0.0
  %7290 = vmatmul.mubr.f32.gmra.mrb[0].mxu0 %v7113
  %v7291 = vpop.f32.mrb[0].mxu0
  %v7292 = vadd.f32 0.0, %v7291
  %v7293 = vpop.f32.mrb[0].mxu0
  %7294 = vmatprep.mubr.f32.mxu0 0.0
  %7295 = vmatmul.mubr.f32.gmra.mrb[0].mxu0 %v7116
  %v7296 = vpop.f32.mrb[0].mxu0
  %v7297 = vadd.f32 0.0, %v7296
  %v7298 = vpop.f32.mrb[0].mxu0
  %7299 = vmatprep.mubr.f32.mxu0 0.0
  %7300 = vmatmul.mubr.f32.gmra.mrb[0].mxu0 %v7119
  %v7301 = vpop.f32.mrb[0].mxu0
  %v7302 = vadd.f32 0.0, %v7301
  %v7303 = vpop.f32.mrb[0].mxu0
  %7304 = vmatprep.mubr.f32.mxu0 0.0
  %7305 = vmatmul.mubr.f32.gmra.mrb[0].mxu0 %v7122
  %v7306 = vpop.f32.mrb[0].mxu0
  %v7307 = vadd.f32 0.0, %v7306
  %v7308 = vpop.f32.mrb[0].mxu0
  %7309 = vmatprep.mubr.f32.mxu0 0.0
  %7310 = vmatmul.mubr.f32.gmra.mrb[0].mxu0 %v7125
  %v7311 = vpop.f32.mrb[0].mxu0
  %v7312 = vadd.f32 0.0, %v7311
  %v7313 = vpop.f32.mrb[0].mxu0
  %7314 = vmatprep.mubr.f32.mxu0 0.0
  %7315 = vmatmul.mubr.f32.gmra.mrb[0].mxu0 %v7128
  %v7316 = vpop.f32.mrb[0].mxu0
  %v7317 = vadd.f32 0.0, %v7316
  %v7318 = vpop.f32.mrb[0].mxu0
  %7319 = vdwg.mxu0
  %v7320 = vadd.f32 %v6997, %v7197
  %v7321 = vadd.f32 %v6998, %v7202
  %v7322 = vadd.f32 %v6999, %v7207
  %v7323 = vadd.f32 %v7000, %v7212
  %v7324 = vadd.f32 %v7001, %v7217
  %v7325 = vadd.f32 %v7002, %v7222
  %v7326 = vadd.f32 %v7003, %v7227
  %v7327 = vadd.f32 %v7004, %v7232
  %v7328 = vadd.f32 %v7005, %v7237
  %v7329 = vadd.f32 %v7006, %v7242
  %v7330 = vadd.f32 %v7007, %v7247
  %v7331 = vadd.f32 %v7008, %v7252
  %v7332 = vadd.f32 %v7009, %v7257
  %v7333 = vadd.f32 %v7010, %v7262
  %v7334 = vadd.f32 %v7011, %v7267
  %v7335 = vadd.f32 %v7012, %v7272
  %v7336 = vadd.f32 %v7013, %v7277
  %v7337 = vadd.f32 %v7014, %v7282
  %v7338 = vadd.f32 %v7015, %v7287
  %v7339 = vadd.f32 %v7016, %v7292
  %v7340 = vadd.f32 %v7017, %v7297
  %v7341 = vadd.f32 %v7018, %v7302
  %v7342 = vadd.f32 %v7019, %v7307
  %v7343 = vadd.f32 %v7020, %v7312
  %v7344 = vadd.f32 %v7021, %v7317
  %v7345 = vld [vmem:[#allocation3 + $0x10] sm:$0xff]
  %v7346 = vld [vmem:[#allocation3 + $0x18] sm:$0xff]
  %v7347 = vld [vmem:[#allocation3 + $0x20] sm:$0xff]
  %v7348 = vld [vmem:[#allocation3 + $0x28] sm:$0xff]
  %v7349 = vld [vmem:[#allocation3 + $0x30] sm:$0xff]
  %v7350 = vld [vmem:[#allocation3 + $0x38] sm:$0xff]
  %v7351 = vld [vmem:[#allocation3 + $0x40] sm:$0xff]
  %v7352 = vld [vmem:[#allocation3 + $0x48] sm:$0xff]
  %v7353 = vld [vmem:[#allocation3 + $0x50] sm:$0xff]
  %v7354 = vld [vmem:[#allocation3 + $0x58] sm:$0xff]
  %v7355 = vld [vmem:[#allocation3 + $0x60] sm:$0xff]
  %v7356 = vld [vmem:[#allocation3 + $0x68] sm:$0xff]
  %v7357 = vld [vmem:[#allocation3 + $0x70] sm:$0xff]
  %v7358 = vld [vmem:[#allocation3 + $0x78] sm:$0xff]
  %v7359 = vld [vmem:[#allocation3 + $0x80] sm:$0xff]
  %v7360 = vld [vmem:[#allocation3 + $0x88] sm:$0xff]
  %v7361 = vld [vmem:[#allocation3 + $0x90] sm:$0xff]
  %v7362 = vld [vmem:[#allocation3 + $0x98] sm:$0xff]
  %v7363 = vld [vmem:[#allocation3 + $0xa0] sm:$0xff]
  %v7364 = vld [vmem:[#allocation3 + $0xa8] sm:$0xff]
  %v7365 = vld [vmem:[#allocation3 + $0xb0] sm:$0xff]
  %v7366 = vld [vmem:[#allocation3 + $0xb8] sm:$0xff]
  %v7367 = vld [vmem:[#allocation3 + $0xc0] sm:$0xff]
  %v7368 = vld [vmem:[#allocation3 + $0xc8] sm:$0xff]
  %v7369 = vld [vmem:[#allocation3 + $0xd0] sm:$0xff]
  %v7370 = vld [vmem:[%s6 + $0x100] sm:$0xff]
  %v7371 = vld [vmem:[%s6 + $0x108] sm:$0xff]
  %v7372 = vld [vmem:[%s6 + $0x110] sm:$0xff]
  %v7373 = vld [vmem:[%s6 + $0x118] sm:$0xff]
  %v7374 = vld [vmem:[%s6 + $0x120] sm:$0xff]
  %v7375 = vld [vmem:[%s6 + $0x128] sm:$0xff]
  %v7376 = vld [vmem:[%s6 + $0x130] sm:$0xff]
  %v7377 = vld [vmem:[%s6 + $0x138] sm:$0xff]
  %v7379 = vsel %vm6023, %v7345, 0
  %v7382 = vsel %vm6023, %v7346, 0
  %v7385 = vsel %vm6023, %v7347, 0
  %v7388 = vsel %vm6023, %v7348, 0
  %v7391 = vsel %vm6023, %v7349, 0
  %v7394 = vsel %vm6023, %v7350, 0
  %v7397 = vsel %vm6023, %v7351, 0
  %v7400 = vsel %vm6023, %v7352, 0
  %v7403 = vsel %vm6023, %v7353, 0
  %v7406 = vsel %vm6023, %v7354, 0
  %v7409 = vsel %vm6023, %v7355, 0
  %v7412 = vsel %vm6023, %v7356, 0
  %v7415 = vsel %vm6023, %v7357, 0
  %v7418 = vsel %vm6023, %v7358, 0
  %v7421 = vsel %vm6023, %v7359, 0
  %v7424 = vsel %vm6023, %v7360, 0
  %v7427 = vsel %vm6023, %v7361, 0
  %v7430 = vsel %vm6023, %v7362, 0
  %v7433 = vsel %vm6023, %v7363, 0
  %v7436 = vsel %vm6023, %v7364, 0
  %v7439 = vsel %vm6023, %v7365, 0
  %v7442 = vsel %vm6023, %v7366, 0
  %v7445 = vsel %vm6023, %v7367, 0
  %v7448 = vsel %vm6023, %v7368, 0
  %v7451 = vsel %vm6023, %v7369, 0
  %7453 = vmatprep.subr.mxu0 0.0
  %7454 = vmatpush1.msra.mxu0 %v7370
  %7455 = vmatprep.subr.mxu0 0.0
  %7456 = vmatpush1.msra.mxu0 %v7371
  %7457 = vmatprep.subr.mxu0 0.0
  %7458 = vmatpush1.msra.mxu0 %v7372
  %7459 = vmatprep.subr.mxu0 0.0
  %7460 = vmatpush1.msra.mxu0 %v7373
  %7461 = vmatprep.subr.mxu0 0.0
  %7462 = vmatpush1.msra.mxu0 %v7374
  %7463 = vmatprep.subr.mxu0 0.0
  %7464 = vmatpush1.msra.mxu0 %v7375
  %7465 = vmatprep.subr.mxu0 0.0
  %7466 = vmatpush1.msra.mxu0 %v7376
  %7467 = vmatprep.subr.mxu0 0.0
  %7468 = vmatpush1.msra.mxu0 %v7377
  %7469 = vmatprep.subr.mxu0 0.0
  %7470 = vmatpush1.msra.mxu0 0.0
  %7471 = vmatprep.subr.mxu0 0.0
  %7472 = vmatpush1.msra.mxu0 0.0
  %7473 = vmatprep.subr.mxu0 0.0
  %7474 = vmatpush1.msra.mxu0 0.0
  %7475 = vmatprep.subr.mxu0 0.0
  %7476 = vmatpush1.msra.mxu0 0.0
  %7477 = vmatprep.subr.mxu0 0.0
  %7478 = vmatpush1.msra.mxu0 0.0
  %7479 = vmatprep.subr.mxu0 0.0
  %7480 = vmatpush1.msra.mxu0 0.0
  %7481 = vmatprep.subr.mxu0 0.0
  %7482 = vmatpush1.msra.mxu0 0.0
  %7483 = vmatprep.subr.mxu0 0.0
  %7484 = vmatpush1.msra.mxu0 0.0
  %7485 = vmatprep.subr.mxu0 0.0
  %7486 = vmatpush1.msra.mxu0 0.0
  %7487 = vmatprep.subr.mxu0 0.0
  %7488 = vmatpush1.msra.mxu0 0.0
  %7489 = vmatprep.subr.mxu0 0.0
  %7490 = vmatpush1.msra.mxu0 0.0
  %7491 = vmatprep.subr.mxu0 0.0
  %7492 = vmatpush1.msra.mxu0 0.0
  %7493 = vmatprep.subr.mxu0 0.0
  %7494 = vmatpush1.msra.mxu0 0.0
  %7495 = vmatprep.subr.mxu0 0.0
  %7496 = vmatpush1.msra.mxu0 0.0
  %7497 = vmatprep.subr.mxu0 0.0
  %7498 = vmatpush1.msra.mxu0 0.0
  %7499 = vmatprep.subr.mxu0 0.0
  %7500 = vmatpush1.msra.mxu0 0.0
  %7501 = vmatprep.subr.mxu0 0.0
  %7502 = vmatpush1.msra.mxu0 0.0
  %7503 = vmatprep.subr.mxu0 0.0
  %7504 = vmatpush1.msra.mxu0 0.0
  %7505 = vmatprep.subr.mxu0 0.0
  %7506 = vmatpush1.msra.mxu0 0.0
  %7507 = vmatprep.subr.mxu0 0.0
  %7508 = vmatpush1.msra.mxu0 0.0
  %7509 = vmatprep.subr.mxu0 0.0
  %7510 = vmatpush1.msra.mxu0 0.0
  %7511 = vmatprep.subr.mxu0 0.0
  %7512 = vmatpush1.msra.mxu0 0.0
  %7513 = vmatprep.subr.mxu0 0.0
  %7514 = vmatpush1.msra.mxu0 0.0
  %7515 = vmatprep.subr.mxu0 0.0
  %7516 = vmatpush1.msra.mxu0 0.0
  %7517 = vmatprep.mubr.f32.mxu0 0.0
  %7518 = vmatmul.mubr.f32.gmra.mrb[0].mxu0 %v7379
  %v7519 = vpop.f32.mrb[0].mxu0
  %v7520 = vadd.f32 0.0, %v7519
  %v7521 = vpop.f32.mrb[0].mxu0
  %7522 = vmatprep.mubr.f32.mxu0 0.0
  %7523 = vmatmul.mubr.f32.gmra.mrb[0].mxu0 %v7382
  %v7524 = vpop.f32.mrb[0].mxu0
  %v7525 = vadd.f32 0.0, %v7524
  %v7526 = vpop.f32.mrb[0].mxu0
  %7527 = vmatprep.mubr.f32.mxu0 0.0
  %7528 = vmatmul.mubr.f32.gmra.mrb[0].mxu0 %v7385
  %v7529 = vpop.f32.mrb[0].mxu0
  %v7530 = vadd.f32 0.0, %v7529
  %v7531 = vpop.f32.mrb[0].mxu0
  %7532 = vmatprep.mubr.f32.mxu0 0.0
  %7533 = vmatmul.mubr.f32.gmra.mrb[0].mxu0 %v7388
  %v7534 = vpop.f32.mrb[0].mxu0
  %v7535 = vadd.f32 0.0, %v7534
  %v7536 = vpop.f32.mrb[0].mxu0
  %7537 = vmatprep.mubr.f32.mxu0 0.0
  %7538 = vmatmul.mubr.f32.gmra.mrb[0].mxu0 %v7391
  %v7539 = vpop.f32.mrb[0].mxu0
  %v7540 = vadd.f32 0.0, %v7539
  %v7541 = vpop.f32.mrb[0].mxu0
  %7542 = vmatprep.mubr.f32.mxu0 0.0
  %7543 = vmatmul.mubr.f32.gmra.mrb[0].mxu0 %v7394
  %v7544 = vpop.f32.mrb[0].mxu0
  %v7545 = vadd.f32 0.0, %v7544
  %v7546 = vpop.f32.mrb[0].mxu0
  %7547 = vmatprep.mubr.f32.mxu0 0.0
  %7548 = vmatmul.mubr.f32.gmra.mrb[0].mxu0 %v7397
  %v7549 = vpop.f32.mrb[0].mxu0
  %v7550 = vadd.f32 0.0, %v7549
  %v7551 = vpop.f32.mrb[0].mxu0
  %7552 = vmatprep.mubr.f32.mxu0 0.0
  %7553 = vmatmul.mubr.f32.gmra.mrb[0].mxu0 %v7400
  %v7554 = vpop.f32.mrb[0].mxu0
  %v7555 = vadd.f32 0.0, %v7554
  %v7556 = vpop.f32.mrb[0].mxu0
  %7557 = vmatprep.mubr.f32.mxu0 0.0
  %7558 = vmatmul.mubr.f32.gmra.mrb[0].mxu0 %v7403
  %v7559 = vpop.f32.mrb[0].mxu0
  %v7560 = vadd.f32 0.0, %v7559
  %v7561 = vpop.f32.mrb[0].mxu0
  %7562 = vmatprep.mubr.f32.mxu0 0.0
  %7563 = vmatmul.mubr.f32.gmra.mrb[0].mxu0 %v7406
  %v7564 = vpop.f32.mrb[0].mxu0
  %v7565 = vadd.f32 0.0, %v7564
  %v7566 = vpop.f32.mrb[0].mxu0
  %7567 = vmatprep.mubr.f32.mxu0 0.0
  %7568 = vmatmul.mubr.f32.gmra.mrb[0].mxu0 %v7409
  %v7569 = vpop.f32.mrb[0].mxu0
  %v7570 = vadd.f32 0.0, %v7569
  %v7571 = vpop.f32.mrb[0].mxu0
  %7572 = vmatprep.mubr.f32.mxu0 0.0
  %7573 = vmatmul.mubr.f32.gmra.mrb[0].mxu0 %v7412
  %v7574 = vpop.f32.mrb[0].mxu0
  %v7575 = vadd.f32 0.0, %v7574
  %v7576 = vpop.f32.mrb[0].mxu0
  %7577 = vmatprep.mubr.f32.mxu0 0.0
  %7578 = vmatmul.mubr.f32.gmra.mrb[0].mxu0 %v7415
  %v7579 = vpop.f32.mrb[0].mxu0
  %v7580 = vadd.f32 0.0, %v7579
  %v7581 = vpop.f32.mrb[0].mxu0
  %7582 = vmatprep.mubr.f32.mxu0 0.0
  %7583 = vmatmul.mubr.f32.gmra.mrb[0].mxu0 %v7418
  %v7584 = vpop.f32.mrb[0].mxu0
  %v7585 = vadd.f32 0.0, %v7584
  %v7586 = vpop.f32.mrb[0].mxu0
  %7587 = vmatprep.mubr.f32.mxu0 0.0
  %7588 = vmatmul.mubr.f32.gmra.mrb[0].mxu0 %v7421
  %v7589 = vpop.f32.mrb[0].mxu0
  %v7590 = vadd.f32 0.0, %v7589
  %v7591 = vpop.f32.mrb[0].mxu0
  %7592 = vmatprep.mubr.f32.mxu0 0.0
  %7593 = vmatmul.mubr.f32.gmra.mrb[0].mxu0 %v7424
  %v7594 = vpop.f32.mrb[0].mxu0
  %v7595 = vadd.f32 0.0, %v7594
  %v7596 = vpop.f32.mrb[0].mxu0
  %7597 = vmatprep.mubr.f32.mxu0 0.0
  %7598 = vmatmul.mubr.f32.gmra.mrb[0].mxu0 %v7427
  %v7599 = vpop.f32.mrb[0].mxu0
  %v7600 = vadd.f32 0.0, %v7599
  %v7601 = vpop.f32.mrb[0].mxu0
  %7602 = vmatprep.mubr.f32.mxu0 0.0
  %7603 = vmatmul.mubr.f32.gmra.mrb[0].mxu0 %v7430
  %v7604 = vpop.f32.mrb[0].mxu0
  %v7605 = vadd.f32 0.0, %v7604
  %v7606 = vpop.f32.mrb[0].mxu0
  %7607 = vmatprep.mubr.f32.mxu0 0.0
  %7608 = vmatmul.mubr.f32.gmra.mrb[0].mxu0 %v7433
  %v7609 = vpop.f32.mrb[0].mxu0
  %v7610 = vadd.f32 0.0, %v7609
  %v7611 = vpop.f32.mrb[0].mxu0
  %7612 = vmatprep.mubr.f32.mxu0 0.0
  %7613 = vmatmul.mubr.f32.gmra.mrb[0].mxu0 %v7436
  %v7614 = vpop.f32.mrb[0].mxu0
  %v7615 = vadd.f32 0.0, %v7614
  %v7616 = vpop.f32.mrb[0].mxu0
  %7617 = vmatprep.mubr.f32.mxu0 0.0
  %7618 = vmatmul.mubr.f32.gmra.mrb[0].mxu0 %v7439
  %v7619 = vpop.f32.mrb[0].mxu0
  %v7620 = vadd.f32 0.0, %v7619
  %v7621 = vpop.f32.mrb[0].mxu0
  %7622 = vmatprep.mubr.f32.mxu0 0.0
  %7623 = vmatmul.mubr.f32.gmra.mrb[0].mxu0 %v7442
  %v7624 = vpop.f32.mrb[0].mxu0
  %v7625 = vadd.f32 0.0, %v7624
  %v7626 = vpop.f32.mrb[0].mxu0
  %7627 = vmatprep.mubr.f32.mxu0 0.0
  %7628 = vmatmul.mubr.f32.gmra.mrb[0].mxu0 %v7445
  %v7629 = vpop.f32.mrb[0].mxu0
  %v7630 = vadd.f32 0.0, %v7629
  %v7631 = vpop.f32.mrb[0].mxu0
  %7632 = vmatprep.mubr.f32.mxu0 0.0
  %7633 = vmatmul.mubr.f32.gmra.mrb[0].mxu0 %v7448
  %v7634 = vpop.f32.mrb[0].mxu0
  %v7635 = vadd.f32 0.0, %v7634
  %v7636 = vpop.f32.mrb[0].mxu0
  %7637 = vmatprep.mubr.f32.mxu0 0.0
  %7638 = vmatmul.mubr.f32.gmra.mrb[0].mxu0 %v7451
  %v7639 = vpop.f32.mrb[0].mxu0
  %v7640 = vadd.f32 0.0, %v7639
  %v7641 = vpop.f32.mrb[0].mxu0
  %7642 = vdwg.mxu0
  %v7643 = vadd.f32 %v7320, %v7520
  %v7644 = vadd.f32 %v7321, %v7525
  %v7645 = vadd.f32 %v7322, %v7530
  %v7646 = vadd.f32 %v7323, %v7535
  %v7647 = vadd.f32 %v7324, %v7540
  %v7648 = vadd.f32 %v7325, %v7545
  %v7649 = vadd.f32 %v7326, %v7550
  %v7650 = vadd.f32 %v7327, %v7555
  %v7651 = vadd.f32 %v7328, %v7560
  %v7652 = vadd.f32 %v7329, %v7565
  %v7653 = vadd.f32 %v7330, %v7570
  %v7654 = vadd.f32 %v7331, %v7575
  %v7655 = vadd.f32 %v7332, %v7580
  %v7656 = vadd.f32 %v7333, %v7585
  %v7657 = vadd.f32 %v7334, %v7590
  %v7658 = vadd.f32 %v7335, %v7595
  %v7659 = vadd.f32 %v7336, %v7600
  %v7660 = vadd.f32 %v7337, %v7605
  %v7661 = vadd.f32 %v7338, %v7610
  %v7662 = vadd.f32 %v7339, %v7615
  %v7663 = vadd.f32 %v7340, %v7620
  %v7664 = vadd.f32 %v7341, %v7625
  %v7665 = vadd.f32 %v7342, %v7630
  %v7666 = vadd.f32 %v7343, %v7635
  %v7667 = vadd.f32 %v7344, %v7640
  %v7668 = vld [vmem:[#allocation3 + $0x11] sm:$0xff]
  %v7669 = vld [vmem:[#allocation3 + $0x19] sm:$0xff]
  %v7670 = vld [vmem:[#allocation3 + $0x21] sm:$0xff]
  %v7671 = vld [vmem:[#allocation3 + $0x29] sm:$0xff]
  %v7672 = vld [vmem:[#allocation3 + $0x31] sm:$0xff]
  %v7673 = vld [vmem:[#allocation3 + $0x39] sm:$0xff]
  %v7674 = vld [vmem:[#allocation3 + $0x41] sm:$0xff]
  %v7675 = vld [vmem:[#allocation3 + $0x49] sm:$0xff]
  %v7676 = vld [vmem:[#allocation3 + $0x51] sm:$0xff]
  %v7677 = vld [vmem:[#allocation3 + $0x59] sm:$0xff]
  %v7678 = vld [vmem:[#allocation3 + $0x61] sm:$0xff]
  %v7679 = vld [vmem:[#allocation3 + $0x69] sm:$0xff]
  %v7680 = vld [vmem:[#allocation3 + $0x71] sm:$0xff]
  %v7681 = vld [vmem:[#allocation3 + $0x79] sm:$0xff]
  %v7682 = vld [vmem:[#allocation3 + $0x81] sm:$0xff]
  %v7683 = vld [vmem:[#allocation3 + $0x89] sm:$0xff]
  %v7684 = vld [vmem:[#allocation3 + $0x91] sm:$0xff]
  %v7685 = vld [vmem:[#allocation3 + $0x99] sm:$0xff]
  %v7686 = vld [vmem:[#allocation3 + $0xa1] sm:$0xff]
  %v7687 = vld [vmem:[#allocation3 + $0xa9] sm:$0xff]
  %v7688 = vld [vmem:[#allocation3 + $0xb1] sm:$0xff]
  %v7689 = vld [vmem:[#allocation3 + $0xb9] sm:$0xff]
  %v7690 = vld [vmem:[#allocation3 + $0xc1] sm:$0xff]
  %v7691 = vld [vmem:[#allocation3 + $0xc9] sm:$0xff]
  %v7692 = vld [vmem:[#allocation3 + $0xd1] sm:$0xff]
  %v7693 = vld [vmem:[%s6 + $0x140] sm:$0xff]
  %v7694 = vld [vmem:[%s6 + $0x148] sm:$0xff]
  %v7695 = vld [vmem:[%s6 + $0x150] sm:$0xff]
  %v7696 = vld [vmem:[%s6 + $0x158] sm:$0xff]
  %v7697 = vld [vmem:[%s6 + $0x160] sm:$0xff]
  %v7698 = vld [vmem:[%s6 + $0x168] sm:$0xff]
  %v7699 = vld [vmem:[%s6 + $0x170] sm:$0xff]
  %v7700 = vld [vmem:[%s6 + $0x178] sm:$0xff]
  %v7702 = vsel %vm6023, %v7668, 0
  %v7705 = vsel %vm6023, %v7669, 0
  %v7708 = vsel %vm6023, %v7670, 0
  %v7711 = vsel %vm6023, %v7671, 0
  %v7714 = vsel %vm6023, %v7672, 0
  %v7717 = vsel %vm6023, %v7673, 0
  %v7720 = vsel %vm6023, %v7674, 0
  %v7723 = vsel %vm6023, %v7675, 0
  %v7726 = vsel %vm6023, %v7676, 0
  %v7729 = vsel %vm6023, %v7677, 0
  %v7732 = vsel %vm6023, %v7678, 0
  %v7735 = vsel %vm6023, %v7679, 0
  %v7738 = vsel %vm6023, %v7680, 0
  %v7741 = vsel %vm6023, %v7681, 0
  %v7744 = vsel %vm6023, %v7682, 0
  %v7747 = vsel %vm6023, %v7683, 0
  %v7750 = vsel %vm6023, %v7684, 0
  %v7753 = vsel %vm6023, %v7685, 0
  %v7756 = vsel %vm6023, %v7686, 0
  %v7759 = vsel %vm6023, %v7687, 0
  %v7762 = vsel %vm6023, %v7688, 0
  %v7765 = vsel %vm6023, %v7689, 0
  %v7768 = vsel %vm6023, %v7690, 0
  %v7771 = vsel %vm6023, %v7691, 0
  %v7774 = vsel %vm6023, %v7692, 0
  %7776 = vmatprep.subr.mxu0 0.0
  %7777 = vmatpush1.msra.mxu0 %v7693
  %7778 = vmatprep.subr.mxu0 0.0
  %7779 = vmatpush1.msra.mxu0 %v7694
  %7780 = vmatprep.subr.mxu0 0.0
  %7781 = vmatpush1.msra.mxu0 %v7695
  %7782 = vmatprep.subr.mxu0 0.0
  %7783 = vmatpush1.msra.mxu0 %v7696
  %7784 = vmatprep.subr.mxu0 0.0
  %7785 = vmatpush1.msra.mxu0 %v7697
  %7786 = vmatprep.subr.mxu0 0.0
  %7787 = vmatpush1.msra.mxu0 %v7698
  %7788 = vmatprep.subr.mxu0 0.0
  %7789 = vmatpush1.msra.mxu0 %v7699
  %7790 = vmatprep.subr.mxu0 0.0
  %7791 = vmatpush1.msra.mxu0 %v7700
  %7792 = vmatprep.subr.mxu0 0.0
  %7793 = vmatpush1.msra.mxu0 0.0
  %7794 = vmatprep.subr.mxu0 0.0
  %7795 = vmatpush1.msra.mxu0 0.0
  %7796 = vmatprep.subr.mxu0 0.0
  %7797 = vmatpush1.msra.mxu0 0.0
  %7798 = vmatprep.subr.mxu0 0.0
  %7799 = vmatpush1.msra.mxu0 0.0
  %7800 = vmatprep.subr.mxu0 0.0
  %7801 = vmatpush1.msra.mxu0 0.0
  %7802 = vmatprep.subr.mxu0 0.0
  %7803 = vmatpush1.msra.mxu0 0.0
  %7804 = vmatprep.subr.mxu0 0.0
  %7805 = vmatpush1.msra.mxu0 0.0
  %7806 = vmatprep.subr.mxu0 0.0
  %7807 = vmatpush1.msra.mxu0 0.0
  %7808 = vmatprep.subr.mxu0 0.0
  %7809 = vmatpush1.msra.mxu0 0.0
  %7810 = vmatprep.subr.mxu0 0.0
  %7811 = vmatpush1.msra.mxu0 0.0
  %7812 = vmatprep.subr.mxu0 0.0
  %7813 = vmatpush1.msra.mxu0 0.0
  %7814 = vmatprep.subr.mxu0 0.0
  %7815 = vmatpush1.msra.mxu0 0.0
  %7816 = vmatprep.subr.mxu0 0.0
  %7817 = vmatpush1.msra.mxu0 0.0
  %7818 = vmatprep.subr.mxu0 0.0
  %7819 = vmatpush1.msra.mxu0 0.0
  %7820 = vmatprep.subr.mxu0 0.0
  %7821 = vmatpush1.msra.mxu0 0.0
  %7822 = vmatprep.subr.mxu0 0.0
  %7823 = vmatpush1.msra.mxu0 0.0
  %7824 = vmatprep.subr.mxu0 0.0
  %7825 = vmatpush1.msra.mxu0 0.0
  %7826 = vmatprep.subr.mxu0 0.0
  %7827 = vmatpush1.msra.mxu0 0.0
  %7828 = vmatprep.subr.mxu0 0.0
  %7829 = vmatpush1.msra.mxu0 0.0
  %7830 = vmatprep.subr.mxu0 0.0
  %7831 = vmatpush1.msra.mxu0 0.0
  %7832 = vmatprep.subr.mxu0 0.0
  %7833 = vmatpush1.msra.mxu0 0.0
  %7834 = vmatprep.subr.mxu0 0.0
  %7835 = vmatpush1.msra.mxu0 0.0
  %7836 = vmatprep.subr.mxu0 0.0
  %7837 = vmatpush1.msra.mxu0 0.0
  %7838 = vmatprep.subr.mxu0 0.0
  %7839 = vmatpush1.msra.mxu0 0.0
  %7840 = vmatprep.mubr.f32.mxu0 0.0
  %7841 = vmatmul.mubr.f32.gmra.mrb[0].mxu0 %v7702
  %v7842 = vpop.f32.mrb[0].mxu0
  %v7843 = vadd.f32 0.0, %v7842
  %v7844 = vpop.f32.mrb[0].mxu0
  %7845 = vmatprep.mubr.f32.mxu0 0.0
  %7846 = vmatmul.mubr.f32.gmra.mrb[0].mxu0 %v7705
  %v7847 = vpop.f32.mrb[0].mxu0
  %v7848 = vadd.f32 0.0, %v7847
  %v7849 = vpop.f32.mrb[0].mxu0
  %7850 = vmatprep.mubr.f32.mxu0 0.0
  %7851 = vmatmul.mubr.f32.gmra.mrb[0].mxu0 %v7708
  %v7852 = vpop.f32.mrb[0].mxu0
  %v7853 = vadd.f32 0.0, %v7852
  %v7854 = vpop.f32.mrb[0].mxu0
  %7855 = vmatprep.mubr.f32.mxu0 0.0
  %7856 = vmatmul.mubr.f32.gmra.mrb[0].mxu0 %v7711
  %v7857 = vpop.f32.mrb[0].mxu0
  %v7858 = vadd.f32 0.0, %v7857
  %v7859 = vpop.f32.mrb[0].mxu0
  %7860 = vmatprep.mubr.f32.mxu0 0.0
  %7861 = vmatmul.mubr.f32.gmra.mrb[0].mxu0 %v7714
  %v7862 = vpop.f32.mrb[0].mxu0
  %v7863 = vadd.f32 0.0, %v7862
  %v7864 = vpop.f32.mrb[0].mxu0
  %7865 = vmatprep.mubr.f32.mxu0 0.0
  %7866 = vmatmul.mubr.f32.gmra.mrb[0].mxu0 %v7717
  %v7867 = vpop.f32.mrb[0].mxu0
  %v7868 = vadd.f32 0.0, %v7867
  %v7869 = vpop.f32.mrb[0].mxu0
  %7870 = vmatprep.mubr.f32.mxu0 0.0
  %7871 = vmatmul.mubr.f32.gmra.mrb[0].mxu0 %v7720
  %v7872 = vpop.f32.mrb[0].mxu0
  %v7873 = vadd.f32 0.0, %v7872
  %v7874 = vpop.f32.mrb[0].mxu0
  %7875 = vmatprep.mubr.f32.mxu0 0.0
  %7876 = vmatmul.mubr.f32.gmra.mrb[0].mxu0 %v7723
  %v7877 = vpop.f32.mrb[0].mxu0
  %v7878 = vadd.f32 0.0, %v7877
  %v7879 = vpop.f32.mrb[0].mxu0
  %7880 = vmatprep.mubr.f32.mxu0 0.0
  %7881 = vmatmul.mubr.f32.gmra.mrb[0].mxu0 %v7726
  %v7882 = vpop.f32.mrb[0].mxu0
  %v7883 = vadd.f32 0.0, %v7882
  %v7884 = vpop.f32.mrb[0].mxu0
  %7885 = vmatprep.mubr.f32.mxu0 0.0
  %7886 = vmatmul.mubr.f32.gmra.mrb[0].mxu0 %v7729
  %v7887 = vpop.f32.mrb[0].mxu0
  %v7888 = vadd.f32 0.0, %v7887
  %v7889 = vpop.f32.mrb[0].mxu0
  %7890 = vmatprep.mubr.f32.mxu0 0.0
  %7891 = vmatmul.mubr.f32.gmra.mrb[0].mxu0 %v7732
  %v7892 = vpop.f32.mrb[0].mxu0
  %v7893 = vadd.f32 0.0, %v7892
  %v7894 = vpop.f32.mrb[0].mxu0
  %7895 = vmatprep.mubr.f32.mxu0 0.0
  %7896 = vmatmul.mubr.f32.gmra.mrb[0].mxu0 %v7735
  %v7897 = vpop.f32.mrb[0].mxu0
  %v7898 = vadd.f32 0.0, %v7897
  %v7899 = vpop.f32.mrb[0].mxu0
  %7900 = vmatprep.mubr.f32.mxu0 0.0
  %7901 = vmatmul.mubr.f32.gmra.mrb[0].mxu0 %v7738
  %v7902 = vpop.f32.mrb[0].mxu0
  %v7903 = vadd.f32 0.0, %v7902
  %v7904 = vpop.f32.mrb[0].mxu0
  %7905 = vmatprep.mubr.f32.mxu0 0.0
  %7906 = vmatmul.mubr.f32.gmra.mrb[0].mxu0 %v7741
  %v7907 = vpop.f32.mrb[0].mxu0
  %v7908 = vadd.f32 0.0, %v7907
  %v7909 = vpop.f32.mrb[0].mxu0
  %7910 = vmatprep.mubr.f32.mxu0 0.0
  %7911 = vmatmul.mubr.f32.gmra.mrb[0].mxu0 %v7744
  %v7912 = vpop.f32.mrb[0].mxu0
  %v7913 = vadd.f32 0.0, %v7912
  %v7914 = vpop.f32.mrb[0].mxu0
  %7915 = vmatprep.mubr.f32.mxu0 0.0
  %7916 = vmatmul.mubr.f32.gmra.mrb[0].mxu0 %v7747
  %v7917 = vpop.f32.mrb[0].mxu0
  %v7918 = vadd.f32 0.0, %v7917
  %v7919 = vpop.f32.mrb[0].mxu0
  %7920 = vmatprep.mubr.f32.mxu0 0.0
  %7921 = vmatmul.mubr.f32.gmra.mrb[0].mxu0 %v7750
  %v7922 = vpop.f32.mrb[0].mxu0
  %v7923 = vadd.f32 0.0, %v7922
  %v7924 = vpop.f32.mrb[0].mxu0
  %7925 = vmatprep.mubr.f32.mxu0 0.0
  %7926 = vmatmul.mubr.f32.gmra.mrb[0].mxu0 %v7753
  %v7927 = vpop.f32.mrb[0].mxu0
  %v7928 = vadd.f32 0.0, %v7927
  %v7929 = vpop.f32.mrb[0].mxu0
  %7930 = vmatprep.mubr.f32.mxu0 0.0
  %7931 = vmatmul.mubr.f32.gmra.mrb[0].mxu0 %v7756
  %v7932 = vpop.f32.mrb[0].mxu0
  %v7933 = vadd.f32 0.0, %v7932
  %v7934 = vpop.f32.mrb[0].mxu0
  %7935 = vmatprep.mubr.f32.mxu0 0.0
  %7936 = vmatmul.mubr.f32.gmra.mrb[0].mxu0 %v7759
  %v7937 = vpop.f32.mrb[0].mxu0
  %v7938 = vadd.f32 0.0, %v7937
  %v7939 = vpop.f32.mrb[0].mxu0
  %7940 = vmatprep.mubr.f32.mxu0 0.0
  %7941 = vmatmul.mubr.f32.gmra.mrb[0].mxu0 %v7762
  %v7942 = vpop.f32.mrb[0].mxu0
  %v7943 = vadd.f32 0.0, %v7942
  %v7944 = vpop.f32.mrb[0].mxu0
  %7945 = vmatprep.mubr.f32.mxu0 0.0
  %7946 = vmatmul.mubr.f32.gmra.mrb[0].mxu0 %v7765
  %v7947 = vpop.f32.mrb[0].mxu0
  %v7948 = vadd.f32 0.0, %v7947
  %v7949 = vpop.f32.mrb[0].mxu0
  %7950 = vmatprep.mubr.f32.mxu0 0.0
  %7951 = vmatmul.mubr.f32.gmra.mrb[0].mxu0 %v7768
  %v7952 = vpop.f32.mrb[0].mxu0
  %v7953 = vadd.f32 0.0, %v7952
  %v7954 = vpop.f32.mrb[0].mxu0
  %7955 = vmatprep.mubr.f32.mxu0 0.0
  %7956 = vmatmul.mubr.f32.gmra.mrb[0].mxu0 %v7771
  %v7957 = vpop.f32.mrb[0].mxu0
  %v7958 = vadd.f32 0.0, %v7957
  %v7959 = vpop.f32.mrb[0].mxu0
  %7960 = vmatprep.mubr.f32.mxu0 0.0
  %7961 = vmatmul.mubr.f32.gmra.mrb[0].mxu0 %v7774
  %v7962 = vpop.f32.mrb[0].mxu0
  %v7963 = vadd.f32 0.0, %v7962
  %v7964 = vpop.f32.mrb[0].mxu0
  %7965 = vdwg.mxu0
  %v7966 = vadd.f32 %v7643, %v7843
  %v7967 = vadd.f32 %v7644, %v7848
  %v7968 = vadd.f32 %v7645, %v7853
  %v7969 = vadd.f32 %v7646, %v7858
  %v7970 = vadd.f32 %v7647, %v7863
  %v7971 = vadd.f32 %v7648, %v7868
  %v7972 = vadd.f32 %v7649, %v7873
  %v7973 = vadd.f32 %v7650, %v7878
  %v7974 = vadd.f32 %v7651, %v7883
  %v7975 = vadd.f32 %v7652, %v7888
  %v7976 = vadd.f32 %v7653, %v7893
  %v7977 = vadd.f32 %v7654, %v7898
  %v7978 = vadd.f32 %v7655, %v7903
  %v7979 = vadd.f32 %v7656, %v7908
  %v7980 = vadd.f32 %v7657, %v7913
  %v7981 = vadd.f32 %v7658, %v7918
  %v7982 = vadd.f32 %v7659, %v7923
  %v7983 = vadd.f32 %v7660, %v7928
  %v7984 = vadd.f32 %v7661, %v7933
  %v7985 = vadd.f32 %v7662, %v7938
  %v7986 = vadd.f32 %v7663, %v7943
  %v7987 = vadd.f32 %v7664, %v7948
  %v7988 = vadd.f32 %v7665, %v7953
  %v7989 = vadd.f32 %v7666, %v7958
  %v7990 = vadd.f32 %v7667, %v7963
  %v7991 = vld [vmem:[#allocation3 + $0x19] sm:$0xff]
  %v7992 = vld [vmem:[#allocation3 + $0x21] sm:$0xff]
  %v7993 = vld [vmem:[#allocation3 + $0x29] sm:$0xff]
  %v7994 = vld [vmem:[#allocation3 + $0x31] sm:$0xff]
  %v7995 = vld [vmem:[#allocation3 + $0x39] sm:$0xff]
  %v7996 = vld [vmem:[#allocation3 + $0x41] sm:$0xff]
  %v7997 = vld [vmem:[#allocation3 + $0x49] sm:$0xff]
  %v7998 = vld [vmem:[#allocation3 + $0x51] sm:$0xff]
  %v7999 = vld [vmem:[#allocation3 + $0x59] sm:$0xff]
  %v8000 = vld [vmem:[#allocation3 + $0x61] sm:$0xff]
  %v8001 = vld [vmem:[#allocation3 + $0x69] sm:$0xff]
  %v8002 = vld [vmem:[#allocation3 + $0x71] sm:$0xff]
  %v8003 = vld [vmem:[#allocation3 + $0x79] sm:$0xff]
  %v8004 = vld [vmem:[#allocation3 + $0x81] sm:$0xff]
  %v8005 = vld [vmem:[#allocation3 + $0x89] sm:$0xff]
  %v8006 = vld [vmem:[#allocation3 + $0x91] sm:$0xff]
  %v8007 = vld [vmem:[#allocation3 + $0x99] sm:$0xff]
  %v8008 = vld [vmem:[#allocation3 + $0xa1] sm:$0xff]
  %v8009 = vld [vmem:[#allocation3 + $0xa9] sm:$0xff]
  %v8010 = vld [vmem:[#allocation3 + $0xb1] sm:$0xff]
  %v8011 = vld [vmem:[#allocation3 + $0xb9] sm:$0xff]
  %v8012 = vld [vmem:[#allocation3 + $0xc1] sm:$0xff]
  %v8013 = vld [vmem:[#allocation3 + $0xc9] sm:$0xff]
  %v8014 = vld [vmem:[#allocation3 + $0xd1] sm:$0xff]
  %v8015 = vld [vmem:[#allocation3 + $0xd9] sm:$0xff]
  %v8016 = vld [vmem:[%s6 + $0x180] sm:$0xff]
  %v8017 = vld [vmem:[%s6 + $0x188] sm:$0xff]
  %v8018 = vld [vmem:[%s6 + $0x190] sm:$0xff]
  %v8019 = vld [vmem:[%s6 + $0x198] sm:$0xff]
  %v8020 = vld [vmem:[%s6 + $0x1a0] sm:$0xff]
  %v8021 = vld [vmem:[%s6 + $0x1a8] sm:$0xff]
  %v8022 = vld [vmem:[%s6 + $0x1b0] sm:$0xff]
  %v8023 = vld [vmem:[%s6 + $0x1b8] sm:$0xff]
  %v8025 = vsel %vm6023, %v7991, 0
  %v8028 = vsel %vm6023, %v7992, 0
  %v8031 = vsel %vm6023, %v7993, 0
  %v8034 = vsel %vm6023, %v7994, 0
  %v8037 = vsel %vm6023, %v7995, 0
  %v8040 = vsel %vm6023, %v7996, 0
  %v8043 = vsel %vm6023, %v7997, 0
  %v8046 = vsel %vm6023, %v7998, 0
  %v8049 = vsel %vm6023, %v7999, 0
  %v8052 = vsel %vm6023, %v8000, 0
  %v8055 = vsel %vm6023, %v8001, 0
  %v8058 = vsel %vm6023, %v8002, 0
  %v8061 = vsel %vm6023, %v8003, 0
  %v8064 = vsel %vm6023, %v8004, 0
  %v8067 = vsel %vm6023, %v8005, 0
  %v8070 = vsel %vm6023, %v8006, 0
  %v8073 = vsel %vm6023, %v8007, 0
  %v8076 = vsel %vm6023, %v8008, 0
  %v8079 = vsel %vm6023, %v8009, 0
  %v8082 = vsel %vm6023, %v8010, 0
  %v8085 = vsel %vm6023, %v8011, 0
  %v8088 = vsel %vm6023, %v8012, 0
  %v8091 = vsel %vm6023, %v8013, 0
  %v8094 = vsel %vm6023, %v8014, 0
  %v8097 = vsel %vm6023, %v8015, 0
  %8099 = vmatprep.subr.mxu0 0.0
  %8100 = vmatpush1.msra.mxu0 %v8016
  %8101 = vmatprep.subr.mxu0 0.0
  %8102 = vmatpush1.msra.mxu0 %v8017
  %8103 = vmatprep.subr.mxu0 0.0
  %8104 = vmatpush1.msra.mxu0 %v8018
  %8105 = vmatprep.subr.mxu0 0.0
  %8106 = vmatpush1.msra.mxu0 %v8019
  %8107 = vmatprep.subr.mxu0 0.0
  %8108 = vmatpush1.msra.mxu0 %v8020
  %8109 = vmatprep.subr.mxu0 0.0
  %8110 = vmatpush1.msra.mxu0 %v8021
  %8111 = vmatprep.subr.mxu0 0.0
  %8112 = vmatpush1.msra.mxu0 %v8022
  %8113 = vmatprep.subr.mxu0 0.0
  %8114 = vmatpush1.msra.mxu0 %v8023
  %8115 = vmatprep.subr.mxu0 0.0
  %8116 = vmatpush1.msra.mxu0 0.0
  %8117 = vmatprep.subr.mxu0 0.0
  %8118 = vmatpush1.msra.mxu0 0.0
  %8119 = vmatprep.subr.mxu0 0.0
  %8120 = vmatpush1.msra.mxu0 0.0
  %8121 = vmatprep.subr.mxu0 0.0
  %8122 = vmatpush1.msra.mxu0 0.0
  %8123 = vmatprep.subr.mxu0 0.0
  %8124 = vmatpush1.msra.mxu0 0.0
  %8125 = vmatprep.subr.mxu0 0.0
  %8126 = vmatpush1.msra.mxu0 0.0
  %8127 = vmatprep.subr.mxu0 0.0
  %8128 = vmatpush1.msra.mxu0 0.0
  %8129 = vmatprep.subr.mxu0 0.0
  %8130 = vmatpush1.msra.mxu0 0.0
  %8131 = vmatprep.subr.mxu0 0.0
  %8132 = vmatpush1.msra.mxu0 0.0
  %8133 = vmatprep.subr.mxu0 0.0
  %8134 = vmatpush1.msra.mxu0 0.0
  %8135 = vmatprep.subr.mxu0 0.0
  %8136 = vmatpush1.msra.mxu0 0.0
  %8137 = vmatprep.subr.mxu0 0.0
  %8138 = vmatpush1.msra.mxu0 0.0
  %8139 = vmatprep.subr.mxu0 0.0
  %8140 = vmatpush1.msra.mxu0 0.0
  %8141 = vmatprep.subr.mxu0 0.0
  %8142 = vmatpush1.msra.mxu0 0.0
  %8143 = vmatprep.subr.mxu0 0.0
  %8144 = vmatpush1.msra.mxu0 0.0
  %8145 = vmatprep.subr.mxu0 0.0
  %8146 = vmatpush1.msra.mxu0 0.0
  %8147 = vmatprep.subr.mxu0 0.0
  %8148 = vmatpush1.msra.mxu0 0.0
  %8149 = vmatprep.subr.mxu0 0.0
  %8150 = vmatpush1.msra.mxu0 0.0
  %8151 = vmatprep.subr.mxu0 0.0
  %8152 = vmatpush1.msra.mxu0 0.0
  %8153 = vmatprep.subr.mxu0 0.0
  %8154 = vmatpush1.msra.mxu0 0.0
  %8155 = vmatprep.subr.mxu0 0.0
  %8156 = vmatpush1.msra.mxu0 0.0
  %8157 = vmatprep.subr.mxu0 0.0
  %8158 = vmatpush1.msra.mxu0 0.0
  %8159 = vmatprep.subr.mxu0 0.0
  %8160 = vmatpush1.msra.mxu0 0.0
  %8161 = vmatprep.subr.mxu0 0.0
  %8162 = vmatpush1.msra.mxu0 0.0
  %8163 = vmatprep.mubr.f32.mxu0 0.0
  %8164 = vmatmul.mubr.f32.gmra.mrb[0].mxu0 %v8025
  %v8165 = vpop.f32.mrb[0].mxu0
  %v8166 = vadd.f32 0.0, %v8165
  %v8167 = vpop.f32.mrb[0].mxu0
  %8168 = vmatprep.mubr.f32.mxu0 0.0
  %8169 = vmatmul.mubr.f32.gmra.mrb[0].mxu0 %v8028
  %v8170 = vpop.f32.mrb[0].mxu0
  %v8171 = vadd.f32 0.0, %v8170
  %v8172 = vpop.f32.mrb[0].mxu0
  %8173 = vmatprep.mubr.f32.mxu0 0.0
  %8174 = vmatmul.mubr.f32.gmra.mrb[0].mxu0 %v8031
  %v8175 = vpop.f32.mrb[0].mxu0
  %v8176 = vadd.f32 0.0, %v8175
  %v8177 = vpop.f32.mrb[0].mxu0
  %8178 = vmatprep.mubr.f32.mxu0 0.0
  %8179 = vmatmul.mubr.f32.gmra.mrb[0].mxu0 %v8034
  %v8180 = vpop.f32.mrb[0].mxu0
  %v8181 = vadd.f32 0.0, %v8180
  %v8182 = vpop.f32.mrb[0].mxu0
  %8183 = vmatprep.mubr.f32.mxu0 0.0
  %8184 = vmatmul.mubr.f32.gmra.mrb[0].mxu0 %v8037
  %v8185 = vpop.f32.mrb[0].mxu0
  %v8186 = vadd.f32 0.0, %v8185
  %v8187 = vpop.f32.mrb[0].mxu0
  %8188 = vmatprep.mubr.f32.mxu0 0.0
  %8189 = vmatmul.mubr.f32.gmra.mrb[0].mxu0 %v8040
  %v8190 = vpop.f32.mrb[0].mxu0
  %v8191 = vadd.f32 0.0, %v8190
  %v8192 = vpop.f32.mrb[0].mxu0
  %8193 = vmatprep.mubr.f32.mxu0 0.0
  %8194 = vmatmul.mubr.f32.gmra.mrb[0].mxu0 %v8043
  %v8195 = vpop.f32.mrb[0].mxu0
  %v8196 = vadd.f32 0.0, %v8195
  %v8197 = vpop.f32.mrb[0].mxu0
  %8198 = vmatprep.mubr.f32.mxu0 0.0
  %8199 = vmatmul.mubr.f32.gmra.mrb[0].mxu0 %v8046
  %v8200 = vpop.f32.mrb[0].mxu0
  %v8201 = vadd.f32 0.0, %v8200
  %v8202 = vpop.f32.mrb[0].mxu0
  %8203 = vmatprep.mubr.f32.mxu0 0.0
  %8204 = vmatmul.mubr.f32.gmra.mrb[0].mxu0 %v8049
  %v8205 = vpop.f32.mrb[0].mxu0
  %v8206 = vadd.f32 0.0, %v8205
  %v8207 = vpop.f32.mrb[0].mxu0
  %8208 = vmatprep.mubr.f32.mxu0 0.0
  %8209 = vmatmul.mubr.f32.gmra.mrb[0].mxu0 %v8052
  %v8210 = vpop.f32.mrb[0].mxu0
  %v8211 = vadd.f32 0.0, %v8210
  %v8212 = vpop.f32.mrb[0].mxu0
  %8213 = vmatprep.mubr.f32.mxu0 0.0
  %8214 = vmatmul.mubr.f32.gmra.mrb[0].mxu0 %v8055
  %v8215 = vpop.f32.mrb[0].mxu0
  %v8216 = vadd.f32 0.0, %v8215
  %v8217 = vpop.f32.mrb[0].mxu0
  %8218 = vmatprep.mubr.f32.mxu0 0.0
  %8219 = vmatmul.mubr.f32.gmra.mrb[0].mxu0 %v8058
  %v8220 = vpop.f32.mrb[0].mxu0
  %v8221 = vadd.f32 0.0, %v8220
  %v8222 = vpop.f32.mrb[0].mxu0
  %8223 = vmatprep.mubr.f32.mxu0 0.0
  %8224 = vmatmul.mubr.f32.gmra.mrb[0].mxu0 %v8061
  %v8225 = vpop.f32.mrb[0].mxu0
  %v8226 = vadd.f32 0.0, %v8225
  %v8227 = vpop.f32.mrb[0].mxu0
  %8228 = vmatprep.mubr.f32.mxu0 0.0
  %8229 = vmatmul.mubr.f32.gmra.mrb[0].mxu0 %v8064
  %v8230 = vpop.f32.mrb[0].mxu0
  %v8231 = vadd.f32 0.0, %v8230
  %v8232 = vpop.f32.mrb[0].mxu0
  %8233 = vmatprep.mubr.f32.mxu0 0.0
  %8234 = vmatmul.mubr.f32.gmra.mrb[0].mxu0 %v8067
  %v8235 = vpop.f32.mrb[0].mxu0
  %v8236 = vadd.f32 0.0, %v8235
  %v8237 = vpop.f32.mrb[0].mxu0
  %8238 = vmatprep.mubr.f32.mxu0 0.0
  %8239 = vmatmul.mubr.f32.gmra.mrb[0].mxu0 %v8070
  %v8240 = vpop.f32.mrb[0].mxu0
  %v8241 = vadd.f32 0.0, %v8240
  %v8242 = vpop.f32.mrb[0].mxu0
  %8243 = vmatprep.mubr.f32.mxu0 0.0
  %8244 = vmatmul.mubr.f32.gmra.mrb[0].mxu0 %v8073
  %v8245 = vpop.f32.mrb[0].mxu0
  %v8246 = vadd.f32 0.0, %v8245
  %v8247 = vpop.f32.mrb[0].mxu0
  %8248 = vmatprep.mubr.f32.mxu0 0.0
  %8249 = vmatmul.mubr.f32.gmra.mrb[0].mxu0 %v8076
  %v8250 = vpop.f32.mrb[0].mxu0
  %v8251 = vadd.f32 0.0, %v8250
  %v8252 = vpop.f32.mrb[0].mxu0
  %8253 = vmatprep.mubr.f32.mxu0 0.0
  %8254 = vmatmul.mubr.f32.gmra.mrb[0].mxu0 %v8079
  %v8255 = vpop.f32.mrb[0].mxu0
  %v8256 = vadd.f32 0.0, %v8255
  %v8257 = vpop.f32.mrb[0].mxu0
  %8258 = vmatprep.mubr.f32.mxu0 0.0
  %8259 = vmatmul.mubr.f32.gmra.mrb[0].mxu0 %v8082
  %v8260 = vpop.f32.mrb[0].mxu0
  %v8261 = vadd.f32 0.0, %v8260
  %v8262 = vpop.f32.mrb[0].mxu0
  %8263 = vmatprep.mubr.f32.mxu0 0.0
  %8264 = vmatmul.mubr.f32.gmra.mrb[0].mxu0 %v8085
  %v8265 = vpop.f32.mrb[0].mxu0
  %v8266 = vadd.f32 0.0, %v8265
  %v8267 = vpop.f32.mrb[0].mxu0
  %8268 = vmatprep.mubr.f32.mxu0 0.0
  %8269 = vmatmul.mubr.f32.gmra.mrb[0].mxu0 %v8088
  %v8270 = vpop.f32.mrb[0].mxu0
  %v8271 = vadd.f32 0.0, %v8270
  %v8272 = vpop.f32.mrb[0].mxu0
  %8273 = vmatprep.mubr.f32.mxu0 0.0
  %8274 = vmatmul.mubr.f32.gmra.mrb[0].mxu0 %v8091
  %v8275 = vpop.f32.mrb[0].mxu0
  %v8276 = vadd.f32 0.0, %v8275
  %v8277 = vpop.f32.mrb[0].mxu0
  %8278 = vmatprep.mubr.f32.mxu0 0.0
  %8279 = vmatmul.mubr.f32.gmra.mrb[0].mxu0 %v8094
  %v8280 = vpop.f32.mrb[0].mxu0
  %v8281 = vadd.f32 0.0, %v8280
  %v8282 = vpop.f32.mrb[0].mxu0
  %8283 = vmatprep.mubr.f32.mxu0 0.0
  %8284 = vmatmul.mubr.f32.gmra.mrb[0].mxu0 %v8097
  %v8285 = vpop.f32.mrb[0].mxu0
  %v8286 = vadd.f32 0.0, %v8285
  %v8287 = vpop.f32.mrb[0].mxu0
  %8288 = vdwg.mxu0
  %v8289 = vadd.f32 %v7966, %v8166
  %v8290 = vadd.f32 %v7967, %v8171
  %v8291 = vadd.f32 %v7968, %v8176
  %v8292 = vadd.f32 %v7969, %v8181
  %v8293 = vadd.f32 %v7970, %v8186
  %v8294 = vadd.f32 %v7971, %v8191
  %v8295 = vadd.f32 %v7972, %v8196
  %v8296 = vadd.f32 %v7973, %v8201
  %v8297 = vadd.f32 %v7974, %v8206
  %v8298 = vadd.f32 %v7975, %v8211
  %v8299 = vadd.f32 %v7976, %v8216
  %v8300 = vadd.f32 %v7977, %v8221
  %v8301 = vadd.f32 %v7978, %v8226
  %v8302 = vadd.f32 %v7979, %v8231
  %v8303 = vadd.f32 %v7980, %v8236
  %v8304 = vadd.f32 %v7981, %v8241
  %v8305 = vadd.f32 %v7982, %v8246
  %v8306 = vadd.f32 %v7983, %v8251
  %v8307 = vadd.f32 %v7984, %v8256
  %v8308 = vadd.f32 %v7985, %v8261
  %v8309 = vadd.f32 %v7986, %v8266
  %v8310 = vadd.f32 %v7987, %v8271
  %v8311 = vadd.f32 %v7988, %v8276
  %v8312 = vadd.f32 %v7989, %v8281
  %v8313 = vadd.f32 %v7990, %v8286
  %v8314 = vld [vmem:[#allocation3 + $0x1a] sm:$0xff]
  %v8315 = vld [vmem:[#allocation3 + $0x22] sm:$0xff]
  %v8316 = vld [vmem:[#allocation3 + $0x2a] sm:$0xff]
  %v8317 = vld [vmem:[#allocation3 + $0x32] sm:$0xff]
  %v8318 = vld [vmem:[#allocation3 + $0x3a] sm:$0xff]
  %v8319 = vld [vmem:[#allocation3 + $0x42] sm:$0xff]
  %v8320 = vld [vmem:[#allocation3 + $0x4a] sm:$0xff]
  %v8321 = vld [vmem:[#allocation3 + $0x52] sm:$0xff]
  %v8322 = vld [vmem:[#allocation3 + $0x5a] sm:$0xff]
  %v8323 = vld [vmem:[#allocation3 + $0x62] sm:$0xff]
  %v8324 = vld [vmem:[#allocation3 + $0x6a] sm:$0xff]
  %v8325 = vld [vmem:[#allocation3 + $0x72] sm:$0xff]
  %v8326 = vld [vmem:[#allocation3 + $0x7a] sm:$0xff]
  %v8327 = vld [vmem:[#allocation3 + $0x82] sm:$0xff]
  %v8328 = vld [vmem:[#allocation3 + $0x8a] sm:$0xff]
  %v8329 = vld [vmem:[#allocation3 + $0x92] sm:$0xff]
  %v8330 = vld [vmem:[#allocation3 + $0x9a] sm:$0xff]
  %v8331 = vld [vmem:[#allocation3 + $0xa2] sm:$0xff]
  %v8332 = vld [vmem:[#allocation3 + $0xaa] sm:$0xff]
  %v8333 = vld [vmem:[#allocation3 + $0xb2] sm:$0xff]
  %v8334 = vld [vmem:[#allocation3 + $0xba] sm:$0xff]
  %v8335 = vld [vmem:[#allocation3 + $0xc2] sm:$0xff]
  %v8336 = vld [vmem:[#allocation3 + $0xca] sm:$0xff]
  %v8337 = vld [vmem:[#allocation3 + $0xd2] sm:$0xff]
  %v8338 = vld [vmem:[#allocation3 + $0xda] sm:$0xff]
  %v8339 = vld [vmem:[%s6 + $0x1c0] sm:$0xff]
  %v8340 = vld [vmem:[%s6 + $0x1c8] sm:$0xff]
  %v8341 = vld [vmem:[%s6 + $0x1d0] sm:$0xff]
  %v8342 = vld [vmem:[%s6 + $0x1d8] sm:$0xff]
  %v8343 = vld [vmem:[%s6 + $0x1e0] sm:$0xff]
  %v8344 = vld [vmem:[%s6 + $0x1e8] sm:$0xff]
  %v8345 = vld [vmem:[%s6 + $0x1f0] sm:$0xff]
  %v8346 = vld [vmem:[%s6 + $0x1f8] sm:$0xff]
  %v8348 = vsel %vm6023, %v8314, 0
  %v8351 = vsel %vm6023, %v8315, 0
  %v8354 = vsel %vm6023, %v8316, 0
  %v8357 = vsel %vm6023, %v8317, 0
  %v8360 = vsel %vm6023, %v8318, 0
  %v8363 = vsel %vm6023, %v8319, 0
  %v8366 = vsel %vm6023, %v8320, 0
  %v8369 = vsel %vm6023, %v8321, 0
  %v8372 = vsel %vm6023, %v8322, 0
  %v8375 = vsel %vm6023, %v8323, 0
  %v8378 = vsel %vm6023, %v8324, 0
  %v8381 = vsel %vm6023, %v8325, 0
  %v8384 = vsel %vm6023, %v8326, 0
  %v8387 = vsel %vm6023, %v8327, 0
  %v8390 = vsel %vm6023, %v8328, 0
  %v8393 = vsel %vm6023, %v8329, 0
  %v8396 = vsel %vm6023, %v8330, 0
  %v8399 = vsel %vm6023, %v8331, 0
  %v8402 = vsel %vm6023, %v8332, 0
  %v8405 = vsel %vm6023, %v8333, 0
  %v8408 = vsel %vm6023, %v8334, 0
  %v8411 = vsel %vm6023, %v8335, 0
  %v8414 = vsel %vm6023, %v8336, 0
  %v8417 = vsel %vm6023, %v8337, 0
  %v8420 = vsel %vm6023, %v8338, 0
  %8422 = vmatprep.subr.mxu0 0.0
  %8423 = vmatpush1.msra.mxu0 %v8339
  %8424 = vmatprep.subr.mxu0 0.0
  %8425 = vmatpush1.msra.mxu0 %v8340
  %8426 = vmatprep.subr.mxu0 0.0
  %8427 = vmatpush1.msra.mxu0 %v8341
  %8428 = vmatprep.subr.mxu0 0.0
  %8429 = vmatpush1.msra.mxu0 %v8342
  %8430 = vmatprep.subr.mxu0 0.0
  %8431 = vmatpush1.msra.mxu0 %v8343
  %8432 = vmatprep.subr.mxu0 0.0
  %8433 = vmatpush1.msra.mxu0 %v8344
  %8434 = vmatprep.subr.mxu0 0.0
  %8435 = vmatpush1.msra.mxu0 %v8345
  %8436 = vmatprep.subr.mxu0 0.0
  %8437 = vmatpush1.msra.mxu0 %v8346
  %8438 = vmatprep.subr.mxu0 0.0
  %8439 = vmatpush1.msra.mxu0 0.0
  %8440 = vmatprep.subr.mxu0 0.0
  %8441 = vmatpush1.msra.mxu0 0.0
  %8442 = vmatprep.subr.mxu0 0.0
  %8443 = vmatpush1.msra.mxu0 0.0
  %8444 = vmatprep.subr.mxu0 0.0
  %8445 = vmatpush1.msra.mxu0 0.0
  %8446 = vmatprep.subr.mxu0 0.0
  %8447 = vmatpush1.msra.mxu0 0.0
  %8448 = vmatprep.subr.mxu0 0.0
  %8449 = vmatpush1.msra.mxu0 0.0
  %8450 = vmatprep.subr.mxu0 0.0
  %8451 = vmatpush1.msra.mxu0 0.0
  %8452 = vmatprep.subr.mxu0 0.0
  %8453 = vmatpush1.msra.mxu0 0.0
  %8454 = vmatprep.subr.mxu0 0.0
  %8455 = vmatpush1.msra.mxu0 0.0
  %8456 = vmatprep.subr.mxu0 0.0
  %8457 = vmatpush1.msra.mxu0 0.0
  %8458 = vmatprep.subr.mxu0 0.0
  %8459 = vmatpush1.msra.mxu0 0.0
  %8460 = vmatprep.subr.mxu0 0.0
  %8461 = vmatpush1.msra.mxu0 0.0
  %8462 = vmatprep.subr.mxu0 0.0
  %8463 = vmatpush1.msra.mxu0 0.0
  %8464 = vmatprep.subr.mxu0 0.0
  %8465 = vmatpush1.msra.mxu0 0.0
  %8466 = vmatprep.subr.mxu0 0.0
  %8467 = vmatpush1.msra.mxu0 0.0
  %8468 = vmatprep.subr.mxu0 0.0
  %8469 = vmatpush1.msra.mxu0 0.0
  %8470 = vmatprep.subr.mxu0 0.0
  %8471 = vmatpush1.msra.mxu0 0.0
  %8472 = vmatprep.subr.mxu0 0.0
  %8473 = vmatpush1.msra.mxu0 0.0
  %8474 = vmatprep.subr.mxu0 0.0
  %8475 = vmatpush1.msra.mxu0 0.0
  %8476 = vmatprep.subr.mxu0 0.0
  %8477 = vmatpush1.msra.mxu0 0.0
  %8478 = vmatprep.subr.mxu0 0.0
  %8479 = vmatpush1.msra.mxu0 0.0
  %8480 = vmatprep.subr.mxu0 0.0
  %8481 = vmatpush1.msra.mxu0 0.0
  %8482 = vmatprep.subr.mxu0 0.0
  %8483 = vmatpush1.msra.mxu0 0.0
  %8484 = vmatprep.subr.mxu0 0.0
  %8485 = vmatpush1.msra.mxu0 0.0
  %8486 = vmatprep.mubr.f32.mxu0 0.0
  %8487 = vmatmul.mubr.f32.gmra.mrb[0].mxu0 %v8348
  %v8488 = vpop.f32.mrb[0].mxu0
  %v8489 = vadd.f32 0.0, %v8488
  %v8490 = vpop.f32.mrb[0].mxu0
  %8491 = vmatprep.mubr.f32.mxu0 0.0
  %8492 = vmatmul.mubr.f32.gmra.mrb[0].mxu0 %v8351
  %v8493 = vpop.f32.mrb[0].mxu0
  %v8494 = vadd.f32 0.0, %v8493
  %v8495 = vpop.f32.mrb[0].mxu0
  %8496 = vmatprep.mubr.f32.mxu0 0.0
  %8497 = vmatmul.mubr.f32.gmra.mrb[0].mxu0 %v8354
  %v8498 = vpop.f32.mrb[0].mxu0
  %v8499 = vadd.f32 0.0, %v8498
  %v8500 = vpop.f32.mrb[0].mxu0
  %8501 = vmatprep.mubr.f32.mxu0 0.0
  %8502 = vmatmul.mubr.f32.gmra.mrb[0].mxu0 %v8357
  %v8503 = vpop.f32.mrb[0].mxu0
  %v8504 = vadd.f32 0.0, %v8503
  %v8505 = vpop.f32.mrb[0].mxu0
  %8506 = vmatprep.mubr.f32.mxu0 0.0
  %8507 = vmatmul.mubr.f32.gmra.mrb[0].mxu0 %v8360
  %v8508 = vpop.f32.mrb[0].mxu0
  %v8509 = vadd.f32 0.0, %v8508
  %v8510 = vpop.f32.mrb[0].mxu0
  %8511 = vmatprep.mubr.f32.mxu0 0.0
  %8512 = vmatmul.mubr.f32.gmra.mrb[0].mxu0 %v8363
  %v8513 = vpop.f32.mrb[0].mxu0
  %v8514 = vadd.f32 0.0, %v8513
  %v8515 = vpop.f32.mrb[0].mxu0
  %8516 = vmatprep.mubr.f32.mxu0 0.0
  %8517 = vmatmul.mubr.f32.gmra.mrb[0].mxu0 %v8366
  %v8518 = vpop.f32.mrb[0].mxu0
  %v8519 = vadd.f32 0.0, %v8518
  %v8520 = vpop.f32.mrb[0].mxu0
  %8521 = vmatprep.mubr.f32.mxu0 0.0
  %8522 = vmatmul.mubr.f32.gmra.mrb[0].mxu0 %v8369
  %v8523 = vpop.f32.mrb[0].mxu0
  %v8524 = vadd.f32 0.0, %v8523
  %v8525 = vpop.f32.mrb[0].mxu0
  %8526 = vmatprep.mubr.f32.mxu0 0.0
  %8527 = vmatmul.mubr.f32.gmra.mrb[0].mxu0 %v8372
  %v8528 = vpop.f32.mrb[0].mxu0
  %v8529 = vadd.f32 0.0, %v8528
  %v8530 = vpop.f32.mrb[0].mxu0
  %8531 = vmatprep.mubr.f32.mxu0 0.0
  %8532 = vmatmul.mubr.f32.gmra.mrb[0].mxu0 %v8375
  %v8533 = vpop.f32.mrb[0].mxu0
  %v8534 = vadd.f32 0.0, %v8533
  %v8535 = vpop.f32.mrb[0].mxu0
  %8536 = vmatprep.mubr.f32.mxu0 0.0
  %8537 = vmatmul.mubr.f32.gmra.mrb[0].mxu0 %v8378
  %v8538 = vpop.f32.mrb[0].mxu0
  %v8539 = vadd.f32 0.0, %v8538
  %v8540 = vpop.f32.mrb[0].mxu0
  %8541 = vmatprep.mubr.f32.mxu0 0.0
  %8542 = vmatmul.mubr.f32.gmra.mrb[0].mxu0 %v8381
  %v8543 = vpop.f32.mrb[0].mxu0
  %v8544 = vadd.f32 0.0, %v8543
  %v8545 = vpop.f32.mrb[0].mxu0
  %8546 = vmatprep.mubr.f32.mxu0 0.0
  %8547 = vmatmul.mubr.f32.gmra.mrb[0].mxu0 %v8384
  %v8548 = vpop.f32.mrb[0].mxu0
  %v8549 = vadd.f32 0.0, %v8548
  %v8550 = vpop.f32.mrb[0].mxu0
  %8551 = vmatprep.mubr.f32.mxu0 0.0
  %8552 = vmatmul.mubr.f32.gmra.mrb[0].mxu0 %v8387
  %v8553 = vpop.f32.mrb[0].mxu0
  %v8554 = vadd.f32 0.0, %v8553
  %v8555 = vpop.f32.mrb[0].mxu0
  %8556 = vmatprep.mubr.f32.mxu0 0.0
  %8557 = vmatmul.mubr.f32.gmra.mrb[0].mxu0 %v8390
  %v8558 = vpop.f32.mrb[0].mxu0
  %v8559 = vadd.f32 0.0, %v8558
  %v8560 = vpop.f32.mrb[0].mxu0
  %8561 = vmatprep.mubr.f32.mxu0 0.0
  %8562 = vmatmul.mubr.f32.gmra.mrb[0].mxu0 %v8393
  %v8563 = vpop.f32.mrb[0].mxu0
  %v8564 = vadd.f32 0.0, %v8563
  %v8565 = vpop.f32.mrb[0].mxu0
  %8566 = vmatprep.mubr.f32.mxu0 0.0
  %8567 = vmatmul.mubr.f32.gmra.mrb[0].mxu0 %v8396
  %v8568 = vpop.f32.mrb[0].mxu0
  %v8569 = vadd.f32 0.0, %v8568
  %v8570 = vpop.f32.mrb[0].mxu0
  %8571 = vmatprep.mubr.f32.mxu0 0.0
  %8572 = vmatmul.mubr.f32.gmra.mrb[0].mxu0 %v8399
  %v8573 = vpop.f32.mrb[0].mxu0
  %v8574 = vadd.f32 0.0, %v8573
  %v8575 = vpop.f32.mrb[0].mxu0
  %8576 = vmatprep.mubr.f32.mxu0 0.0
  %8577 = vmatmul.mubr.f32.gmra.mrb[0].mxu0 %v8402
  %v8578 = vpop.f32.mrb[0].mxu0
  %v8579 = vadd.f32 0.0, %v8578
  %v8580 = vpop.f32.mrb[0].mxu0
  %8581 = vmatprep.mubr.f32.mxu0 0.0
  %8582 = vmatmul.mubr.f32.gmra.mrb[0].mxu0 %v8405
  %v8583 = vpop.f32.mrb[0].mxu0
  %v8584 = vadd.f32 0.0, %v8583
  %v8585 = vpop.f32.mrb[0].mxu0
  %8586 = vmatprep.mubr.f32.mxu0 0.0
  %8587 = vmatmul.mubr.f32.gmra.mrb[0].mxu0 %v8408
  %v8588 = vpop.f32.mrb[0].mxu0
  %v8589 = vadd.f32 0.0, %v8588
  %v8590 = vpop.f32.mrb[0].mxu0
  %8591 = vmatprep.mubr.f32.mxu0 0.0
  %8592 = vmatmul.mubr.f32.gmra.mrb[0].mxu0 %v8411
  %v8593 = vpop.f32.mrb[0].mxu0
  %v8594 = vadd.f32 0.0, %v8593
  %v8595 = vpop.f32.mrb[0].mxu0
  %8596 = vmatprep.mubr.f32.mxu0 0.0
  %8597 = vmatmul.mubr.f32.gmra.mrb[0].mxu0 %v8414
  %v8598 = vpop.f32.mrb[0].mxu0
  %v8599 = vadd.f32 0.0, %v8598
  %v8600 = vpop.f32.mrb[0].mxu0
  %8601 = vmatprep.mubr.f32.mxu0 0.0
  %8602 = vmatmul.mubr.f32.gmra.mrb[0].mxu0 %v8417
  %v8603 = vpop.f32.mrb[0].mxu0
  %v8604 = vadd.f32 0.0, %v8603
  %v8605 = vpop.f32.mrb[0].mxu0
  %8606 = vmatprep.mubr.f32.mxu0 0.0
  %8607 = vmatmul.mubr.f32.gmra.mrb[0].mxu0 %v8420
  %v8608 = vpop.f32.mrb[0].mxu0
  %v8609 = vadd.f32 0.0, %v8608
  %v8610 = vpop.f32.mrb[0].mxu0
  %8611 = vdwg.mxu0
  %v8612 = vadd.f32 %v8289, %v8489
  %v8613 = vadd.f32 %v8290, %v8494
  %v8614 = vadd.f32 %v8291, %v8499
  %v8615 = vadd.f32 %v8292, %v8504
  %v8616 = vadd.f32 %v8293, %v8509
  %v8617 = vadd.f32 %v8294, %v8514
  %v8618 = vadd.f32 %v8295, %v8519
  %v8619 = vadd.f32 %v8296, %v8524
  %v8620 = vadd.f32 %v8297, %v8529
  %v8621 = vadd.f32 %v8298, %v8534
  %v8622 = vadd.f32 %v8299, %v8539
  %v8623 = vadd.f32 %v8300, %v8544
  %v8624 = vadd.f32 %v8301, %v8549
  %v8625 = vadd.f32 %v8302, %v8554
  %v8626 = vadd.f32 %v8303, %v8559
  %v8627 = vadd.f32 %v8304, %v8564
  %v8628 = vadd.f32 %v8305, %v8569
  %v8629 = vadd.f32 %v8306, %v8574
  %v8630 = vadd.f32 %v8307, %v8579
  %v8631 = vadd.f32 %v8308, %v8584
  %v8632 = vadd.f32 %v8309, %v8589
  %v8633 = vadd.f32 %v8310, %v8594
  %v8634 = vadd.f32 %v8311, %v8599
  %v8635 = vadd.f32 %v8312, %v8604
  %v8636 = vadd.f32 %v8313, %v8609
  %v8637 = vld [vmem:[#allocation3 + $0x1b] sm:$0xff]
  %v8638 = vld [vmem:[#allocation3 + $0x23] sm:$0xff]
  %v8639 = vld [vmem:[#allocation3 + $0x2b] sm:$0xff]
  %v8640 = vld [vmem:[#allocation3 + $0x33] sm:$0xff]
  %v8641 = vld [vmem:[#allocation3 + $0x3b] sm:$0xff]
  %v8642 = vld [vmem:[#allocation3 + $0x43] sm:$0xff]
  %v8643 = vld [vmem:[#allocation3 + $0x4b] sm:$0xff]
  %v8644 = vld [vmem:[#allocation3 + $0x53] sm:$0xff]
  %v8645 = vld [vmem:[#allocation3 + $0x5b] sm:$0xff]
  %v8646 = vld [vmem:[#allocation3 + $0x63] sm:$0xff]
  %v8647 = vld [vmem:[#allocation3 + $0x6b] sm:$0xff]
  %v8648 = vld [vmem:[#allocation3 + $0x73] sm:$0xff]
  %v8649 = vld [vmem:[#allocation3 + $0x7b] sm:$0xff]
  %v8650 = vld [vmem:[#allocation3 + $0x83] sm:$0xff]
  %v8651 = vld [vmem:[#allocation3 + $0x8b] sm:$0xff]
  %v8652 = vld [vmem:[#allocation3 + $0x93] sm:$0xff]
  %v8653 = vld [vmem:[#allocation3 + $0x9b] sm:$0xff]
  %v8654 = vld [vmem:[#allocation3 + $0xa3] sm:$0xff]
  %v8655 = vld [vmem:[#allocation3 + $0xab] sm:$0xff]
  %v8656 = vld [vmem:[#allocation3 + $0xb3] sm:$0xff]
  %v8657 = vld [vmem:[#allocation3 + $0xbb] sm:$0xff]
  %v8658 = vld [vmem:[#allocation3 + $0xc3] sm:$0xff]
  %v8659 = vld [vmem:[#allocation3 + $0xcb] sm:$0xff]
  %v8660 = vld [vmem:[#allocation3 + $0xd3] sm:$0xff]
  %v8661 = vld [vmem:[#allocation3 + $0xdb] sm:$0xff]
  %v8662 = vld [vmem:[%s6 + $0x200] sm:$0xff]
  %v8663 = vld [vmem:[%s6 + $0x208] sm:$0xff]
  %v8664 = vld [vmem:[%s6 + $0x210] sm:$0xff]
  %v8665 = vld [vmem:[%s6 + $0x218] sm:$0xff]
  %v8666 = vld [vmem:[%s6 + $0x220] sm:$0xff]
  %v8667 = vld [vmem:[%s6 + $0x228] sm:$0xff]
  %v8668 = vld [vmem:[%s6 + $0x230] sm:$0xff]
  %v8669 = vld [vmem:[%s6 + $0x238] sm:$0xff]
  %v8671 = vsel %vm6023, %v8637, 0
  %v8674 = vsel %vm6023, %v8638, 0
  %v8677 = vsel %vm6023, %v8639, 0
  %v8680 = vsel %vm6023, %v8640, 0
  %v8683 = vsel %vm6023, %v8641, 0
  %v8686 = vsel %vm6023, %v8642, 0
  %v8689 = vsel %vm6023, %v8643, 0
  %v8692 = vsel %vm6023, %v8644, 0
  %v8695 = vsel %vm6023, %v8645, 0
  %v8698 = vsel %vm6023, %v8646, 0
  %v8701 = vsel %vm6023, %v8647, 0
  %v8704 = vsel %vm6023, %v8648, 0
  %v8707 = vsel %vm6023, %v8649, 0
  %v8710 = vsel %vm6023, %v8650, 0
  %v8713 = vsel %vm6023, %v8651, 0
  %v8716 = vsel %vm6023, %v8652, 0
  %v8719 = vsel %vm6023, %v8653, 0
  %v8722 = vsel %vm6023, %v8654, 0
  %v8725 = vsel %vm6023, %v8655, 0
  %v8728 = vsel %vm6023, %v8656, 0
  %v8731 = vsel %vm6023, %v8657, 0
  %v8734 = vsel %vm6023, %v8658, 0
  %v8737 = vsel %vm6023, %v8659, 0
  %v8740 = vsel %vm6023, %v8660, 0
  %v8743 = vsel %vm6023, %v8661, 0
  %8745 = vmatprep.subr.mxu0 0.0
  %8746 = vmatpush1.msra.mxu0 %v8662
  %8747 = vmatprep.subr.mxu0 0.0
  %8748 = vmatpush1.msra.mxu0 %v8663
  %8749 = vmatprep.subr.mxu0 0.0
  %8750 = vmatpush1.msra.mxu0 %v8664
  %8751 = vmatprep.subr.mxu0 0.0
  %8752 = vmatpush1.msra.mxu0 %v8665
  %8753 = vmatprep.subr.mxu0 0.0
  %8754 = vmatpush1.msra.mxu0 %v8666
  %8755 = vmatprep.subr.mxu0 0.0
  %8756 = vmatpush1.msra.mxu0 %v8667
  %8757 = vmatprep.subr.mxu0 0.0
  %8758 = vmatpush1.msra.mxu0 %v8668
  %8759 = vmatprep.subr.mxu0 0.0
  %8760 = vmatpush1.msra.mxu0 %v8669
  %8761 = vmatprep.subr.mxu0 0.0
  %8762 = vmatpush1.msra.mxu0 0.0
  %8763 = vmatprep.subr.mxu0 0.0
  %8764 = vmatpush1.msra.mxu0 0.0
  %8765 = vmatprep.subr.mxu0 0.0
  %8766 = vmatpush1.msra.mxu0 0.0
  %8767 = vmatprep.subr.mxu0 0.0
  %8768 = vmatpush1.msra.mxu0 0.0
  %8769 = vmatprep.subr.mxu0 0.0
  %8770 = vmatpush1.msra.mxu0 0.0
  %8771 = vmatprep.subr.mxu0 0.0
  %8772 = vmatpush1.msra.mxu0 0.0
  %8773 = vmatprep.subr.mxu0 0.0
  %8774 = vmatpush1.msra.mxu0 0.0
  %8775 = vmatprep.subr.mxu0 0.0
  %8776 = vmatpush1.msra.mxu0 0.0
  %8777 = vmatprep.subr.mxu0 0.0
  %8778 = vmatpush1.msra.mxu0 0.0
  %8779 = vmatprep.subr.mxu0 0.0
  %8780 = vmatpush1.msra.mxu0 0.0
  %8781 = vmatprep.subr.mxu0 0.0
  %8782 = vmatpush1.msra.mxu0 0.0
  %8783 = vmatprep.subr.mxu0 0.0
  %8784 = vmatpush1.msra.mxu0 0.0
  %8785 = vmatprep.subr.mxu0 0.0
  %8786 = vmatpush1.msra.mxu0 0.0
  %8787 = vmatprep.subr.mxu0 0.0
  %8788 = vmatpush1.msra.mxu0 0.0
  %8789 = vmatprep.subr.mxu0 0.0
  %8790 = vmatpush1.msra.mxu0 0.0
  %8791 = vmatprep.subr.mxu0 0.0
  %8792 = vmatpush1.msra.mxu0 0.0
  %8793 = vmatprep.subr.mxu0 0.0
  %8794 = vmatpush1.msra.mxu0 0.0
  %8795 = vmatprep.subr.mxu0 0.0
  %8796 = vmatpush1.msra.mxu0 0.0
  %8797 = vmatprep.subr.mxu0 0.0
  %8798 = vmatpush1.msra.mxu0 0.0
  %8799 = vmatprep.subr.mxu0 0.0
  %8800 = vmatpush1.msra.mxu0 0.0
  %8801 = vmatprep.subr.mxu0 0.0
  %8802 = vmatpush1.msra.mxu0 0.0
  %8803 = vmatprep.subr.mxu0 0.0
  %8804 = vmatpush1.msra.mxu0 0.0
  %8805 = vmatprep.subr.mxu0 0.0
  %8806 = vmatpush1.msra.mxu0 0.0
  %8807 = vmatprep.subr.mxu0 0.0
  %8808 = vmatpush1.msra.mxu0 0.0
  %8809 = vmatprep.mubr.f32.mxu0 0.0
  %8810 = vmatmul.mubr.f32.gmra.mrb[0].mxu0 %v8671
  %v8811 = vpop.f32.mrb[0].mxu0
  %v8812 = vadd.f32 0.0, %v8811
  %v8813 = vpop.f32.mrb[0].mxu0
  %8814 = vmatprep.mubr.f32.mxu0 0.0
  %8815 = vmatmul.mubr.f32.gmra.mrb[0].mxu0 %v8674
  %v8816 = vpop.f32.mrb[0].mxu0
  %v8817 = vadd.f32 0.0, %v8816
  %v8818 = vpop.f32.mrb[0].mxu0
  %8819 = vmatprep.mubr.f32.mxu0 0.0
  %8820 = vmatmul.mubr.f32.gmra.mrb[0].mxu0 %v8677
  %v8821 = vpop.f32.mrb[0].mxu0
  %v8822 = vadd.f32 0.0, %v8821
  %v8823 = vpop.f32.mrb[0].mxu0
  %8824 = vmatprep.mubr.f32.mxu0 0.0
  %8825 = vmatmul.mubr.f32.gmra.mrb[0].mxu0 %v8680
  %v8826 = vpop.f32.mrb[0].mxu0
  %v8827 = vadd.f32 0.0, %v8826
  %v8828 = vpop.f32.mrb[0].mxu0
  %8829 = vmatprep.mubr.f32.mxu0 0.0
  %8830 = vmatmul.mubr.f32.gmra.mrb[0].mxu0 %v8683
  %v8831 = vpop.f32.mrb[0].mxu0
  %v8832 = vadd.f32 0.0, %v8831
  %v8833 = vpop.f32.mrb[0].mxu0
  %8834 = vmatprep.mubr.f32.mxu0 0.0
  %8835 = vmatmul.mubr.f32.gmra.mrb[0].mxu0 %v8686
  %v8836 = vpop.f32.mrb[0].mxu0
  %v8837 = vadd.f32 0.0, %v8836
  %v8838 = vpop.f32.mrb[0].mxu0
  %8839 = vmatprep.mubr.f32.mxu0 0.0
  %8840 = vmatmul.mubr.f32.gmra.mrb[0].mxu0 %v8689
  %v8841 = vpop.f32.mrb[0].mxu0
  %v8842 = vadd.f32 0.0, %v8841
  %v8843 = vpop.f32.mrb[0].mxu0
  %8844 = vmatprep.mubr.f32.mxu0 0.0
  %8845 = vmatmul.mubr.f32.gmra.mrb[0].mxu0 %v8692
  %v8846 = vpop.f32.mrb[0].mxu0
  %v8847 = vadd.f32 0.0, %v8846
  %v8848 = vpop.f32.mrb[0].mxu0
  %8849 = vmatprep.mubr.f32.mxu0 0.0
  %8850 = vmatmul.mubr.f32.gmra.mrb[0].mxu0 %v8695
  %v8851 = vpop.f32.mrb[0].mxu0
  %v8852 = vadd.f32 0.0, %v8851
  %v8853 = vpop.f32.mrb[0].mxu0
  %8854 = vmatprep.mubr.f32.mxu0 0.0
  %8855 = vmatmul.mubr.f32.gmra.mrb[0].mxu0 %v8698
  %v8856 = vpop.f32.mrb[0].mxu0
  %v8857 = vadd.f32 0.0, %v8856
  %v8858 = vpop.f32.mrb[0].mxu0
  %8859 = vmatprep.mubr.f32.mxu0 0.0
  %8860 = vmatmul.mubr.f32.gmra.mrb[0].mxu0 %v8701
  %v8861 = vpop.f32.mrb[0].mxu0
  %v8862 = vadd.f32 0.0, %v8861
  %v8863 = vpop.f32.mrb[0].mxu0
  %8864 = vmatprep.mubr.f32.mxu0 0.0
  %8865 = vmatmul.mubr.f32.gmra.mrb[0].mxu0 %v8704
  %v8866 = vpop.f32.mrb[0].mxu0
  %v8867 = vadd.f32 0.0, %v8866
  %v8868 = vpop.f32.mrb[0].mxu0
  %8869 = vmatprep.mubr.f32.mxu0 0.0
  %8870 = vmatmul.mubr.f32.gmra.mrb[0].mxu0 %v8707
  %v8871 = vpop.f32.mrb[0].mxu0
  %v8872 = vadd.f32 0.0, %v8871
  %v8873 = vpop.f32.mrb[0].mxu0
  %8874 = vmatprep.mubr.f32.mxu0 0.0
  %8875 = vmatmul.mubr.f32.gmra.mrb[0].mxu0 %v8710
  %v8876 = vpop.f32.mrb[0].mxu0
  %v8877 = vadd.f32 0.0, %v8876
  %v8878 = vpop.f32.mrb[0].mxu0
  %8879 = vmatprep.mubr.f32.mxu0 0.0
  %8880 = vmatmul.mubr.f32.gmra.mrb[0].mxu0 %v8713
  %v8881 = vpop.f32.mrb[0].mxu0
  %v8882 = vadd.f32 0.0, %v8881
  %v8883 = vpop.f32.mrb[0].mxu0
  %8884 = vmatprep.mubr.f32.mxu0 0.0
  %8885 = vmatmul.mubr.f32.gmra.mrb[0].mxu0 %v8716
  %v8886 = vpop.f32.mrb[0].mxu0
  %v8887 = vadd.f32 0.0, %v8886
  %v8888 = vpop.f32.mrb[0].mxu0
  %8889 = vmatprep.mubr.f32.mxu0 0.0
  %8890 = vmatmul.mubr.f32.gmra.mrb[0].mxu0 %v8719
  %v8891 = vpop.f32.mrb[0].mxu0
  %v8892 = vadd.f32 0.0, %v8891
  %v8893 = vpop.f32.mrb[0].mxu0
  %8894 = vmatprep.mubr.f32.mxu0 0.0
  %8895 = vmatmul.mubr.f32.gmra.mrb[0].mxu0 %v8722
  %v8896 = vpop.f32.mrb[0].mxu0
  %v8897 = vadd.f32 0.0, %v8896
  %v8898 = vpop.f32.mrb[0].mxu0
  %8899 = vmatprep.mubr.f32.mxu0 0.0
  %8900 = vmatmul.mubr.f32.gmra.mrb[0].mxu0 %v8725
  %v8901 = vpop.f32.mrb[0].mxu0
  %v8902 = vadd.f32 0.0, %v8901
  %v8903 = vpop.f32.mrb[0].mxu0
  %8904 = vmatprep.mubr.f32.mxu0 0.0
  %8905 = vmatmul.mubr.f32.gmra.mrb[0].mxu0 %v8728
  %v8906 = vpop.f32.mrb[0].mxu0
  %v8907 = vadd.f32 0.0, %v8906
  %v8908 = vpop.f32.mrb[0].mxu0
  %8909 = vmatprep.mubr.f32.mxu0 0.0
  %8910 = vmatmul.mubr.f32.gmra.mrb[0].mxu0 %v8731
  %v8911 = vpop.f32.mrb[0].mxu0
  %v8912 = vadd.f32 0.0, %v8911
  %v8913 = vpop.f32.mrb[0].mxu0
  %8914 = vmatprep.mubr.f32.mxu0 0.0
  %8915 = vmatmul.mubr.f32.gmra.mrb[0].mxu0 %v8734
  %v8916 = vpop.f32.mrb[0].mxu0
  %v8917 = vadd.f32 0.0, %v8916
  %v8918 = vpop.f32.mrb[0].mxu0
  %8919 = vmatprep.mubr.f32.mxu0 0.0
  %8920 = vmatmul.mubr.f32.gmra.mrb[0].mxu0 %v8737
  %v8921 = vpop.f32.mrb[0].mxu0
  %v8922 = vadd.f32 0.0, %v8921
  %v8923 = vpop.f32.mrb[0].mxu0
  %8924 = vmatprep.mubr.f32.mxu0 0.0
  %8925 = vmatmul.mubr.f32.gmra.mrb[0].mxu0 %v8740
  %v8926 = vpop.f32.mrb[0].mxu0
  %v8927 = vadd.f32 0.0, %v8926
  %v8928 = vpop.f32.mrb[0].mxu0
  %8929 = vmatprep.mubr.f32.mxu0 0.0
  %8930 = vmatmul.mubr.f32.gmra.mrb[0].mxu0 %v8743
  %v8931 = vpop.f32.mrb[0].mxu0
  %v8932 = vadd.f32 0.0, %v8931
  %v8933 = vpop.f32.mrb[0].mxu0
  %8934 = vdwg.mxu0
  %v8935 = vadd.f32 %v8612, %v8812
  %v8936 = vadd.f32 %v8613, %v8817
  %v8937 = vadd.f32 %v8614, %v8822
  %v8938 = vadd.f32 %v8615, %v8827
  %v8939 = vadd.f32 %v8616, %v8832
  %v8940 = vadd.f32 %v8617, %v8837
  %v8941 = vadd.f32 %v8618, %v8842
  %v8942 = vadd.f32 %v8619, %v8847
  %v8943 = vadd.f32 %v8620, %v8852
  %v8944 = vadd.f32 %v8621, %v8857
  %v8945 = vadd.f32 %v8622, %v8862
  %v8946 = vadd.f32 %v8623, %v8867
  %v8947 = vadd.f32 %v8624, %v8872
  %v8948 = vadd.f32 %v8625, %v8877
  %v8949 = vadd.f32 %v8626, %v8882
  %v8950 = vadd.f32 %v8627, %v8887
  %v8951 = vadd.f32 %v8628, %v8892
  %v8952 = vadd.f32 %v8629, %v8897
  %v8953 = vadd.f32 %v8630, %v8902
  %v8954 = vadd.f32 %v8631, %v8907
  %v8955 = vadd.f32 %v8632, %v8912
  %v8956 = vadd.f32 %v8633, %v8917
  %v8957 = vadd.f32 %v8634, %v8922
  %v8958 = vadd.f32 %v8635, %v8927
  %v8959 = vadd.f32 %v8636, %v8932
  %v8960 = vld [vmem:[%s7] sm:$0x1]
  %v8962 = vlaneseq
  %v8963 = vshrl.u32 %v8962, 7
  %v8964 = vsub.s32 0, %v8963
  %v8965 = vrot.slane %v8960, %v8964
  %v8967 = vadd.f32 %v8935, %v8965
  %v8968 = vadd.f32 %v8936, %v8965
  %v8969 = vadd.f32 %v8937, %v8965
  %v8970 = vadd.f32 %v8938, %v8965
  %v8971 = vadd.f32 %v8939, %v8965
  %v8972 = vadd.f32 %v8940, %v8965
  %v8973 = vadd.f32 %v8941, %v8965
  %v8974 = vadd.f32 %v8942, %v8965
  %v8975 = vadd.f32 %v8943, %v8965
  %v8976 = vadd.f32 %v8944, %v8965
  %v8977 = vadd.f32 %v8945, %v8965
  %v8978 = vadd.f32 %v8946, %v8965
  %v8979 = vadd.f32 %v8947, %v8965
  %v8980 = vadd.f32 %v8948, %v8965
  %v8981 = vadd.f32 %v8949, %v8965
  %v8982 = vadd.f32 %v8950, %v8965
  %v8983 = vadd.f32 %v8951, %v8965
  %v8984 = vadd.f32 %v8952, %v8965
  %v8985 = vadd.f32 %v8953, %v8965
  %v8986 = vadd.f32 %v8954, %v8965
  %v8987 = vadd.f32 %v8955, %v8965
  %v8988 = vadd.f32 %v8956, %v8965
  %v8989 = vadd.f32 %v8957, %v8965
  %v8990 = vadd.f32 %v8958, %v8965
  %v8991 = vadd.f32 %v8959, %v8965
  %v8992 = vmax.f32 %v8967, 0.0
  %v8993 = vmax.f32 %v8968, 0.0
  %v8994 = vmax.f32 %v8969, 0.0
  %v8995 = vmax.f32 %v8970, 0.0
  %v8996 = vmax.f32 %v8971, 0.0
  %v8997 = vmax.f32 %v8972, 0.0
  %v8998 = vmax.f32 %v8973, 0.0
  %v8999 = vmax.f32 %v8974, 0.0
  %v9000 = vmax.f32 %v8975, 0.0
  %v9001 = vmax.f32 %v8976, 0.0
  %v9002 = vmax.f32 %v8977, 0.0
  %v9003 = vmax.f32 %v8978, 0.0
  %v9004 = vmax.f32 %v8979, 0.0
  %v9005 = vmax.f32 %v8980, 0.0
  %v9006 = vmax.f32 %v8981, 0.0
  %v9007 = vmax.f32 %v8982, 0.0
  %v9008 = vmax.f32 %v8983, 0.0
  %v9009 = vmax.f32 %v8984, 0.0
  %v9010 = vmax.f32 %v8985, 0.0
  %v9011 = vmax.f32 %v8986, 0.0
  %v9012 = vmax.f32 %v8987, 0.0
  %v9013 = vmax.f32 %v8988, 0.0
  %v9014 = vmax.f32 %v8989, 0.0
  %v9015 = vmax.f32 %v8990, 0.0
  %v9016 = vmax.f32 %v8991, 0.0
  %v9017 = vld [vmem:[%s8] sm:$0xff]
  %v9018 = vld [vmem:[%s8 + $0x8] sm:$0xff]
  %v9019 = vld [vmem:[%s8 + $0x10] sm:$0xff]
  %v9020 = vld [vmem:[%s8 + $0x18] sm:$0xff]
  %v9021 = vld [vmem:[%s8 + $0x20] sm:$0xff]
  %v9022 = vld [vmem:[%s8 + $0x28] sm:$0xff]
  %v9023 = vld [vmem:[%s8 + $0x30] sm:$0xff]
  %v9024 = vld [vmem:[%s8 + $0x38] sm:$0xff]
  %v9025 = vld [vmem:[%s8 + $0x40] sm:$0xff]
  %v9026 = vld [vmem:[%s8 + $0x48] sm:$0xff]
  %v9027 = vld [vmem:[%s8 + $0x50] sm:$0xff]
  %v9028 = vld [vmem:[%s8 + $0x58] sm:$0xff]
  %v9029 = vld [vmem:[%s8 + $0x60] sm:$0xff]
  %v9030 = vld [vmem:[%s8 + $0x68] sm:$0xff]
  %v9031 = vld [vmem:[%s8 + $0x70] sm:$0xff]
  %v9032 = vld [vmem:[%s8 + $0x78] sm:$0xff]
  %v9033 = vld [vmem:[%s9] sm:$0x1]
  %v9035 = vlaneseq
  %v9036 = vshrl.u32 %v9035, 7
  %v9037 = vsub.s32 0, %v9036
  %v9038 = vrot.slane %v9033, %v9037
  %9040 = vmatprep.subr.mxu0 0.0
  %9041 = vmatpush1.msra.mxu0 %v9017
  %9042 = vmatprep.subr.mxu0 0.0
  %9043 = vmatpush1.msra.mxu0 %v9018
  %9044 = vmatprep.subr.mxu0 0.0
  %9045 = vmatpush1.msra.mxu0 %v9019
  %9046 = vmatprep.subr.mxu0 0.0
  %9047 = vmatpush1.msra.mxu0 %v9020
  %9048 = vmatprep.subr.mxu0 0.0
  %9049 = vmatpush1.msra.mxu0 %v9021
  %9050 = vmatprep.subr.mxu0 0.0
  %9051 = vmatpush1.msra.mxu0 %v9022
  %9052 = vmatprep.subr.mxu0 0.0
  %9053 = vmatpush1.msra.mxu0 %v9023
  %9054 = vmatprep.subr.mxu0 0.0
  %9055 = vmatpush1.msra.mxu0 %v9024
  %9056 = vmatprep.subr.mxu0 0.0
  %9057 = vmatpush1.msra.mxu0 %v9025
  %9058 = vmatprep.subr.mxu0 0.0
  %9059 = vmatpush1.msra.mxu0 %v9026
  %9060 = vmatprep.subr.mxu0 0.0
  %9061 = vmatpush1.msra.mxu0 %v9027
  %9062 = vmatprep.subr.mxu0 0.0
  %9063 = vmatpush1.msra.mxu0 %v9028
  %9064 = vmatprep.subr.mxu0 0.0
  %9065 = vmatpush1.msra.mxu0 %v9029
  %9066 = vmatprep.subr.mxu0 0.0
  %9067 = vmatpush1.msra.mxu0 %v9030
  %9068 = vmatprep.subr.mxu0 0.0
  %9069 = vmatpush1.msra.mxu0 %v9031
  %9070 = vmatprep.subr.mxu0 0.0
  %9071 = vmatpush1.msra.mxu0 %v9032
  %9072 = vmatprep.subr.mxu0 0.0
  %9073 = vmatpush1.msra.mxu0 0.0
  %9074 = vmatprep.subr.mxu0 0.0
  %9075 = vmatpush1.msra.mxu0 0.0
  %9076 = vmatprep.subr.mxu0 0.0
  %9077 = vmatpush1.msra.mxu0 0.0
  %9078 = vmatprep.subr.mxu0 0.0
  %9079 = vmatpush1.msra.mxu0 0.0
  %9080 = vmatprep.subr.mxu0 0.0
  %9081 = vmatpush1.msra.mxu0 0.0
  %9082 = vmatprep.subr.mxu0 0.0
  %9083 = vmatpush1.msra.mxu0 0.0
  %9084 = vmatprep.subr.mxu0 0.0
  %9085 = vmatpush1.msra.mxu0 0.0
  %9086 = vmatprep.subr.mxu0 0.0
  %9087 = vmatpush1.msra.mxu0 0.0
  %9088 = vmatprep.subr.mxu0 0.0
  %9089 = vmatpush1.msra.mxu0 0.0
  %9090 = vmatprep.subr.mxu0 0.0
  %9091 = vmatpush1.msra.mxu0 0.0
  %9092 = vmatprep.subr.mxu0 0.0
  %9093 = vmatpush1.msra.mxu0 0.0
  %9094 = vmatprep.subr.mxu0 0.0
  %9095 = vmatpush1.msra.mxu0 0.0
  %9096 = vmatprep.subr.mxu0 0.0
  %9097 = vmatpush1.msra.mxu0 0.0
  %9098 = vmatprep.subr.mxu0 0.0
  %9099 = vmatpush1.msra.mxu0 0.0
  %9100 = vmatprep.subr.mxu0 0.0
  %9101 = vmatpush1.msra.mxu0 0.0
  %9102 = vmatprep.subr.mxu0 0.0
  %9103 = vmatpush1.msra.mxu0 0.0
  %9104 = vmatprep.mubr.f32.mxu0 0.0
  %9105 = vmatmul.mubr.f32.gmra.mrb[0].mxu0 %v8992
  %v9106 = vpop.f32.mrb[0].mxu0
  %v9107 = vadd.f32 %v9038, %v9106
  %v9108 = vpop.f32.mrb[0].mxu0
  %9109 = vmatprep.mubr.f32.mxu0 0.0
  %9110 = vmatmul.mubr.f32.gmra.mrb[0].mxu0 %v8993
  %v9111 = vpop.f32.mrb[0].mxu0
  %v9112 = vadd.f32 %v9038, %v9111
  %v9113 = vpop.f32.mrb[0].mxu0
  %9114 = vmatprep.mubr.f32.mxu0 0.0
  %9115 = vmatmul.mubr.f32.gmra.mrb[0].mxu0 %v8994
  %v9116 = vpop.f32.mrb[0].mxu0
  %v9117 = vadd.f32 %v9038, %v9116
  %v9118 = vpop.f32.mrb[0].mxu0
  %9119 = vmatprep.mubr.f32.mxu0 0.0
  %9120 = vmatmul.mubr.f32.gmra.mrb[0].mxu0 %v8995
  %v9121 = vpop.f32.mrb[0].mxu0
  %v9122 = vadd.f32 %v9038, %v9121
  %v9123 = vpop.f32.mrb[0].mxu0
  %9124 = vmatprep.mubr.f32.mxu0 0.0
  %9125 = vmatmul.mubr.f32.gmra.mrb[0].mxu0 %v8996
  %v9126 = vpop.f32.mrb[0].mxu0
  %v9127 = vadd.f32 %v9038, %v9126
  %v9128 = vpop.f32.mrb[0].mxu0
  %9129 = vmatprep.mubr.f32.mxu0 0.0
  %9130 = vmatmul.mubr.f32.gmra.mrb[0].mxu0 %v8997
  %v9131 = vpop.f32.mrb[0].mxu0
  %v9132 = vadd.f32 %v9038, %v9131
  %v9133 = vpop.f32.mrb[0].mxu0
  %9134 = vmatprep.mubr.f32.mxu0 0.0
  %9135 = vmatmul.mubr.f32.gmra.mrb[0].mxu0 %v8998
  %v9136 = vpop.f32.mrb[0].mxu0
  %v9137 = vadd.f32 %v9038, %v9136
  %v9138 = vpop.f32.mrb[0].mxu0
  %9139 = vmatprep.mubr.f32.mxu0 0.0
  %9140 = vmatmul.mubr.f32.gmra.mrb[0].mxu0 %v8999
  %v9141 = vpop.f32.mrb[0].mxu0
  %v9142 = vadd.f32 %v9038, %v9141
  %v9143 = vpop.f32.mrb[0].mxu0
  %9144 = vmatprep.mubr.f32.mxu0 0.0
  %9145 = vmatmul.mubr.f32.gmra.mrb[0].mxu0 %v9000
  %v9146 = vpop.f32.mrb[0].mxu0
  %v9147 = vadd.f32 %v9038, %v9146
  %v9148 = vpop.f32.mrb[0].mxu0
  %9149 = vmatprep.mubr.f32.mxu0 0.0
  %9150 = vmatmul.mubr.f32.gmra.mrb[0].mxu0 %v9001
  %v9151 = vpop.f32.mrb[0].mxu0
  %v9152 = vadd.f32 %v9038, %v9151
  %v9153 = vpop.f32.mrb[0].mxu0
  %9154 = vmatprep.mubr.f32.mxu0 0.0
  %9155 = vmatmul.mubr.f32.gmra.mrb[0].mxu0 %v9002
  %v9156 = vpop.f32.mrb[0].mxu0
  %v9157 = vadd.f32 %v9038, %v9156
  %v9158 = vpop.f32.mrb[0].mxu0
  %9159 = vmatprep.mubr.f32.mxu0 0.0
  %9160 = vmatmul.mubr.f32.gmra.mrb[0].mxu0 %v9003
  %v9161 = vpop.f32.mrb[0].mxu0
  %v9162 = vadd.f32 %v9038, %v9161
  %v9163 = vpop.f32.mrb[0].mxu0
  %9164 = vmatprep.mubr.f32.mxu0 0.0
  %9165 = vmatmul.mubr.f32.gmra.mrb[0].mxu0 %v9004
  %v9166 = vpop.f32.mrb[0].mxu0
  %v9167 = vadd.f32 %v9038, %v9166
  %v9168 = vpop.f32.mrb[0].mxu0
  %9169 = vmatprep.mubr.f32.mxu0 0.0
  %9170 = vmatmul.mubr.f32.gmra.mrb[0].mxu0 %v9005
  %v9171 = vpop.f32.mrb[0].mxu0
  %v9172 = vadd.f32 %v9038, %v9171
  %v9173 = vpop.f32.mrb[0].mxu0
  %9174 = vmatprep.mubr.f32.mxu0 0.0
  %9175 = vmatmul.mubr.f32.gmra.mrb[0].mxu0 %v9006
  %v9176 = vpop.f32.mrb[0].mxu0
  %v9177 = vadd.f32 %v9038, %v9176
  %v9178 = vpop.f32.mrb[0].mxu0
  %9179 = vmatprep.mubr.f32.mxu0 0.0
  %9180 = vmatmul.mubr.f32.gmra.mrb[0].mxu0 %v9007
  %v9181 = vpop.f32.mrb[0].mxu0
  %v9182 = vadd.f32 %v9038, %v9181
  %v9183 = vpop.f32.mrb[0].mxu0
  %9184 = vmatprep.mubr.f32.mxu0 0.0
  %9185 = vmatmul.mubr.f32.gmra.mrb[0].mxu0 %v9008
  %v9186 = vpop.f32.mrb[0].mxu0
  %v9187 = vadd.f32 %v9038, %v9186
  %v9188 = vpop.f32.mrb[0].mxu0
  %9189 = vmatprep.mubr.f32.mxu0 0.0
  %9190 = vmatmul.mubr.f32.gmra.mrb[0].mxu0 %v9009
  %v9191 = vpop.f32.mrb[0].mxu0
  %v9192 = vadd.f32 %v9038, %v9191
  %v9193 = vpop.f32.mrb[0].mxu0
  %9194 = vmatprep.mubr.f32.mxu0 0.0
  %9195 = vmatmul.mubr.f32.gmra.mrb[0].mxu0 %v9010
  %v9196 = vpop.f32.mrb[0].mxu0
  %v9197 = vadd.f32 %v9038, %v9196
  %v9198 = vpop.f32.mrb[0].mxu0
  %9199 = vmatprep.mubr.f32.mxu0 0.0
  %9200 = vmatmul.mubr.f32.gmra.mrb[0].mxu0 %v9011
  %v9201 = vpop.f32.mrb[0].mxu0
  %v9202 = vadd.f32 %v9038, %v9201
  %v9203 = vpop.f32.mrb[0].mxu0
  %9204 = vmatprep.mubr.f32.mxu0 0.0
  %9205 = vmatmul.mubr.f32.gmra.mrb[0].mxu0 %v9012
  %v9206 = vpop.f32.mrb[0].mxu0
  %v9207 = vadd.f32 %v9038, %v9206
  %v9208 = vpop.f32.mrb[0].mxu0
  %9209 = vmatprep.mubr.f32.mxu0 0.0
  %9210 = vmatmul.mubr.f32.gmra.mrb[0].mxu0 %v9013
  %v9211 = vpop.f32.mrb[0].mxu0
  %v9212 = vadd.f32 %v9038, %v9211
  %v9213 = vpop.f32.mrb[0].mxu0
  %9214 = vmatprep.mubr.f32.mxu0 0.0
  %9215 = vmatmul.mubr.f32.gmra.mrb[0].mxu0 %v9014
  %v9216 = vpop.f32.mrb[0].mxu0
  %v9217 = vadd.f32 %v9038, %v9216
  %v9218 = vpop.f32.mrb[0].mxu0
  %9219 = vmatprep.mubr.f32.mxu0 0.0
  %9220 = vmatmul.mubr.f32.gmra.mrb[0].mxu0 %v9015
  %v9221 = vpop.f32.mrb[0].mxu0
  %v9222 = vadd.f32 %v9038, %v9221
  %v9223 = vpop.f32.mrb[0].mxu0
  %9224 = vmatprep.mubr.f32.mxu0 0.0
  %9225 = vmatmul.mubr.f32.gmra.mrb[0].mxu0 %v9016
  %v9226 = vpop.f32.mrb[0].mxu0
  %v9227 = vadd.f32 %v9038, %v9226
  %v9228 = vpop.f32.mrb[0].mxu0
  %9229 = vdwg.mxu0
  %v9230 = vmax.f32 %v9107, 0.0
  %v9231 = vmax.f32 %v9112, 0.0
  %v9232 = vmax.f32 %v9117, 0.0
  %v9233 = vmax.f32 %v9122, 0.0
  %v9234 = vmax.f32 %v9127, 0.0
  %v9235 = vmax.f32 %v9132, 0.0
  %v9236 = vmax.f32 %v9137, 0.0
  %v9237 = vmax.f32 %v9142, 0.0
  %v9238 = vmax.f32 %v9147, 0.0
  %v9239 = vmax.f32 %v9152, 0.0
  %v9240 = vmax.f32 %v9157, 0.0
  %v9241 = vmax.f32 %v9162, 0.0
  %v9242 = vmax.f32 %v9167, 0.0
  %v9243 = vmax.f32 %v9172, 0.0
  %v9244 = vmax.f32 %v9177, 0.0
  %v9245 = vmax.f32 %v9182, 0.0
  %v9246 = vmax.f32 %v9187, 0.0
  %v9247 = vmax.f32 %v9192, 0.0
  %v9248 = vmax.f32 %v9197, 0.0
  %v9249 = vmax.f32 %v9202, 0.0
  %v9250 = vmax.f32 %v9207, 0.0
  %v9251 = vmax.f32 %v9212, 0.0
  %v9252 = vmax.f32 %v9217, 0.0
  %v9253 = vmax.f32 %v9222, 0.0
  %v9254 = vmax.f32 %v9227, 0.0
  %vm9255 = vcmask 48128
  %9256 = vst.msk [vmem:[%s10] sm:$0xff] %vm9255, %v9230
  %9257 = vst.msk [vmem:[%s10 + $0x8] sm:$0xff] %vm9255, %v9231
  %9258 = vst.msk [vmem:[%s10 + $0x10] sm:$0xff] %vm9255, %v9232
  %9259 = vst.msk [vmem:[%s10 + $0x18] sm:$0xff] %vm9255, %v9233
  %9260 = vst.msk [vmem:[%s10 + $0x20] sm:$0xff] %vm9255, %v9234
  %9261 = vst.msk [vmem:[%s10 + $0x28] sm:$0xff] %vm9255, %v9235
  %9262 = vst.msk [vmem:[%s10 + $0x30] sm:$0xff] %vm9255, %v9236
  %9263 = vst.msk [vmem:[%s10 + $0x38] sm:$0xff] %vm9255, %v9237
  %9264 = vst.msk [vmem:[%s10 + $0x40] sm:$0xff] %vm9255, %v9238
  %9265 = vst.msk [vmem:[%s10 + $0x48] sm:$0xff] %vm9255, %v9239
  %9266 = vst.msk [vmem:[%s10 + $0x50] sm:$0xff] %vm9255, %v9240
  %9267 = vst.msk [vmem:[%s10 + $0x58] sm:$0xff] %vm9255, %v9241
  %9268 = vst.msk [vmem:[%s10 + $0x60] sm:$0xff] %vm9255, %v9242
  %9269 = vst.msk [vmem:[%s10 + $0x68] sm:$0xff] %vm9255, %v9243
  %9270 = vst.msk [vmem:[%s10 + $0x70] sm:$0xff] %vm9255, %v9244
  %9271 = vst.msk [vmem:[%s10 + $0x78] sm:$0xff] %vm9255, %v9245
  %9272 = vst.msk [vmem:[%s10 + $0x80] sm:$0xff] %vm9255, %v9246
  %9273 = vst.msk [vmem:[%s10 + $0x88] sm:$0xff] %vm9255, %v9247
  %9274 = vst.msk [vmem:[%s10 + $0x90] sm:$0xff] %vm9255, %v9248
  %9275 = vst.msk [vmem:[%s10 + $0x98] sm:$0xff] %vm9255, %v9249
  %9276 = vst.msk [vmem:[%s10 + $0xa0] sm:$0xff] %vm9255, %v9250
  %9277 = vst.msk [vmem:[%s10 + $0xa8] sm:$0xff] %vm9255, %v9251
  %9278 = vst.msk [vmem:[%s10 + $0xb0] sm:$0xff] %vm9255, %v9252
  %9279 = vst.msk [vmem:[%s10 + $0xb8] sm:$0xff] %vm9255, %v9253
  %9280 = vst.msk [vmem:[%s10 + $0xc0] sm:$0xff] %vm9255, %v9254
  // Predicated region
  $region42: #{net_forward.2} parent=0 // pred_check
    _
  $region43: #{net_forward.2} parent=0 // pred_check_branch
    %9282 = sbr.rel (0) target = $region45
  $region44: #{net_forward.2} parent=0 // pred_region
    _
  $region45: #{net_forward.2} parent=0 // pred_fallthru
    _
  // Predicated region
  $region46: #{net_forward.2} parent=0 // pred_check
    _
  $region47: #{net_forward.2} parent=0 // pred_check_branch
    %9284 = sbr.rel (0) target = $region49
  $region48: #{net_forward.2} parent=0 // pred_region
    _
  $region49: #{net_forward.2} parent=0 // pred_fallthru
    _

</llo_original>
